<compile_context>
chip_gen: v7x
topology: tpu7x:2x2x1
jax: 0.10.0
libtpu: 0.0.40
codegen_flags: <defaults>
</compile_context>

<pallas_src>
import jax
import jax.numpy as jnp
from jax import lax
from jax.experimental import pallas as pl
from jax.experimental.pallas import tpu as pltpu

LANE = 128


def _round_up(x, m):
    return ((x + m - 1) // m) * m


def _full_spec(shape):
    zeros = (0,) * len(shape)
    return pl.BlockSpec(shape, lambda i, _z=zeros: _z)


def _pad2(a, rows, cols):
    return jnp.pad(a, ((0, rows - a.shape[0]), (0, cols - a.shape[1])))


# --------------------------------------------------------------------------
# Fused kernel: pre-decode attentions + GRU decode loop, single invocation.
# Time-major x (S,B,In) / out (S,B,Hp) so per-step access is a cheap dynamic
# index on the leading (untiled) axis.
# --------------------------------------------------------------------------
def _make_fused_kernel(has_modal):
    def kernel(*refs):
        if has_modal:
            (x_ref, eh_ref, eo_ref, md_ref,
             wmh_ref, wqh_ref, bh_ref,
             wmo_ref, wqo_ref, bo_ref,
             wih0_ref, whh0_ref, bih0_ref, bhh0_ref,
             wih1_ref, whh1_ref, bih1_ref, bhh1_ref,
             wmr_ref, wqr_ref, br_ref,
             out_ref, ctx_scr) = refs
        else:
            (x_ref, eh_ref, eo_ref,
             wmo_ref, wqo_ref, bo_ref,
             wih0_ref, whh0_ref, bih0_ref, bhh0_ref,
             wih1_ref, whh1_ref, bih1_ref, bhh1_ref,
             wmr_ref, wqr_ref, br_ref,
             out_ref, ctx_scr) = refs

        S = out_ref.shape[0]
        B, Te, Hp = ctx_scr.shape

        def attend_mix(q3, c3):
            # q3: (B,Tq,Hp)  c3: (B,Tc,Hp) -> softmax(q3 c3^T) c3 on the MXU.
            scores = jnp.einsum("bqh,bkh->bqk", q3, c3,
                                preferred_element_type=jnp.float32)
            m = jnp.max(scores, axis=-1, keepdims=True)
            e = jnp.exp(scores - m)
            attn = e * pl.reciprocal(jnp.sum(e, axis=-1, keepdims=True),
                                     approx=True)
            return jnp.einsum("bqk,bkh->bqh", attn, c3,
                              preferred_element_type=jnp.float32)

        enc_h = eh_ref[...].astype(jnp.float32)                 # (B, Hp)
        enc_out = eo_ref[...].astype(jnp.float32)               # (B, Te, Hp)
        att_ctx = md_ref[...].astype(jnp.float32) if has_modal else enc_out

        # ---- pre-decode: h_attention(encoder_h, inter_modal_out) ----
        if has_modal:
            mix_h = attend_mix(enc_h[:, None, :], att_ctx)[:, 0, :]   # (B,Hp)
            enc_h = jnp.tanh(
                jnp.dot(mix_h, wmh_ref[...], preferred_element_type=jnp.float32)
                + jnp.dot(enc_h, wqh_ref[...], preferred_element_type=jnp.float32)
                + bh_ref[...])

        # ---- pre-decode: out_attention -> decode context (B,Te,Hp) ----
        mix_o = attend_mix(enc_out, att_ctx)                     # (B, Te, Hp)
        ctx2 = jnp.tanh(
            jnp.dot(mix_o.reshape(B * Te, Hp), wmo_ref[...],
                    preferred_element_type=jnp.float32)
            + jnp.dot(enc_out.reshape(B * Te, Hp), wqo_ref[...],
                      preferred_element_type=jnp.float32)
            + bo_ref[...])
        for b in range(B):                                       # static, tiny B
            ctx_scr[b] = ctx2[b * Te:(b + 1) * Te, :]
        ctx = ctx_scr[...]                                       # loop-invariant

        def gru_gates(gi, gh, h_prev):
            # Fused-gate layouts: r,z,n blocks at column offsets 0, Hp, 2Hp.
            i_r, i_z, i_n = gi[:, :Hp], gi[:, Hp:2 * Hp], gi[:, 2 * Hp:]
            h_r, h_z, h_n = gh[:, :Hp], gh[:, Hp:2 * Hp], gh[:, 2 * Hp:]
            r = jax.nn.sigmoid(i_r + h_r)
            z = jax.nn.sigmoid(i_z + h_z)
            n = jnp.tanh(i_n + r * h_n)
            return (1.0 - z) * n + z * h_prev

        def step(t, carry):
            h0, h1 = carry
            xt = x_ref[t].astype(jnp.float32)                    # (B, In)
            gi0 = jnp.dot(xt, wih0_ref[...],
                          preferred_element_type=jnp.float32) + bih0_ref[...]
            gh0 = jnp.dot(h0, whh0_ref[...],
                          preferred_element_type=jnp.float32) + bhh0_ref[...]
            h0 = gru_gates(gi0, gh0, h0)

            gi1 = jnp.dot(h0, wih1_ref[...],
                          preferred_element_type=jnp.float32) + bih1_ref[...]
            gh1 = jnp.dot(h1, whh1_ref[...],
                          preferred_element_type=jnp.float32) + bhh1_ref[...]
            h1 = gru_gates(gi1, gh1, h1)

            # rnn_attention(h1, ctx): split output linear -> no per-step concat.
            mix = attend_mix(h1[:, None, :], ctx)[:, 0, :]       # (B, Hp)
            h = jnp.tanh(
                jnp.dot(mix, wmr_ref[...], preferred_element_type=jnp.float32)
                + jnp.dot(h1, wqr_ref[...], preferred_element_type=jnp.float32)
                + br_ref[...])
            out_ref[t] = h.astype(out_ref.dtype)
            return (h0, h1)

        lax.fori_loop(0, S, step, (enc_h, enc_h), unroll=True)

    return kernel


# --------------------------------------------------------------------------
# Full module forward (Pallas path): one pallas_call for the whole forward.
# --------------------------------------------------------------------------
def modal_attention_gru_decoder(x, encoder_out, encoder_h, inter_modal_out, params):
    B, S, In = x.shape
    H = encoder_h.shape[-1]
    Hp = params["gru1_packed"][1].shape[0]               # whh1 is (Hp, 3Hp)
    Te = encoder_out.shape[1]

    has_modal = inter_modal_out is not None
    if has_modal and inter_modal_out.shape[0] != B:
        # TODO(synk): the PyTorch branch also print()s the sizes; only the
        # repeat_interleave(batch, dim=0) fix-up itself is mirrored here.
        inter_modal_out = jnp.repeat(inter_modal_out, B, axis=0)

    # One-time layout plumbing: time-major x, lane-padded hidden features.
    x_t = jnp.transpose(x, (1, 0, 2))                    # (S, B, In)
    ehp = jnp.pad(encoder_h, ((0, 0), (0, Hp - H)))
    eop = jnp.pad(encoder_out, ((0, 0), (0, 0), (0, Hp - H)))

    in_arrays = [x_t, ehp, eop]
    if has_modal:
        in_arrays.append(jnp.pad(inter_modal_out, ((0, 0), (0, 0), (0, Hp - H))))
        in_arrays.extend(params["h_attention_packed"])
    else:
        # NOTE: PyTorch's else-branch assigns the (out, attn) tuple to
        # encoder_out (a bug downstream); we use the intended unpacked value.
        pass
    in_arrays.extend(params["out_attention_packed"])
    in_arrays.extend(params["gru0_packed"])
    in_arrays.extend(params["gru1_packed"])
    in_arrays.extend(params["rnn_attention_packed"])

    out = pl.pallas_call(
        _make_fused_kernel(has_modal),
        out_shape=jax.ShapeDtypeStruct((S, B, Hp), jnp.float32),
        grid=(1,),                                       # whole forward, one shot
        in_specs=[_full_spec(a.shape) for a in in_arrays],
        out_specs=_full_spec((S, B, Hp)),
        scratch_shapes=[pltpu.VMEM((B, Te, Hp), jnp.float32)],
        compiler_params=pltpu.CompilerParams(
            dimension_semantics=("arbitrary",)),
    )(*in_arrays)
    out = jnp.transpose(out, (1, 0, 2))[:, :, :H]        # (B, S, H)
    return out, out[:, -1, :]


# --------------------------------------------------------------------------
# Parameter init (PyTorch shapes) + fused / lane-padded packing.
# --------------------------------------------------------------------------
def init_gru_cell(key, in_size, hidden):
    k = 1.0 / jnp.sqrt(float(hidden))
    k1, k2, k3, k4 = jax.random.split(key, 4)
    return dict(
        w_ih=jax.random.uniform(k1, (3 * hidden, in_size), jnp.float32, -k, k),
        w_hh=jax.random.uniform(k2, (3 * hidden, hidden), jnp.float32, -k, k),
        b_ih=jax.random.uniform(k3, (3 * hidden,), jnp.float32, -k, k),
        b_hh=jax.random.uniform(k4, (3 * hidden,), jnp.float32, -k, k),
    )


def pack_gru(p, in_size, hidden, in_rows, h_pad):
    """Fused gates; gate g's real block at column offset g*h_pad (zeros elsewhere)."""
    wih_g = p["w_ih"].reshape(3, hidden, in_size)        # gates r, z, n
    whh_g = p["w_hh"].reshape(3, hidden, hidden)
    wih = jnp.concatenate([_pad2(wih_g[g].T, in_rows, h_pad) for g in range(3)], axis=1)
    whh = jnp.concatenate([_pad2(whh_g[g].T, h_pad, h_pad) for g in range(3)], axis=1)
    bih_g = p["b_ih"].reshape(3, hidden)
    bhh_g = p["b_hh"].reshape(3, hidden)
    bih = jnp.concatenate([jnp.pad(bih_g[g], (0, h_pad - hidden)) for g in range(3)])[None, :]
    bhh = jnp.concatenate([jnp.pad(bhh_g[g], (0, h_pad - hidden)) for g in range(3)])[None, :]
    return (wih, whh, bih, bhh)


def init_attention(key, hidden):
    k = 1.0 / jnp.sqrt(float(2 * hidden))
    k1, k2 = jax.random.split(key)
    return dict(
        w=jax.random.uniform(k1, (hidden, 2 * hidden), jnp.float32, -k, k),
        b=jax.random.uniform(k2, (hidden,), jnp.float32, -k, k),
    )


def pack_attention(p, hidden, h_pad):
    """Split Linear([mix, q]) into (w_mix, w_q, b); each (h_pad, h_pad) lane-padded."""
    wt = p["w"].T                                        # (2H, H)
    w_mix = _pad2(wt[:hidden], h_pad, h_pad)
    w_q = _pad2(wt[hidden:], h_pad, h_pad)
    b = jnp.pad(p["b"], (0, h_pad - hidden))[None, :]
    return (w_mix, w_q, b)


# --------------------------------------------------------------------------
# Pure-JAX reference (mirrors the PyTorch math) for validation.
# --------------------------------------------------------------------------
def _ref_attention(q, c, p):
    squeeze = q.ndim == 2
    if squeeze:
        q = q[:, None, :]
    scores = jnp.einsum("bqh,bkh->bqk", q, c)
    attn = jax.nn.softmax(scores, axis=-1)
    mix = jnp.einsum("bqk,bkh->bqh", attn, c)
    combined = jnp.concatenate([mix, q], axis=-1)
    out = jnp.tanh(combined @ p["w"].T + p["b"])
    if squeeze:
        out = out[:, 0, :]
    return out


def _ref_gru_cell(x, h, p):
    H = h.shape[-1]
    gi = x @ p["w_ih"].T + p["b_ih"]
    gh = h @ p["w_hh"].T + p["b_hh"]
    i_r, i_z, i_n = gi[:, :H], gi[:, H:2 * H], gi[:, 2 * H:]
    h_r, h_z, h_n = gh[:, :H], gh[:, H:2 * H], gh[:, 2 * H:]
    r = jax.nn.sigmoid(i_r + h_r)
    z = jax.nn.sigmoid(i_z + h_z)
    n = jnp.tanh(i_n + r * h_n)
    return (1.0 - z) * n + z * h


def reference_forward(x, encoder_out, encoder_h, inter_modal_out, params):
    if inter_modal_out is not None:
        encoder_h = _ref_attention(encoder_h, inter_modal_out, params["h_attention"])
        encoder_out = _ref_attention(encoder_out, inter_modal_out, params["out_attention"])
    else:
        encoder_out = _ref_attention(encoder_out, encoder_out, params["out_attention"])
    seq_len = x.shape[1]
    h0 = h1 = encoder_h
    outs = []
    for i in range(seq_len):
        h0 = _ref_gru_cell(x[:, i, :], h0, params["gru0"])
        h1 = _ref_gru_cell(h0, h1, params["gru1"])
        h = _ref_attention(h1, encoder_out, params["rnn_attention"])
        outs.append(h)
    return jnp.stack(outs, axis=1), h


# --------------------------------------------------------------------------
if __name__ == "__main__":
    B, S, In, H = 2, 6, 16, 32     # batch, decode seq, input_size, hidden_size
    Te, Tm = 8, 4                  # encoder_out length, inter-modal length
    H_PAD = _round_up(H, LANE)     # lane-dense hidden size used inside the kernel

    root = jax.random.PRNGKey(0)
    keys = jax.random.split(root, 10)

    params = {
        "gru0": init_gru_cell(keys[0], In, H),
        "gru1": init_gru_cell(keys[1], H, H),
        "h_attention": init_attention(keys[2], H),
        "out_attention": init_attention(keys[3], H),
        "rnn_attention": init_attention(keys[4], H),
    }
    params["gru0_packed"] = pack_gru(params["gru0"], In, H, in_rows=In, h_pad=H_PAD)
    params["gru1_packed"] = pack_gru(params["gru1"], H, H, in_rows=H_PAD, h_pad=H_PAD)
    params["h_attention_packed"] = pack_attention(params["h_attention"], H, H_PAD)
    params["out_attention_packed"] = pack_attention(params["out_attention"], H, H_PAD)
    params["rnn_attention_packed"] = pack_attention(params["rnn_attention"], H, H_PAD)

    x = jax.random.normal(keys[5], (B, S, In), jnp.float32)
    encoder_out = jax.random.normal(keys[6], (B, Te, H), jnp.float32)
    encoder_h = jax.random.normal(keys[7], (B, H), jnp.float32)
    inter_modal_out = jax.random.normal(keys[8], (B, Tm, H), jnp.float32)

    # Inter-modal branch.
    out, h = modal_attention_gru_decoder(x, encoder_out, encoder_h,
                                         inter_modal_out, params)
    out = jax.block_until_ready(out)
    h = jax.block_until_ready(h)
    ref_out, ref_h = reference_forward(x, encoder_out, encoder_h,
                                       inter_modal_out, params)
    assert out.shape == (B, S, H) and h.shape == (B, H)
    # Tolerance covers the approximate EUP reciprocal in the softmax denominators.
    assert jnp.allclose(out, ref_out, rtol=1e-2, atol=1e-2)
    assert jnp.allclose(h, ref_h, rtol=1e-2, atol=1e-2)

    # No-inter-modal (self-attention on encoder_out) branch.
    out2, h2 = modal_attention_gru_decoder(x, encoder_out, encoder_h, None, params)
    out2 = jax.block_until_ready(out2)
    h2 = jax.block_until_ready(h2)
    ref_out2, ref_h2 = reference_forward(x, encoder_out, encoder_h, None, params)
    assert jnp.allclose(out2, ref_out2, rtol=1e-2, atol=1e-2)
    assert jnp.allclose(h2, ref_h2, rtol=1e-2, atol=1e-2)

    print("KERNEL_OK")
</pallas_src>

<mosaic_0001>
module attributes {stable_mosaic.version = 11 : i64} {
  func.func @kernel(%arg0: i32, %arg1: memref<6x2x16xf32, #tpu.memory_space<vmem>>, %arg2: memref<2x128xf32, #tpu.memory_space<vmem>>, %arg3: memref<2x8x128xf32, #tpu.memory_space<vmem>>, %arg4: memref<2x4x128xf32, #tpu.memory_space<vmem>>, %arg5: memref<128x128xf32, #tpu.memory_space<vmem>>, %arg6: memref<128x128xf32, #tpu.memory_space<vmem>>, %arg7: memref<1x128xf32, #tpu.memory_space<vmem>>, %arg8: memref<128x128xf32, #tpu.memory_space<vmem>>, %arg9: memref<128x128xf32, #tpu.memory_space<vmem>>, %arg10: memref<1x128xf32, #tpu.memory_space<vmem>>, %arg11: memref<16x384xf32, #tpu.memory_space<vmem>>, %arg12: memref<128x384xf32, #tpu.memory_space<vmem>>, %arg13: memref<1x384xf32, #tpu.memory_space<vmem>>, %arg14: memref<1x384xf32, #tpu.memory_space<vmem>>, %arg15: memref<128x384xf32, #tpu.memory_space<vmem>>, %arg16: memref<128x384xf32, #tpu.memory_space<vmem>>, %arg17: memref<1x384xf32, #tpu.memory_space<vmem>>, %arg18: memref<1x384xf32, #tpu.memory_space<vmem>>, %arg19: memref<128x128xf32, #tpu.memory_space<vmem>>, %arg20: memref<128x128xf32, #tpu.memory_space<vmem>>, %arg21: memref<1x128xf32, #tpu.memory_space<vmem>>, %arg22: memref<6x2x128xf32, #tpu.memory_space<vmem>>, %arg23: memref<2x8x128xf32, #tpu.memory_space<vmem>>) attributes {dimension_semantics = [#tpu.dimension_semantics<arbitrary>], iteration_bounds = array<i64: 1>, scalar_prefetch = 0 : i64, scratch_operands = 1 : i64, tpu.core_type = #tpu.core_type<tc>, window_params = [{pipeline_mode = #tpu.pipeline_mode<synchronous>, transform_indices = @transform_0, window_bounds = array<i64: 6, 2, 16>}, {pipeline_mode = #tpu.pipeline_mode<synchronous>, transform_indices = @transform_1, window_bounds = array<i64: 2, 128>}, {pipeline_mode = #tpu.pipeline_mode<synchronous>, transform_indices = @transform_2, window_bounds = array<i64: 2, 8, 128>}, {pipeline_mode = #tpu.pipeline_mode<synchronous>, transform_indices = @transform_3, window_bounds = array<i64: 2, 4, 128>}, {pipeline_mode = #tpu.pipeline_mode<synchronous>, transform_indices = @transform_4, window_bounds = array<i64: 128, 128>}, {pipeline_mode = #tpu.pipeline_mode<synchronous>, transform_indices = @transform_5, window_bounds = array<i64: 128, 128>}, {pipeline_mode = #tpu.pipeline_mode<synchronous>, transform_indices = @transform_6, window_bounds = array<i64: 1, 128>}, {pipeline_mode = #tpu.pipeline_mode<synchronous>, transform_indices = @transform_7, window_bounds = array<i64: 128, 128>}, {pipeline_mode = #tpu.pipeline_mode<synchronous>, transform_indices = @transform_8, window_bounds = array<i64: 128, 128>}, {pipeline_mode = #tpu.pipeline_mode<synchronous>, transform_indices = @transform_9, window_bounds = array<i64: 1, 128>}, {pipeline_mode = #tpu.pipeline_mode<synchronous>, transform_indices = @transform_10, window_bounds = array<i64: 16, 384>}, {pipeline_mode = #tpu.pipeline_mode<synchronous>, transform_indices = @transform_11, window_bounds = array<i64: 128, 384>}, {pipeline_mode = #tpu.pipeline_mode<synchronous>, transform_indices = @transform_12, window_bounds = array<i64: 1, 384>}, {pipeline_mode = #tpu.pipeline_mode<synchronous>, transform_indices = @transform_13, window_bounds = array<i64: 1, 384>}, {pipeline_mode = #tpu.pipeline_mode<synchronous>, transform_indices = @transform_14, window_bounds = array<i64: 128, 384>}, {pipeline_mode = #tpu.pipeline_mode<synchronous>, transform_indices = @transform_15, window_bounds = array<i64: 128, 384>}, {pipeline_mode = #tpu.pipeline_mode<synchronous>, transform_indices = @transform_16, window_bounds = array<i64: 1, 384>}, {pipeline_mode = #tpu.pipeline_mode<synchronous>, transform_indices = @transform_17, window_bounds = array<i64: 1, 384>}, {pipeline_mode = #tpu.pipeline_mode<synchronous>, transform_indices = @transform_18, window_bounds = array<i64: 128, 128>}, {pipeline_mode = #tpu.pipeline_mode<synchronous>, transform_indices = @transform_19, window_bounds = array<i64: 128, 128>}, {pipeline_mode = #tpu.pipeline_mode<synchronous>, transform_indices = @transform_20, window_bounds = array<i64: 1, 128>}, {pipeline_mode = #tpu.pipeline_mode<synchronous>, transform_indices = @transform_21, window_bounds = array<i64: 6, 2, 128>}]} {
    %c0 = arith.constant 0 : index
    %c0_0 = arith.constant 0 : index
    %0 = vector.load %arg2[%c0, %c0_0] : memref<2x128xf32, #tpu.memory_space<vmem>>, vector<2x128xf32>
    %c0_1 = arith.constant 0 : index
    %c0_2 = arith.constant 0 : index
    %c0_3 = arith.constant 0 : index
    %1 = vector.load %arg3[%c0_1, %c0_2, %c0_3] : memref<2x8x128xf32, #tpu.memory_space<vmem>>, vector<2x8x128xf32>
    %c0_4 = arith.constant 0 : index
    %c0_5 = arith.constant 0 : index
    %c0_6 = arith.constant 0 : index
    %2 = vector.load %arg4[%c0_4, %c0_5, %c0_6] : memref<2x4x128xf32, #tpu.memory_space<vmem>>, vector<2x4x128xf32>
    %3 = vector.shape_cast %0 : vector<2x128xf32> to vector<2x1x128xf32>
    "tpu.trace_start"() <{level = 10 : i32, message = "bqh,bkh->bqk"}> : () -> ()
    %cst = arith.constant dense<0.000000e+00> : vector<2x1x4xf32>
    %4 = tpu.matmul %3, %2, %cst {dimension_numbers = #tpu.dot_dimension_numbers<[2], [2], [1], [1], [0, 0, 0, 1, 1, 1], [0], [0]>} : vector<2x1x128xf32>, vector<2x4x128xf32>, vector<2x1x4xf32> -> vector<2x1x4xf32>
    "tpu.trace_stop"() : () -> ()
    %cst_7 = arith.constant dense<0xFF800000> : vector<2x1xf32>
    %5 = vector.multi_reduction <maximumf>, %4, %cst_7 [2] : vector<2x1x4xf32> to vector<2x1xf32>
    %6 = vector.shape_cast %5 : vector<2x1xf32> to vector<2x1x1xf32>
    %7 = vector.broadcast %6 : vector<2x1x1xf32> to vector<2x1x4xf32>
    %8 = arith.subf %4, %7 : vector<2x1x4xf32>
    %9 = math.exp %8 : vector<2x1x4xf32>
    %cst_8 = arith.constant dense<0.000000e+00> : vector<2x1xf32>
    %10 = vector.multi_reduction <add>, %9, %cst_8 [2] : vector<2x1x4xf32> to vector<2x1xf32>
    %11 = vector.shape_cast %10 : vector<2x1xf32> to vector<2x1x1xf32>
    %12 = tpu.reciprocal %11 {approx = true} : vector<2x1x1xf32> -> vector<2x1x1xf32>
    %13 = vector.broadcast %12 : vector<2x1x1xf32> to vector<2x1x4xf32>
    %14 = arith.mulf %9, %13 : vector<2x1x4xf32>
    "tpu.trace_start"() <{level = 10 : i32, message = "bqk,bkh->bqh"}> : () -> ()
    %cst_9 = arith.constant dense<0.000000e+00> : vector<2x1x128xf32>
    %15 = tpu.matmul %14, %2, %cst_9 {dimension_numbers = #tpu.dot_dimension_numbers<[2], [1], [1], [2], [0, 0, 0, 1, 1, 2], [0], [0]>} : vector<2x1x4xf32>, vector<2x4x128xf32>, vector<2x1x128xf32> -> vector<2x1x128xf32>
    "tpu.trace_stop"() : () -> ()
    %16 = vector.shape_cast %15 : vector<2x1x128xf32> to vector<2x128xf32>
    %c0_10 = arith.constant 0 : index
    %c0_11 = arith.constant 0 : index
    %17 = vector.load %arg5[%c0_10, %c0_11] : memref<128x128xf32, #tpu.memory_space<vmem>>, vector<128x128xf32>
    %cst_12 = arith.constant dense<0.000000e+00> : vector<2x128xf32>
    %18 = tpu.matmul %16, %17, %cst_12 {dimension_numbers = #tpu.dot_dimension_numbers<[1], [0], [0], [1], [0, 0, 1, 1], [], []>} : vector<2x128xf32>, vector<128x128xf32>, vector<2x128xf32> -> vector<2x128xf32>
    %c0_13 = arith.constant 0 : index
    %c0_14 = arith.constant 0 : index
    %19 = vector.load %arg6[%c0_13, %c0_14] : memref<128x128xf32, #tpu.memory_space<vmem>>, vector<128x128xf32>
    %cst_15 = arith.constant dense<0.000000e+00> : vector<2x128xf32>
    %20 = tpu.matmul %0, %19, %cst_15 {dimension_numbers = #tpu.dot_dimension_numbers<[1], [0], [0], [1], [0, 0, 1, 1], [], []>} : vector<2x128xf32>, vector<128x128xf32>, vector<2x128xf32> -> vector<2x128xf32>
    %21 = arith.addf %18, %20 : vector<2x128xf32>
    %c0_16 = arith.constant 0 : index
    %c0_17 = arith.constant 0 : index
    %22 = vector.load %arg7[%c0_16, %c0_17] : memref<1x128xf32, #tpu.memory_space<vmem>>, vector<1x128xf32>
    %23 = vector.broadcast %22 : vector<1x128xf32> to vector<2x128xf32>
    %24 = arith.addf %21, %23 : vector<2x128xf32>
    %25 = math.tanh %24 : vector<2x128xf32>
    "tpu.trace_start"() <{level = 10 : i32, message = "bqh,bkh->bqk"}> : () -> ()
    %cst_18 = arith.constant dense<0.000000e+00> : vector<2x8x4xf32>
    %26 = tpu.matmul %1, %2, %cst_18 {dimension_numbers = #tpu.dot_dimension_numbers<[2], [2], [1], [1], [0, 0, 0, 1, 1, 1], [0], [0]>} : vector<2x8x128xf32>, vector<2x4x128xf32>, vector<2x8x4xf32> -> vector<2x8x4xf32>
    "tpu.trace_stop"() : () -> ()
    %cst_19 = arith.constant dense<0xFF800000> : vector<2x8xf32>
    %27 = vector.multi_reduction <maximumf>, %26, %cst_19 [2] : vector<2x8x4xf32> to vector<2x8xf32>
    %28 = vector.shape_cast %27 : vector<2x8xf32> to vector<2x8x1xf32>
    %29 = vector.broadcast %28 : vector<2x8x1xf32> to vector<2x8x4xf32>
    %30 = arith.subf %26, %29 : vector<2x8x4xf32>
    %31 = math.exp %30 : vector<2x8x4xf32>
    %cst_20 = arith.constant dense<0.000000e+00> : vector<2x8xf32>
    %32 = vector.multi_reduction <add>, %31, %cst_20 [2] : vector<2x8x4xf32> to vector<2x8xf32>
    %33 = vector.shape_cast %32 : vector<2x8xf32> to vector<2x8x1xf32>
    %34 = tpu.reciprocal %33 {approx = true} : vector<2x8x1xf32> -> vector<2x8x1xf32>
    %35 = vector.broadcast %34 : vector<2x8x1xf32> to vector<2x8x4xf32>
    %36 = arith.mulf %31, %35 : vector<2x8x4xf32>
    "tpu.trace_start"() <{level = 10 : i32, message = "bqk,bkh->bqh"}> : () -> ()
    %cst_21 = arith.constant dense<0.000000e+00> : vector<2x8x128xf32>
    %37 = tpu.matmul %36, %2, %cst_21 {dimension_numbers = #tpu.dot_dimension_numbers<[2], [1], [1], [2], [0, 0, 0, 1, 1, 2], [0], [0]>} : vector<2x8x4xf32>, vector<2x4x128xf32>, vector<2x8x128xf32> -> vector<2x8x128xf32>
    "tpu.trace_stop"() : () -> ()
    %38 = vector.shape_cast %37 : vector<2x8x128xf32> to vector<16x128xf32>
    %c0_22 = arith.constant 0 : index
    %c0_23 = arith.constant 0 : index
    %39 = vector.load %arg8[%c0_22, %c0_23] : memref<128x128xf32, #tpu.memory_space<vmem>>, vector<128x128xf32>
    %cst_24 = arith.constant dense<0.000000e+00> : vector<16x128xf32>
    %40 = tpu.matmul %38, %39, %cst_24 {dimension_numbers = #tpu.dot_dimension_numbers<[1], [0], [0], [1], [0, 0, 1, 1], [], []>} : vector<16x128xf32>, vector<128x128xf32>, vector<16x128xf32> -> vector<16x128xf32>
    %41 = vector.shape_cast %1 : vector<2x8x128xf32> to vector<16x128xf32>
    %c0_25 = arith.constant 0 : index
    %c0_26 = arith.constant 0 : index
    %42 = vector.load %arg9[%c0_25, %c0_26] : memref<128x128xf32, #tpu.memory_space<vmem>>, vector<128x128xf32>
    %cst_27 = arith.constant dense<0.000000e+00> : vector<16x128xf32>
    %43 = tpu.matmul %41, %42, %cst_27 {dimension_numbers = #tpu.dot_dimension_numbers<[1], [0], [0], [1], [0, 0, 1, 1], [], []>} : vector<16x128xf32>, vector<128x128xf32>, vector<16x128xf32> -> vector<16x128xf32>
    %44 = arith.addf %40, %43 : vector<16x128xf32>
    %c0_28 = arith.constant 0 : index
    %c0_29 = arith.constant 0 : index
    %45 = vector.load %arg10[%c0_28, %c0_29] : memref<1x128xf32, #tpu.memory_space<vmem>>, vector<1x128xf32>
    %46 = vector.broadcast %45 : vector<1x128xf32> to vector<16x128xf32>
    %47 = arith.addf %44, %46 : vector<16x128xf32>
    %48 = math.tanh %47 : vector<16x128xf32>
    %49 = vector.extract_strided_slice %48 {offsets = [0, 0], sizes = [8, 128], strides = [1, 1]} : vector<16x128xf32> to vector<8x128xf32>
    %c0_30 = arith.constant 0 : index
    %c0_31 = arith.constant 0 : index
    %c0_32 = arith.constant 0 : index
    %50 = vector.load %arg23[%c0_30, %c0_31, %c0_32] : memref<2x8x128xf32, #tpu.memory_space<vmem>>, vector<1x8x128xf32>
    %51 = vector.shape_cast %50 : vector<1x8x128xf32> to vector<8x128xf32>
    %52 = vector.shape_cast %49 : vector<8x128xf32> to vector<1x8x128xf32>
    tpu.vector_store %arg23[%c0_30, %c0_31, %c0_32], %52 {strides = array<i32>} : memref<2x8x128xf32, #tpu.memory_space<vmem>>, vector<1x8x128xf32>,
    %53 = vector.extract_strided_slice %48 {offsets = [8, 0], sizes = [8, 128], strides = [1, 1]} : vector<16x128xf32> to vector<8x128xf32>
    %c1 = arith.constant 1 : index
    %c0_33 = arith.constant 0 : index
    %c0_34 = arith.constant 0 : index
    %54 = vector.load %arg23[%c1, %c0_33, %c0_34] : memref<2x8x128xf32, #tpu.memory_space<vmem>>, vector<1x8x128xf32>
    %55 = vector.shape_cast %54 : vector<1x8x128xf32> to vector<8x128xf32>
    %56 = vector.shape_cast %53 : vector<8x128xf32> to vector<1x8x128xf32>
    tpu.vector_store %arg23[%c1, %c0_33, %c0_34], %56 {strides = array<i32>} : memref<2x8x128xf32, #tpu.memory_space<vmem>>, vector<1x8x128xf32>,
    %c0_35 = arith.constant 0 : index
    %c0_36 = arith.constant 0 : index
    %c0_37 = arith.constant 0 : index
    %57 = vector.load %arg23[%c0_35, %c0_36, %c0_37] : memref<2x8x128xf32, #tpu.memory_space<vmem>>, vector<2x8x128xf32>
    %c0_i32 = arith.constant 0 : i32
    %58 = arith.index_cast %c0_i32 : i32 to index
    %c0_38 = arith.constant 0 : index
    %c0_39 = arith.constant 0 : index
    %59 = vector.load %arg1[%58, %c0_38, %c0_39] : memref<6x2x16xf32, #tpu.memory_space<vmem>>, vector<1x2x16xf32>
    %60 = vector.shape_cast %59 : vector<1x2x16xf32> to vector<2x16xf32>
    %c0_40 = arith.constant 0 : index
    %c0_41 = arith.constant 0 : index
    %61 = vector.load %arg11[%c0_40, %c0_41] : memref<16x384xf32, #tpu.memory_space<vmem>>, vector<16x384xf32>
    %cst_42 = arith.constant dense<0.000000e+00> : vector<2x384xf32>
    %62 = tpu.matmul %60, %61, %cst_42 {dimension_numbers = #tpu.dot_dimension_numbers<[1], [0], [0], [1], [0, 0, 1, 1], [], []>} : vector<2x16xf32>, vector<16x384xf32>, vector<2x384xf32> -> vector<2x384xf32>
    %c0_43 = arith.constant 0 : index
    %c0_44 = arith.constant 0 : index
    %63 = vector.load %arg13[%c0_43, %c0_44] : memref<1x384xf32, #tpu.memory_space<vmem>>, vector<1x384xf32>
    %64 = vector.broadcast %63 : vector<1x384xf32> to vector<2x384xf32>
    %65 = arith.addf %62, %64 : vector<2x384xf32>
    %c0_45 = arith.constant 0 : index
    %c0_46 = arith.constant 0 : index
    %66 = vector.load %arg12[%c0_45, %c0_46] : memref<128x384xf32, #tpu.memory_space<vmem>>, vector<128x384xf32>
    %cst_47 = arith.constant dense<0.000000e+00> : vector<2x384xf32>
    %67 = tpu.matmul %25, %66, %cst_47 {dimension_numbers = #tpu.dot_dimension_numbers<[1], [0], [0], [1], [0, 0, 1, 1], [], []>} : vector<2x128xf32>, vector<128x384xf32>, vector<2x384xf32> -> vector<2x384xf32>
    %c0_48 = arith.constant 0 : index
    %c0_49 = arith.constant 0 : index
    %68 = vector.load %arg14[%c0_48, %c0_49] : memref<1x384xf32, #tpu.memory_space<vmem>>, vector<1x384xf32>
    %69 = vector.broadcast %68 : vector<1x384xf32> to vector<2x384xf32>
    %70 = arith.addf %67, %69 : vector<2x384xf32>
    %71 = vector.extract_strided_slice %65 {offsets = [0, 0], sizes = [2, 128], strides = [1, 1]} : vector<2x384xf32> to vector<2x128xf32>
    %72 = vector.extract_strided_slice %65 {offsets = [0, 128], sizes = [2, 128], strides = [1, 1]} : vector<2x384xf32> to vector<2x128xf32>
    %73 = vector.extract_strided_slice %65 {offsets = [0, 256], sizes = [2, 128], strides = [1, 1]} : vector<2x384xf32> to vector<2x128xf32>
    %74 = vector.extract_strided_slice %70 {offsets = [0, 0], sizes = [2, 128], strides = [1, 1]} : vector<2x384xf32> to vector<2x128xf32>
    %75 = vector.extract_strided_slice %70 {offsets = [0, 128], sizes = [2, 128], strides = [1, 1]} : vector<2x384xf32> to vector<2x128xf32>
    %76 = vector.extract_strided_slice %70 {offsets = [0, 256], sizes = [2, 128], strides = [1, 1]} : vector<2x384xf32> to vector<2x128xf32>
    %77 = arith.addf %71, %74 : vector<2x128xf32>
    %78 = arith.negf %77 : vector<2x128xf32>
    %79 = math.exp %78 : vector<2x128xf32>
    %cst_50 = arith.constant 1.000000e+00 : f32
    %80 = vector.broadcast %cst_50 : f32 to vector<2x128xf32>
    %81 = arith.addf %80, %79 : vector<2x128xf32>
    %82 = arith.divf %80, %81 : vector<2x128xf32>
    %83 = arith.addf %72, %75 : vector<2x128xf32>
    %84 = arith.negf %83 : vector<2x128xf32>
    %85 = math.exp %84 : vector<2x128xf32>
    %cst_51 = arith.constant 1.000000e+00 : f32
    %86 = vector.broadcast %cst_51 : f32 to vector<2x128xf32>
    %87 = arith.addf %86, %85 : vector<2x128xf32>
    %88 = arith.divf %86, %87 : vector<2x128xf32>
    %89 = arith.mulf %82, %76 : vector<2x128xf32>
    %90 = arith.addf %73, %89 : vector<2x128xf32>
    %91 = math.tanh %90 : vector<2x128xf32>
    %cst_52 = arith.constant 1.000000e+00 : f32
    %92 = vector.broadcast %cst_52 : f32 to vector<2x128xf32>
    %93 = arith.subf %92, %88 : vector<2x128xf32>
    %94 = arith.mulf %93, %91 : vector<2x128xf32>
    %95 = arith.mulf %88, %25 : vector<2x128xf32>
    %96 = arith.addf %94, %95 : vector<2x128xf32>
    %c0_53 = arith.constant 0 : index
    %c0_54 = arith.constant 0 : index
    %97 = vector.load %arg15[%c0_53, %c0_54] : memref<128x384xf32, #tpu.memory_space<vmem>>, vector<128x384xf32>
    %cst_55 = arith.constant dense<0.000000e+00> : vector<2x384xf32>
    %98 = tpu.matmul %96, %97, %cst_55 {dimension_numbers = #tpu.dot_dimension_numbers<[1], [0], [0], [1], [0, 0, 1, 1], [], []>} : vector<2x128xf32>, vector<128x384xf32>, vector<2x384xf32> -> vector<2x384xf32>
    %c0_56 = arith.constant 0 : index
    %c0_57 = arith.constant 0 : index
    %99 = vector.load %arg17[%c0_56, %c0_57] : memref<1x384xf32, #tpu.memory_space<vmem>>, vector<1x384xf32>
    %100 = vector.broadcast %99 : vector<1x384xf32> to vector<2x384xf32>
    %101 = arith.addf %98, %100 : vector<2x384xf32>
    %c0_58 = arith.constant 0 : index
    %c0_59 = arith.constant 0 : index
    %102 = vector.load %arg16[%c0_58, %c0_59] : memref<128x384xf32, #tpu.memory_space<vmem>>, vector<128x384xf32>
    %cst_60 = arith.constant dense<0.000000e+00> : vector<2x384xf32>
    %103 = tpu.matmul %25, %102, %cst_60 {dimension_numbers = #tpu.dot_dimension_numbers<[1], [0], [0], [1], [0, 0, 1, 1], [], []>} : vector<2x128xf32>, vector<128x384xf32>, vector<2x384xf32> -> vector<2x384xf32>
    %c0_61 = arith.constant 0 : index
    %c0_62 = arith.constant 0 : index
    %104 = vector.load %arg18[%c0_61, %c0_62] : memref<1x384xf32, #tpu.memory_space<vmem>>, vector<1x384xf32>
    %105 = vector.broadcast %104 : vector<1x384xf32> to vector<2x384xf32>
    %106 = arith.addf %103, %105 : vector<2x384xf32>
    %107 = vector.extract_strided_slice %101 {offsets = [0, 0], sizes = [2, 128], strides = [1, 1]} : vector<2x384xf32> to vector<2x128xf32>
    %108 = vector.extract_strided_slice %101 {offsets = [0, 128], sizes = [2, 128], strides = [1, 1]} : vector<2x384xf32> to vector<2x128xf32>
    %109 = vector.extract_strided_slice %101 {offsets = [0, 256], sizes = [2, 128], strides = [1, 1]} : vector<2x384xf32> to vector<2x128xf32>
    %110 = vector.extract_strided_slice %106 {offsets = [0, 0], sizes = [2, 128], strides = [1, 1]} : vector<2x384xf32> to vector<2x128xf32>
    %111 = vector.extract_strided_slice %106 {offsets = [0, 128], sizes = [2, 128], strides = [1, 1]} : vector<2x384xf32> to vector<2x128xf32>
    %112 = vector.extract_strided_slice %106 {offsets = [0, 256], sizes = [2, 128], strides = [1, 1]} : vector<2x384xf32> to vector<2x128xf32>
    %113 = arith.addf %107, %110 : vector<2x128xf32>
    %114 = arith.negf %113 : vector<2x128xf32>
    %115 = math.exp %114 : vector<2x128xf32>
    %cst_63 = arith.constant 1.000000e+00 : f32
    %116 = vector.broadcast %cst_63 : f32 to vector<2x128xf32>
    %117 = arith.addf %116, %115 : vector<2x128xf32>
    %118 = arith.divf %116, %117 : vector<2x128xf32>
    %119 = arith.addf %108, %111 : vector<2x128xf32>
    %120 = arith.negf %119 : vector<2x128xf32>
    %121 = math.exp %120 : vector<2x128xf32>
    %cst_64 = arith.constant 1.000000e+00 : f32
    %122 = vector.broadcast %cst_64 : f32 to vector<2x128xf32>
    %123 = arith.addf %122, %121 : vector<2x128xf32>
    %124 = arith.divf %122, %123 : vector<2x128xf32>
    %125 = arith.mulf %118, %112 : vector<2x128xf32>
    %126 = arith.addf %109, %125 : vector<2x128xf32>
    %127 = math.tanh %126 : vector<2x128xf32>
    %cst_65 = arith.constant 1.000000e+00 : f32
    %128 = vector.broadcast %cst_65 : f32 to vector<2x128xf32>
    %129 = arith.subf %128, %124 : vector<2x128xf32>
    %130 = arith.mulf %129, %127 : vector<2x128xf32>
    %131 = arith.mulf %124, %25 : vector<2x128xf32>
    %132 = arith.addf %130, %131 : vector<2x128xf32>
    %133 = vector.shape_cast %132 : vector<2x128xf32> to vector<2x1x128xf32>
    "tpu.trace_start"() <{level = 10 : i32, message = "bqh,bkh->bqk"}> : () -> ()
    %cst_66 = arith.constant dense<0.000000e+00> : vector<2x1x8xf32>
    %134 = tpu.matmul %133, %57, %cst_66 {dimension_numbers = #tpu.dot_dimension_numbers<[2], [2], [1], [1], [0, 0, 0, 1, 1, 1], [0], [0]>} : vector<2x1x128xf32>, vector<2x8x128xf32>, vector<2x1x8xf32> -> vector<2x1x8xf32>
    "tpu.trace_stop"() : () -> ()
    %cst_67 = arith.constant dense<0xFF800000> : vector<2x1xf32>
    %135 = vector.multi_reduction <maximumf>, %134, %cst_67 [2] : vector<2x1x8xf32> to vector<2x1xf32>
    %136 = vector.shape_cast %135 : vector<2x1xf32> to vector<2x1x1xf32>
    %137 = vector.broadcast %136 : vector<2x1x1xf32> to vector<2x1x8xf32>
    %138 = arith.subf %134, %137 : vector<2x1x8xf32>
    %139 = math.exp %138 : vector<2x1x8xf32>
    %cst_68 = arith.constant dense<0.000000e+00> : vector<2x1xf32>
    %140 = vector.multi_reduction <add>, %139, %cst_68 [2] : vector<2x1x8xf32> to vector<2x1xf32>
    %141 = vector.shape_cast %140 : vector<2x1xf32> to vector<2x1x1xf32>
    %142 = tpu.reciprocal %141 {approx = true} : vector<2x1x1xf32> -> vector<2x1x1xf32>
    %143 = vector.broadcast %142 : vector<2x1x1xf32> to vector<2x1x8xf32>
    %144 = arith.mulf %139, %143 : vector<2x1x8xf32>
    "tpu.trace_start"() <{level = 10 : i32, message = "bqk,bkh->bqh"}> : () -> ()
    %cst_69 = arith.constant dense<0.000000e+00> : vector<2x1x128xf32>
    %145 = tpu.matmul %144, %57, %cst_69 {dimension_numbers = #tpu.dot_dimension_numbers<[2], [1], [1], [2], [0, 0, 0, 1, 1, 2], [0], [0]>} : vector<2x1x8xf32>, vector<2x8x128xf32>, vector<2x1x128xf32> -> vector<2x1x128xf32>
    "tpu.trace_stop"() : () -> ()
    %146 = vector.shape_cast %145 : vector<2x1x128xf32> to vector<2x128xf32>
    %c0_70 = arith.constant 0 : index
    %c0_71 = arith.constant 0 : index
    %147 = vector.load %arg19[%c0_70, %c0_71] : memref<128x128xf32, #tpu.memory_space<vmem>>, vector<128x128xf32>
    %cst_72 = arith.constant dense<0.000000e+00> : vector<2x128xf32>
    %148 = tpu.matmul %146, %147, %cst_72 {dimension_numbers = #tpu.dot_dimension_numbers<[1], [0], [0], [1], [0, 0, 1, 1], [], []>} : vector<2x128xf32>, vector<128x128xf32>, vector<2x128xf32> -> vector<2x128xf32>
    %c0_73 = arith.constant 0 : index
    %c0_74 = arith.constant 0 : index
    %149 = vector.load %arg20[%c0_73, %c0_74] : memref<128x128xf32, #tpu.memory_space<vmem>>, vector<128x128xf32>
    %cst_75 = arith.constant dense<0.000000e+00> : vector<2x128xf32>
    %150 = tpu.matmul %132, %149, %cst_75 {dimension_numbers = #tpu.dot_dimension_numbers<[1], [0], [0], [1], [0, 0, 1, 1], [], []>} : vector<2x128xf32>, vector<128x128xf32>, vector<2x128xf32> -> vector<2x128xf32>
    %151 = arith.addf %148, %150 : vector<2x128xf32>
    %c0_76 = arith.constant 0 : index
    %c0_77 = arith.constant 0 : index
    %152 = vector.load %arg21[%c0_76, %c0_77] : memref<1x128xf32, #tpu.memory_space<vmem>>, vector<1x128xf32>
    %153 = vector.broadcast %152 : vector<1x128xf32> to vector<2x128xf32>
    %154 = arith.addf %151, %153 : vector<2x128xf32>
    %155 = math.tanh %154 : vector<2x128xf32>
    %156 = arith.index_cast %c0_i32 : i32 to index
    %c0_78 = arith.constant 0 : index
    %c0_79 = arith.constant 0 : index
    %157 = vector.load %arg22[%156, %c0_78, %c0_79] : memref<6x2x128xf32, #tpu.memory_space<vmem>>, vector<1x2x128xf32>
    %158 = vector.shape_cast %157 : vector<1x2x128xf32> to vector<2x128xf32>
    %159 = vector.shape_cast %155 : vector<2x128xf32> to vector<1x2x128xf32>
    tpu.vector_store %arg22[%156, %c0_78, %c0_79], %159 {strides = array<i32>} : memref<6x2x128xf32, #tpu.memory_space<vmem>>, vector<1x2x128xf32>,
    %c1_i32 = arith.constant 1 : i32
    %160 = arith.index_cast %c1_i32 : i32 to index
    %c0_80 = arith.constant 0 : index
    %c0_81 = arith.constant 0 : index
    %161 = vector.load %arg1[%160, %c0_80, %c0_81] : memref<6x2x16xf32, #tpu.memory_space<vmem>>, vector<1x2x16xf32>
    %162 = vector.shape_cast %161 : vector<1x2x16xf32> to vector<2x16xf32>
    %c0_82 = arith.constant 0 : index
    %c0_83 = arith.constant 0 : index
    %163 = vector.load %arg11[%c0_82, %c0_83] : memref<16x384xf32, #tpu.memory_space<vmem>>, vector<16x384xf32>
    %cst_84 = arith.constant dense<0.000000e+00> : vector<2x384xf32>
    %164 = tpu.matmul %162, %163, %cst_84 {dimension_numbers = #tpu.dot_dimension_numbers<[1], [0], [0], [1], [0, 0, 1, 1], [], []>} : vector<2x16xf32>, vector<16x384xf32>, vector<2x384xf32> -> vector<2x384xf32>
    %c0_85 = arith.constant 0 : index
    %c0_86 = arith.constant 0 : index
    %165 = vector.load %arg13[%c0_85, %c0_86] : memref<1x384xf32, #tpu.memory_space<vmem>>, vector<1x384xf32>
    %166 = vector.broadcast %165 : vector<1x384xf32> to vector<2x384xf32>
    %167 = arith.addf %164, %166 : vector<2x384xf32>
    %c0_87 = arith.constant 0 : index
    %c0_88 = arith.constant 0 : index
    %168 = vector.load %arg12[%c0_87, %c0_88] : memref<128x384xf32, #tpu.memory_space<vmem>>, vector<128x384xf32>
    %cst_89 = arith.constant dense<0.000000e+00> : vector<2x384xf32>
    %169 = tpu.matmul %96, %168, %cst_89 {dimension_numbers = #tpu.dot_dimension_numbers<[1], [0], [0], [1], [0, 0, 1, 1], [], []>} : vector<2x128xf32>, vector<128x384xf32>, vector<2x384xf32> -> vector<2x384xf32>
    %c0_90 = arith.constant 0 : index
    %c0_91 = arith.constant 0 : index
    %170 = vector.load %arg14[%c0_90, %c0_91] : memref<1x384xf32, #tpu.memory_space<vmem>>, vector<1x384xf32>
    %171 = vector.broadcast %170 : vector<1x384xf32> to vector<2x384xf32>
    %172 = arith.addf %169, %171 : vector<2x384xf32>
    %173 = vector.extract_strided_slice %167 {offsets = [0, 0], sizes = [2, 128], strides = [1, 1]} : vector<2x384xf32> to vector<2x128xf32>
    %174 = vector.extract_strided_slice %167 {offsets = [0, 128], sizes = [2, 128], strides = [1, 1]} : vector<2x384xf32> to vector<2x128xf32>
    %175 = vector.extract_strided_slice %167 {offsets = [0, 256], sizes = [2, 128], strides = [1, 1]} : vector<2x384xf32> to vector<2x128xf32>
    %176 = vector.extract_strided_slice %172 {offsets = [0, 0], sizes = [2, 128], strides = [1, 1]} : vector<2x384xf32> to vector<2x128xf32>
    %177 = vector.extract_strided_slice %172 {offsets = [0, 128], sizes = [2, 128], strides = [1, 1]} : vector<2x384xf32> to vector<2x128xf32>
    %178 = vector.extract_strided_slice %172 {offsets = [0, 256], sizes = [2, 128], strides = [1, 1]} : vector<2x384xf32> to vector<2x128xf32>
    %179 = arith.addf %173, %176 : vector<2x128xf32>
    %180 = arith.negf %179 : vector<2x128xf32>
    %181 = math.exp %180 : vector<2x128xf32>
    %cst_92 = arith.constant 1.000000e+00 : f32
    %182 = vector.broadcast %cst_92 : f32 to vector<2x128xf32>
    %183 = arith.addf %182, %181 : vector<2x128xf32>
    %184 = arith.divf %182, %183 : vector<2x128xf32>
    %185 = arith.addf %174, %177 : vector<2x128xf32>
    %186 = arith.negf %185 : vector<2x128xf32>
    %187 = math.exp %186 : vector<2x128xf32>
    %cst_93 = arith.constant 1.000000e+00 : f32
    %188 = vector.broadcast %cst_93 : f32 to vector<2x128xf32>
    %189 = arith.addf %188, %187 : vector<2x128xf32>
    %190 = arith.divf %188, %189 : vector<2x128xf32>
    %191 = arith.mulf %184, %178 : vector<2x128xf32>
    %192 = arith.addf %175, %191 : vector<2x128xf32>
    %193 = math.tanh %192 : vector<2x128xf32>
    %cst_94 = arith.constant 1.000000e+00 : f32
    %194 = vector.broadcast %cst_94 : f32 to vector<2x128xf32>
    %195 = arith.subf %194, %190 : vector<2x128xf32>
    %196 = arith.mulf %195, %193 : vector<2x128xf32>
    %197 = arith.mulf %190, %96 : vector<2x128xf32>
    %198 = arith.addf %196, %197 : vector<2x128xf32>
    %c0_95 = arith.constant 0 : index
    %c0_96 = arith.constant 0 : index
    %199 = vector.load %arg15[%c0_95, %c0_96] : memref<128x384xf32, #tpu.memory_space<vmem>>, vector<128x384xf32>
    %cst_97 = arith.constant dense<0.000000e+00> : vector<2x384xf32>
    %200 = tpu.matmul %198, %199, %cst_97 {dimension_numbers = #tpu.dot_dimension_numbers<[1], [0], [0], [1], [0, 0, 1, 1], [], []>} : vector<2x128xf32>, vector<128x384xf32>, vector<2x384xf32> -> vector<2x384xf32>
    %c0_98 = arith.constant 0 : index
    %c0_99 = arith.constant 0 : index
    %201 = vector.load %arg17[%c0_98, %c0_99] : memref<1x384xf32, #tpu.memory_space<vmem>>, vector<1x384xf32>
    %202 = vector.broadcast %201 : vector<1x384xf32> to vector<2x384xf32>
    %203 = arith.addf %200, %202 : vector<2x384xf32>
    %c0_100 = arith.constant 0 : index
    %c0_101 = arith.constant 0 : index
    %204 = vector.load %arg16[%c0_100, %c0_101] : memref<128x384xf32, #tpu.memory_space<vmem>>, vector<128x384xf32>
    %cst_102 = arith.constant dense<0.000000e+00> : vector<2x384xf32>
    %205 = tpu.matmul %132, %204, %cst_102 {dimension_numbers = #tpu.dot_dimension_numbers<[1], [0], [0], [1], [0, 0, 1, 1], [], []>} : vector<2x128xf32>, vector<128x384xf32>, vector<2x384xf32> -> vector<2x384xf32>
    %c0_103 = arith.constant 0 : index
    %c0_104 = arith.constant 0 : index
    %206 = vector.load %arg18[%c0_103, %c0_104] : memref<1x384xf32, #tpu.memory_space<vmem>>, vector<1x384xf32>
    %207 = vector.broadcast %206 : vector<1x384xf32> to vector<2x384xf32>
    %208 = arith.addf %205, %207 : vector<2x384xf32>
    %209 = vector.extract_strided_slice %203 {offsets = [0, 0], sizes = [2, 128], strides = [1, 1]} : vector<2x384xf32> to vector<2x128xf32>
    %210 = vector.extract_strided_slice %203 {offsets = [0, 128], sizes = [2, 128], strides = [1, 1]} : vector<2x384xf32> to vector<2x128xf32>
    %211 = vector.extract_strided_slice %203 {offsets = [0, 256], sizes = [2, 128], strides = [1, 1]} : vector<2x384xf32> to vector<2x128xf32>
    %212 = vector.extract_strided_slice %208 {offsets = [0, 0], sizes = [2, 128], strides = [1, 1]} : vector<2x384xf32> to vector<2x128xf32>
    %213 = vector.extract_strided_slice %208 {offsets = [0, 128], sizes = [2, 128], strides = [1, 1]} : vector<2x384xf32> to vector<2x128xf32>
    %214 = vector.extract_strided_slice %208 {offsets = [0, 256], sizes = [2, 128], strides = [1, 1]} : vector<2x384xf32> to vector<2x128xf32>
    %215 = arith.addf %209, %212 : vector<2x128xf32>
    %216 = arith.negf %215 : vector<2x128xf32>
    %217 = math.exp %216 : vector<2x128xf32>
    %cst_105 = arith.constant 1.000000e+00 : f32
    %218 = vector.broadcast %cst_105 : f32 to vector<2x128xf32>
    %219 = arith.addf %218, %217 : vector<2x128xf32>
    %220 = arith.divf %218, %219 : vector<2x128xf32>
    %221 = arith.addf %210, %213 : vector<2x128xf32>
    %222 = arith.negf %221 : vector<2x128xf32>
    %223 = math.exp %222 : vector<2x128xf32>
    %cst_106 = arith.constant 1.000000e+00 : f32
    %224 = vector.broadcast %cst_106 : f32 to vector<2x128xf32>
    %225 = arith.addf %224, %223 : vector<2x128xf32>
    %226 = arith.divf %224, %225 : vector<2x128xf32>
    %227 = arith.mulf %220, %214 : vector<2x128xf32>
    %228 = arith.addf %211, %227 : vector<2x128xf32>
    %229 = math.tanh %228 : vector<2x128xf32>
    %cst_107 = arith.constant 1.000000e+00 : f32
    %230 = vector.broadcast %cst_107 : f32 to vector<2x128xf32>
    %231 = arith.subf %230, %226 : vector<2x128xf32>
    %232 = arith.mulf %231, %229 : vector<2x128xf32>
    %233 = arith.mulf %226, %132 : vector<2x128xf32>
    %234 = arith.addf %232, %233 : vector<2x128xf32>
    %235 = vector.shape_cast %234 : vector<2x128xf32> to vector<2x1x128xf32>
    "tpu.trace_start"() <{level = 10 : i32, message = "bqh,bkh->bqk"}> : () -> ()
    %cst_108 = arith.constant dense<0.000000e+00> : vector<2x1x8xf32>
    %236 = tpu.matmul %235, %57, %cst_108 {dimension_numbers = #tpu.dot_dimension_numbers<[2], [2], [1], [1], [0, 0, 0, 1, 1, 1], [0], [0]>} : vector<2x1x128xf32>, vector<2x8x128xf32>, vector<2x1x8xf32> -> vector<2x1x8xf32>
    "tpu.trace_stop"() : () -> ()
    %cst_109 = arith.constant dense<0xFF800000> : vector<2x1xf32>
    %237 = vector.multi_reduction <maximumf>, %236, %cst_109 [2] : vector<2x1x8xf32> to vector<2x1xf32>
    %238 = vector.shape_cast %237 : vector<2x1xf32> to vector<2x1x1xf32>
    %239 = vector.broadcast %238 : vector<2x1x1xf32> to vector<2x1x8xf32>
    %240 = arith.subf %236, %239 : vector<2x1x8xf32>
    %241 = math.exp %240 : vector<2x1x8xf32>
    %cst_110 = arith.constant dense<0.000000e+00> : vector<2x1xf32>
    %242 = vector.multi_reduction <add>, %241, %cst_110 [2] : vector<2x1x8xf32> to vector<2x1xf32>
    %243 = vector.shape_cast %242 : vector<2x1xf32> to vector<2x1x1xf32>
    %244 = tpu.reciprocal %243 {approx = true} : vector<2x1x1xf32> -> vector<2x1x1xf32>
    %245 = vector.broadcast %244 : vector<2x1x1xf32> to vector<2x1x8xf32>
    %246 = arith.mulf %241, %245 : vector<2x1x8xf32>
    "tpu.trace_start"() <{level = 10 : i32, message = "bqk,bkh->bqh"}> : () -> ()
    %cst_111 = arith.constant dense<0.000000e+00> : vector<2x1x128xf32>
    %247 = tpu.matmul %246, %57, %cst_111 {dimension_numbers = #tpu.dot_dimension_numbers<[2], [1], [1], [2], [0, 0, 0, 1, 1, 2], [0], [0]>} : vector<2x1x8xf32>, vector<2x8x128xf32>, vector<2x1x128xf32> -> vector<2x1x128xf32>
    "tpu.trace_stop"() : () -> ()
    %248 = vector.shape_cast %247 : vector<2x1x128xf32> to vector<2x128xf32>
    %c0_112 = arith.constant 0 : index
    %c0_113 = arith.constant 0 : index
    %249 = vector.load %arg19[%c0_112, %c0_113] : memref<128x128xf32, #tpu.memory_space<vmem>>, vector<128x128xf32>
    %cst_114 = arith.constant dense<0.000000e+00> : vector<2x128xf32>
    %250 = tpu.matmul %248, %249, %cst_114 {dimension_numbers = #tpu.dot_dimension_numbers<[1], [0], [0], [1], [0, 0, 1, 1], [], []>} : vector<2x128xf32>, vector<128x128xf32>, vector<2x128xf32> -> vector<2x128xf32>
    %c0_115 = arith.constant 0 : index
    %c0_116 = arith.constant 0 : index
    %251 = vector.load %arg20[%c0_115, %c0_116] : memref<128x128xf32, #tpu.memory_space<vmem>>, vector<128x128xf32>
    %cst_117 = arith.constant dense<0.000000e+00> : vector<2x128xf32>
    %252 = tpu.matmul %234, %251, %cst_117 {dimension_numbers = #tpu.dot_dimension_numbers<[1], [0], [0], [1], [0, 0, 1, 1], [], []>} : vector<2x128xf32>, vector<128x128xf32>, vector<2x128xf32> -> vector<2x128xf32>
    %253 = arith.addf %250, %252 : vector<2x128xf32>
    %c0_118 = arith.constant 0 : index
    %c0_119 = arith.constant 0 : index
    %254 = vector.load %arg21[%c0_118, %c0_119] : memref<1x128xf32, #tpu.memory_space<vmem>>, vector<1x128xf32>
    %255 = vector.broadcast %254 : vector<1x128xf32> to vector<2x128xf32>
    %256 = arith.addf %253, %255 : vector<2x128xf32>
    %257 = math.tanh %256 : vector<2x128xf32>
    %258 = arith.index_cast %c1_i32 : i32 to index
    %c0_120 = arith.constant 0 : index
    %c0_121 = arith.constant 0 : index
    %259 = vector.load %arg22[%258, %c0_120, %c0_121] : memref<6x2x128xf32, #tpu.memory_space<vmem>>, vector<1x2x128xf32>
    %260 = vector.shape_cast %259 : vector<1x2x128xf32> to vector<2x128xf32>
    %261 = vector.shape_cast %257 : vector<2x128xf32> to vector<1x2x128xf32>
    tpu.vector_store %arg22[%258, %c0_120, %c0_121], %261 {strides = array<i32>} : memref<6x2x128xf32, #tpu.memory_space<vmem>>, vector<1x2x128xf32>,
    %c2_i32 = arith.constant 2 : i32
    %262 = arith.index_cast %c2_i32 : i32 to index
    %c0_122 = arith.constant 0 : index
    %c0_123 = arith.constant 0 : index
    %263 = vector.load %arg1[%262, %c0_122, %c0_123] : memref<6x2x16xf32, #tpu.memory_space<vmem>>, vector<1x2x16xf32>
    %264 = vector.shape_cast %263 : vector<1x2x16xf32> to vector<2x16xf32>
    %c0_124 = arith.constant 0 : index
    %c0_125 = arith.constant 0 : index
    %265 = vector.load %arg11[%c0_124, %c0_125] : memref<16x384xf32, #tpu.memory_space<vmem>>, vector<16x384xf32>
    %cst_126 = arith.constant dense<0.000000e+00> : vector<2x384xf32>
    %266 = tpu.matmul %264, %265, %cst_126 {dimension_numbers = #tpu.dot_dimension_numbers<[1], [0], [0], [1], [0, 0, 1, 1], [], []>} : vector<2x16xf32>, vector<16x384xf32>, vector<2x384xf32> -> vector<2x384xf32>
    %c0_127 = arith.constant 0 : index
    %c0_128 = arith.constant 0 : index
    %267 = vector.load %arg13[%c0_127, %c0_128] : memref<1x384xf32, #tpu.memory_space<vmem>>, vector<1x384xf32>
    %268 = vector.broadcast %267 : vector<1x384xf32> to vector<2x384xf32>
    %269 = arith.addf %266, %268 : vector<2x384xf32>
    %c0_129 = arith.constant 0 : index
    %c0_130 = arith.constant 0 : index
    %270 = vector.load %arg12[%c0_129, %c0_130] : memref<128x384xf32, #tpu.memory_space<vmem>>, vector<128x384xf32>
    %cst_131 = arith.constant dense<0.000000e+00> : vector<2x384xf32>
    %271 = tpu.matmul %198, %270, %cst_131 {dimension_numbers = #tpu.dot_dimension_numbers<[1], [0], [0], [1], [0, 0, 1, 1], [], []>} : vector<2x128xf32>, vector<128x384xf32>, vector<2x384xf32> -> vector<2x384xf32>
    %c0_132 = arith.constant 0 : index
    %c0_133 = arith.constant 0 : index
    %272 = vector.load %arg14[%c0_132, %c0_133] : memref<1x384xf32, #tpu.memory_space<vmem>>, vector<1x384xf32>
    %273 = vector.broadcast %272 : vector<1x384xf32> to vector<2x384xf32>
    %274 = arith.addf %271, %273 : vector<2x384xf32>
    %275 = vector.extract_strided_slice %269 {offsets = [0, 0], sizes = [2, 128], strides = [1, 1]} : vector<2x384xf32> to vector<2x128xf32>
    %276 = vector.extract_strided_slice %269 {offsets = [0, 128], sizes = [2, 128], strides = [1, 1]} : vector<2x384xf32> to vector<2x128xf32>
    %277 = vector.extract_strided_slice %269 {offsets = [0, 256], sizes = [2, 128], strides = [1, 1]} : vector<2x384xf32> to vector<2x128xf32>
    %278 = vector.extract_strided_slice %274 {offsets = [0, 0], sizes = [2, 128], strides = [1, 1]} : vector<2x384xf32> to vector<2x128xf32>
    %279 = vector.extract_strided_slice %274 {offsets = [0, 128], sizes = [2, 128], strides = [1, 1]} : vector<2x384xf32> to vector<2x128xf32>
    %280 = vector.extract_strided_slice %274 {offsets = [0, 256], sizes = [2, 128], strides = [1, 1]} : vector<2x384xf32> to vector<2x128xf32>
    %281 = arith.addf %275, %278 : vector<2x128xf32>
    %282 = arith.negf %281 : vector<2x128xf32>
    %283 = math.exp %282 : vector<2x128xf32>
    %cst_134 = arith.constant 1.000000e+00 : f32
    %284 = vector.broadcast %cst_134 : f32 to vector<2x128xf32>
    %285 = arith.addf %284, %283 : vector<2x128xf32>
    %286 = arith.divf %284, %285 : vector<2x128xf32>
    %287 = arith.addf %276, %279 : vector<2x128xf32>
    %288 = arith.negf %287 : vector<2x128xf32>
    %289 = math.exp %288 : vector<2x128xf32>
    %cst_135 = arith.constant 1.000000e+00 : f32
    %290 = vector.broadcast %cst_135 : f32 to vector<2x128xf32>
    %291 = arith.addf %290, %289 : vector<2x128xf32>
    %292 = arith.divf %290, %291 : vector<2x128xf32>
    %293 = arith.mulf %286, %280 : vector<2x128xf32>
    %294 = arith.addf %277, %293 : vector<2x128xf32>
    %295 = math.tanh %294 : vector<2x128xf32>
    %cst_136 = arith.constant 1.000000e+00 : f32
    %296 = vector.broadcast %cst_136 : f32 to vector<2x128xf32>
    %297 = arith.subf %296, %292 : vector<2x128xf32>
    %298 = arith.mulf %297, %295 : vector<2x128xf32>
    %299 = arith.mulf %292, %198 : vector<2x128xf32>
    %300 = arith.addf %298, %299 : vector<2x128xf32>
    %c0_137 = arith.constant 0 : index
    %c0_138 = arith.constant 0 : index
    %301 = vector.load %arg15[%c0_137, %c0_138] : memref<128x384xf32, #tpu.memory_space<vmem>>, vector<128x384xf32>
    %cst_139 = arith.constant dense<0.000000e+00> : vector<2x384xf32>
    %302 = tpu.matmul %300, %301, %cst_139 {dimension_numbers = #tpu.dot_dimension_numbers<[1], [0], [0], [1], [0, 0, 1, 1], [], []>} : vector<2x128xf32>, vector<128x384xf32>, vector<2x384xf32> -> vector<2x384xf32>
    %c0_140 = arith.constant 0 : index
    %c0_141 = arith.constant 0 : index
    %303 = vector.load %arg17[%c0_140, %c0_141] : memref<1x384xf32, #tpu.memory_space<vmem>>, vector<1x384xf32>
    %304 = vector.broadcast %303 : vector<1x384xf32> to vector<2x384xf32>
    %305 = arith.addf %302, %304 : vector<2x384xf32>
    %c0_142 = arith.constant 0 : index
    %c0_143 = arith.constant 0 : index
    %306 = vector.load %arg16[%c0_142, %c0_143] : memref<128x384xf32, #tpu.memory_space<vmem>>, vector<128x384xf32>
    %cst_144 = arith.constant dense<0.000000e+00> : vector<2x384xf32>
    %307 = tpu.matmul %234, %306, %cst_144 {dimension_numbers = #tpu.dot_dimension_numbers<[1], [0], [0], [1], [0, 0, 1, 1], [], []>} : vector<2x128xf32>, vector<128x384xf32>, vector<2x384xf32> -> vector<2x384xf32>
    %c0_145 = arith.constant 0 : index
    %c0_146 = arith.constant 0 : index
    %308 = vector.load %arg18[%c0_145, %c0_146] : memref<1x384xf32, #tpu.memory_space<vmem>>, vector<1x384xf32>
    %309 = vector.broadcast %308 : vector<1x384xf32> to vector<2x384xf32>
    %310 = arith.addf %307, %309 : vector<2x384xf32>
    %311 = vector.extract_strided_slice %305 {offsets = [0, 0], sizes = [2, 128], strides = [1, 1]} : vector<2x384xf32> to vector<2x128xf32>
    %312 = vector.extract_strided_slice %305 {offsets = [0, 128], sizes = [2, 128], strides = [1, 1]} : vector<2x384xf32> to vector<2x128xf32>
    %313 = vector.extract_strided_slice %305 {offsets = [0, 256], sizes = [2, 128], strides = [1, 1]} : vector<2x384xf32> to vector<2x128xf32>
    %314 = vector.extract_strided_slice %310 {offsets = [0, 0], sizes = [2, 128], strides = [1, 1]} : vector<2x384xf32> to vector<2x128xf32>
    %315 = vector.extract_strided_slice %310 {offsets = [0, 128], sizes = [2, 128], strides = [1, 1]} : vector<2x384xf32> to vector<2x128xf32>
    %316 = vector.extract_strided_slice %310 {offsets = [0, 256], sizes = [2, 128], strides = [1, 1]} : vector<2x384xf32> to vector<2x128xf32>
    %317 = arith.addf %311, %314 : vector<2x128xf32>
    %318 = arith.negf %317 : vector<2x128xf32>
    %319 = math.exp %318 : vector<2x128xf32>
    %cst_147 = arith.constant 1.000000e+00 : f32
    %320 = vector.broadcast %cst_147 : f32 to vector<2x128xf32>
    %321 = arith.addf %320, %319 : vector<2x128xf32>
    %322 = arith.divf %320, %321 : vector<2x128xf32>
    %323 = arith.addf %312, %315 : vector<2x128xf32>
    %324 = arith.negf %323 : vector<2x128xf32>
    %325 = math.exp %324 : vector<2x128xf32>
    %cst_148 = arith.constant 1.000000e+00 : f32
    %326 = vector.broadcast %cst_148 : f32 to vector<2x128xf32>
    %327 = arith.addf %326, %325 : vector<2x128xf32>
    %328 = arith.divf %326, %327 : vector<2x128xf32>
    %329 = arith.mulf %322, %316 : vector<2x128xf32>
    %330 = arith.addf %313, %329 : vector<2x128xf32>
    %331 = math.tanh %330 : vector<2x128xf32>
    %cst_149 = arith.constant 1.000000e+00 : f32
    %332 = vector.broadcast %cst_149 : f32 to vector<2x128xf32>
    %333 = arith.subf %332, %328 : vector<2x128xf32>
    %334 = arith.mulf %333, %331 : vector<2x128xf32>
    %335 = arith.mulf %328, %234 : vector<2x128xf32>
    %336 = arith.addf %334, %335 : vector<2x128xf32>
    %337 = vector.shape_cast %336 : vector<2x128xf32> to vector<2x1x128xf32>
    "tpu.trace_start"() <{level = 10 : i32, message = "bqh,bkh->bqk"}> : () -> ()
    %cst_150 = arith.constant dense<0.000000e+00> : vector<2x1x8xf32>
    %338 = tpu.matmul %337, %57, %cst_150 {dimension_numbers = #tpu.dot_dimension_numbers<[2], [2], [1], [1], [0, 0, 0, 1, 1, 1], [0], [0]>} : vector<2x1x128xf32>, vector<2x8x128xf32>, vector<2x1x8xf32> -> vector<2x1x8xf32>
    "tpu.trace_stop"() : () -> ()
    %cst_151 = arith.constant dense<0xFF800000> : vector<2x1xf32>
    %339 = vector.multi_reduction <maximumf>, %338, %cst_151 [2] : vector<2x1x8xf32> to vector<2x1xf32>
    %340 = vector.shape_cast %339 : vector<2x1xf32> to vector<2x1x1xf32>
    %341 = vector.broadcast %340 : vector<2x1x1xf32> to vector<2x1x8xf32>
    %342 = arith.subf %338, %341 : vector<2x1x8xf32>
    %343 = math.exp %342 : vector<2x1x8xf32>
    %cst_152 = arith.constant dense<0.000000e+00> : vector<2x1xf32>
    %344 = vector.multi_reduction <add>, %343, %cst_152 [2] : vector<2x1x8xf32> to vector<2x1xf32>
    %345 = vector.shape_cast %344 : vector<2x1xf32> to vector<2x1x1xf32>
    %346 = tpu.reciprocal %345 {approx = true} : vector<2x1x1xf32> -> vector<2x1x1xf32>
    %347 = vector.broadcast %346 : vector<2x1x1xf32> to vector<2x1x8xf32>
    %348 = arith.mulf %343, %347 : vector<2x1x8xf32>
    "tpu.trace_start"() <{level = 10 : i32, message = "bqk,bkh->bqh"}> : () -> ()
    %cst_153 = arith.constant dense<0.000000e+00> : vector<2x1x128xf32>
    %349 = tpu.matmul %348, %57, %cst_153 {dimension_numbers = #tpu.dot_dimension_numbers<[2], [1], [1], [2], [0, 0, 0, 1, 1, 2], [0], [0]>} : vector<2x1x8xf32>, vector<2x8x128xf32>, vector<2x1x128xf32> -> vector<2x1x128xf32>
    "tpu.trace_stop"() : () -> ()
    %350 = vector.shape_cast %349 : vector<2x1x128xf32> to vector<2x128xf32>
    %c0_154 = arith.constant 0 : index
    %c0_155 = arith.constant 0 : index
    %351 = vector.load %arg19[%c0_154, %c0_155] : memref<128x128xf32, #tpu.memory_space<vmem>>, vector<128x128xf32>
    %cst_156 = arith.constant dense<0.000000e+00> : vector<2x128xf32>
    %352 = tpu.matmul %350, %351, %cst_156 {dimension_numbers = #tpu.dot_dimension_numbers<[1], [0], [0], [1], [0, 0, 1, 1], [], []>} : vector<2x128xf32>, vector<128x128xf32>, vector<2x128xf32> -> vector<2x128xf32>
    %c0_157 = arith.constant 0 : index
    %c0_158 = arith.constant 0 : index
    %353 = vector.load %arg20[%c0_157, %c0_158] : memref<128x128xf32, #tpu.memory_space<vmem>>, vector<128x128xf32>
    %cst_159 = arith.constant dense<0.000000e+00> : vector<2x128xf32>
    %354 = tpu.matmul %336, %353, %cst_159 {dimension_numbers = #tpu.dot_dimension_numbers<[1], [0], [0], [1], [0, 0, 1, 1], [], []>} : vector<2x128xf32>, vector<128x128xf32>, vector<2x128xf32> -> vector<2x128xf32>
    %355 = arith.addf %352, %354 : vector<2x128xf32>
    %c0_160 = arith.constant 0 : index
    %c0_161 = arith.constant 0 : index
    %356 = vector.load %arg21[%c0_160, %c0_161] : memref<1x128xf32, #tpu.memory_space<vmem>>, vector<1x128xf32>
    %357 = vector.broadcast %356 : vector<1x128xf32> to vector<2x128xf32>
    %358 = arith.addf %355, %357 : vector<2x128xf32>
    %359 = math.tanh %358 : vector<2x128xf32>
    %360 = arith.index_cast %c2_i32 : i32 to index
    %c0_162 = arith.constant 0 : index
    %c0_163 = arith.constant 0 : index
    %361 = vector.load %arg22[%360, %c0_162, %c0_163] : memref<6x2x128xf32, #tpu.memory_space<vmem>>, vector<1x2x128xf32>
    %362 = vector.shape_cast %361 : vector<1x2x128xf32> to vector<2x128xf32>
    %363 = vector.shape_cast %359 : vector<2x128xf32> to vector<1x2x128xf32>
    tpu.vector_store %arg22[%360, %c0_162, %c0_163], %363 {strides = array<i32>} : memref<6x2x128xf32, #tpu.memory_space<vmem>>, vector<1x2x128xf32>,
    %c3_i32 = arith.constant 3 : i32
    %364 = arith.index_cast %c3_i32 : i32 to index
    %c0_164 = arith.constant 0 : index
    %c0_165 = arith.constant 0 : index
    %365 = vector.load %arg1[%364, %c0_164, %c0_165] : memref<6x2x16xf32, #tpu.memory_space<vmem>>, vector<1x2x16xf32>
    %366 = vector.shape_cast %365 : vector<1x2x16xf32> to vector<2x16xf32>
    %c0_166 = arith.constant 0 : index
    %c0_167 = arith.constant 0 : index
    %367 = vector.load %arg11[%c0_166, %c0_167] : memref<16x384xf32, #tpu.memory_space<vmem>>, vector<16x384xf32>
    %cst_168 = arith.constant dense<0.000000e+00> : vector<2x384xf32>
    %368 = tpu.matmul %366, %367, %cst_168 {dimension_numbers = #tpu.dot_dimension_numbers<[1], [0], [0], [1], [0, 0, 1, 1], [], []>} : vector<2x16xf32>, vector<16x384xf32>, vector<2x384xf32> -> vector<2x384xf32>
    %c0_169 = arith.constant 0 : index
    %c0_170 = arith.constant 0 : index
    %369 = vector.load %arg13[%c0_169, %c0_170] : memref<1x384xf32, #tpu.memory_space<vmem>>, vector<1x384xf32>
    %370 = vector.broadcast %369 : vector<1x384xf32> to vector<2x384xf32>
    %371 = arith.addf %368, %370 : vector<2x384xf32>
    %c0_171 = arith.constant 0 : index
    %c0_172 = arith.constant 0 : index
    %372 = vector.load %arg12[%c0_171, %c0_172] : memref<128x384xf32, #tpu.memory_space<vmem>>, vector<128x384xf32>
    %cst_173 = arith.constant dense<0.000000e+00> : vector<2x384xf32>
    %373 = tpu.matmul %300, %372, %cst_173 {dimension_numbers = #tpu.dot_dimension_numbers<[1], [0], [0], [1], [0, 0, 1, 1], [], []>} : vector<2x128xf32>, vector<128x384xf32>, vector<2x384xf32> -> vector<2x384xf32>
    %c0_174 = arith.constant 0 : index
    %c0_175 = arith.constant 0 : index
    %374 = vector.load %arg14[%c0_174, %c0_175] : memref<1x384xf32, #tpu.memory_space<vmem>>, vector<1x384xf32>
    %375 = vector.broadcast %374 : vector<1x384xf32> to vector<2x384xf32>
    %376 = arith.addf %373, %375 : vector<2x384xf32>
    %377 = vector.extract_strided_slice %371 {offsets = [0, 0], sizes = [2, 128], strides = [1, 1]} : vector<2x384xf32> to vector<2x128xf32>
    %378 = vector.extract_strided_slice %371 {offsets = [0, 128], sizes = [2, 128], strides = [1, 1]} : vector<2x384xf32> to vector<2x128xf32>
    %379 = vector.extract_strided_slice %371 {offsets = [0, 256], sizes = [2, 128], strides = [1, 1]} : vector<2x384xf32> to vector<2x128xf32>
    %380 = vector.extract_strided_slice %376 {offsets = [0, 0], sizes = [2, 128], strides = [1, 1]} : vector<2x384xf32> to vector<2x128xf32>
    %381 = vector.extract_strided_slice %376 {offsets = [0, 128], sizes = [2, 128], strides = [1, 1]} : vector<2x384xf32> to vector<2x128xf32>
    %382 = vector.extract_strided_slice %376 {offsets = [0, 256], sizes = [2, 128], strides = [1, 1]} : vector<2x384xf32> to vector<2x128xf32>
    %383 = arith.addf %377, %380 : vector<2x128xf32>
    %384 = arith.negf %383 : vector<2x128xf32>
    %385 = math.exp %384 : vector<2x128xf32>
    %cst_176 = arith.constant 1.000000e+00 : f32
    %386 = vector.broadcast %cst_176 : f32 to vector<2x128xf32>
    %387 = arith.addf %386, %385 : vector<2x128xf32>
    %388 = arith.divf %386, %387 : vector<2x128xf32>
    %389 = arith.addf %378, %381 : vector<2x128xf32>
    %390 = arith.negf %389 : vector<2x128xf32>
    %391 = math.exp %390 : vector<2x128xf32>
    %cst_177 = arith.constant 1.000000e+00 : f32
    %392 = vector.broadcast %cst_177 : f32 to vector<2x128xf32>
    %393 = arith.addf %392, %391 : vector<2x128xf32>
    %394 = arith.divf %392, %393 : vector<2x128xf32>
    %395 = arith.mulf %388, %382 : vector<2x128xf32>
    %396 = arith.addf %379, %395 : vector<2x128xf32>
    %397 = math.tanh %396 : vector<2x128xf32>
    %cst_178 = arith.constant 1.000000e+00 : f32
    %398 = vector.broadcast %cst_178 : f32 to vector<2x128xf32>
    %399 = arith.subf %398, %394 : vector<2x128xf32>
    %400 = arith.mulf %399, %397 : vector<2x128xf32>
    %401 = arith.mulf %394, %300 : vector<2x128xf32>
    %402 = arith.addf %400, %401 : vector<2x128xf32>
    %c0_179 = arith.constant 0 : index
    %c0_180 = arith.constant 0 : index
    %403 = vector.load %arg15[%c0_179, %c0_180] : memref<128x384xf32, #tpu.memory_space<vmem>>, vector<128x384xf32>
    %cst_181 = arith.constant dense<0.000000e+00> : vector<2x384xf32>
    %404 = tpu.matmul %402, %403, %cst_181 {dimension_numbers = #tpu.dot_dimension_numbers<[1], [0], [0], [1], [0, 0, 1, 1], [], []>} : vector<2x128xf32>, vector<128x384xf32>, vector<2x384xf32> -> vector<2x384xf32>
    %c0_182 = arith.constant 0 : index
    %c0_183 = arith.constant 0 : index
    %405 = vector.load %arg17[%c0_182, %c0_183] : memref<1x384xf32, #tpu.memory_space<vmem>>, vector<1x384xf32>
    %406 = vector.broadcast %405 : vector<1x384xf32> to vector<2x384xf32>
    %407 = arith.addf %404, %406 : vector<2x384xf32>
    %c0_184 = arith.constant 0 : index
    %c0_185 = arith.constant 0 : index
    %408 = vector.load %arg16[%c0_184, %c0_185] : memref<128x384xf32, #tpu.memory_space<vmem>>, vector<128x384xf32>
    %cst_186 = arith.constant dense<0.000000e+00> : vector<2x384xf32>
    %409 = tpu.matmul %336, %408, %cst_186 {dimension_numbers = #tpu.dot_dimension_numbers<[1], [0], [0], [1], [0, 0, 1, 1], [], []>} : vector<2x128xf32>, vector<128x384xf32>, vector<2x384xf32> -> vector<2x384xf32>
    %c0_187 = arith.constant 0 : index
    %c0_188 = arith.constant 0 : index
    %410 = vector.load %arg18[%c0_187, %c0_188] : memref<1x384xf32, #tpu.memory_space<vmem>>, vector<1x384xf32>
    %411 = vector.broadcast %410 : vector<1x384xf32> to vector<2x384xf32>
    %412 = arith.addf %409, %411 : vector<2x384xf32>
    %413 = vector.extract_strided_slice %407 {offsets = [0, 0], sizes = [2, 128], strides = [1, 1]} : vector<2x384xf32> to vector<2x128xf32>
    %414 = vector.extract_strided_slice %407 {offsets = [0, 128], sizes = [2, 128], strides = [1, 1]} : vector<2x384xf32> to vector<2x128xf32>
    %415 = vector.extract_strided_slice %407 {offsets = [0, 256], sizes = [2, 128], strides = [1, 1]} : vector<2x384xf32> to vector<2x128xf32>
    %416 = vector.extract_strided_slice %412 {offsets = [0, 0], sizes = [2, 128], strides = [1, 1]} : vector<2x384xf32> to vector<2x128xf32>
    %417 = vector.extract_strided_slice %412 {offsets = [0, 128], sizes = [2, 128], strides = [1, 1]} : vector<2x384xf32> to vector<2x128xf32>
    %418 = vector.extract_strided_slice %412 {offsets = [0, 256], sizes = [2, 128], strides = [1, 1]} : vector<2x384xf32> to vector<2x128xf32>
    %419 = arith.addf %413, %416 : vector<2x128xf32>
    %420 = arith.negf %419 : vector<2x128xf32>
    %421 = math.exp %420 : vector<2x128xf32>
    %cst_189 = arith.constant 1.000000e+00 : f32
    %422 = vector.broadcast %cst_189 : f32 to vector<2x128xf32>
    %423 = arith.addf %422, %421 : vector<2x128xf32>
    %424 = arith.divf %422, %423 : vector<2x128xf32>
    %425 = arith.addf %414, %417 : vector<2x128xf32>
    %426 = arith.negf %425 : vector<2x128xf32>
    %427 = math.exp %426 : vector<2x128xf32>
    %cst_190 = arith.constant 1.000000e+00 : f32
    %428 = vector.broadcast %cst_190 : f32 to vector<2x128xf32>
    %429 = arith.addf %428, %427 : vector<2x128xf32>
    %430 = arith.divf %428, %429 : vector<2x128xf32>
    %431 = arith.mulf %424, %418 : vector<2x128xf32>
    %432 = arith.addf %415, %431 : vector<2x128xf32>
    %433 = math.tanh %432 : vector<2x128xf32>
    %cst_191 = arith.constant 1.000000e+00 : f32
    %434 = vector.broadcast %cst_191 : f32 to vector<2x128xf32>
    %435 = arith.subf %434, %430 : vector<2x128xf32>
    %436 = arith.mulf %435, %433 : vector<2x128xf32>
    %437 = arith.mulf %430, %336 : vector<2x128xf32>
    %438 = arith.addf %436, %437 : vector<2x128xf32>
    %439 = vector.shape_cast %438 : vector<2x128xf32> to vector<2x1x128xf32>
    "tpu.trace_start"() <{level = 10 : i32, message = "bqh,bkh->bqk"}> : () -> ()
    %cst_192 = arith.constant dense<0.000000e+00> : vector<2x1x8xf32>
    %440 = tpu.matmul %439, %57, %cst_192 {dimension_numbers = #tpu.dot_dimension_numbers<[2], [2], [1], [1], [0, 0, 0, 1, 1, 1], [0], [0]>} : vector<2x1x128xf32>, vector<2x8x128xf32>, vector<2x1x8xf32> -> vector<2x1x8xf32>
    "tpu.trace_stop"() : () -> ()
    %cst_193 = arith.constant dense<0xFF800000> : vector<2x1xf32>
    %441 = vector.multi_reduction <maximumf>, %440, %cst_193 [2] : vector<2x1x8xf32> to vector<2x1xf32>
    %442 = vector.shape_cast %441 : vector<2x1xf32> to vector<2x1x1xf32>
    %443 = vector.broadcast %442 : vector<2x1x1xf32> to vector<2x1x8xf32>
    %444 = arith.subf %440, %443 : vector<2x1x8xf32>
    %445 = math.exp %444 : vector<2x1x8xf32>
    %cst_194 = arith.constant dense<0.000000e+00> : vector<2x1xf32>
    %446 = vector.multi_reduction <add>, %445, %cst_194 [2] : vector<2x1x8xf32> to vector<2x1xf32>
    %447 = vector.shape_cast %446 : vector<2x1xf32> to vector<2x1x1xf32>
    %448 = tpu.reciprocal %447 {approx = true} : vector<2x1x1xf32> -> vector<2x1x1xf32>
    %449 = vector.broadcast %448 : vector<2x1x1xf32> to vector<2x1x8xf32>
    %450 = arith.mulf %445, %449 : vector<2x1x8xf32>
    "tpu.trace_start"() <{level = 10 : i32, message = "bqk,bkh->bqh"}> : () -> ()
    %cst_195 = arith.constant dense<0.000000e+00> : vector<2x1x128xf32>
    %451 = tpu.matmul %450, %57, %cst_195 {dimension_numbers = #tpu.dot_dimension_numbers<[2], [1], [1], [2], [0, 0, 0, 1, 1, 2], [0], [0]>} : vector<2x1x8xf32>, vector<2x8x128xf32>, vector<2x1x128xf32> -> vector<2x1x128xf32>
    "tpu.trace_stop"() : () -> ()
    %452 = vector.shape_cast %451 : vector<2x1x128xf32> to vector<2x128xf32>
    %c0_196 = arith.constant 0 : index
    %c0_197 = arith.constant 0 : index
    %453 = vector.load %arg19[%c0_196, %c0_197] : memref<128x128xf32, #tpu.memory_space<vmem>>, vector<128x128xf32>
    %cst_198 = arith.constant dense<0.000000e+00> : vector<2x128xf32>
    %454 = tpu.matmul %452, %453, %cst_198 {dimension_numbers = #tpu.dot_dimension_numbers<[1], [0], [0], [1], [0, 0, 1, 1], [], []>} : vector<2x128xf32>, vector<128x128xf32>, vector<2x128xf32> -> vector<2x128xf32>
    %c0_199 = arith.constant 0 : index
    %c0_200 = arith.constant 0 : index
    %455 = vector.load %arg20[%c0_199, %c0_200] : memref<128x128xf32, #tpu.memory_space<vmem>>, vector<128x128xf32>
    %cst_201 = arith.constant dense<0.000000e+00> : vector<2x128xf32>
    %456 = tpu.matmul %438, %455, %cst_201 {dimension_numbers = #tpu.dot_dimension_numbers<[1], [0], [0], [1], [0, 0, 1, 1], [], []>} : vector<2x128xf32>, vector<128x128xf32>, vector<2x128xf32> -> vector<2x128xf32>
    %457 = arith.addf %454, %456 : vector<2x128xf32>
    %c0_202 = arith.constant 0 : index
    %c0_203 = arith.constant 0 : index
    %458 = vector.load %arg21[%c0_202, %c0_203] : memref<1x128xf32, #tpu.memory_space<vmem>>, vector<1x128xf32>
    %459 = vector.broadcast %458 : vector<1x128xf32> to vector<2x128xf32>
    %460 = arith.addf %457, %459 : vector<2x128xf32>
    %461 = math.tanh %460 : vector<2x128xf32>
    %462 = arith.index_cast %c3_i32 : i32 to index
    %c0_204 = arith.constant 0 : index
    %c0_205 = arith.constant 0 : index
    %463 = vector.load %arg22[%462, %c0_204, %c0_205] : memref<6x2x128xf32, #tpu.memory_space<vmem>>, vector<1x2x128xf32>
    %464 = vector.shape_cast %463 : vector<1x2x128xf32> to vector<2x128xf32>
    %465 = vector.shape_cast %461 : vector<2x128xf32> to vector<1x2x128xf32>
    tpu.vector_store %arg22[%462, %c0_204, %c0_205], %465 {strides = array<i32>} : memref<6x2x128xf32, #tpu.memory_space<vmem>>, vector<1x2x128xf32>,
    %c4_i32 = arith.constant 4 : i32
    %466 = arith.index_cast %c4_i32 : i32 to index
    %c0_206 = arith.constant 0 : index
    %c0_207 = arith.constant 0 : index
    %467 = vector.load %arg1[%466, %c0_206, %c0_207] : memref<6x2x16xf32, #tpu.memory_space<vmem>>, vector<1x2x16xf32>
    %468 = vector.shape_cast %467 : vector<1x2x16xf32> to vector<2x16xf32>
    %c0_208 = arith.constant 0 : index
    %c0_209 = arith.constant 0 : index
    %469 = vector.load %arg11[%c0_208, %c0_209] : memref<16x384xf32, #tpu.memory_space<vmem>>, vector<16x384xf32>
    %cst_210 = arith.constant dense<0.000000e+00> : vector<2x384xf32>
    %470 = tpu.matmul %468, %469, %cst_210 {dimension_numbers = #tpu.dot_dimension_numbers<[1], [0], [0], [1], [0, 0, 1, 1], [], []>} : vector<2x16xf32>, vector<16x384xf32>, vector<2x384xf32> -> vector<2x384xf32>
    %c0_211 = arith.constant 0 : index
    %c0_212 = arith.constant 0 : index
    %471 = vector.load %arg13[%c0_211, %c0_212] : memref<1x384xf32, #tpu.memory_space<vmem>>, vector<1x384xf32>
    %472 = vector.broadcast %471 : vector<1x384xf32> to vector<2x384xf32>
    %473 = arith.addf %470, %472 : vector<2x384xf32>
    %c0_213 = arith.constant 0 : index
    %c0_214 = arith.constant 0 : index
    %474 = vector.load %arg12[%c0_213, %c0_214] : memref<128x384xf32, #tpu.memory_space<vmem>>, vector<128x384xf32>
    %cst_215 = arith.constant dense<0.000000e+00> : vector<2x384xf32>
    %475 = tpu.matmul %402, %474, %cst_215 {dimension_numbers = #tpu.dot_dimension_numbers<[1], [0], [0], [1], [0, 0, 1, 1], [], []>} : vector<2x128xf32>, vector<128x384xf32>, vector<2x384xf32> -> vector<2x384xf32>
    %c0_216 = arith.constant 0 : index
    %c0_217 = arith.constant 0 : index
    %476 = vector.load %arg14[%c0_216, %c0_217] : memref<1x384xf32, #tpu.memory_space<vmem>>, vector<1x384xf32>
    %477 = vector.broadcast %476 : vector<1x384xf32> to vector<2x384xf32>
    %478 = arith.addf %475, %477 : vector<2x384xf32>
    %479 = vector.extract_strided_slice %473 {offsets = [0, 0], sizes = [2, 128], strides = [1, 1]} : vector<2x384xf32> to vector<2x128xf32>
    %480 = vector.extract_strided_slice %473 {offsets = [0, 128], sizes = [2, 128], strides = [1, 1]} : vector<2x384xf32> to vector<2x128xf32>
    %481 = vector.extract_strided_slice %473 {offsets = [0, 256], sizes = [2, 128], strides = [1, 1]} : vector<2x384xf32> to vector<2x128xf32>
    %482 = vector.extract_strided_slice %478 {offsets = [0, 0], sizes = [2, 128], strides = [1, 1]} : vector<2x384xf32> to vector<2x128xf32>
    %483 = vector.extract_strided_slice %478 {offsets = [0, 128], sizes = [2, 128], strides = [1, 1]} : vector<2x384xf32> to vector<2x128xf32>
    %484 = vector.extract_strided_slice %478 {offsets = [0, 256], sizes = [2, 128], strides = [1, 1]} : vector<2x384xf32> to vector<2x128xf32>
    %485 = arith.addf %479, %482 : vector<2x128xf32>
    %486 = arith.negf %485 : vector<2x128xf32>
    %487 = math.exp %486 : vector<2x128xf32>
    %cst_218 = arith.constant 1.000000e+00 : f32
    %488 = vector.broadcast %cst_218 : f32 to vector<2x128xf32>
    %489 = arith.addf %488, %487 : vector<2x128xf32>
    %490 = arith.divf %488, %489 : vector<2x128xf32>
    %491 = arith.addf %480, %483 : vector<2x128xf32>
    %492 = arith.negf %491 : vector<2x128xf32>
    %493 = math.exp %492 : vector<2x128xf32>
    %cst_219 = arith.constant 1.000000e+00 : f32
    %494 = vector.broadcast %cst_219 : f32 to vector<2x128xf32>
    %495 = arith.addf %494, %493 : vector<2x128xf32>
    %496 = arith.divf %494, %495 : vector<2x128xf32>
    %497 = arith.mulf %490, %484 : vector<2x128xf32>
    %498 = arith.addf %481, %497 : vector<2x128xf32>
    %499 = math.tanh %498 : vector<2x128xf32>
    %cst_220 = arith.constant 1.000000e+00 : f32
    %500 = vector.broadcast %cst_220 : f32 to vector<2x128xf32>
    %501 = arith.subf %500, %496 : vector<2x128xf32>
    %502 = arith.mulf %501, %499 : vector<2x128xf32>
    %503 = arith.mulf %496, %402 : vector<2x128xf32>
    %504 = arith.addf %502, %503 : vector<2x128xf32>
    %c0_221 = arith.constant 0 : index
    %c0_222 = arith.constant 0 : index
    %505 = vector.load %arg15[%c0_221, %c0_222] : memref<128x384xf32, #tpu.memory_space<vmem>>, vector<128x384xf32>
    %cst_223 = arith.constant dense<0.000000e+00> : vector<2x384xf32>
    %506 = tpu.matmul %504, %505, %cst_223 {dimension_numbers = #tpu.dot_dimension_numbers<[1], [0], [0], [1], [0, 0, 1, 1], [], []>} : vector<2x128xf32>, vector<128x384xf32>, vector<2x384xf32> -> vector<2x384xf32>
    %c0_224 = arith.constant 0 : index
    %c0_225 = arith.constant 0 : index
    %507 = vector.load %arg17[%c0_224, %c0_225] : memref<1x384xf32, #tpu.memory_space<vmem>>, vector<1x384xf32>
    %508 = vector.broadcast %507 : vector<1x384xf32> to vector<2x384xf32>
    %509 = arith.addf %506, %508 : vector<2x384xf32>
    %c0_226 = arith.constant 0 : index
    %c0_227 = arith.constant 0 : index
    %510 = vector.load %arg16[%c0_226, %c0_227] : memref<128x384xf32, #tpu.memory_space<vmem>>, vector<128x384xf32>
    %cst_228 = arith.constant dense<0.000000e+00> : vector<2x384xf32>
    %511 = tpu.matmul %438, %510, %cst_228 {dimension_numbers = #tpu.dot_dimension_numbers<[1], [0], [0], [1], [0, 0, 1, 1], [], []>} : vector<2x128xf32>, vector<128x384xf32>, vector<2x384xf32> -> vector<2x384xf32>
    %c0_229 = arith.constant 0 : index
    %c0_230 = arith.constant 0 : index
    %512 = vector.load %arg18[%c0_229, %c0_230] : memref<1x384xf32, #tpu.memory_space<vmem>>, vector<1x384xf32>
    %513 = vector.broadcast %512 : vector<1x384xf32> to vector<2x384xf32>
    %514 = arith.addf %511, %513 : vector<2x384xf32>
    %515 = vector.extract_strided_slice %509 {offsets = [0, 0], sizes = [2, 128], strides = [1, 1]} : vector<2x384xf32> to vector<2x128xf32>
    %516 = vector.extract_strided_slice %509 {offsets = [0, 128], sizes = [2, 128], strides = [1, 1]} : vector<2x384xf32> to vector<2x128xf32>
    %517 = vector.extract_strided_slice %509 {offsets = [0, 256], sizes = [2, 128], strides = [1, 1]} : vector<2x384xf32> to vector<2x128xf32>
    %518 = vector.extract_strided_slice %514 {offsets = [0, 0], sizes = [2, 128], strides = [1, 1]} : vector<2x384xf32> to vector<2x128xf32>
    %519 = vector.extract_strided_slice %514 {offsets = [0, 128], sizes = [2, 128], strides = [1, 1]} : vector<2x384xf32> to vector<2x128xf32>
    %520 = vector.extract_strided_slice %514 {offsets = [0, 256], sizes = [2, 128], strides = [1, 1]} : vector<2x384xf32> to vector<2x128xf32>
    %521 = arith.addf %515, %518 : vector<2x128xf32>
    %522 = arith.negf %521 : vector<2x128xf32>
    %523 = math.exp %522 : vector<2x128xf32>
    %cst_231 = arith.constant 1.000000e+00 : f32
    %524 = vector.broadcast %cst_231 : f32 to vector<2x128xf32>
    %525 = arith.addf %524, %523 : vector<2x128xf32>
    %526 = arith.divf %524, %525 : vector<2x128xf32>
    %527 = arith.addf %516, %519 : vector<2x128xf32>
    %528 = arith.negf %527 : vector<2x128xf32>
    %529 = math.exp %528 : vector<2x128xf32>
    %cst_232 = arith.constant 1.000000e+00 : f32
    %530 = vector.broadcast %cst_232 : f32 to vector<2x128xf32>
    %531 = arith.addf %530, %529 : vector<2x128xf32>
    %532 = arith.divf %530, %531 : vector<2x128xf32>
    %533 = arith.mulf %526, %520 : vector<2x128xf32>
    %534 = arith.addf %517, %533 : vector<2x128xf32>
    %535 = math.tanh %534 : vector<2x128xf32>
    %cst_233 = arith.constant 1.000000e+00 : f32
    %536 = vector.broadcast %cst_233 : f32 to vector<2x128xf32>
    %537 = arith.subf %536, %532 : vector<2x128xf32>
    %538 = arith.mulf %537, %535 : vector<2x128xf32>
    %539 = arith.mulf %532, %438 : vector<2x128xf32>
    %540 = arith.addf %538, %539 : vector<2x128xf32>
    %541 = vector.shape_cast %540 : vector<2x128xf32> to vector<2x1x128xf32>
    "tpu.trace_start"() <{level = 10 : i32, message = "bqh,bkh->bqk"}> : () -> ()
    %cst_234 = arith.constant dense<0.000000e+00> : vector<2x1x8xf32>
    %542 = tpu.matmul %541, %57, %cst_234 {dimension_numbers = #tpu.dot_dimension_numbers<[2], [2], [1], [1], [0, 0, 0, 1, 1, 1], [0], [0]>} : vector<2x1x128xf32>, vector<2x8x128xf32>, vector<2x1x8xf32> -> vector<2x1x8xf32>
    "tpu.trace_stop"() : () -> ()
    %cst_235 = arith.constant dense<0xFF800000> : vector<2x1xf32>
    %543 = vector.multi_reduction <maximumf>, %542, %cst_235 [2] : vector<2x1x8xf32> to vector<2x1xf32>
    %544 = vector.shape_cast %543 : vector<2x1xf32> to vector<2x1x1xf32>
    %545 = vector.broadcast %544 : vector<2x1x1xf32> to vector<2x1x8xf32>
    %546 = arith.subf %542, %545 : vector<2x1x8xf32>
    %547 = math.exp %546 : vector<2x1x8xf32>
    %cst_236 = arith.constant dense<0.000000e+00> : vector<2x1xf32>
    %548 = vector.multi_reduction <add>, %547, %cst_236 [2] : vector<2x1x8xf32> to vector<2x1xf32>
    %549 = vector.shape_cast %548 : vector<2x1xf32> to vector<2x1x1xf32>
    %550 = tpu.reciprocal %549 {approx = true} : vector<2x1x1xf32> -> vector<2x1x1xf32>
    %551 = vector.broadcast %550 : vector<2x1x1xf32> to vector<2x1x8xf32>
    %552 = arith.mulf %547, %551 : vector<2x1x8xf32>
    "tpu.trace_start"() <{level = 10 : i32, message = "bqk,bkh->bqh"}> : () -> ()
    %cst_237 = arith.constant dense<0.000000e+00> : vector<2x1x128xf32>
    %553 = tpu.matmul %552, %57, %cst_237 {dimension_numbers = #tpu.dot_dimension_numbers<[2], [1], [1], [2], [0, 0, 0, 1, 1, 2], [0], [0]>} : vector<2x1x8xf32>, vector<2x8x128xf32>, vector<2x1x128xf32> -> vector<2x1x128xf32>
    "tpu.trace_stop"() : () -> ()
    %554 = vector.shape_cast %553 : vector<2x1x128xf32> to vector<2x128xf32>
    %c0_238 = arith.constant 0 : index
    %c0_239 = arith.constant 0 : index
    %555 = vector.load %arg19[%c0_238, %c0_239] : memref<128x128xf32, #tpu.memory_space<vmem>>, vector<128x128xf32>
    %cst_240 = arith.constant dense<0.000000e+00> : vector<2x128xf32>
    %556 = tpu.matmul %554, %555, %cst_240 {dimension_numbers = #tpu.dot_dimension_numbers<[1], [0], [0], [1], [0, 0, 1, 1], [], []>} : vector<2x128xf32>, vector<128x128xf32>, vector<2x128xf32> -> vector<2x128xf32>
    %c0_241 = arith.constant 0 : index
    %c0_242 = arith.constant 0 : index
    %557 = vector.load %arg20[%c0_241, %c0_242] : memref<128x128xf32, #tpu.memory_space<vmem>>, vector<128x128xf32>
    %cst_243 = arith.constant dense<0.000000e+00> : vector<2x128xf32>
    %558 = tpu.matmul %540, %557, %cst_243 {dimension_numbers = #tpu.dot_dimension_numbers<[1], [0], [0], [1], [0, 0, 1, 1], [], []>} : vector<2x128xf32>, vector<128x128xf32>, vector<2x128xf32> -> vector<2x128xf32>
    %559 = arith.addf %556, %558 : vector<2x128xf32>
    %c0_244 = arith.constant 0 : index
    %c0_245 = arith.constant 0 : index
    %560 = vector.load %arg21[%c0_244, %c0_245] : memref<1x128xf32, #tpu.memory_space<vmem>>, vector<1x128xf32>
    %561 = vector.broadcast %560 : vector<1x128xf32> to vector<2x128xf32>
    %562 = arith.addf %559, %561 : vector<2x128xf32>
    %563 = math.tanh %562 : vector<2x128xf32>
    %564 = arith.index_cast %c4_i32 : i32 to index
    %c0_246 = arith.constant 0 : index
    %c0_247 = arith.constant 0 : index
    %565 = vector.load %arg22[%564, %c0_246, %c0_247] : memref<6x2x128xf32, #tpu.memory_space<vmem>>, vector<1x2x128xf32>
    %566 = vector.shape_cast %565 : vector<1x2x128xf32> to vector<2x128xf32>
    %567 = vector.shape_cast %563 : vector<2x128xf32> to vector<1x2x128xf32>
    tpu.vector_store %arg22[%564, %c0_246, %c0_247], %567 {strides = array<i32>} : memref<6x2x128xf32, #tpu.memory_space<vmem>>, vector<1x2x128xf32>,
    %c5_i32 = arith.constant 5 : i32
    %568 = arith.index_cast %c5_i32 : i32 to index
    %c0_248 = arith.constant 0 : index
    %c0_249 = arith.constant 0 : index
    %569 = vector.load %arg1[%568, %c0_248, %c0_249] : memref<6x2x16xf32, #tpu.memory_space<vmem>>, vector<1x2x16xf32>
    %570 = vector.shape_cast %569 : vector<1x2x16xf32> to vector<2x16xf32>
    %c0_250 = arith.constant 0 : index
    %c0_251 = arith.constant 0 : index
    %571 = vector.load %arg11[%c0_250, %c0_251] : memref<16x384xf32, #tpu.memory_space<vmem>>, vector<16x384xf32>
    %cst_252 = arith.constant dense<0.000000e+00> : vector<2x384xf32>
    %572 = tpu.matmul %570, %571, %cst_252 {dimension_numbers = #tpu.dot_dimension_numbers<[1], [0], [0], [1], [0, 0, 1, 1], [], []>} : vector<2x16xf32>, vector<16x384xf32>, vector<2x384xf32> -> vector<2x384xf32>
    %c0_253 = arith.constant 0 : index
    %c0_254 = arith.constant 0 : index
    %573 = vector.load %arg13[%c0_253, %c0_254] : memref<1x384xf32, #tpu.memory_space<vmem>>, vector<1x384xf32>
    %574 = vector.broadcast %573 : vector<1x384xf32> to vector<2x384xf32>
    %575 = arith.addf %572, %574 : vector<2x384xf32>
    %c0_255 = arith.constant 0 : index
    %c0_256 = arith.constant 0 : index
    %576 = vector.load %arg12[%c0_255, %c0_256] : memref<128x384xf32, #tpu.memory_space<vmem>>, vector<128x384xf32>
    %cst_257 = arith.constant dense<0.000000e+00> : vector<2x384xf32>
    %577 = tpu.matmul %504, %576, %cst_257 {dimension_numbers = #tpu.dot_dimension_numbers<[1], [0], [0], [1], [0, 0, 1, 1], [], []>} : vector<2x128xf32>, vector<128x384xf32>, vector<2x384xf32> -> vector<2x384xf32>
    %c0_258 = arith.constant 0 : index
    %c0_259 = arith.constant 0 : index
    %578 = vector.load %arg14[%c0_258, %c0_259] : memref<1x384xf32, #tpu.memory_space<vmem>>, vector<1x384xf32>
    %579 = vector.broadcast %578 : vector<1x384xf32> to vector<2x384xf32>
    %580 = arith.addf %577, %579 : vector<2x384xf32>
    %581 = vector.extract_strided_slice %575 {offsets = [0, 0], sizes = [2, 128], strides = [1, 1]} : vector<2x384xf32> to vector<2x128xf32>
    %582 = vector.extract_strided_slice %575 {offsets = [0, 128], sizes = [2, 128], strides = [1, 1]} : vector<2x384xf32> to vector<2x128xf32>
    %583 = vector.extract_strided_slice %575 {offsets = [0, 256], sizes = [2, 128], strides = [1, 1]} : vector<2x384xf32> to vector<2x128xf32>
    %584 = vector.extract_strided_slice %580 {offsets = [0, 0], sizes = [2, 128], strides = [1, 1]} : vector<2x384xf32> to vector<2x128xf32>
    %585 = vector.extract_strided_slice %580 {offsets = [0, 128], sizes = [2, 128], strides = [1, 1]} : vector<2x384xf32> to vector<2x128xf32>
    %586 = vector.extract_strided_slice %580 {offsets = [0, 256], sizes = [2, 128], strides = [1, 1]} : vector<2x384xf32> to vector<2x128xf32>
    %587 = arith.addf %581, %584 : vector<2x128xf32>
    %588 = arith.negf %587 : vector<2x128xf32>
    %589 = math.exp %588 : vector<2x128xf32>
    %cst_260 = arith.constant 1.000000e+00 : f32
    %590 = vector.broadcast %cst_260 : f32 to vector<2x128xf32>
    %591 = arith.addf %590, %589 : vector<2x128xf32>
    %592 = arith.divf %590, %591 : vector<2x128xf32>
    %593 = arith.addf %582, %585 : vector<2x128xf32>
    %594 = arith.negf %593 : vector<2x128xf32>
    %595 = math.exp %594 : vector<2x128xf32>
    %cst_261 = arith.constant 1.000000e+00 : f32
    %596 = vector.broadcast %cst_261 : f32 to vector<2x128xf32>
    %597 = arith.addf %596, %595 : vector<2x128xf32>
    %598 = arith.divf %596, %597 : vector<2x128xf32>
    %599 = arith.mulf %592, %586 : vector<2x128xf32>
    %600 = arith.addf %583, %599 : vector<2x128xf32>
    %601 = math.tanh %600 : vector<2x128xf32>
    %cst_262 = arith.constant 1.000000e+00 : f32
    %602 = vector.broadcast %cst_262 : f32 to vector<2x128xf32>
    %603 = arith.subf %602, %598 : vector<2x128xf32>
    %604 = arith.mulf %603, %601 : vector<2x128xf32>
    %605 = arith.mulf %598, %504 : vector<2x128xf32>
    %606 = arith.addf %604, %605 : vector<2x128xf32>
    %c0_263 = arith.constant 0 : index
    %c0_264 = arith.constant 0 : index
    %607 = vector.load %arg15[%c0_263, %c0_264] : memref<128x384xf32, #tpu.memory_space<vmem>>, vector<128x384xf32>
    %cst_265 = arith.constant dense<0.000000e+00> : vector<2x384xf32>
    %608 = tpu.matmul %606, %607, %cst_265 {dimension_numbers = #tpu.dot_dimension_numbers<[1], [0], [0], [1], [0, 0, 1, 1], [], []>} : vector<2x128xf32>, vector<128x384xf32>, vector<2x384xf32> -> vector<2x384xf32>
    %c0_266 = arith.constant 0 : index
    %c0_267 = arith.constant 0 : index
    %609 = vector.load %arg17[%c0_266, %c0_267] : memref<1x384xf32, #tpu.memory_space<vmem>>, vector<1x384xf32>
    %610 = vector.broadcast %609 : vector<1x384xf32> to vector<2x384xf32>
    %611 = arith.addf %608, %610 : vector<2x384xf32>
    %c0_268 = arith.constant 0 : index
    %c0_269 = arith.constant 0 : index
    %612 = vector.load %arg16[%c0_268, %c0_269] : memref<128x384xf32, #tpu.memory_space<vmem>>, vector<128x384xf32>
    %cst_270 = arith.constant dense<0.000000e+00> : vector<2x384xf32>
    %613 = tpu.matmul %540, %612, %cst_270 {dimension_numbers = #tpu.dot_dimension_numbers<[1], [0], [0], [1], [0, 0, 1, 1], [], []>} : vector<2x128xf32>, vector<128x384xf32>, vector<2x384xf32> -> vector<2x384xf32>
    %c0_271 = arith.constant 0 : index
    %c0_272 = arith.constant 0 : index
    %614 = vector.load %arg18[%c0_271, %c0_272] : memref<1x384xf32, #tpu.memory_space<vmem>>, vector<1x384xf32>
    %615 = vector.broadcast %614 : vector<1x384xf32> to vector<2x384xf32>
    %616 = arith.addf %613, %615 : vector<2x384xf32>
    %617 = vector.extract_strided_slice %611 {offsets = [0, 0], sizes = [2, 128], strides = [1, 1]} : vector<2x384xf32> to vector<2x128xf32>
    %618 = vector.extract_strided_slice %611 {offsets = [0, 128], sizes = [2, 128], strides = [1, 1]} : vector<2x384xf32> to vector<2x128xf32>
    %619 = vector.extract_strided_slice %611 {offsets = [0, 256], sizes = [2, 128], strides = [1, 1]} : vector<2x384xf32> to vector<2x128xf32>
    %620 = vector.extract_strided_slice %616 {offsets = [0, 0], sizes = [2, 128], strides = [1, 1]} : vector<2x384xf32> to vector<2x128xf32>
    %621 = vector.extract_strided_slice %616 {offsets = [0, 128], sizes = [2, 128], strides = [1, 1]} : vector<2x384xf32> to vector<2x128xf32>
    %622 = vector.extract_strided_slice %616 {offsets = [0, 256], sizes = [2, 128], strides = [1, 1]} : vector<2x384xf32> to vector<2x128xf32>
    %623 = arith.addf %617, %620 : vector<2x128xf32>
    %624 = arith.negf %623 : vector<2x128xf32>
    %625 = math.exp %624 : vector<2x128xf32>
    %cst_273 = arith.constant 1.000000e+00 : f32
    %626 = vector.broadcast %cst_273 : f32 to vector<2x128xf32>
    %627 = arith.addf %626, %625 : vector<2x128xf32>
    %628 = arith.divf %626, %627 : vector<2x128xf32>
    %629 = arith.addf %618, %621 : vector<2x128xf32>
    %630 = arith.negf %629 : vector<2x128xf32>
    %631 = math.exp %630 : vector<2x128xf32>
    %cst_274 = arith.constant 1.000000e+00 : f32
    %632 = vector.broadcast %cst_274 : f32 to vector<2x128xf32>
    %633 = arith.addf %632, %631 : vector<2x128xf32>
    %634 = arith.divf %632, %633 : vector<2x128xf32>
    %635 = arith.mulf %628, %622 : vector<2x128xf32>
    %636 = arith.addf %619, %635 : vector<2x128xf32>
    %637 = math.tanh %636 : vector<2x128xf32>
    %cst_275 = arith.constant 1.000000e+00 : f32
    %638 = vector.broadcast %cst_275 : f32 to vector<2x128xf32>
    %639 = arith.subf %638, %634 : vector<2x128xf32>
    %640 = arith.mulf %639, %637 : vector<2x128xf32>
    %641 = arith.mulf %634, %540 : vector<2x128xf32>
    %642 = arith.addf %640, %641 : vector<2x128xf32>
    %643 = vector.shape_cast %642 : vector<2x128xf32> to vector<2x1x128xf32>
    "tpu.trace_start"() <{level = 10 : i32, message = "bqh,bkh->bqk"}> : () -> ()
    %cst_276 = arith.constant dense<0.000000e+00> : vector<2x1x8xf32>
    %644 = tpu.matmul %643, %57, %cst_276 {dimension_numbers = #tpu.dot_dimension_numbers<[2], [2], [1], [1], [0, 0, 0, 1, 1, 1], [0], [0]>} : vector<2x1x128xf32>, vector<2x8x128xf32>, vector<2x1x8xf32> -> vector<2x1x8xf32>
    "tpu.trace_stop"() : () -> ()
    %cst_277 = arith.constant dense<0xFF800000> : vector<2x1xf32>
    %645 = vector.multi_reduction <maximumf>, %644, %cst_277 [2] : vector<2x1x8xf32> to vector<2x1xf32>
    %646 = vector.shape_cast %645 : vector<2x1xf32> to vector<2x1x1xf32>
    %647 = vector.broadcast %646 : vector<2x1x1xf32> to vector<2x1x8xf32>
    %648 = arith.subf %644, %647 : vector<2x1x8xf32>
    %649 = math.exp %648 : vector<2x1x8xf32>
    %cst_278 = arith.constant dense<0.000000e+00> : vector<2x1xf32>
    %650 = vector.multi_reduction <add>, %649, %cst_278 [2] : vector<2x1x8xf32> to vector<2x1xf32>
    %651 = vector.shape_cast %650 : vector<2x1xf32> to vector<2x1x1xf32>
    %652 = tpu.reciprocal %651 {approx = true} : vector<2x1x1xf32> -> vector<2x1x1xf32>
    %653 = vector.broadcast %652 : vector<2x1x1xf32> to vector<2x1x8xf32>
    %654 = arith.mulf %649, %653 : vector<2x1x8xf32>
    "tpu.trace_start"() <{level = 10 : i32, message = "bqk,bkh->bqh"}> : () -> ()
    %cst_279 = arith.constant dense<0.000000e+00> : vector<2x1x128xf32>
    %655 = tpu.matmul %654, %57, %cst_279 {dimension_numbers = #tpu.dot_dimension_numbers<[2], [1], [1], [2], [0, 0, 0, 1, 1, 2], [0], [0]>} : vector<2x1x8xf32>, vector<2x8x128xf32>, vector<2x1x128xf32> -> vector<2x1x128xf32>
    "tpu.trace_stop"() : () -> ()
    %656 = vector.shape_cast %655 : vector<2x1x128xf32> to vector<2x128xf32>
    %c0_280 = arith.constant 0 : index
    %c0_281 = arith.constant 0 : index
    %657 = vector.load %arg19[%c0_280, %c0_281] : memref<128x128xf32, #tpu.memory_space<vmem>>, vector<128x128xf32>
    %cst_282 = arith.constant dense<0.000000e+00> : vector<2x128xf32>
    %658 = tpu.matmul %656, %657, %cst_282 {dimension_numbers = #tpu.dot_dimension_numbers<[1], [0], [0], [1], [0, 0, 1, 1], [], []>} : vector<2x128xf32>, vector<128x128xf32>, vector<2x128xf32> -> vector<2x128xf32>
    %c0_283 = arith.constant 0 : index
    %c0_284 = arith.constant 0 : index
    %659 = vector.load %arg20[%c0_283, %c0_284] : memref<128x128xf32, #tpu.memory_space<vmem>>, vector<128x128xf32>
    %cst_285 = arith.constant dense<0.000000e+00> : vector<2x128xf32>
    %660 = tpu.matmul %642, %659, %cst_285 {dimension_numbers = #tpu.dot_dimension_numbers<[1], [0], [0], [1], [0, 0, 1, 1], [], []>} : vector<2x128xf32>, vector<128x128xf32>, vector<2x128xf32> -> vector<2x128xf32>
    %661 = arith.addf %658, %660 : vector<2x128xf32>
    %c0_286 = arith.constant 0 : index
    %c0_287 = arith.constant 0 : index
    %662 = vector.load %arg21[%c0_286, %c0_287] : memref<1x128xf32, #tpu.memory_space<vmem>>, vector<1x128xf32>
    %663 = vector.broadcast %662 : vector<1x128xf32> to vector<2x128xf32>
    %664 = arith.addf %661, %663 : vector<2x128xf32>
    %665 = math.tanh %664 : vector<2x128xf32>
    %666 = arith.index_cast %c5_i32 : i32 to index
    %c0_288 = arith.constant 0 : index
    %c0_289 = arith.constant 0 : index
    %667 = vector.load %arg22[%666, %c0_288, %c0_289] : memref<6x2x128xf32, #tpu.memory_space<vmem>>, vector<1x2x128xf32>
    %668 = vector.shape_cast %667 : vector<1x2x128xf32> to vector<2x128xf32>
    %669 = vector.shape_cast %665 : vector<2x128xf32> to vector<1x2x128xf32>
    tpu.vector_store %arg22[%666, %c0_288, %c0_289], %669 {strides = array<i32>} : memref<6x2x128xf32, #tpu.memory_space<vmem>>, vector<1x2x128xf32>,
    %c6_i32 = arith.constant 6 : i32
    return
  }
  func.func @transform_0(%arg0: i32) -> (i32, i32, i32) {
    %c0_i32 = arith.constant 0 : i32
    %c0_i32_0 = arith.constant 0 : i32
    %c0_i32_1 = arith.constant 0 : i32
    %c0_i32_2 = arith.constant 0 : i32
    return %c0_i32, %c0_i32_0, %c0_i32_1 : i32, i32, i32
  }
  func.func @transform_1(%arg0: i32) -> (i32, i32) {
    %c0_i32 = arith.constant 0 : i32
    %c0_i32_0 = arith.constant 0 : i32
    %c0_i32_1 = arith.constant 0 : i32
    return %c0_i32, %c0_i32_0 : i32, i32
  }
  func.func @transform_2(%arg0: i32) -> (i32, i32, i32) {
    %c0_i32 = arith.constant 0 : i32
    %c0_i32_0 = arith.constant 0 : i32
    %c0_i32_1 = arith.constant 0 : i32
    %c0_i32_2 = arith.constant 0 : i32
    return %c0_i32, %c0_i32_0, %c0_i32_1 : i32, i32, i32
  }
  func.func @transform_3(%arg0: i32) -> (i32, i32, i32) {
    %c0_i32 = arith.constant 0 : i32
    %c0_i32_0 = arith.constant 0 : i32
    %c0_i32_1 = arith.constant 0 : i32
    %c0_i32_2 = arith.constant 0 : i32
    return %c0_i32, %c0_i32_0, %c0_i32_1 : i32, i32, i32
  }
  func.func @transform_4(%arg0: i32) -> (i32, i32) {
    %c0_i32 = arith.constant 0 : i32
    %c0_i32_0 = arith.constant 0 : i32
    %c0_i32_1 = arith.constant 0 : i32
    return %c0_i32, %c0_i32_0 : i32, i32
  }
  func.func @transform_5(%arg0: i32) -> (i32, i32) {
    %c0_i32 = arith.constant 0 : i32
    %c0_i32_0 = arith.constant 0 : i32
    %c0_i32_1 = arith.constant 0 : i32
    return %c0_i32, %c0_i32_0 : i32, i32
  }
  func.func @transform_6(%arg0: i32) -> (i32, i32) {
    %c0_i32 = arith.constant 0 : i32
    %c0_i32_0 = arith.constant 0 : i32
    %c0_i32_1 = arith.constant 0 : i32
    return %c0_i32, %c0_i32_0 : i32, i32
  }
  func.func @transform_7(%arg0: i32) -> (i32, i32) {
    %c0_i32 = arith.constant 0 : i32
    %c0_i32_0 = arith.constant 0 : i32
    %c0_i32_1 = arith.constant 0 : i32
    return %c0_i32, %c0_i32_0 : i32, i32
  }
  func.func @transform_8(%arg0: i32) -> (i32, i32) {
    %c0_i32 = arith.constant 0 : i32
    %c0_i32_0 = arith.constant 0 : i32
    %c0_i32_1 = arith.constant 0 : i32
    return %c0_i32, %c0_i32_0 : i32, i32
  }
  func.func @transform_9(%arg0: i32) -> (i32, i32) {
    %c0_i32 = arith.constant 0 : i32
    %c0_i32_0 = arith.constant 0 : i32
    %c0_i32_1 = arith.constant 0 : i32
    return %c0_i32, %c0_i32_0 : i32, i32
  }
  func.func @transform_10(%arg0: i32) -> (i32, i32) {
    %c0_i32 = arith.constant 0 : i32
    %c0_i32_0 = arith.constant 0 : i32
    %c0_i32_1 = arith.constant 0 : i32
    return %c0_i32, %c0_i32_0 : i32, i32
  }
  func.func @transform_11(%arg0: i32) -> (i32, i32) {
    %c0_i32 = arith.constant 0 : i32
    %c0_i32_0 = arith.constant 0 : i32
    %c0_i32_1 = arith.constant 0 : i32
    return %c0_i32, %c0_i32_0 : i32, i32
  }
  func.func @transform_12(%arg0: i32) -> (i32, i32) {
    %c0_i32 = arith.constant 0 : i32
    %c0_i32_0 = arith.constant 0 : i32
    %c0_i32_1 = arith.constant 0 : i32
    return %c0_i32, %c0_i32_0 : i32, i32
  }
  func.func @transform_13(%arg0: i32) -> (i32, i32) {
    %c0_i32 = arith.constant 0 : i32
    %c0_i32_0 = arith.constant 0 : i32
    %c0_i32_1 = arith.constant 0 : i32
    return %c0_i32, %c0_i32_0 : i32, i32
  }
  func.func @transform_14(%arg0: i32) -> (i32, i32) {
    %c0_i32 = arith.constant 0 : i32
    %c0_i32_0 = arith.constant 0 : i32
    %c0_i32_1 = arith.constant 0 : i32
    return %c0_i32, %c0_i32_0 : i32, i32
  }
  func.func @transform_15(%arg0: i32) -> (i32, i32) {
    %c0_i32 = arith.constant 0 : i32
    %c0_i32_0 = arith.constant 0 : i32
    %c0_i32_1 = arith.constant 0 : i32
    return %c0_i32, %c0_i32_0 : i32, i32
  }
  func.func @transform_16(%arg0: i32) -> (i32, i32) {
    %c0_i32 = arith.constant 0 : i32
    %c0_i32_0 = arith.constant 0 : i32
    %c0_i32_1 = arith.constant 0 : i32
    return %c0_i32, %c0_i32_0 : i32, i32
  }
  func.func @transform_17(%arg0: i32) -> (i32, i32) {
    %c0_i32 = arith.constant 0 : i32
    %c0_i32_0 = arith.constant 0 : i32
    %c0_i32_1 = arith.constant 0 : i32
    return %c0_i32, %c0_i32_0 : i32, i32
  }
  func.func @transform_18(%arg0: i32) -> (i32, i32) {
    %c0_i32 = arith.constant 0 : i32
    %c0_i32_0 = arith.constant 0 : i32
    %c0_i32_1 = arith.constant 0 : i32
    return %c0_i32, %c0_i32_0 : i32, i32
  }
  func.func @transform_19(%arg0: i32) -> (i32, i32) {
    %c0_i32 = arith.constant 0 : i32
    %c0_i32_0 = arith.constant 0 : i32
    %c0_i32_1 = arith.constant 0 : i32
    return %c0_i32, %c0_i32_0 : i32, i32
  }
  func.func @transform_20(%arg0: i32) -> (i32, i32) {
    %c0_i32 = arith.constant 0 : i32
    %c0_i32_0 = arith.constant 0 : i32
    %c0_i32_1 = arith.constant 0 : i32
    return %c0_i32, %c0_i32_0 : i32, i32
  }
  func.func @transform_21(%arg0: i32) -> (i32, i32, i32) {
    %c0_i32 = arith.constant 0 : i32
    %c0_i32_0 = arith.constant 0 : i32
    %c0_i32_1 = arith.constant 0 : i32
    %c0_i32_2 = arith.constant 0 : i32
    return %c0_i32, %c0_i32_0, %c0_i32_1 : i32, i32, i32
  }
}

</mosaic_0001>

<llo_original>
// kernel: tpu_custom_call.1
$region0: #{tpu_custom_call.1}
  #allocation0 [shape = 'u32[]', space=smem, size = 0x4, offset = 0x4, fixed_abs, tag = 'smem constant byte address 0x4 - core index']
  #allocation1 [shape = 'u32[144,128]{1,0:T(1,128)}', space=vmem, size = 0x12000, scoped, tag = 'internal scratch']
  #allocation2 [shape = 'f32[2,8,128]{2,1,0:T(8,128)}', space=vmem, size = 0x2000, scoped, tag = 'scratch operand']
  %s0 = inlined_call_operand.hbm [shape: f32[6,2,16], index: 0, kind: input, shape index: {}]
  %s1 = inlined_call_operand.hbm [shape: f32[2,128], index: 1, kind: input, shape index: {}]
  %s2 = inlined_call_operand.hbm [shape: f32[2,8,128], index: 2, kind: input, shape index: {}]
  %s3 = inlined_call_operand.vmem [shape: f32[2,4,128], index: 3, kind: input, shape index: {}]
  %s4 = inlined_call_operand.hbm [shape: f32[128,128], index: 4, kind: input, shape index: {}]
  %s5 = inlined_call_operand.hbm [shape: f32[128,128], index: 5, kind: input, shape index: {}]
  %s6 = inlined_call_operand.vmem [shape: f32[1,128], index: 6, kind: input, shape index: {}]
  %s7 = inlined_call_operand.hbm [shape: f32[128,128], index: 7, kind: input, shape index: {}]
  %s8 = inlined_call_operand.hbm [shape: f32[128,128], index: 8, kind: input, shape index: {}]
  %s9 = inlined_call_operand.vmem [shape: f32[1,128], index: 9, kind: input, shape index: {}]
  %s10 = inlined_call_operand.hbm [shape: f32[16,384], index: 10, kind: input, shape index: {}]
  %s11 = inlined_call_operand.hbm [shape: f32[128,384], index: 11, kind: input, shape index: {}]
  %s12 = inlined_call_operand.vmem [shape: f32[1,384], index: 12, kind: input, shape index: {}]
  %s13 = inlined_call_operand.vmem [shape: f32[1,384], index: 13, kind: input, shape index: {}]
  %s14 = inlined_call_operand.hbm [shape: f32[128,384], index: 14, kind: input, shape index: {}]
  %s15 = inlined_call_operand.hbm [shape: f32[128,384], index: 15, kind: input, shape index: {}]
  %s16 = inlined_call_operand.vmem [shape: f32[1,384], index: 16, kind: input, shape index: {}]
  %s17 = inlined_call_operand.vmem [shape: f32[1,384], index: 17, kind: input, shape index: {}]
  %s18 = inlined_call_operand.hbm [shape: f32[128,128], index: 18, kind: input, shape index: {}]
  %s19 = inlined_call_operand.hbm [shape: f32[128,128], index: 19, kind: input, shape index: {}]
  %s20 = inlined_call_operand.vmem [shape: f32[1,128], index: 20, kind: input, shape index: {}]
  %s21 = inlined_call_operand.hbm [shape: f32[6,2,128], index: 21, kind: output, shape index: {}]
  %s22 = sld [smem:[#allocation0]]
  $region146: #{tpu_custom_call.1} parent=0
    _
  %s24 = ssub.s32 1, %s22
  %s25 = scalar_select 0, %s24, %s22
  $region1: #{tpu_custom_call.1} parent=0
    #allocation3 [shape = 'u8[6144]{0}', space=vmem, size = 0x1800, scoped, tag = 'input window, operand 0, single buffered']
    #allocation4 [shape = 's32[1]{0}', space=sflag, size = 0x4, scoped, tag = 'scoped memory for tpu_custom_call.1']
    #allocation5 [shape = 's32[1]{0}', space=sflag, size = 0x4, scoped, tag = 'scoped memory for tpu_custom_call.1']
    #allocation6 [shape = 'u8[1024]{0}', space=vmem, size = 0x400, scoped, tag = 'input window, operand 1, single buffered']
    #allocation7 [shape = 's32[1]{0}', space=sflag, size = 0x4, scoped, tag = 'scoped memory for tpu_custom_call.1']
    #allocation8 [shape = 'u8[8192]{0}', space=vmem, size = 0x2000, scoped, tag = 'input window, operand 2, single buffered']
    #allocation9 [shape = 'u8[65536]{0}', space=vmem, size = 0x10000, scoped, tag = 'input window, operand 4, single buffered']
    #allocation10 [shape = 's32[1]{0}', space=sflag, size = 0x4, scoped, tag = 'scoped memory for tpu_custom_call.1']
    #allocation11 [shape = 'u8[65536]{0}', space=vmem, size = 0x10000, scoped, tag = 'input window, operand 5, single buffered']
    #allocation12 [shape = 'u8[65536]{0}', space=vmem, size = 0x10000, scoped, tag = 'input window, operand 7, single buffered']
    #allocation13 [shape = 's32[1]{0}', space=sflag, size = 0x4, scoped, tag = 'scoped memory for tpu_custom_call.1']
    #allocation14 [shape = 'u8[65536]{0}', space=vmem, size = 0x10000, scoped, tag = 'input window, operand 8, single buffered']
    #allocation15 [shape = 'u8[24576]{0}', space=vmem, size = 0x6000, scoped, tag = 'input window, operand 10, single buffered']
    #allocation16 [shape = 's32[1]{0}', space=sflag, size = 0x4, scoped, tag = 'scoped memory for tpu_custom_call.1']
    #allocation17 [shape = 'u8[196608]{0}', space=vmem, size = 0x30000, scoped, tag = 'input window, operand 11, single buffered']
    #allocation18 [shape = 'u8[196608]{0}', space=vmem, size = 0x30000, scoped, tag = 'input window, operand 14, single buffered']
    #allocation19 [shape = 's32[1]{0}', space=sflag, size = 0x4, scoped, tag = 'scoped memory for tpu_custom_call.1']
    #allocation20 [shape = 'u8[196608]{0}', space=vmem, size = 0x30000, scoped, tag = 'input window, operand 15, single buffered']
    #allocation21 [shape = 'u8[65536]{0}', space=vmem, size = 0x10000, scoped, tag = 'input window, operand 18, single buffered']
    #allocation22 [shape = 's32[1]{0}', space=sflag, size = 0x4, scoped, tag = 'scoped memory for tpu_custom_call.1']
    #allocation23 [shape = 'u8[65536]{0}', space=vmem, size = 0x10000, scoped, tag = 'input window, operand 19, single buffered']
    #allocation24 [shape = 'u8[6144]{0}', space=vmem, size = 0x1800, scoped, tag = 'output window, operand 0, single buffered']
    %26 = vsyncpa [#allocation4], 0
    %27 = vsyncpa [#allocation7], 0
    %28 = vsyncpa [#allocation10], 0
    %29 = vsyncpa [#allocation13], 0
    %30 = vsyncpa [#allocation16], 0
    %31 = vsyncpa [#allocation19], 0
    %32 = vsyncpa [#allocation22], 0
    %33 = vsyncpa [#allocation5], 0
    // Predicated region
    $region2: #{tpu_custom_call.1} parent=1 // pred_check
      _
    $region3: #{tpu_custom_call.1} parent=1 // pred_check_branch
      %35 = sbr.rel (0) target = $region5
    $region4: #{tpu_custom_call.1} parent=1 // pred_region
      %s37 = ssub.s32 192, 192
      %38 = vsyncadd [#allocation4], %s37
      %s39 = sshll.u32 [#allocation3], 4
      %s40 = int_to_ptr.vmem [resolvable:$true] %s39
      %45 = dma.hbm_to_vmem [thread:$0]  %s0, 192, %s40, [#allocation4], 32, 32, 2
    $region5: #{tpu_custom_call.1} parent=1 // pred_fallthru
      _
    // Predicated region
    $region6: #{tpu_custom_call.1} parent=1 // pred_check
      _
    $region7: #{tpu_custom_call.1} parent=1 // pred_check_branch
      %47 = sbr.rel (0) target = $region9
    $region8: #{tpu_custom_call.1} parent=1 // pred_region
      %s49 = ssub.s32 32, 32
      %50 = vsyncadd [#allocation7], %s49
      %s52 = sshll.u32 [#allocation6], 4
      %s53 = int_to_ptr.vmem [resolvable:$true] %s52
      %55 = dma.hbm_to_vmem [thread:$0]  %s1, 32, %s53, [#allocation7]
    $region9: #{tpu_custom_call.1} parent=1 // pred_fallthru
      _
    // Predicated region
    $region10: #{tpu_custom_call.1} parent=1 // pred_check
      _
    $region11: #{tpu_custom_call.1} parent=1 // pred_check_branch
      %57 = sbr.rel (0) target = $region13
    $region12: #{tpu_custom_call.1} parent=1 // pred_region
      %s59 = ssub.s32 256, 256
      %60 = vsyncadd [#allocation7], %s59
      %s61 = sshll.u32 [#allocation8], 4
      %s62 = int_to_ptr.vmem [resolvable:$true] %s61
      %67 = dma.hbm_to_vmem [thread:$0]  %s2, 256, %s62, [#allocation7], 128, 128, 8
    $region13: #{tpu_custom_call.1} parent=1 // pred_fallthru
      _
    // Predicated region
    $region14: #{tpu_custom_call.1} parent=1 // pred_check
      _
    $region15: #{tpu_custom_call.1} parent=1 // pred_check_branch
      %69 = sbr.rel (0) target = $region17
    $region16: #{tpu_custom_call.1} parent=1 // pred_region
      _
    $region17: #{tpu_custom_call.1} parent=1 // pred_fallthru
      _
    // Predicated region
    $region18: #{tpu_custom_call.1} parent=1 // pred_check
      _
    $region19: #{tpu_custom_call.1} parent=1 // pred_check_branch
      %71 = sbr.rel (0) target = $region21
    $region20: #{tpu_custom_call.1} parent=1 // pred_region
      %s73 = ssub.s32 2048, 2048
      %74 = vsyncadd [#allocation10], %s73
      %s75 = sshll.u32 [#allocation9], 4
      %s76 = int_to_ptr.vmem [resolvable:$true] %s75
      %81 = dma.hbm_to_vmem [thread:$0]  %s4, 2048, %s76, [#allocation10], 128, 128, 8
    $region21: #{tpu_custom_call.1} parent=1 // pred_fallthru
      _
    // Predicated region
    $region22: #{tpu_custom_call.1} parent=1 // pred_check
      _
    $region23: #{tpu_custom_call.1} parent=1 // pred_check_branch
      %83 = sbr.rel (0) target = $region25
    $region24: #{tpu_custom_call.1} parent=1 // pred_region
      %s85 = ssub.s32 2048, 2048
      %86 = vsyncadd [#allocation10], %s85
      %s87 = sshll.u32 [#allocation11], 4
      %s88 = int_to_ptr.vmem [resolvable:$true] %s87
      %93 = dma.hbm_to_vmem [thread:$0]  %s5, 2048, %s88, [#allocation10], 128, 128, 8
    $region25: #{tpu_custom_call.1} parent=1 // pred_fallthru
      _
    // Predicated region
    $region26: #{tpu_custom_call.1} parent=1 // pred_check
      _
    $region27: #{tpu_custom_call.1} parent=1 // pred_check_branch
      %95 = sbr.rel (0) target = $region29
    $region28: #{tpu_custom_call.1} parent=1 // pred_region
      _
    $region29: #{tpu_custom_call.1} parent=1 // pred_fallthru
      _
    // Predicated region
    $region30: #{tpu_custom_call.1} parent=1 // pred_check
      _
    $region31: #{tpu_custom_call.1} parent=1 // pred_check_branch
      %97 = sbr.rel (0) target = $region33
    $region32: #{tpu_custom_call.1} parent=1 // pred_region
      %s99 = ssub.s32 2048, 2048
      %100 = vsyncadd [#allocation13], %s99
      %s101 = sshll.u32 [#allocation12], 4
      %s102 = int_to_ptr.vmem [resolvable:$true] %s101
      %107 = dma.hbm_to_vmem [thread:$0]  %s7, 2048, %s102, [#allocation13], 128, 128, 8
    $region33: #{tpu_custom_call.1} parent=1 // pred_fallthru
      _
    // Predicated region
    $region34: #{tpu_custom_call.1} parent=1 // pred_check
      _
    $region35: #{tpu_custom_call.1} parent=1 // pred_check_branch
      %109 = sbr.rel (0) target = $region37
    $region36: #{tpu_custom_call.1} parent=1 // pred_region
      %s111 = ssub.s32 2048, 2048
      %112 = vsyncadd [#allocation13], %s111
      %s113 = sshll.u32 [#allocation14], 4
      %s114 = int_to_ptr.vmem [resolvable:$true] %s113
      %119 = dma.hbm_to_vmem [thread:$0]  %s8, 2048, %s114, [#allocation13], 128, 128, 8
    $region37: #{tpu_custom_call.1} parent=1 // pred_fallthru
      _
    // Predicated region
    $region38: #{tpu_custom_call.1} parent=1 // pred_check
      _
    $region39: #{tpu_custom_call.1} parent=1 // pred_check_branch
      %121 = sbr.rel (0) target = $region41
    $region40: #{tpu_custom_call.1} parent=1 // pred_region
      _
    $region41: #{tpu_custom_call.1} parent=1 // pred_fallthru
      _
    // Predicated region
    $region42: #{tpu_custom_call.1} parent=1 // pred_check
      _
    $region43: #{tpu_custom_call.1} parent=1 // pred_check_branch
      %123 = sbr.rel (0) target = $region45
    $region44: #{tpu_custom_call.1} parent=1 // pred_region
      %s125 = ssub.s32 768, 768
      %126 = vsyncadd [#allocation16], %s125
      %s127 = sshll.u32 [#allocation15], 4
      %s128 = int_to_ptr.vmem [resolvable:$true] %s127
      %133 = dma.hbm_to_vmem [thread:$0]  %s10, 768, %s128, [#allocation16], 384, 384, 24
    $region45: #{tpu_custom_call.1} parent=1 // pred_fallthru
      _
    // Predicated region
    $region46: #{tpu_custom_call.1} parent=1 // pred_check
      _
    $region47: #{tpu_custom_call.1} parent=1 // pred_check_branch
      %135 = sbr.rel (0) target = $region49
    $region48: #{tpu_custom_call.1} parent=1 // pred_region
      %s137 = ssub.s32 6144, 6144
      %138 = vsyncadd [#allocation16], %s137
      %s139 = sshll.u32 [#allocation17], 4
      %s140 = int_to_ptr.vmem [resolvable:$true] %s139
      %145 = dma.hbm_to_vmem [thread:$0]  %s11, 6144, %s140, [#allocation16], 384, 384, 24
    $region49: #{tpu_custom_call.1} parent=1 // pred_fallthru
      _
    // Predicated region
    $region50: #{tpu_custom_call.1} parent=1 // pred_check
      _
    $region51: #{tpu_custom_call.1} parent=1 // pred_check_branch
      %147 = sbr.rel (0) target = $region53
    $region52: #{tpu_custom_call.1} parent=1 // pred_region
      _
    $region53: #{tpu_custom_call.1} parent=1 // pred_fallthru
      _
    // Predicated region
    $region54: #{tpu_custom_call.1} parent=1 // pred_check
      _
    $region55: #{tpu_custom_call.1} parent=1 // pred_check_branch
      %149 = sbr.rel (0) target = $region57
    $region56: #{tpu_custom_call.1} parent=1 // pred_region
      _
    $region57: #{tpu_custom_call.1} parent=1 // pred_fallthru
      _
    // Predicated region
    $region58: #{tpu_custom_call.1} parent=1 // pred_check
      _
    $region59: #{tpu_custom_call.1} parent=1 // pred_check_branch
      %151 = sbr.rel (0) target = $region61
    $region60: #{tpu_custom_call.1} parent=1 // pred_region
      %s153 = ssub.s32 6144, 6144
      %154 = vsyncadd [#allocation19], %s153
      %s155 = sshll.u32 [#allocation18], 4
      %s156 = int_to_ptr.vmem [resolvable:$true] %s155
      %161 = dma.hbm_to_vmem [thread:$0]  %s14, 6144, %s156, [#allocation19], 384, 384, 24
    $region61: #{tpu_custom_call.1} parent=1 // pred_fallthru
      _
    // Predicated region
    $region62: #{tpu_custom_call.1} parent=1 // pred_check
      _
    $region63: #{tpu_custom_call.1} parent=1 // pred_check_branch
      %163 = sbr.rel (0) target = $region65
    $region64: #{tpu_custom_call.1} parent=1 // pred_region
      %s165 = ssub.s32 6144, 6144
      %166 = vsyncadd [#allocation19], %s165
      %s167 = sshll.u32 [#allocation20], 4
      %s168 = int_to_ptr.vmem [resolvable:$true] %s167
      %173 = dma.hbm_to_vmem [thread:$0]  %s15, 6144, %s168, [#allocation19], 384, 384, 24
    $region65: #{tpu_custom_call.1} parent=1 // pred_fallthru
      _
    // Predicated region
    $region66: #{tpu_custom_call.1} parent=1 // pred_check
      _
    $region67: #{tpu_custom_call.1} parent=1 // pred_check_branch
      %175 = sbr.rel (0) target = $region69
    $region68: #{tpu_custom_call.1} parent=1 // pred_region
      _
    $region69: #{tpu_custom_call.1} parent=1 // pred_fallthru
      _
    // Predicated region
    $region70: #{tpu_custom_call.1} parent=1 // pred_check
      _
    $region71: #{tpu_custom_call.1} parent=1 // pred_check_branch
      %177 = sbr.rel (0) target = $region73
    $region72: #{tpu_custom_call.1} parent=1 // pred_region
      _
    $region73: #{tpu_custom_call.1} parent=1 // pred_fallthru
      _
    // Predicated region
    $region74: #{tpu_custom_call.1} parent=1 // pred_check
      _
    $region75: #{tpu_custom_call.1} parent=1 // pred_check_branch
      %179 = sbr.rel (0) target = $region77
    $region76: #{tpu_custom_call.1} parent=1 // pred_region
      %s181 = ssub.s32 2048, 2048
      %182 = vsyncadd [#allocation22], %s181
      %s183 = sshll.u32 [#allocation21], 4
      %s184 = int_to_ptr.vmem [resolvable:$true] %s183
      %189 = dma.hbm_to_vmem [thread:$0]  %s18, 2048, %s184, [#allocation22], 128, 128, 8
    $region77: #{tpu_custom_call.1} parent=1 // pred_fallthru
      _
    // Predicated region
    $region78: #{tpu_custom_call.1} parent=1 // pred_check
      _
    $region79: #{tpu_custom_call.1} parent=1 // pred_check_branch
      %191 = sbr.rel (0) target = $region81
    $region80: #{tpu_custom_call.1} parent=1 // pred_region
      %s193 = ssub.s32 2048, 2048
      %194 = vsyncadd [#allocation22], %s193
      %s195 = sshll.u32 [#allocation23], 4
      %s196 = int_to_ptr.vmem [resolvable:$true] %s195
      %201 = dma.hbm_to_vmem [thread:$0]  %s19, 2048, %s196, [#allocation22], 128, 128, 8
    $region81: #{tpu_custom_call.1} parent=1 // pred_fallthru
      _
    // Predicated region
    $region82: #{tpu_custom_call.1} parent=1 // pred_check
      _
    $region83: #{tpu_custom_call.1} parent=1 // pred_check_branch
      %203 = sbr.rel (0) target = $region85
    $region84: #{tpu_custom_call.1} parent=1 // pred_region
      _
    $region85: #{tpu_custom_call.1} parent=1 // pred_fallthru
      _
    // Predicated region
    $region86: #{tpu_custom_call.1} parent=1 // pred_check
      _
    $region87: #{tpu_custom_call.1} parent=1 // pred_check_branch
      %205 = sbr.rel (0) target = $region89
    $region88: #{tpu_custom_call.1} parent=1 // pred_region
      %206 = dma.done [#allocation4], 192
    $region89: #{tpu_custom_call.1} parent=1 // pred_fallthru
      _
    // Predicated region
    $region90: #{tpu_custom_call.1} parent=1 // pred_check
      _
    $region91: #{tpu_custom_call.1} parent=1 // pred_check_branch
      %208 = sbr.rel (0) target = $region93
    $region92: #{tpu_custom_call.1} parent=1 // pred_region
      %209 = dma.done [#allocation7], 32
    $region93: #{tpu_custom_call.1} parent=1 // pred_fallthru
      _
    // Predicated region
    $region94: #{tpu_custom_call.1} parent=1 // pred_check
      _
    $region95: #{tpu_custom_call.1} parent=1 // pred_check_branch
      %211 = sbr.rel (0) target = $region97
    $region96: #{tpu_custom_call.1} parent=1 // pred_region
      %212 = dma.done [#allocation7], 256
    $region97: #{tpu_custom_call.1} parent=1 // pred_fallthru
      _
    // Predicated region
    $region98: #{tpu_custom_call.1} parent=1 // pred_check
      _
    $region99: #{tpu_custom_call.1} parent=1 // pred_check_branch
      %214 = sbr.rel (0) target = $region101
    $region100: #{tpu_custom_call.1} parent=1 // pred_region
      %215 = dma.done [#allocation10], 2048
    $region101: #{tpu_custom_call.1} parent=1 // pred_fallthru
      _
    // Predicated region
    $region102: #{tpu_custom_call.1} parent=1 // pred_check
      _
    $region103: #{tpu_custom_call.1} parent=1 // pred_check_branch
      %217 = sbr.rel (0) target = $region105
    $region104: #{tpu_custom_call.1} parent=1 // pred_region
      %218 = dma.done [#allocation10], 2048
    $region105: #{tpu_custom_call.1} parent=1 // pred_fallthru
      _
    // Predicated region
    $region106: #{tpu_custom_call.1} parent=1 // pred_check
      _
    $region107: #{tpu_custom_call.1} parent=1 // pred_check_branch
      %220 = sbr.rel (0) target = $region109
    $region108: #{tpu_custom_call.1} parent=1 // pred_region
      %221 = dma.done [#allocation13], 2048
    $region109: #{tpu_custom_call.1} parent=1 // pred_fallthru
      _
    // Predicated region
    $region110: #{tpu_custom_call.1} parent=1 // pred_check
      _
    $region111: #{tpu_custom_call.1} parent=1 // pred_check_branch
      %223 = sbr.rel (0) target = $region113
    $region112: #{tpu_custom_call.1} parent=1 // pred_region
      %224 = dma.done [#allocation13], 2048
    $region113: #{tpu_custom_call.1} parent=1 // pred_fallthru
      _
    // Predicated region
    $region114: #{tpu_custom_call.1} parent=1 // pred_check
      _
    $region115: #{tpu_custom_call.1} parent=1 // pred_check_branch
      %226 = sbr.rel (0) target = $region117
    $region116: #{tpu_custom_call.1} parent=1 // pred_region
      %227 = dma.done [#allocation16], 768
    $region117: #{tpu_custom_call.1} parent=1 // pred_fallthru
      _
    // Predicated region
    $region118: #{tpu_custom_call.1} parent=1 // pred_check
      _
    $region119: #{tpu_custom_call.1} parent=1 // pred_check_branch
      %229 = sbr.rel (0) target = $region121
    $region120: #{tpu_custom_call.1} parent=1 // pred_region
      %230 = dma.done [#allocation16], 6144
    $region121: #{tpu_custom_call.1} parent=1 // pred_fallthru
      _
    // Predicated region
    $region122: #{tpu_custom_call.1} parent=1 // pred_check
      _
    $region123: #{tpu_custom_call.1} parent=1 // pred_check_branch
      %232 = sbr.rel (0) target = $region125
    $region124: #{tpu_custom_call.1} parent=1 // pred_region
      %233 = dma.done [#allocation19], 6144
    $region125: #{tpu_custom_call.1} parent=1 // pred_fallthru
      _
    // Predicated region
    $region126: #{tpu_custom_call.1} parent=1 // pred_check
      _
    $region127: #{tpu_custom_call.1} parent=1 // pred_check_branch
      %235 = sbr.rel (0) target = $region129
    $region128: #{tpu_custom_call.1} parent=1 // pred_region
      %236 = dma.done [#allocation19], 6144
    $region129: #{tpu_custom_call.1} parent=1 // pred_fallthru
      _
    // Predicated region
    $region130: #{tpu_custom_call.1} parent=1 // pred_check
      _
    $region131: #{tpu_custom_call.1} parent=1 // pred_check_branch
      %238 = sbr.rel (0) target = $region133
    $region132: #{tpu_custom_call.1} parent=1 // pred_region
      %239 = dma.done [#allocation22], 2048
    $region133: #{tpu_custom_call.1} parent=1 // pred_fallthru
      _
    // Predicated region
    $region134: #{tpu_custom_call.1} parent=1 // pred_check
      _
    $region135: #{tpu_custom_call.1} parent=1 // pred_check_branch
      %241 = sbr.rel (0) target = $region137
    $region136: #{tpu_custom_call.1} parent=1 // pred_region
      %242 = dma.done [#allocation22], 2048
    $region137: #{tpu_custom_call.1} parent=1 // pred_fallthru
      _
    %v243 = vld [vmem:[#allocation6] sm:$0x3]
    %v244 = vld [vmem:[#allocation8] sm:$0xff]
    %v245 = vld [vmem:[#allocation8 + $0x8] sm:$0xff]
    %v246 = vld [vmem:[%s3] sm:$0xf]
    %v247 = vld [vmem:[%s3 + $0x4] sm:$0xf]
    %v250 = vunpack.c.l.s4 1966171168
    %v251 = vunpack.c.0.s8 %v250
    %v252 = vlaneseq
    %v253 = vshrl.u32 %v252, 7
    %v254 = vsub.s32 %v251, %v253
    %v255 = vrot.slane %v243, %v254
    %v256 = vcombine.high %v255, %v255
    %v258 = vunpack.c.l.s4 1966171168
    %v259 = vunpack.c.0.s8 %v258
    %v260 = vlaneseq
    %v261 = vshrl.u32 %v260, 7
    %v262 = vsub.s32 %v259, %v261
    %v263 = vrot.slane %v255, %v262
    %v265 = vunpack.c.l.s4 1966171168
    %v266 = vunpack.c.0.s8 %v265
    %v267 = vlaneseq
    %v268 = vshrl.u32 %v267, 7
    %v269 = vsub.s32 %v266, %v268
    %v270 = vrot.slane %v256, %v269
    %273 = vmatprep.subr.mxu0 0.0
    %274 = vmatpush1.xpose.msra.mxu0 %v246
    %275 = vmatprep.subr.mxu0 0.0
    %276 = vmatpush1.xpose.msra.mxu0 0.0
    %277 = vmatprep.subr.mxu0 0.0
    %278 = vmatpush1.xpose.msra.mxu0 0.0
    %279 = vmatprep.subr.mxu0 0.0
    %280 = vmatpush1.xpose.msra.mxu0 0.0
    %281 = vmatprep.subr.mxu0 0.0
    %282 = vmatpush1.xpose.msra.mxu0 0.0
    %283 = vmatprep.subr.mxu0 0.0
    %284 = vmatpush1.xpose.msra.mxu0 0.0
    %285 = vmatprep.subr.mxu0 0.0
    %286 = vmatpush1.xpose.msra.mxu0 0.0
    %287 = vmatprep.subr.mxu0 0.0
    %288 = vmatpush1.xpose.msra.mxu0 0.0
    %289 = vmatprep.subr.mxu0 0.0
    %290 = vmatpush1.xpose.msra.mxu0 0.0
    %291 = vmatprep.subr.mxu0 0.0
    %292 = vmatpush1.xpose.msra.mxu0 0.0
    %293 = vmatprep.subr.mxu0 0.0
    %294 = vmatpush1.xpose.msra.mxu0 0.0
    %295 = vmatprep.subr.mxu0 0.0
    %296 = vmatpush1.xpose.msra.mxu0 0.0
    %297 = vmatprep.subr.mxu0 0.0
    %298 = vmatpush1.xpose.msra.mxu0 0.0
    %299 = vmatprep.subr.mxu0 0.0
    %300 = vmatpush1.xpose.msra.mxu0 0.0
    %301 = vmatprep.subr.mxu0 0.0
    %302 = vmatpush1.xpose.msra.mxu0 0.0
    %303 = vmatprep.subr.mxu0 0.0
    %304 = vmatpush1.xpose.msra.mxu0 0.0
    %305 = vmatprep.subr.mxu0 0.0
    %306 = vmatpush1.xpose.msra.mxu0 0.0
    %307 = vmatprep.subr.mxu0 0.0
    %308 = vmatpush1.xpose.msra.mxu0 0.0
    %309 = vmatprep.subr.mxu0 0.0
    %310 = vmatpush1.xpose.msra.mxu0 0.0
    %311 = vmatprep.subr.mxu0 0.0
    %312 = vmatpush1.xpose.msra.mxu0 0.0
    %313 = vmatprep.subr.mxu0 0.0
    %314 = vmatpush1.xpose.msra.mxu0 0.0
    %315 = vmatprep.subr.mxu0 0.0
    %316 = vmatpush1.xpose.msra.mxu0 0.0
    %317 = vmatprep.subr.mxu0 0.0
    %318 = vmatpush1.xpose.msra.mxu0 0.0
    %319 = vmatprep.subr.mxu0 0.0
    %320 = vmatpush1.xpose.msra.mxu0 0.0
    %321 = vmatprep.subr.mxu0 0.0
    %322 = vmatpush1.xpose.msra.mxu0 0.0
    %323 = vmatprep.subr.mxu0 0.0
    %324 = vmatpush1.xpose.msra.mxu0 0.0
    %325 = vmatprep.subr.mxu0 0.0
    %326 = vmatpush1.xpose.msra.mxu0 0.0
    %327 = vmatprep.subr.mxu0 0.0
    %328 = vmatpush1.xpose.msra.mxu0 0.0
    %329 = vmatprep.subr.mxu0 0.0
    %330 = vmatpush1.xpose.msra.mxu0 0.0
    %331 = vmatprep.subr.mxu0 0.0
    %332 = vmatpush1.xpose.msra.mxu0 0.0
    %333 = vmatprep.subr.mxu0 0.0
    %334 = vmatpush1.xpose.msra.mxu0 0.0
    %335 = vmatprep.subr.mxu0 0.0
    %336 = vmatpush1.xpose.msra.mxu0 0.0
    %337 = vmatprep.mubr.f32.mxu0 0.0
    %338 = vmatmul.mubr.f32.gmra.mrb[0].mxu0 %v263
    %v339 = vpop.f32.mrb[0].mxu0
    %v340 = vadd.f32 0.0, %v339
    %v341 = vpop.f32.mrb[0].mxu0
    %342 = vdwg.mxu0
    %343 = vmatprep.subr.mxu0 0.0
    %344 = vmatpush1.xpose.msra.mxu0 %v247
    %345 = vmatprep.subr.mxu0 0.0
    %346 = vmatpush1.xpose.msra.mxu0 0.0
    %347 = vmatprep.subr.mxu0 0.0
    %348 = vmatpush1.xpose.msra.mxu0 0.0
    %349 = vmatprep.subr.mxu0 0.0
    %350 = vmatpush1.xpose.msra.mxu0 0.0
    %351 = vmatprep.subr.mxu0 0.0
    %352 = vmatpush1.xpose.msra.mxu0 0.0
    %353 = vmatprep.subr.mxu0 0.0
    %354 = vmatpush1.xpose.msra.mxu0 0.0
    %355 = vmatprep.subr.mxu0 0.0
    %356 = vmatpush1.xpose.msra.mxu0 0.0
    %357 = vmatprep.subr.mxu0 0.0
    %358 = vmatpush1.xpose.msra.mxu0 0.0
    %359 = vmatprep.subr.mxu0 0.0
    %360 = vmatpush1.xpose.msra.mxu0 0.0
    %361 = vmatprep.subr.mxu0 0.0
    %362 = vmatpush1.xpose.msra.mxu0 0.0
    %363 = vmatprep.subr.mxu0 0.0
    %364 = vmatpush1.xpose.msra.mxu0 0.0
    %365 = vmatprep.subr.mxu0 0.0
    %366 = vmatpush1.xpose.msra.mxu0 0.0
    %367 = vmatprep.subr.mxu0 0.0
    %368 = vmatpush1.xpose.msra.mxu0 0.0
    %369 = vmatprep.subr.mxu0 0.0
    %370 = vmatpush1.xpose.msra.mxu0 0.0
    %371 = vmatprep.subr.mxu0 0.0
    %372 = vmatpush1.xpose.msra.mxu0 0.0
    %373 = vmatprep.subr.mxu0 0.0
    %374 = vmatpush1.xpose.msra.mxu0 0.0
    %375 = vmatprep.subr.mxu0 0.0
    %376 = vmatpush1.xpose.msra.mxu0 0.0
    %377 = vmatprep.subr.mxu0 0.0
    %378 = vmatpush1.xpose.msra.mxu0 0.0
    %379 = vmatprep.subr.mxu0 0.0
    %380 = vmatpush1.xpose.msra.mxu0 0.0
    %381 = vmatprep.subr.mxu0 0.0
    %382 = vmatpush1.xpose.msra.mxu0 0.0
    %383 = vmatprep.subr.mxu0 0.0
    %384 = vmatpush1.xpose.msra.mxu0 0.0
    %385 = vmatprep.subr.mxu0 0.0
    %386 = vmatpush1.xpose.msra.mxu0 0.0
    %387 = vmatprep.subr.mxu0 0.0
    %388 = vmatpush1.xpose.msra.mxu0 0.0
    %389 = vmatprep.subr.mxu0 0.0
    %390 = vmatpush1.xpose.msra.mxu0 0.0
    %391 = vmatprep.subr.mxu0 0.0
    %392 = vmatpush1.xpose.msra.mxu0 0.0
    %393 = vmatprep.subr.mxu0 0.0
    %394 = vmatpush1.xpose.msra.mxu0 0.0
    %395 = vmatprep.subr.mxu0 0.0
    %396 = vmatpush1.xpose.msra.mxu0 0.0
    %397 = vmatprep.subr.mxu0 0.0
    %398 = vmatpush1.xpose.msra.mxu0 0.0
    %399 = vmatprep.subr.mxu0 0.0
    %400 = vmatpush1.xpose.msra.mxu0 0.0
    %401 = vmatprep.subr.mxu0 0.0
    %402 = vmatpush1.xpose.msra.mxu0 0.0
    %403 = vmatprep.subr.mxu0 0.0
    %404 = vmatpush1.xpose.msra.mxu0 0.0
    %405 = vmatprep.subr.mxu0 0.0
    %406 = vmatpush1.xpose.msra.mxu0 0.0
    %407 = vmatprep.mubr.f32.mxu0 0.0
    %408 = vmatmul.mubr.f32.gmra.mrb[0].mxu0 %v270
    %v409 = vpop.f32.mrb[0].mxu0
    %v410 = vadd.f32 0.0, %v409
    %v411 = vpop.f32.mrb[0].mxu0
    %412 = vdwg.mxu0
    %vm413 = vcmask 24576
    %v414 = vsel %vm413, %v340, -inf
    %415 = vmax.xlane.f32.xlu0 %v414
    %v416 = vpop.xlane.xlu0 %415
    %v417 = vsel %vm413, %v410, -inf
    %418 = vmax.xlane.f32.xlu0 %v417
    %v419 = vpop.xlane.xlu0 %418
    %v420 = vsub.f32 %v340, %v416
    %v421 = vsub.f32 %v410, %v419
    %v422 = vmul.f32 %v420, 1.442695
    %v423 = vpow.pop %v422
    %v424 = vmul.f32 %v421, 1.442695
    %v425 = vpow.pop %v424
    %v426 = vsel %vm413, %v423, 0.0
    %427 = vadd.xlane.f32.xlu0 %v426
    %v428 = vpop.xlane.xlu0 %427
    %v429 = vsel %vm413, %v425, 0.0
    %430 = vadd.xlane.f32.xlu0 %v429
    %v431 = vpop.xlane.xlu0 %430
    %v432 = vrcp.pop %v428
    %v433 = vrcp.pop %v431
    %v434 = vmul.f32 %v423, %v432
    %v435 = vmul.f32 %v425, %v433
    %vm436 = vcmask 31744
    %v438 = vsel %vm436, %v434, 0
    %vm440 = vcmask 1043456
    %v442 = vsel %vm440, %v246, 0
    %444 = vmatprep.subr.mxu0 0.0
    %445 = vmatpush1.msra.mxu0 %v442
    %446 = vmatprep.subr.mxu0 0.0
    %447 = vmatpush1.msra.mxu0 0.0
    %448 = vmatprep.subr.mxu0 0.0
    %449 = vmatpush1.msra.mxu0 0.0
    %450 = vmatprep.subr.mxu0 0.0
    %451 = vmatpush1.msra.mxu0 0.0
    %452 = vmatprep.subr.mxu0 0.0
    %453 = vmatpush1.msra.mxu0 0.0
    %454 = vmatprep.subr.mxu0 0.0
    %455 = vmatpush1.msra.mxu0 0.0
    %456 = vmatprep.subr.mxu0 0.0
    %457 = vmatpush1.msra.mxu0 0.0
    %458 = vmatprep.subr.mxu0 0.0
    %459 = vmatpush1.msra.mxu0 0.0
    %460 = vmatprep.subr.mxu0 0.0
    %461 = vmatpush1.msra.mxu0 0.0
    %462 = vmatprep.subr.mxu0 0.0
    %463 = vmatpush1.msra.mxu0 0.0
    %464 = vmatprep.subr.mxu0 0.0
    %465 = vmatpush1.msra.mxu0 0.0
    %466 = vmatprep.subr.mxu0 0.0
    %467 = vmatpush1.msra.mxu0 0.0
    %468 = vmatprep.subr.mxu0 0.0
    %469 = vmatpush1.msra.mxu0 0.0
    %470 = vmatprep.subr.mxu0 0.0
    %471 = vmatpush1.msra.mxu0 0.0
    %472 = vmatprep.subr.mxu0 0.0
    %473 = vmatpush1.msra.mxu0 0.0
    %474 = vmatprep.subr.mxu0 0.0
    %475 = vmatpush1.msra.mxu0 0.0
    %476 = vmatprep.subr.mxu0 0.0
    %477 = vmatpush1.msra.mxu0 0.0
    %478 = vmatprep.subr.mxu0 0.0
    %479 = vmatpush1.msra.mxu0 0.0
    %480 = vmatprep.subr.mxu0 0.0
    %481 = vmatpush1.msra.mxu0 0.0
    %482 = vmatprep.subr.mxu0 0.0
    %483 = vmatpush1.msra.mxu0 0.0
    %484 = vmatprep.subr.mxu0 0.0
    %485 = vmatpush1.msra.mxu0 0.0
    %486 = vmatprep.subr.mxu0 0.0
    %487 = vmatpush1.msra.mxu0 0.0
    %488 = vmatprep.subr.mxu0 0.0
    %489 = vmatpush1.msra.mxu0 0.0
    %490 = vmatprep.subr.mxu0 0.0
    %491 = vmatpush1.msra.mxu0 0.0
    %492 = vmatprep.subr.mxu0 0.0
    %493 = vmatpush1.msra.mxu0 0.0
    %494 = vmatprep.subr.mxu0 0.0
    %495 = vmatpush1.msra.mxu0 0.0
    %496 = vmatprep.subr.mxu0 0.0
    %497 = vmatpush1.msra.mxu0 0.0
    %498 = vmatprep.subr.mxu0 0.0
    %499 = vmatpush1.msra.mxu0 0.0
    %500 = vmatprep.subr.mxu0 0.0
    %501 = vmatpush1.msra.mxu0 0.0
    %502 = vmatprep.subr.mxu0 0.0
    %503 = vmatpush1.msra.mxu0 0.0
    %504 = vmatprep.subr.mxu0 0.0
    %505 = vmatpush1.msra.mxu0 0.0
    %506 = vmatprep.subr.mxu0 0.0
    %507 = vmatpush1.msra.mxu0 0.0
    %508 = vmatprep.mubr.f32.mxu0 0.0
    %509 = vmatmul.mubr.f32.gmra.mrb[0].mxu0 %v438
    %v510 = vpop.f32.mrb[0].mxu0
    %v511 = vadd.f32 0.0, %v510
    %v512 = vpop.f32.mrb[0].mxu0
    %513 = vdwg.mxu0
    %v515 = vsel %vm436, %v435, 0
    %v518 = vsel %vm440, %v247, 0
    %520 = vmatprep.subr.mxu0 0.0
    %521 = vmatpush1.msra.mxu0 %v518
    %522 = vmatprep.subr.mxu0 0.0
    %523 = vmatpush1.msra.mxu0 0.0
    %524 = vmatprep.subr.mxu0 0.0
    %525 = vmatpush1.msra.mxu0 0.0
    %526 = vmatprep.subr.mxu0 0.0
    %527 = vmatpush1.msra.mxu0 0.0
    %528 = vmatprep.subr.mxu0 0.0
    %529 = vmatpush1.msra.mxu0 0.0
    %530 = vmatprep.subr.mxu0 0.0
    %531 = vmatpush1.msra.mxu0 0.0
    %532 = vmatprep.subr.mxu0 0.0
    %533 = vmatpush1.msra.mxu0 0.0
    %534 = vmatprep.subr.mxu0 0.0
    %535 = vmatpush1.msra.mxu0 0.0
    %536 = vmatprep.subr.mxu0 0.0
    %537 = vmatpush1.msra.mxu0 0.0
    %538 = vmatprep.subr.mxu0 0.0
    %539 = vmatpush1.msra.mxu0 0.0
    %540 = vmatprep.subr.mxu0 0.0
    %541 = vmatpush1.msra.mxu0 0.0
    %542 = vmatprep.subr.mxu0 0.0
    %543 = vmatpush1.msra.mxu0 0.0
    %544 = vmatprep.subr.mxu0 0.0
    %545 = vmatpush1.msra.mxu0 0.0
    %546 = vmatprep.subr.mxu0 0.0
    %547 = vmatpush1.msra.mxu0 0.0
    %548 = vmatprep.subr.mxu0 0.0
    %549 = vmatpush1.msra.mxu0 0.0
    %550 = vmatprep.subr.mxu0 0.0
    %551 = vmatpush1.msra.mxu0 0.0
    %552 = vmatprep.subr.mxu0 0.0
    %553 = vmatpush1.msra.mxu0 0.0
    %554 = vmatprep.subr.mxu0 0.0
    %555 = vmatpush1.msra.mxu0 0.0
    %556 = vmatprep.subr.mxu0 0.0
    %557 = vmatpush1.msra.mxu0 0.0
    %558 = vmatprep.subr.mxu0 0.0
    %559 = vmatpush1.msra.mxu0 0.0
    %560 = vmatprep.subr.mxu0 0.0
    %561 = vmatpush1.msra.mxu0 0.0
    %562 = vmatprep.subr.mxu0 0.0
    %563 = vmatpush1.msra.mxu0 0.0
    %564 = vmatprep.subr.mxu0 0.0
    %565 = vmatpush1.msra.mxu0 0.0
    %566 = vmatprep.subr.mxu0 0.0
    %567 = vmatpush1.msra.mxu0 0.0
    %568 = vmatprep.subr.mxu0 0.0
    %569 = vmatpush1.msra.mxu0 0.0
    %570 = vmatprep.subr.mxu0 0.0
    %571 = vmatpush1.msra.mxu0 0.0
    %572 = vmatprep.subr.mxu0 0.0
    %573 = vmatpush1.msra.mxu0 0.0
    %574 = vmatprep.subr.mxu0 0.0
    %575 = vmatpush1.msra.mxu0 0.0
    %576 = vmatprep.subr.mxu0 0.0
    %577 = vmatpush1.msra.mxu0 0.0
    %578 = vmatprep.subr.mxu0 0.0
    %579 = vmatpush1.msra.mxu0 0.0
    %580 = vmatprep.subr.mxu0 0.0
    %581 = vmatpush1.msra.mxu0 0.0
    %582 = vmatprep.subr.mxu0 0.0
    %583 = vmatpush1.msra.mxu0 0.0
    %584 = vmatprep.mubr.f32.mxu0 0.0
    %585 = vmatmul.mubr.f32.gmra.mrb[0].mxu0 %v515
    %v586 = vpop.f32.mrb[0].mxu0
    %v587 = vadd.f32 0.0, %v586
    %v588 = vpop.f32.mrb[0].mxu0
    %589 = vdwg.mxu0
    %v590 = vld [vmem:[#allocation9] sm:$0xff]
    %v591 = vld [vmem:[#allocation9 + $0x8] sm:$0xff]
    %v592 = vld [vmem:[#allocation9 + $0x10] sm:$0xff]
    %v593 = vld [vmem:[#allocation9 + $0x18] sm:$0xff]
    %v594 = vld [vmem:[#allocation9 + $0x20] sm:$0xff]
    %v595 = vld [vmem:[#allocation9 + $0x28] sm:$0xff]
    %v596 = vld [vmem:[#allocation9 + $0x30] sm:$0xff]
    %v597 = vld [vmem:[#allocation9 + $0x38] sm:$0xff]
    %v598 = vld [vmem:[#allocation9 + $0x40] sm:$0xff]
    %v599 = vld [vmem:[#allocation9 + $0x48] sm:$0xff]
    %v600 = vld [vmem:[#allocation9 + $0x50] sm:$0xff]
    %v601 = vld [vmem:[#allocation9 + $0x58] sm:$0xff]
    %v602 = vld [vmem:[#allocation9 + $0x60] sm:$0xff]
    %v603 = vld [vmem:[#allocation9 + $0x68] sm:$0xff]
    %v604 = vld [vmem:[#allocation9 + $0x70] sm:$0xff]
    %v605 = vld [vmem:[#allocation9 + $0x78] sm:$0xff]
    %v606 = vld [vmem:[#allocation11] sm:$0xff]
    %v607 = vld [vmem:[#allocation11 + $0x8] sm:$0xff]
    %v608 = vld [vmem:[#allocation11 + $0x10] sm:$0xff]
    %v609 = vld [vmem:[#allocation11 + $0x18] sm:$0xff]
    %v610 = vld [vmem:[#allocation11 + $0x20] sm:$0xff]
    %v611 = vld [vmem:[#allocation11 + $0x28] sm:$0xff]
    %v612 = vld [vmem:[#allocation11 + $0x30] sm:$0xff]
    %v613 = vld [vmem:[#allocation11 + $0x38] sm:$0xff]
    %v614 = vld [vmem:[#allocation11 + $0x40] sm:$0xff]
    %v615 = vld [vmem:[#allocation11 + $0x48] sm:$0xff]
    %v616 = vld [vmem:[#allocation11 + $0x50] sm:$0xff]
    %v617 = vld [vmem:[#allocation11 + $0x58] sm:$0xff]
    %v618 = vld [vmem:[#allocation11 + $0x60] sm:$0xff]
    %v619 = vld [vmem:[#allocation11 + $0x68] sm:$0xff]
    %v620 = vld [vmem:[#allocation11 + $0x70] sm:$0xff]
    %v621 = vld [vmem:[#allocation11 + $0x78] sm:$0xff]
    %622 = vmatprep.subr.mxu0 0.0
    %623 = vmatpush1.msra.mxu0 %v606
    %624 = vmatprep.subr.mxu0 0.0
    %625 = vmatpush1.msra.mxu0 %v607
    %626 = vmatprep.subr.mxu0 0.0
    %627 = vmatpush1.msra.mxu0 %v608
    %628 = vmatprep.subr.mxu0 0.0
    %629 = vmatpush1.msra.mxu0 %v609
    %630 = vmatprep.subr.mxu0 0.0
    %631 = vmatpush1.msra.mxu0 %v610
    %632 = vmatprep.subr.mxu0 0.0
    %633 = vmatpush1.msra.mxu0 %v611
    %634 = vmatprep.subr.mxu0 0.0
    %635 = vmatpush1.msra.mxu0 %v612
    %636 = vmatprep.subr.mxu0 0.0
    %637 = vmatpush1.msra.mxu0 %v613
    %638 = vmatprep.subr.mxu0 0.0
    %639 = vmatpush1.msra.mxu0 %v614
    %640 = vmatprep.subr.mxu0 0.0
    %641 = vmatpush1.msra.mxu0 %v615
    %642 = vmatprep.subr.mxu0 0.0
    %643 = vmatpush1.msra.mxu0 %v616
    %644 = vmatprep.subr.mxu0 0.0
    %645 = vmatpush1.msra.mxu0 %v617
    %646 = vmatprep.subr.mxu0 0.0
    %647 = vmatpush1.msra.mxu0 %v618
    %648 = vmatprep.subr.mxu0 0.0
    %649 = vmatpush1.msra.mxu0 %v619
    %650 = vmatprep.subr.mxu0 0.0
    %651 = vmatpush1.msra.mxu0 %v620
    %652 = vmatprep.subr.mxu0 0.0
    %653 = vmatpush1.msra.mxu0 %v621
    %654 = vmatprep.subr.mxu0 0.0
    %655 = vmatpush1.msra.mxu0 0.0
    %656 = vmatprep.subr.mxu0 0.0
    %657 = vmatpush1.msra.mxu0 0.0
    %658 = vmatprep.subr.mxu0 0.0
    %659 = vmatpush1.msra.mxu0 0.0
    %660 = vmatprep.subr.mxu0 0.0
    %661 = vmatpush1.msra.mxu0 0.0
    %662 = vmatprep.subr.mxu0 0.0
    %663 = vmatpush1.msra.mxu0 0.0
    %664 = vmatprep.subr.mxu0 0.0
    %665 = vmatpush1.msra.mxu0 0.0
    %666 = vmatprep.subr.mxu0 0.0
    %667 = vmatpush1.msra.mxu0 0.0
    %668 = vmatprep.subr.mxu0 0.0
    %669 = vmatpush1.msra.mxu0 0.0
    %670 = vmatprep.subr.mxu0 0.0
    %671 = vmatpush1.msra.mxu0 0.0
    %672 = vmatprep.subr.mxu0 0.0
    %673 = vmatpush1.msra.mxu0 0.0
    %674 = vmatprep.subr.mxu0 0.0
    %675 = vmatpush1.msra.mxu0 0.0
    %676 = vmatprep.subr.mxu0 0.0
    %677 = vmatpush1.msra.mxu0 0.0
    %678 = vmatprep.subr.mxu0 0.0
    %679 = vmatpush1.msra.mxu0 0.0
    %680 = vmatprep.subr.mxu0 0.0
    %681 = vmatpush1.msra.mxu0 0.0
    %682 = vmatprep.subr.mxu0 0.0
    %683 = vmatpush1.msra.mxu0 0.0
    %684 = vmatprep.subr.mxu0 0.0
    %685 = vmatpush1.msra.mxu0 0.0
    %686 = vmatprep.mubr.f32.mxu0 0.0
    %687 = vmatmul.mubr.f32.gmra.mrb[0].mxu0 %v243
    %v688 = vpop.f32.mrb[0].mxu0
    %v689 = vadd.f32 0.0, %v688
    %v690 = vpop.f32.mrb[0].mxu0
    %691 = vdwg.mxu0
    %v694 = vrot.slane %v587, 7
    %vm695 = vcmask 1041409
    %v696 = vsel %vm695, %v694, %v511
    %698 = vmatprep.subr.mxu0 0.0
    %699 = vmatpush1.msra.mxu0 %v590
    %700 = vmatprep.subr.mxu0 0.0
    %701 = vmatpush1.msra.mxu0 %v591
    %702 = vmatprep.subr.mxu0 0.0
    %703 = vmatpush1.msra.mxu0 %v592
    %704 = vmatprep.subr.mxu0 0.0
    %705 = vmatpush1.msra.mxu0 %v593
    %706 = vmatprep.subr.mxu0 0.0
    %707 = vmatpush1.msra.mxu0 %v594
    %708 = vmatprep.subr.mxu0 0.0
    %709 = vmatpush1.msra.mxu0 %v595
    %710 = vmatprep.subr.mxu0 0.0
    %711 = vmatpush1.msra.mxu0 %v596
    %712 = vmatprep.subr.mxu0 0.0
    %713 = vmatpush1.msra.mxu0 %v597
    %714 = vmatprep.subr.mxu0 0.0
    %715 = vmatpush1.msra.mxu0 %v598
    %716 = vmatprep.subr.mxu0 0.0
    %717 = vmatpush1.msra.mxu0 %v599
    %718 = vmatprep.subr.mxu0 0.0
    %719 = vmatpush1.msra.mxu0 %v600
    %720 = vmatprep.subr.mxu0 0.0
    %721 = vmatpush1.msra.mxu0 %v601
    %722 = vmatprep.subr.mxu0 0.0
    %723 = vmatpush1.msra.mxu0 %v602
    %724 = vmatprep.subr.mxu0 0.0
    %725 = vmatpush1.msra.mxu0 %v603
    %726 = vmatprep.subr.mxu0 0.0
    %727 = vmatpush1.msra.mxu0 %v604
    %728 = vmatprep.subr.mxu0 0.0
    %729 = vmatpush1.msra.mxu0 %v605
    %730 = vmatprep.subr.mxu0 0.0
    %731 = vmatpush1.msra.mxu0 0.0
    %732 = vmatprep.subr.mxu0 0.0
    %733 = vmatpush1.msra.mxu0 0.0
    %734 = vmatprep.subr.mxu0 0.0
    %735 = vmatpush1.msra.mxu0 0.0
    %736 = vmatprep.subr.mxu0 0.0
    %737 = vmatpush1.msra.mxu0 0.0
    %738 = vmatprep.subr.mxu0 0.0
    %739 = vmatpush1.msra.mxu0 0.0
    %740 = vmatprep.subr.mxu0 0.0
    %741 = vmatpush1.msra.mxu0 0.0
    %742 = vmatprep.subr.mxu0 0.0
    %743 = vmatpush1.msra.mxu0 0.0
    %744 = vmatprep.subr.mxu0 0.0
    %745 = vmatpush1.msra.mxu0 0.0
    %746 = vmatprep.subr.mxu0 0.0
    %747 = vmatpush1.msra.mxu0 0.0
    %748 = vmatprep.subr.mxu0 0.0
    %749 = vmatpush1.msra.mxu0 0.0
    %750 = vmatprep.subr.mxu0 0.0
    %751 = vmatpush1.msra.mxu0 0.0
    %752 = vmatprep.subr.mxu0 0.0
    %753 = vmatpush1.msra.mxu0 0.0
    %754 = vmatprep.subr.mxu0 0.0
    %755 = vmatpush1.msra.mxu0 0.0
    %756 = vmatprep.subr.mxu0 0.0
    %757 = vmatpush1.msra.mxu0 0.0
    %758 = vmatprep.subr.mxu0 0.0
    %759 = vmatpush1.msra.mxu0 0.0
    %760 = vmatprep.subr.mxu0 0.0
    %761 = vmatpush1.msra.mxu0 0.0
    %762 = vmatprep.mubr.f32.mxu0 0.0
    %763 = vmatmul.mubr.f32.gmra.mrb[0].mxu0 %v696
    %v764 = vpop.f32.mrb[0].mxu0
    %v765 = vadd.f32 %v689, %v764
    %v766 = vpop.f32.mrb[0].mxu0
    %767 = vdwg.mxu0
    %v768 = vld [vmem:[%s6] sm:$0x1]
    %v770 = vlaneseq
    %v771 = vshrl.u32 %v770, 7
    %v772 = vsub.s32 0, %v771
    %v773 = vrot.slane %v768, %v772
    %v775 = vadd.f32 %v765, %v773
    %v776 = vtanh.pop %v775
    %777 = vmatprep.subr.mxu0 0.0
    %778 = vmatpush1.xpose.msra.mxu0 %v246
    %779 = vmatprep.subr.mxu0 0.0
    %780 = vmatpush1.xpose.msra.mxu0 0.0
    %781 = vmatprep.subr.mxu0 0.0
    %782 = vmatpush1.xpose.msra.mxu0 0.0
    %783 = vmatprep.subr.mxu0 0.0
    %784 = vmatpush1.xpose.msra.mxu0 0.0
    %785 = vmatprep.subr.mxu0 0.0
    %786 = vmatpush1.xpose.msra.mxu0 0.0
    %787 = vmatprep.subr.mxu0 0.0
    %788 = vmatpush1.xpose.msra.mxu0 0.0
    %789 = vmatprep.subr.mxu0 0.0
    %790 = vmatpush1.xpose.msra.mxu0 0.0
    %791 = vmatprep.subr.mxu0 0.0
    %792 = vmatpush1.xpose.msra.mxu0 0.0
    %793 = vmatprep.subr.mxu0 0.0
    %794 = vmatpush1.xpose.msra.mxu0 0.0
    %795 = vmatprep.subr.mxu0 0.0
    %796 = vmatpush1.xpose.msra.mxu0 0.0
    %797 = vmatprep.subr.mxu0 0.0
    %798 = vmatpush1.xpose.msra.mxu0 0.0
    %799 = vmatprep.subr.mxu0 0.0
    %800 = vmatpush1.xpose.msra.mxu0 0.0
    %801 = vmatprep.subr.mxu0 0.0
    %802 = vmatpush1.xpose.msra.mxu0 0.0
    %803 = vmatprep.subr.mxu0 0.0
    %804 = vmatpush1.xpose.msra.mxu0 0.0
    %805 = vmatprep.subr.mxu0 0.0
    %806 = vmatpush1.xpose.msra.mxu0 0.0
    %807 = vmatprep.subr.mxu0 0.0
    %808 = vmatpush1.xpose.msra.mxu0 0.0
    %809 = vmatprep.subr.mxu0 0.0
    %810 = vmatpush1.xpose.msra.mxu0 0.0
    %811 = vmatprep.subr.mxu0 0.0
    %812 = vmatpush1.xpose.msra.mxu0 0.0
    %813 = vmatprep.subr.mxu0 0.0
    %814 = vmatpush1.xpose.msra.mxu0 0.0
    %815 = vmatprep.subr.mxu0 0.0
    %816 = vmatpush1.xpose.msra.mxu0 0.0
    %817 = vmatprep.subr.mxu0 0.0
    %818 = vmatpush1.xpose.msra.mxu0 0.0
    %819 = vmatprep.subr.mxu0 0.0
    %820 = vmatpush1.xpose.msra.mxu0 0.0
    %821 = vmatprep.subr.mxu0 0.0
    %822 = vmatpush1.xpose.msra.mxu0 0.0
    %823 = vmatprep.subr.mxu0 0.0
    %824 = vmatpush1.xpose.msra.mxu0 0.0
    %825 = vmatprep.subr.mxu0 0.0
    %826 = vmatpush1.xpose.msra.mxu0 0.0
    %827 = vmatprep.subr.mxu0 0.0
    %828 = vmatpush1.xpose.msra.mxu0 0.0
    %829 = vmatprep.subr.mxu0 0.0
    %830 = vmatpush1.xpose.msra.mxu0 0.0
    %831 = vmatprep.subr.mxu0 0.0
    %832 = vmatpush1.xpose.msra.mxu0 0.0
    %833 = vmatprep.subr.mxu0 0.0
    %834 = vmatpush1.xpose.msra.mxu0 0.0
    %835 = vmatprep.subr.mxu0 0.0
    %836 = vmatpush1.xpose.msra.mxu0 0.0
    %837 = vmatprep.subr.mxu0 0.0
    %838 = vmatpush1.xpose.msra.mxu0 0.0
    %839 = vmatprep.subr.mxu0 0.0
    %840 = vmatpush1.xpose.msra.mxu0 0.0
    %841 = vmatprep.mubr.f32.mxu0 0.0
    %842 = vmatmul.mubr.f32.gmra.mrb[0].mxu0 %v244
    %v843 = vpop.f32.mrb[0].mxu0
    %v844 = vadd.f32 0.0, %v843
    %v845 = vpop.f32.mrb[0].mxu0
    %846 = vdwg.mxu0
    %847 = vmatprep.subr.mxu0 0.0
    %848 = vmatpush1.xpose.msra.mxu0 %v247
    %849 = vmatprep.subr.mxu0 0.0
    %850 = vmatpush1.xpose.msra.mxu0 0.0
    %851 = vmatprep.subr.mxu0 0.0
    %852 = vmatpush1.xpose.msra.mxu0 0.0
    %853 = vmatprep.subr.mxu0 0.0
    %854 = vmatpush1.xpose.msra.mxu0 0.0
    %855 = vmatprep.subr.mxu0 0.0
    %856 = vmatpush1.xpose.msra.mxu0 0.0
    %857 = vmatprep.subr.mxu0 0.0
    %858 = vmatpush1.xpose.msra.mxu0 0.0
    %859 = vmatprep.subr.mxu0 0.0
    %860 = vmatpush1.xpose.msra.mxu0 0.0
    %861 = vmatprep.subr.mxu0 0.0
    %862 = vmatpush1.xpose.msra.mxu0 0.0
    %863 = vmatprep.subr.mxu0 0.0
    %864 = vmatpush1.xpose.msra.mxu0 0.0
    %865 = vmatprep.subr.mxu0 0.0
    %866 = vmatpush1.xpose.msra.mxu0 0.0
    %867 = vmatprep.subr.mxu0 0.0
    %868 = vmatpush1.xpose.msra.mxu0 0.0
    %869 = vmatprep.subr.mxu0 0.0
    %870 = vmatpush1.xpose.msra.mxu0 0.0
    %871 = vmatprep.subr.mxu0 0.0
    %872 = vmatpush1.xpose.msra.mxu0 0.0
    %873 = vmatprep.subr.mxu0 0.0
    %874 = vmatpush1.xpose.msra.mxu0 0.0
    %875 = vmatprep.subr.mxu0 0.0
    %876 = vmatpush1.xpose.msra.mxu0 0.0
    %877 = vmatprep.subr.mxu0 0.0
    %878 = vmatpush1.xpose.msra.mxu0 0.0
    %879 = vmatprep.subr.mxu0 0.0
    %880 = vmatpush1.xpose.msra.mxu0 0.0
    %881 = vmatprep.subr.mxu0 0.0
    %882 = vmatpush1.xpose.msra.mxu0 0.0
    %883 = vmatprep.subr.mxu0 0.0
    %884 = vmatpush1.xpose.msra.mxu0 0.0
    %885 = vmatprep.subr.mxu0 0.0
    %886 = vmatpush1.xpose.msra.mxu0 0.0
    %887 = vmatprep.subr.mxu0 0.0
    %888 = vmatpush1.xpose.msra.mxu0 0.0
    %889 = vmatprep.subr.mxu0 0.0
    %890 = vmatpush1.xpose.msra.mxu0 0.0
    %891 = vmatprep.subr.mxu0 0.0
    %892 = vmatpush1.xpose.msra.mxu0 0.0
    %893 = vmatprep.subr.mxu0 0.0
    %894 = vmatpush1.xpose.msra.mxu0 0.0
    %895 = vmatprep.subr.mxu0 0.0
    %896 = vmatpush1.xpose.msra.mxu0 0.0
    %897 = vmatprep.subr.mxu0 0.0
    %898 = vmatpush1.xpose.msra.mxu0 0.0
    %899 = vmatprep.subr.mxu0 0.0
    %900 = vmatpush1.xpose.msra.mxu0 0.0
    %901 = vmatprep.subr.mxu0 0.0
    %902 = vmatpush1.xpose.msra.mxu0 0.0
    %903 = vmatprep.subr.mxu0 0.0
    %904 = vmatpush1.xpose.msra.mxu0 0.0
    %905 = vmatprep.subr.mxu0 0.0
    %906 = vmatpush1.xpose.msra.mxu0 0.0
    %907 = vmatprep.subr.mxu0 0.0
    %908 = vmatpush1.xpose.msra.mxu0 0.0
    %909 = vmatprep.subr.mxu0 0.0
    %910 = vmatpush1.xpose.msra.mxu0 0.0
    %911 = vmatprep.mubr.f32.mxu0 0.0
    %912 = vmatmul.mubr.f32.gmra.mrb[0].mxu0 %v245
    %v913 = vpop.f32.mrb[0].mxu0
    %v914 = vadd.f32 0.0, %v913
    %v915 = vpop.f32.mrb[0].mxu0
    %916 = vdwg.mxu0
    %v917 = vsel %vm436, %v844, -inf
    %918 = vmax.xlane.f32.xlu0 %v917
    %v919 = vpop.xlane.xlu0 %918
    %v920 = vsel %vm436, %v914, -inf
    %921 = vmax.xlane.f32.xlu0 %v920
    %v922 = vpop.xlane.xlu0 %921
    %v923 = vsub.f32 %v844, %v919
    %v924 = vsub.f32 %v914, %v922
    %v925 = vmul.f32 %v923, 1.442695
    %v926 = vpow.pop %v925
    %v927 = vmul.f32 %v924, 1.442695
    %v928 = vpow.pop %v927
    %v929 = vsel %vm436, %v926, 0.0
    %930 = vadd.xlane.f32.xlu0 %v929
    %v931 = vpop.xlane.xlu0 %930
    %v932 = vsel %vm436, %v928, 0.0
    %933 = vadd.xlane.f32.xlu0 %v932
    %v934 = vpop.xlane.xlu0 %933
    %v935 = vrcp.pop %v931
    %v936 = vrcp.pop %v934
    %v937 = vmul.f32 %v926, %v935
    %v938 = vmul.f32 %v928, %v936
    %v940 = vsel %vm436, %v937, 0
    %942 = vmatprep.subr.mxu0 0.0
    %943 = vmatpush1.msra.mxu0 %v442
    %944 = vmatprep.subr.mxu0 0.0
    %945 = vmatpush1.msra.mxu0 0.0
    %946 = vmatprep.subr.mxu0 0.0
    %947 = vmatpush1.msra.mxu0 0.0
    %948 = vmatprep.subr.mxu0 0.0
    %949 = vmatpush1.msra.mxu0 0.0
    %950 = vmatprep.subr.mxu0 0.0
    %951 = vmatpush1.msra.mxu0 0.0
    %952 = vmatprep.subr.mxu0 0.0
    %953 = vmatpush1.msra.mxu0 0.0
    %954 = vmatprep.subr.mxu0 0.0
    %955 = vmatpush1.msra.mxu0 0.0
    %956 = vmatprep.subr.mxu0 0.0
    %957 = vmatpush1.msra.mxu0 0.0
    %958 = vmatprep.subr.mxu0 0.0
    %959 = vmatpush1.msra.mxu0 0.0
    %960 = vmatprep.subr.mxu0 0.0
    %961 = vmatpush1.msra.mxu0 0.0
    %962 = vmatprep.subr.mxu0 0.0
    %963 = vmatpush1.msra.mxu0 0.0
    %964 = vmatprep.subr.mxu0 0.0
    %965 = vmatpush1.msra.mxu0 0.0
    %966 = vmatprep.subr.mxu0 0.0
    %967 = vmatpush1.msra.mxu0 0.0
    %968 = vmatprep.subr.mxu0 0.0
    %969 = vmatpush1.msra.mxu0 0.0
    %970 = vmatprep.subr.mxu0 0.0
    %971 = vmatpush1.msra.mxu0 0.0
    %972 = vmatprep.subr.mxu0 0.0
    %973 = vmatpush1.msra.mxu0 0.0
    %974 = vmatprep.subr.mxu0 0.0
    %975 = vmatpush1.msra.mxu0 0.0
    %976 = vmatprep.subr.mxu0 0.0
    %977 = vmatpush1.msra.mxu0 0.0
    %978 = vmatprep.subr.mxu0 0.0
    %979 = vmatpush1.msra.mxu0 0.0
    %980 = vmatprep.subr.mxu0 0.0
    %981 = vmatpush1.msra.mxu0 0.0
    %982 = vmatprep.subr.mxu0 0.0
    %983 = vmatpush1.msra.mxu0 0.0
    %984 = vmatprep.subr.mxu0 0.0
    %985 = vmatpush1.msra.mxu0 0.0
    %986 = vmatprep.subr.mxu0 0.0
    %987 = vmatpush1.msra.mxu0 0.0
    %988 = vmatprep.subr.mxu0 0.0
    %989 = vmatpush1.msra.mxu0 0.0
    %990 = vmatprep.subr.mxu0 0.0
    %991 = vmatpush1.msra.mxu0 0.0
    %992 = vmatprep.subr.mxu0 0.0
    %993 = vmatpush1.msra.mxu0 0.0
    %994 = vmatprep.subr.mxu0 0.0
    %995 = vmatpush1.msra.mxu0 0.0
    %996 = vmatprep.subr.mxu0 0.0
    %997 = vmatpush1.msra.mxu0 0.0
    %998 = vmatprep.subr.mxu0 0.0
    %999 = vmatpush1.msra.mxu0 0.0
    %1000 = vmatprep.subr.mxu0 0.0
    %1001 = vmatpush1.msra.mxu0 0.0
    %1002 = vmatprep.subr.mxu0 0.0
    %1003 = vmatpush1.msra.mxu0 0.0
    %1004 = vmatprep.subr.mxu0 0.0
    %1005 = vmatpush1.msra.mxu0 0.0
    %1006 = vmatprep.mubr.f32.mxu0 0.0
    %1007 = vmatmul.mubr.f32.gmra.mrb[0].mxu0 %v940
    %v1008 = vpop.f32.mrb[0].mxu0
    %v1009 = vadd.f32 0.0, %v1008
    %v1010 = vpop.f32.mrb[0].mxu0
    %1011 = vdwg.mxu0
    %v1013 = vsel %vm436, %v938, 0
    %1015 = vmatprep.subr.mxu0 0.0
    %1016 = vmatpush1.msra.mxu0 %v518
    %1017 = vmatprep.subr.mxu0 0.0
    %1018 = vmatpush1.msra.mxu0 0.0
    %1019 = vmatprep.subr.mxu0 0.0
    %1020 = vmatpush1.msra.mxu0 0.0
    %1021 = vmatprep.subr.mxu0 0.0
    %1022 = vmatpush1.msra.mxu0 0.0
    %1023 = vmatprep.subr.mxu0 0.0
    %1024 = vmatpush1.msra.mxu0 0.0
    %1025 = vmatprep.subr.mxu0 0.0
    %1026 = vmatpush1.msra.mxu0 0.0
    %1027 = vmatprep.subr.mxu0 0.0
    %1028 = vmatpush1.msra.mxu0 0.0
    %1029 = vmatprep.subr.mxu0 0.0
    %1030 = vmatpush1.msra.mxu0 0.0
    %1031 = vmatprep.subr.mxu0 0.0
    %1032 = vmatpush1.msra.mxu0 0.0
    %1033 = vmatprep.subr.mxu0 0.0
    %1034 = vmatpush1.msra.mxu0 0.0
    %1035 = vmatprep.subr.mxu0 0.0
    %1036 = vmatpush1.msra.mxu0 0.0
    %1037 = vmatprep.subr.mxu0 0.0
    %1038 = vmatpush1.msra.mxu0 0.0
    %1039 = vmatprep.subr.mxu0 0.0
    %1040 = vmatpush1.msra.mxu0 0.0
    %1041 = vmatprep.subr.mxu0 0.0
    %1042 = vmatpush1.msra.mxu0 0.0
    %1043 = vmatprep.subr.mxu0 0.0
    %1044 = vmatpush1.msra.mxu0 0.0
    %1045 = vmatprep.subr.mxu0 0.0
    %1046 = vmatpush1.msra.mxu0 0.0
    %1047 = vmatprep.subr.mxu0 0.0
    %1048 = vmatpush1.msra.mxu0 0.0
    %1049 = vmatprep.subr.mxu0 0.0
    %1050 = vmatpush1.msra.mxu0 0.0
    %1051 = vmatprep.subr.mxu0 0.0
    %1052 = vmatpush1.msra.mxu0 0.0
    %1053 = vmatprep.subr.mxu0 0.0
    %1054 = vmatpush1.msra.mxu0 0.0
    %1055 = vmatprep.subr.mxu0 0.0
    %1056 = vmatpush1.msra.mxu0 0.0
    %1057 = vmatprep.subr.mxu0 0.0
    %1058 = vmatpush1.msra.mxu0 0.0
    %1059 = vmatprep.subr.mxu0 0.0
    %1060 = vmatpush1.msra.mxu0 0.0
    %1061 = vmatprep.subr.mxu0 0.0
    %1062 = vmatpush1.msra.mxu0 0.0
    %1063 = vmatprep.subr.mxu0 0.0
    %1064 = vmatpush1.msra.mxu0 0.0
    %1065 = vmatprep.subr.mxu0 0.0
    %1066 = vmatpush1.msra.mxu0 0.0
    %1067 = vmatprep.subr.mxu0 0.0
    %1068 = vmatpush1.msra.mxu0 0.0
    %1069 = vmatprep.subr.mxu0 0.0
    %1070 = vmatpush1.msra.mxu0 0.0
    %1071 = vmatprep.subr.mxu0 0.0
    %1072 = vmatpush1.msra.mxu0 0.0
    %1073 = vmatprep.subr.mxu0 0.0
    %1074 = vmatpush1.msra.mxu0 0.0
    %1075 = vmatprep.subr.mxu0 0.0
    %1076 = vmatpush1.msra.mxu0 0.0
    %1077 = vmatprep.subr.mxu0 0.0
    %1078 = vmatpush1.msra.mxu0 0.0
    %1079 = vmatprep.mubr.f32.mxu0 0.0
    %1080 = vmatmul.mubr.f32.gmra.mrb[0].mxu0 %v1013
    %v1081 = vpop.f32.mrb[0].mxu0
    %v1082 = vadd.f32 0.0, %v1081
    %v1083 = vpop.f32.mrb[0].mxu0
    %1084 = vdwg.mxu0
    %v1085 = vld [vmem:[#allocation12] sm:$0xff]
    %v1086 = vld [vmem:[#allocation12 + $0x8] sm:$0xff]
    %v1087 = vld [vmem:[#allocation12 + $0x10] sm:$0xff]
    %v1088 = vld [vmem:[#allocation12 + $0x18] sm:$0xff]
    %v1089 = vld [vmem:[#allocation12 + $0x20] sm:$0xff]
    %v1090 = vld [vmem:[#allocation12 + $0x28] sm:$0xff]
    %v1091 = vld [vmem:[#allocation12 + $0x30] sm:$0xff]
    %v1092 = vld [vmem:[#allocation12 + $0x38] sm:$0xff]
    %v1093 = vld [vmem:[#allocation12 + $0x40] sm:$0xff]
    %v1094 = vld [vmem:[#allocation12 + $0x48] sm:$0xff]
    %v1095 = vld [vmem:[#allocation12 + $0x50] sm:$0xff]
    %v1096 = vld [vmem:[#allocation12 + $0x58] sm:$0xff]
    %v1097 = vld [vmem:[#allocation12 + $0x60] sm:$0xff]
    %v1098 = vld [vmem:[#allocation12 + $0x68] sm:$0xff]
    %v1099 = vld [vmem:[#allocation12 + $0x70] sm:$0xff]
    %v1100 = vld [vmem:[#allocation12 + $0x78] sm:$0xff]
    %v1101 = vld [vmem:[#allocation14] sm:$0xff]
    %v1102 = vld [vmem:[#allocation14 + $0x8] sm:$0xff]
    %v1103 = vld [vmem:[#allocation14 + $0x10] sm:$0xff]
    %v1104 = vld [vmem:[#allocation14 + $0x18] sm:$0xff]
    %v1105 = vld [vmem:[#allocation14 + $0x20] sm:$0xff]
    %v1106 = vld [vmem:[#allocation14 + $0x28] sm:$0xff]
    %v1107 = vld [vmem:[#allocation14 + $0x30] sm:$0xff]
    %v1108 = vld [vmem:[#allocation14 + $0x38] sm:$0xff]
    %v1109 = vld [vmem:[#allocation14 + $0x40] sm:$0xff]
    %v1110 = vld [vmem:[#allocation14 + $0x48] sm:$0xff]
    %v1111 = vld [vmem:[#allocation14 + $0x50] sm:$0xff]
    %v1112 = vld [vmem:[#allocation14 + $0x58] sm:$0xff]
    %v1113 = vld [vmem:[#allocation14 + $0x60] sm:$0xff]
    %v1114 = vld [vmem:[#allocation14 + $0x68] sm:$0xff]
    %v1115 = vld [vmem:[#allocation14 + $0x70] sm:$0xff]
    %v1116 = vld [vmem:[#allocation14 + $0x78] sm:$0xff]
    %1117 = vmatprep.subr.mxu0 0.0
    %1118 = vmatpush1.msra.mxu0 %v1101
    %1119 = vmatprep.subr.mxu0 0.0
    %1120 = vmatpush1.msra.mxu0 %v1102
    %1121 = vmatprep.subr.mxu0 0.0
    %1122 = vmatpush1.msra.mxu0 %v1103
    %1123 = vmatprep.subr.mxu0 0.0
    %1124 = vmatpush1.msra.mxu0 %v1104
    %1125 = vmatprep.subr.mxu0 0.0
    %1126 = vmatpush1.msra.mxu0 %v1105
    %1127 = vmatprep.subr.mxu0 0.0
    %1128 = vmatpush1.msra.mxu0 %v1106
    %1129 = vmatprep.subr.mxu0 0.0
    %1130 = vmatpush1.msra.mxu0 %v1107
    %1131 = vmatprep.subr.mxu0 0.0
    %1132 = vmatpush1.msra.mxu0 %v1108
    %1133 = vmatprep.subr.mxu0 0.0
    %1134 = vmatpush1.msra.mxu0 %v1109
    %1135 = vmatprep.subr.mxu0 0.0
    %1136 = vmatpush1.msra.mxu0 %v1110
    %1137 = vmatprep.subr.mxu0 0.0
    %1138 = vmatpush1.msra.mxu0 %v1111
    %1139 = vmatprep.subr.mxu0 0.0
    %1140 = vmatpush1.msra.mxu0 %v1112
    %1141 = vmatprep.subr.mxu0 0.0
    %1142 = vmatpush1.msra.mxu0 %v1113
    %1143 = vmatprep.subr.mxu0 0.0
    %1144 = vmatpush1.msra.mxu0 %v1114
    %1145 = vmatprep.subr.mxu0 0.0
    %1146 = vmatpush1.msra.mxu0 %v1115
    %1147 = vmatprep.subr.mxu0 0.0
    %1148 = vmatpush1.msra.mxu0 %v1116
    %1149 = vmatprep.subr.mxu0 0.0
    %1150 = vmatpush1.msra.mxu0 0.0
    %1151 = vmatprep.subr.mxu0 0.0
    %1152 = vmatpush1.msra.mxu0 0.0
    %1153 = vmatprep.subr.mxu0 0.0
    %1154 = vmatpush1.msra.mxu0 0.0
    %1155 = vmatprep.subr.mxu0 0.0
    %1156 = vmatpush1.msra.mxu0 0.0
    %1157 = vmatprep.subr.mxu0 0.0
    %1158 = vmatpush1.msra.mxu0 0.0
    %1159 = vmatprep.subr.mxu0 0.0
    %1160 = vmatpush1.msra.mxu0 0.0
    %1161 = vmatprep.subr.mxu0 0.0
    %1162 = vmatpush1.msra.mxu0 0.0
    %1163 = vmatprep.subr.mxu0 0.0
    %1164 = vmatpush1.msra.mxu0 0.0
    %1165 = vmatprep.subr.mxu0 0.0
    %1166 = vmatpush1.msra.mxu0 0.0
    %1167 = vmatprep.subr.mxu0 0.0
    %1168 = vmatpush1.msra.mxu0 0.0
    %1169 = vmatprep.subr.mxu0 0.0
    %1170 = vmatpush1.msra.mxu0 0.0
    %1171 = vmatprep.subr.mxu0 0.0
    %1172 = vmatpush1.msra.mxu0 0.0
    %1173 = vmatprep.subr.mxu0 0.0
    %1174 = vmatpush1.msra.mxu0 0.0
    %1175 = vmatprep.subr.mxu0 0.0
    %1176 = vmatpush1.msra.mxu0 0.0
    %1177 = vmatprep.subr.mxu0 0.0
    %1178 = vmatpush1.msra.mxu0 0.0
    %1179 = vmatprep.subr.mxu0 0.0
    %1180 = vmatpush1.msra.mxu0 0.0
    %1181 = vmatprep.mubr.f32.mxu0 0.0
    %1182 = vmatmul.mubr.f32.gmra.mrb[0].mxu0 %v244
    %v1183 = vpop.f32.mrb[0].mxu0
    %v1184 = vadd.f32 0.0, %v1183
    %v1185 = vpop.f32.mrb[0].mxu0
    %1186 = vmatprep.mubr.f32.mxu0 0.0
    %1187 = vmatmul.mubr.f32.gmra.mrb[0].mxu0 %v245
    %v1188 = vpop.f32.mrb[0].mxu0
    %v1189 = vadd.f32 0.0, %v1188
    %v1190 = vpop.f32.mrb[0].mxu0
    %1191 = vdwg.mxu0
    %1192 = vmatprep.subr.mxu0 0.0
    %1193 = vmatpush1.msra.mxu0 %v1085
    %1194 = vmatprep.subr.mxu0 0.0
    %1195 = vmatpush1.msra.mxu0 %v1086
    %1196 = vmatprep.subr.mxu0 0.0
    %1197 = vmatpush1.msra.mxu0 %v1087
    %1198 = vmatprep.subr.mxu0 0.0
    %1199 = vmatpush1.msra.mxu0 %v1088
    %1200 = vmatprep.subr.mxu0 0.0
    %1201 = vmatpush1.msra.mxu0 %v1089
    %1202 = vmatprep.subr.mxu0 0.0
    %1203 = vmatpush1.msra.mxu0 %v1090
    %1204 = vmatprep.subr.mxu0 0.0
    %1205 = vmatpush1.msra.mxu0 %v1091
    %1206 = vmatprep.subr.mxu0 0.0
    %1207 = vmatpush1.msra.mxu0 %v1092
    %1208 = vmatprep.subr.mxu0 0.0
    %1209 = vmatpush1.msra.mxu0 %v1093
    %1210 = vmatprep.subr.mxu0 0.0
    %1211 = vmatpush1.msra.mxu0 %v1094
    %1212 = vmatprep.subr.mxu0 0.0
    %1213 = vmatpush1.msra.mxu0 %v1095
    %1214 = vmatprep.subr.mxu0 0.0
    %1215 = vmatpush1.msra.mxu0 %v1096
    %1216 = vmatprep.subr.mxu0 0.0
    %1217 = vmatpush1.msra.mxu0 %v1097
    %1218 = vmatprep.subr.mxu0 0.0
    %1219 = vmatpush1.msra.mxu0 %v1098
    %1220 = vmatprep.subr.mxu0 0.0
    %1221 = vmatpush1.msra.mxu0 %v1099
    %1222 = vmatprep.subr.mxu0 0.0
    %1223 = vmatpush1.msra.mxu0 %v1100
    %1224 = vmatprep.subr.mxu0 0.0
    %1225 = vmatpush1.msra.mxu0 0.0
    %1226 = vmatprep.subr.mxu0 0.0
    %1227 = vmatpush1.msra.mxu0 0.0
    %1228 = vmatprep.subr.mxu0 0.0
    %1229 = vmatpush1.msra.mxu0 0.0
    %1230 = vmatprep.subr.mxu0 0.0
    %1231 = vmatpush1.msra.mxu0 0.0
    %1232 = vmatprep.subr.mxu0 0.0
    %1233 = vmatpush1.msra.mxu0 0.0
    %1234 = vmatprep.subr.mxu0 0.0
    %1235 = vmatpush1.msra.mxu0 0.0
    %1236 = vmatprep.subr.mxu0 0.0
    %1237 = vmatpush1.msra.mxu0 0.0
    %1238 = vmatprep.subr.mxu0 0.0
    %1239 = vmatpush1.msra.mxu0 0.0
    %1240 = vmatprep.subr.mxu0 0.0
    %1241 = vmatpush1.msra.mxu0 0.0
    %1242 = vmatprep.subr.mxu0 0.0
    %1243 = vmatpush1.msra.mxu0 0.0
    %1244 = vmatprep.subr.mxu0 0.0
    %1245 = vmatpush1.msra.mxu0 0.0
    %1246 = vmatprep.subr.mxu0 0.0
    %1247 = vmatpush1.msra.mxu0 0.0
    %1248 = vmatprep.subr.mxu0 0.0
    %1249 = vmatpush1.msra.mxu0 0.0
    %1250 = vmatprep.subr.mxu0 0.0
    %1251 = vmatpush1.msra.mxu0 0.0
    %1252 = vmatprep.subr.mxu0 0.0
    %1253 = vmatpush1.msra.mxu0 0.0
    %1254 = vmatprep.subr.mxu0 0.0
    %1255 = vmatpush1.msra.mxu0 0.0
    %1256 = vmatprep.mubr.f32.mxu0 0.0
    %1257 = vmatmul.mubr.f32.gmra.mrb[0].mxu0 %v1009
    %v1258 = vpop.f32.mrb[0].mxu0
    %v1259 = vadd.f32 %v1184, %v1258
    %v1260 = vpop.f32.mrb[0].mxu0
    %1261 = vmatprep.mubr.f32.mxu0 0.0
    %1262 = vmatmul.mubr.f32.gmra.mrb[0].mxu0 %v1082
    %v1263 = vpop.f32.mrb[0].mxu0
    %v1264 = vadd.f32 %v1189, %v1263
    %v1265 = vpop.f32.mrb[0].mxu0
    %1266 = vdwg.mxu0
    %v1267 = vld [vmem:[%s9] sm:$0x1]
    %v1269 = vlaneseq
    %v1270 = vshrl.u32 %v1269, 7
    %v1271 = vsub.s32 0, %v1270
    %v1272 = vrot.slane %v1267, %v1271
    %v1274 = vadd.f32 %v1259, %v1272
    %v1275 = vadd.f32 %v1264, %v1272
    %v1276 = vtanh.pop %v1274
    %v1277 = vtanh.pop %v1275
    %1278 = vst [vmem:[#allocation2] sm:$0xff] %v1276
    %s1279 = scalar_lea.vmem [#allocation2], 8
    %1280 = vst [vmem:[%s1279] sm:$0xff] %v1277
    %v1281 = vld [vmem:[#allocation2] sm:$0xff]
    %v1282 = vld [vmem:[#allocation2 + $0x8] sm:$0xff]
    %v1283 = vld [vmem:[#allocation3] sm:$0x3]
    %v1284 = vld [vmem:[#allocation15] sm:$0xff]
    %v1285 = vld [vmem:[#allocation15 + $0x8] sm:$0xff]
    %v1286 = vld [vmem:[#allocation15 + $0x10] sm:$0xff]
    %v1287 = vld [vmem:[#allocation15 + $0x18] sm:$0xff]
    %v1288 = vld [vmem:[#allocation15 + $0x20] sm:$0xff]
    %v1289 = vld [vmem:[#allocation15 + $0x28] sm:$0xff]
    %v1290 = vld [vmem:[%s12] sm:$0x7]
    %v1292 = vlaneseq
    %v1293 = vshrl.u32 %v1292, 7
    %v1294 = vsub.s32 0, %v1293
    %v1295 = vrot.slane %v1290, %v1294
    %v1296 = vlaneseq
    %v1297 = vshrl.u32 %v1296, 7
    %v1298 = vsub.s32 1, %v1297
    %v1299 = vrot.slane %v1290, %v1298
    %v1300 = vlaneseq
    %v1301 = vshrl.u32 %v1300, 7
    %v1302 = vsub.s32 2, %v1301
    %v1303 = vrot.slane %v1290, %v1302
    %vm1307 = vcmask 130048
    %v1309 = vsel %vm1307, %v1283, 0
    %1311 = vmatprep.subr.mxu0 %v1285
    %1312 = vmatpush1.msra.mxu0 %v1284
    %1313 = vmatprep.subr.mxu0 %v1288
    %1314 = vmatpush1.msra.mxu0 %v1287
    %1315 = vmatprep.subr.mxu0 0.0
    %1316 = vmatpush1.msra.mxu0 0.0
    %1317 = vmatprep.subr.mxu0 0.0
    %1318 = vmatpush1.msra.mxu0 0.0
    %1319 = vmatprep.subr.mxu0 0.0
    %1320 = vmatpush1.msra.mxu0 0.0
    %1321 = vmatprep.subr.mxu0 0.0
    %1322 = vmatpush1.msra.mxu0 0.0
    %1323 = vmatprep.subr.mxu0 0.0
    %1324 = vmatpush1.msra.mxu0 0.0
    %1325 = vmatprep.subr.mxu0 0.0
    %1326 = vmatpush1.msra.mxu0 0.0
    %1327 = vmatprep.subr.mxu0 0.0
    %1328 = vmatpush1.msra.mxu0 0.0
    %1329 = vmatprep.subr.mxu0 0.0
    %1330 = vmatpush1.msra.mxu0 0.0
    %1331 = vmatprep.subr.mxu0 0.0
    %1332 = vmatpush1.msra.mxu0 0.0
    %1333 = vmatprep.subr.mxu0 0.0
    %1334 = vmatpush1.msra.mxu0 0.0
    %1335 = vmatprep.subr.mxu0 0.0
    %1336 = vmatpush1.msra.mxu0 0.0
    %1337 = vmatprep.subr.mxu0 0.0
    %1338 = vmatpush1.msra.mxu0 0.0
    %1339 = vmatprep.subr.mxu0 0.0
    %1340 = vmatpush1.msra.mxu0 0.0
    %1341 = vmatprep.subr.mxu0 0.0
    %1342 = vmatpush1.msra.mxu0 0.0
    %1343 = vmatprep.subr.mxu0 0.0
    %1344 = vmatpush1.msra.mxu0 0.0
    %1345 = vmatprep.subr.mxu0 0.0
    %1346 = vmatpush1.msra.mxu0 0.0
    %1347 = vmatprep.subr.mxu0 0.0
    %1348 = vmatpush1.msra.mxu0 0.0
    %1349 = vmatprep.subr.mxu0 0.0
    %1350 = vmatpush1.msra.mxu0 0.0
    %1351 = vmatprep.subr.mxu0 0.0
    %1352 = vmatpush1.msra.mxu0 0.0
    %1353 = vmatprep.subr.mxu0 0.0
    %1354 = vmatpush1.msra.mxu0 0.0
    %1355 = vmatprep.subr.mxu0 0.0
    %1356 = vmatpush1.msra.mxu0 0.0
    %1357 = vmatprep.subr.mxu0 0.0
    %1358 = vmatpush1.msra.mxu0 0.0
    %1359 = vmatprep.subr.mxu0 0.0
    %1360 = vmatpush1.msra.mxu0 0.0
    %1361 = vmatprep.subr.mxu0 0.0
    %1362 = vmatpush1.msra.mxu0 0.0
    %1363 = vmatprep.subr.mxu0 0.0
    %1364 = vmatpush1.msra.mxu0 0.0
    %1365 = vmatprep.subr.mxu0 0.0
    %1366 = vmatpush1.msra.mxu0 0.0
    %1367 = vmatprep.subr.mxu0 0.0
    %1368 = vmatpush1.msra.mxu0 0.0
    %1369 = vmatprep.subr.mxu0 0.0
    %1370 = vmatpush1.msra.mxu0 0.0
    %1371 = vmatprep.subr.mxu0 0.0
    %1372 = vmatpush1.msra.mxu0 0.0
    %1373 = vmatprep.subr.mxu0 0.0
    %1374 = vmatpush1.msra.mxu0 0.0
    %1375 = vmatprep.mubr.f32.mxu0 0.0
    %1376 = vmatmul.mubr.f32.gmra.mrb[0].mxu0 %v1309
    %v1377 = vpop.f32.mrb[0].mxu0
    %v1378 = vadd.f32 %v1295, %v1377
    %v1379 = vpop.f32.mrb[0].mxu0
    %v1380 = vadd.f32 %v1299, %v1379
    %1381 = vdwg.mxu0
    %1382 = vmatprep.subr.mxu0 0.0
    %1383 = vmatpush1.msra.mxu0 %v1286
    %1384 = vmatprep.subr.mxu0 0.0
    %1385 = vmatpush1.msra.mxu0 %v1289
    %1386 = vmatprep.subr.mxu0 0.0
    %1387 = vmatpush1.msra.mxu0 0.0
    %1388 = vmatprep.subr.mxu0 0.0
    %1389 = vmatpush1.msra.mxu0 0.0
    %1390 = vmatprep.subr.mxu0 0.0
    %1391 = vmatpush1.msra.mxu0 0.0
    %1392 = vmatprep.subr.mxu0 0.0
    %1393 = vmatpush1.msra.mxu0 0.0
    %1394 = vmatprep.subr.mxu0 0.0
    %1395 = vmatpush1.msra.mxu0 0.0
    %1396 = vmatprep.subr.mxu0 0.0
    %1397 = vmatpush1.msra.mxu0 0.0
    %1398 = vmatprep.subr.mxu0 0.0
    %1399 = vmatpush1.msra.mxu0 0.0
    %1400 = vmatprep.subr.mxu0 0.0
    %1401 = vmatpush1.msra.mxu0 0.0
    %1402 = vmatprep.subr.mxu0 0.0
    %1403 = vmatpush1.msra.mxu0 0.0
    %1404 = vmatprep.subr.mxu0 0.0
    %1405 = vmatpush1.msra.mxu0 0.0
    %1406 = vmatprep.subr.mxu0 0.0
    %1407 = vmatpush1.msra.mxu0 0.0
    %1408 = vmatprep.subr.mxu0 0.0
    %1409 = vmatpush1.msra.mxu0 0.0
    %1410 = vmatprep.subr.mxu0 0.0
    %1411 = vmatpush1.msra.mxu0 0.0
    %1412 = vmatprep.subr.mxu0 0.0
    %1413 = vmatpush1.msra.mxu0 0.0
    %1414 = vmatprep.subr.mxu0 0.0
    %1415 = vmatpush1.msra.mxu0 0.0
    %1416 = vmatprep.subr.mxu0 0.0
    %1417 = vmatpush1.msra.mxu0 0.0
    %1418 = vmatprep.subr.mxu0 0.0
    %1419 = vmatpush1.msra.mxu0 0.0
    %1420 = vmatprep.subr.mxu0 0.0
    %1421 = vmatpush1.msra.mxu0 0.0
    %1422 = vmatprep.subr.mxu0 0.0
    %1423 = vmatpush1.msra.mxu0 0.0
    %1424 = vmatprep.subr.mxu0 0.0
    %1425 = vmatpush1.msra.mxu0 0.0
    %1426 = vmatprep.subr.mxu0 0.0
    %1427 = vmatpush1.msra.mxu0 0.0
    %1428 = vmatprep.subr.mxu0 0.0
    %1429 = vmatpush1.msra.mxu0 0.0
    %1430 = vmatprep.subr.mxu0 0.0
    %1431 = vmatpush1.msra.mxu0 0.0
    %1432 = vmatprep.subr.mxu0 0.0
    %1433 = vmatpush1.msra.mxu0 0.0
    %1434 = vmatprep.subr.mxu0 0.0
    %1435 = vmatpush1.msra.mxu0 0.0
    %1436 = vmatprep.subr.mxu0 0.0
    %1437 = vmatpush1.msra.mxu0 0.0
    %1438 = vmatprep.subr.mxu0 0.0
    %1439 = vmatpush1.msra.mxu0 0.0
    %1440 = vmatprep.subr.mxu0 0.0
    %1441 = vmatpush1.msra.mxu0 0.0
    %1442 = vmatprep.subr.mxu0 0.0
    %1443 = vmatpush1.msra.mxu0 0.0
    %1444 = vmatprep.subr.mxu0 0.0
    %1445 = vmatpush1.msra.mxu0 0.0
    %1446 = vmatprep.mubr.f32.mxu0 0.0
    %1447 = vmatmul.mubr.f32.gmra.mrb[0].mxu0 %v1309
    %v1448 = vpop.f32.mrb[0].mxu0
    %v1449 = vadd.f32 %v1303, %v1448
    %v1450 = vpop.f32.mrb[0].mxu0
    %1451 = vdwg.mxu0
    %v1452 = vld [vmem:[#allocation17] sm:$0xff]
    %v1453 = vld [vmem:[#allocation17 + $0x8] sm:$0xff]
    %v1454 = vld [vmem:[#allocation17 + $0x10] sm:$0xff]
    %v1455 = vld [vmem:[#allocation17 + $0x18] sm:$0xff]
    %v1456 = vld [vmem:[#allocation17 + $0x20] sm:$0xff]
    %v1457 = vld [vmem:[#allocation17 + $0x28] sm:$0xff]
    %v1458 = vld [vmem:[#allocation17 + $0x30] sm:$0xff]
    %v1459 = vld [vmem:[#allocation17 + $0x38] sm:$0xff]
    %v1460 = vld [vmem:[#allocation17 + $0x40] sm:$0xff]
    %v1461 = vld [vmem:[#allocation17 + $0x48] sm:$0xff]
    %v1462 = vld [vmem:[#allocation17 + $0x50] sm:$0xff]
    %v1463 = vld [vmem:[#allocation17 + $0x58] sm:$0xff]
    %v1464 = vld [vmem:[#allocation17 + $0x60] sm:$0xff]
    %v1465 = vld [vmem:[#allocation17 + $0x68] sm:$0xff]
    %v1466 = vld [vmem:[#allocation17 + $0x70] sm:$0xff]
    %v1467 = vld [vmem:[#allocation17 + $0x78] sm:$0xff]
    %v1468 = vld [vmem:[#allocation17 + $0x80] sm:$0xff]
    %v1469 = vld [vmem:[#allocation17 + $0x88] sm:$0xff]
    %v1470 = vld [vmem:[#allocation17 + $0x90] sm:$0xff]
    %v1471 = vld [vmem:[#allocation17 + $0x98] sm:$0xff]
    %v1472 = vld [vmem:[#allocation17 + $0xa0] sm:$0xff]
    %v1473 = vld [vmem:[#allocation17 + $0xa8] sm:$0xff]
    %v1474 = vld [vmem:[#allocation17 + $0xb0] sm:$0xff]
    %v1475 = vld [vmem:[#allocation17 + $0xb8] sm:$0xff]
    %v1476 = vld [vmem:[#allocation17 + $0xc0] sm:$0xff]
    %v1477 = vld [vmem:[#allocation17 + $0xc8] sm:$0xff]
    %v1478 = vld [vmem:[#allocation17 + $0xd0] sm:$0xff]
    %v1479 = vld [vmem:[#allocation17 + $0xd8] sm:$0xff]
    %v1480 = vld [vmem:[#allocation17 + $0xe0] sm:$0xff]
    %v1481 = vld [vmem:[#allocation17 + $0xe8] sm:$0xff]
    %v1482 = vld [vmem:[#allocation17 + $0xf0] sm:$0xff]
    %v1483 = vld [vmem:[#allocation17 + $0xf8] sm:$0xff]
    %v1484 = vld [vmem:[#allocation17 + $0x100] sm:$0xff]
    %v1485 = vld [vmem:[#allocation17 + $0x108] sm:$0xff]
    %v1486 = vld [vmem:[#allocation17 + $0x110] sm:$0xff]
    %v1487 = vld [vmem:[#allocation17 + $0x118] sm:$0xff]
    %v1488 = vld [vmem:[#allocation17 + $0x120] sm:$0xff]
    %v1489 = vld [vmem:[#allocation17 + $0x128] sm:$0xff]
    %v1490 = vld [vmem:[#allocation17 + $0x130] sm:$0xff]
    %v1491 = vld [vmem:[#allocation17 + $0x138] sm:$0xff]
    %v1492 = vld [vmem:[#allocation17 + $0x140] sm:$0xff]
    %v1493 = vld [vmem:[#allocation17 + $0x148] sm:$0xff]
    %v1494 = vld [vmem:[#allocation17 + $0x150] sm:$0xff]
    %v1495 = vld [vmem:[#allocation17 + $0x158] sm:$0xff]
    %v1496 = vld [vmem:[#allocation17 + $0x160] sm:$0xff]
    %v1497 = vld [vmem:[#allocation17 + $0x168] sm:$0xff]
    %v1498 = vld [vmem:[#allocation17 + $0x170] sm:$0xff]
    %v1499 = vld [vmem:[#allocation17 + $0x178] sm:$0xff]
    %v1500 = vld [vmem:[%s13] sm:$0x7]
    %v1502 = vlaneseq
    %v1503 = vshrl.u32 %v1502, 7
    %v1504 = vsub.s32 0, %v1503
    %v1505 = vrot.slane %v1500, %v1504
    %v1506 = vlaneseq
    %v1507 = vshrl.u32 %v1506, 7
    %v1508 = vsub.s32 1, %v1507
    %v1509 = vrot.slane %v1500, %v1508
    %v1510 = vlaneseq
    %v1511 = vshrl.u32 %v1510, 7
    %v1512 = vsub.s32 2, %v1511
    %v1513 = vrot.slane %v1500, %v1512
    %1517 = vmatprep.subr.mxu0 %v1453
    %1518 = vmatpush1.msra.mxu0 %v1452
    %1519 = vmatprep.subr.mxu0 %v1456
    %1520 = vmatpush1.msra.mxu0 %v1455
    %1521 = vmatprep.subr.mxu0 %v1459
    %1522 = vmatpush1.msra.mxu0 %v1458
    %1523 = vmatprep.subr.mxu0 %v1462
    %1524 = vmatpush1.msra.mxu0 %v1461
    %1525 = vmatprep.subr.mxu0 %v1465
    %1526 = vmatpush1.msra.mxu0 %v1464
    %1527 = vmatprep.subr.mxu0 %v1468
    %1528 = vmatpush1.msra.mxu0 %v1467
    %1529 = vmatprep.subr.mxu0 %v1471
    %1530 = vmatpush1.msra.mxu0 %v1470
    %1531 = vmatprep.subr.mxu0 %v1474
    %1532 = vmatpush1.msra.mxu0 %v1473
    %1533 = vmatprep.subr.mxu0 %v1477
    %1534 = vmatpush1.msra.mxu0 %v1476
    %1535 = vmatprep.subr.mxu0 %v1480
    %1536 = vmatpush1.msra.mxu0 %v1479
    %1537 = vmatprep.subr.mxu0 %v1483
    %1538 = vmatpush1.msra.mxu0 %v1482
    %1539 = vmatprep.subr.mxu0 %v1486
    %1540 = vmatpush1.msra.mxu0 %v1485
    %1541 = vmatprep.subr.mxu0 %v1489
    %1542 = vmatpush1.msra.mxu0 %v1488
    %1543 = vmatprep.subr.mxu0 %v1492
    %1544 = vmatpush1.msra.mxu0 %v1491
    %1545 = vmatprep.subr.mxu0 %v1495
    %1546 = vmatpush1.msra.mxu0 %v1494
    %1547 = vmatprep.subr.mxu0 %v1498
    %1548 = vmatpush1.msra.mxu0 %v1497
    %1549 = vmatprep.subr.mxu0 0.0
    %1550 = vmatpush1.msra.mxu0 0.0
    %1551 = vmatprep.subr.mxu0 0.0
    %1552 = vmatpush1.msra.mxu0 0.0
    %1553 = vmatprep.subr.mxu0 0.0
    %1554 = vmatpush1.msra.mxu0 0.0
    %1555 = vmatprep.subr.mxu0 0.0
    %1556 = vmatpush1.msra.mxu0 0.0
    %1557 = vmatprep.subr.mxu0 0.0
    %1558 = vmatpush1.msra.mxu0 0.0
    %1559 = vmatprep.subr.mxu0 0.0
    %1560 = vmatpush1.msra.mxu0 0.0
    %1561 = vmatprep.subr.mxu0 0.0
    %1562 = vmatpush1.msra.mxu0 0.0
    %1563 = vmatprep.subr.mxu0 0.0
    %1564 = vmatpush1.msra.mxu0 0.0
    %1565 = vmatprep.subr.mxu0 0.0
    %1566 = vmatpush1.msra.mxu0 0.0
    %1567 = vmatprep.subr.mxu0 0.0
    %1568 = vmatpush1.msra.mxu0 0.0
    %1569 = vmatprep.subr.mxu0 0.0
    %1570 = vmatpush1.msra.mxu0 0.0
    %1571 = vmatprep.subr.mxu0 0.0
    %1572 = vmatpush1.msra.mxu0 0.0
    %1573 = vmatprep.subr.mxu0 0.0
    %1574 = vmatpush1.msra.mxu0 0.0
    %1575 = vmatprep.subr.mxu0 0.0
    %1576 = vmatpush1.msra.mxu0 0.0
    %1577 = vmatprep.subr.mxu0 0.0
    %1578 = vmatpush1.msra.mxu0 0.0
    %1579 = vmatprep.subr.mxu0 0.0
    %1580 = vmatpush1.msra.mxu0 0.0
    %1581 = vmatprep.mubr.f32.mxu0 0.0
    %1582 = vmatmul.mubr.f32.gmra.mrb[0].mxu0 %v776
    %v1583 = vpop.f32.mrb[0].mxu0
    %v1584 = vadd.f32 %v1505, %v1583
    %v1585 = vpop.f32.mrb[0].mxu0
    %v1586 = vadd.f32 %v1509, %v1585
    %1587 = vdwg.mxu0
    %1588 = vmatprep.subr.mxu0 0.0
    %1589 = vmatpush1.msra.mxu0 %v1454
    %1590 = vmatprep.subr.mxu0 0.0
    %1591 = vmatpush1.msra.mxu0 %v1457
    %1592 = vmatprep.subr.mxu0 0.0
    %1593 = vmatpush1.msra.mxu0 %v1460
    %1594 = vmatprep.subr.mxu0 0.0
    %1595 = vmatpush1.msra.mxu0 %v1463
    %1596 = vmatprep.subr.mxu0 0.0
    %1597 = vmatpush1.msra.mxu0 %v1466
    %1598 = vmatprep.subr.mxu0 0.0
    %1599 = vmatpush1.msra.mxu0 %v1469
    %1600 = vmatprep.subr.mxu0 0.0
    %1601 = vmatpush1.msra.mxu0 %v1472
    %1602 = vmatprep.subr.mxu0 0.0
    %1603 = vmatpush1.msra.mxu0 %v1475
    %1604 = vmatprep.subr.mxu0 0.0
    %1605 = vmatpush1.msra.mxu0 %v1478
    %1606 = vmatprep.subr.mxu0 0.0
    %1607 = vmatpush1.msra.mxu0 %v1481
    %1608 = vmatprep.subr.mxu0 0.0
    %1609 = vmatpush1.msra.mxu0 %v1484
    %1610 = vmatprep.subr.mxu0 0.0
    %1611 = vmatpush1.msra.mxu0 %v1487
    %1612 = vmatprep.subr.mxu0 0.0
    %1613 = vmatpush1.msra.mxu0 %v1490
    %1614 = vmatprep.subr.mxu0 0.0
    %1615 = vmatpush1.msra.mxu0 %v1493
    %1616 = vmatprep.subr.mxu0 0.0
    %1617 = vmatpush1.msra.mxu0 %v1496
    %1618 = vmatprep.subr.mxu0 0.0
    %1619 = vmatpush1.msra.mxu0 %v1499
    %1620 = vmatprep.subr.mxu0 0.0
    %1621 = vmatpush1.msra.mxu0 0.0
    %1622 = vmatprep.subr.mxu0 0.0
    %1623 = vmatpush1.msra.mxu0 0.0
    %1624 = vmatprep.subr.mxu0 0.0
    %1625 = vmatpush1.msra.mxu0 0.0
    %1626 = vmatprep.subr.mxu0 0.0
    %1627 = vmatpush1.msra.mxu0 0.0
    %1628 = vmatprep.subr.mxu0 0.0
    %1629 = vmatpush1.msra.mxu0 0.0
    %1630 = vmatprep.subr.mxu0 0.0
    %1631 = vmatpush1.msra.mxu0 0.0
    %1632 = vmatprep.subr.mxu0 0.0
    %1633 = vmatpush1.msra.mxu0 0.0
    %1634 = vmatprep.subr.mxu0 0.0
    %1635 = vmatpush1.msra.mxu0 0.0
    %1636 = vmatprep.subr.mxu0 0.0
    %1637 = vmatpush1.msra.mxu0 0.0
    %1638 = vmatprep.subr.mxu0 0.0
    %1639 = vmatpush1.msra.mxu0 0.0
    %1640 = vmatprep.subr.mxu0 0.0
    %1641 = vmatpush1.msra.mxu0 0.0
    %1642 = vmatprep.subr.mxu0 0.0
    %1643 = vmatpush1.msra.mxu0 0.0
    %1644 = vmatprep.subr.mxu0 0.0
    %1645 = vmatpush1.msra.mxu0 0.0
    %1646 = vmatprep.subr.mxu0 0.0
    %1647 = vmatpush1.msra.mxu0 0.0
    %1648 = vmatprep.subr.mxu0 0.0
    %1649 = vmatpush1.msra.mxu0 0.0
    %1650 = vmatprep.subr.mxu0 0.0
    %1651 = vmatpush1.msra.mxu0 0.0
    %1652 = vmatprep.mubr.f32.mxu0 0.0
    %1653 = vmatmul.mubr.f32.gmra.mrb[0].mxu0 %v776
    %v1654 = vpop.f32.mrb[0].mxu0
    %v1655 = vadd.f32 %v1513, %v1654
    %v1656 = vpop.f32.mrb[0].mxu0
    %1657 = vdwg.mxu0
    %v1658 = vadd.f32 %v1378, %v1584
    %v1659 = vxor.u32 %v1658, 2147483648
    %v1660 = vmul.f32 %v1659, 1.442695
    %v1661 = vpow.pop %v1660
    %v1662 = vadd.f32 %v1661, 1.0
    %v1663 = vrcp.pop %v1662
    %v1664 = vmul.f32 1.0, %v1663
    %v1665 = vadd.f32 %v1380, %v1586
    %v1666 = vxor.u32 %v1665, 2147483648
    %v1667 = vmul.f32 %v1666, 1.442695
    %v1668 = vpow.pop %v1667
    %v1669 = vadd.f32 %v1668, 1.0
    %v1670 = vrcp.pop %v1669
    %v1671 = vmul.f32 1.0, %v1670
    %v1672 = vmul.f32 %v1664, %v1655
    %v1673 = vadd.f32 %v1449, %v1672
    %v1674 = vtanh.pop %v1673
    %v1675 = vsub.f32 1.0, %v1671
    %v1676 = vmul.f32 %v1675, %v1674
    %v1677 = vmul.f32 %v1671, %v776
    %v1678 = vadd.f32 %v1676, %v1677
    %v1679 = vld [vmem:[#allocation18] sm:$0xff]
    %v1680 = vld [vmem:[#allocation18 + $0x8] sm:$0xff]
    %v1681 = vld [vmem:[#allocation18 + $0x10] sm:$0xff]
    %v1682 = vld [vmem:[#allocation18 + $0x18] sm:$0xff]
    %v1683 = vld [vmem:[#allocation18 + $0x20] sm:$0xff]
    %v1684 = vld [vmem:[#allocation18 + $0x28] sm:$0xff]
    %v1685 = vld [vmem:[#allocation18 + $0x30] sm:$0xff]
    %v1686 = vld [vmem:[#allocation18 + $0x38] sm:$0xff]
    %v1687 = vld [vmem:[#allocation18 + $0x40] sm:$0xff]
    %v1688 = vld [vmem:[#allocation18 + $0x48] sm:$0xff]
    %v1689 = vld [vmem:[#allocation18 + $0x50] sm:$0xff]
    %v1690 = vld [vmem:[#allocation18 + $0x58] sm:$0xff]
    %v1691 = vld [vmem:[#allocation18 + $0x60] sm:$0xff]
    %v1692 = vld [vmem:[#allocation18 + $0x68] sm:$0xff]
    %v1693 = vld [vmem:[#allocation18 + $0x70] sm:$0xff]
    %v1694 = vld [vmem:[#allocation18 + $0x78] sm:$0xff]
    %v1695 = vld [vmem:[#allocation18 + $0x80] sm:$0xff]
    %v1696 = vld [vmem:[#allocation18 + $0x88] sm:$0xff]
    %v1697 = vld [vmem:[#allocation18 + $0x90] sm:$0xff]
    %v1698 = vld [vmem:[#allocation18 + $0x98] sm:$0xff]
    %v1699 = vld [vmem:[#allocation18 + $0xa0] sm:$0xff]
    %v1700 = vld [vmem:[#allocation18 + $0xa8] sm:$0xff]
    %v1701 = vld [vmem:[#allocation18 + $0xb0] sm:$0xff]
    %v1702 = vld [vmem:[#allocation18 + $0xb8] sm:$0xff]
    %v1703 = vld [vmem:[#allocation18 + $0xc0] sm:$0xff]
    %v1704 = vld [vmem:[#allocation18 + $0xc8] sm:$0xff]
    %v1705 = vld [vmem:[#allocation18 + $0xd0] sm:$0xff]
    %v1706 = vld [vmem:[#allocation18 + $0xd8] sm:$0xff]
    %v1707 = vld [vmem:[#allocation18 + $0xe0] sm:$0xff]
    %v1708 = vld [vmem:[#allocation18 + $0xe8] sm:$0xff]
    %v1709 = vld [vmem:[#allocation18 + $0xf0] sm:$0xff]
    %v1710 = vld [vmem:[#allocation18 + $0xf8] sm:$0xff]
    %v1711 = vld [vmem:[#allocation18 + $0x100] sm:$0xff]
    %v1712 = vld [vmem:[#allocation18 + $0x108] sm:$0xff]
    %v1713 = vld [vmem:[#allocation18 + $0x110] sm:$0xff]
    %v1714 = vld [vmem:[#allocation18 + $0x118] sm:$0xff]
    %v1715 = vld [vmem:[#allocation18 + $0x120] sm:$0xff]
    %v1716 = vld [vmem:[#allocation18 + $0x128] sm:$0xff]
    %v1717 = vld [vmem:[#allocation18 + $0x130] sm:$0xff]
    %v1718 = vld [vmem:[#allocation18 + $0x138] sm:$0xff]
    %v1719 = vld [vmem:[#allocation18 + $0x140] sm:$0xff]
    %v1720 = vld [vmem:[#allocation18 + $0x148] sm:$0xff]
    %v1721 = vld [vmem:[#allocation18 + $0x150] sm:$0xff]
    %v1722 = vld [vmem:[#allocation18 + $0x158] sm:$0xff]
    %v1723 = vld [vmem:[#allocation18 + $0x160] sm:$0xff]
    %v1724 = vld [vmem:[#allocation18 + $0x168] sm:$0xff]
    %v1725 = vld [vmem:[#allocation18 + $0x170] sm:$0xff]
    %v1726 = vld [vmem:[#allocation18 + $0x178] sm:$0xff]
    %v1727 = vld [vmem:[%s16] sm:$0x7]
    %v1729 = vlaneseq
    %v1730 = vshrl.u32 %v1729, 7
    %v1731 = vsub.s32 0, %v1730
    %v1732 = vrot.slane %v1727, %v1731
    %v1733 = vlaneseq
    %v1734 = vshrl.u32 %v1733, 7
    %v1735 = vsub.s32 1, %v1734
    %v1736 = vrot.slane %v1727, %v1735
    %v1737 = vlaneseq
    %v1738 = vshrl.u32 %v1737, 7
    %v1739 = vsub.s32 2, %v1738
    %v1740 = vrot.slane %v1727, %v1739
    %1744 = vmatprep.subr.mxu0 %v1680
    %1745 = vmatpush1.msra.mxu0 %v1679
    %1746 = vmatprep.subr.mxu0 %v1683
    %1747 = vmatpush1.msra.mxu0 %v1682
    %1748 = vmatprep.subr.mxu0 %v1686
    %1749 = vmatpush1.msra.mxu0 %v1685
    %1750 = vmatprep.subr.mxu0 %v1689
    %1751 = vmatpush1.msra.mxu0 %v1688
    %1752 = vmatprep.subr.mxu0 %v1692
    %1753 = vmatpush1.msra.mxu0 %v1691
    %1754 = vmatprep.subr.mxu0 %v1695
    %1755 = vmatpush1.msra.mxu0 %v1694
    %1756 = vmatprep.subr.mxu0 %v1698
    %1757 = vmatpush1.msra.mxu0 %v1697
    %1758 = vmatprep.subr.mxu0 %v1701
    %1759 = vmatpush1.msra.mxu0 %v1700
    %1760 = vmatprep.subr.mxu0 %v1704
    %1761 = vmatpush1.msra.mxu0 %v1703
    %1762 = vmatprep.subr.mxu0 %v1707
    %1763 = vmatpush1.msra.mxu0 %v1706
    %1764 = vmatprep.subr.mxu0 %v1710
    %1765 = vmatpush1.msra.mxu0 %v1709
    %1766 = vmatprep.subr.mxu0 %v1713
    %1767 = vmatpush1.msra.mxu0 %v1712
    %1768 = vmatprep.subr.mxu0 %v1716
    %1769 = vmatpush1.msra.mxu0 %v1715
    %1770 = vmatprep.subr.mxu0 %v1719
    %1771 = vmatpush1.msra.mxu0 %v1718
    %1772 = vmatprep.subr.mxu0 %v1722
    %1773 = vmatpush1.msra.mxu0 %v1721
    %1774 = vmatprep.subr.mxu0 %v1725
    %1775 = vmatpush1.msra.mxu0 %v1724
    %1776 = vmatprep.subr.mxu0 0.0
    %1777 = vmatpush1.msra.mxu0 0.0
    %1778 = vmatprep.subr.mxu0 0.0
    %1779 = vmatpush1.msra.mxu0 0.0
    %1780 = vmatprep.subr.mxu0 0.0
    %1781 = vmatpush1.msra.mxu0 0.0
    %1782 = vmatprep.subr.mxu0 0.0
    %1783 = vmatpush1.msra.mxu0 0.0
    %1784 = vmatprep.subr.mxu0 0.0
    %1785 = vmatpush1.msra.mxu0 0.0
    %1786 = vmatprep.subr.mxu0 0.0
    %1787 = vmatpush1.msra.mxu0 0.0
    %1788 = vmatprep.subr.mxu0 0.0
    %1789 = vmatpush1.msra.mxu0 0.0
    %1790 = vmatprep.subr.mxu0 0.0
    %1791 = vmatpush1.msra.mxu0 0.0
    %1792 = vmatprep.subr.mxu0 0.0
    %1793 = vmatpush1.msra.mxu0 0.0
    %1794 = vmatprep.subr.mxu0 0.0
    %1795 = vmatpush1.msra.mxu0 0.0
    %1796 = vmatprep.subr.mxu0 0.0
    %1797 = vmatpush1.msra.mxu0 0.0
    %1798 = vmatprep.subr.mxu0 0.0
    %1799 = vmatpush1.msra.mxu0 0.0
    %1800 = vmatprep.subr.mxu0 0.0
    %1801 = vmatpush1.msra.mxu0 0.0
    %1802 = vmatprep.subr.mxu0 0.0
    %1803 = vmatpush1.msra.mxu0 0.0
    %1804 = vmatprep.subr.mxu0 0.0
    %1805 = vmatpush1.msra.mxu0 0.0
    %1806 = vmatprep.subr.mxu0 0.0
    %1807 = vmatpush1.msra.mxu0 0.0
    %1808 = vmatprep.mubr.f32.mxu0 0.0
    %1809 = vmatmul.mubr.f32.gmra.mrb[0].mxu0 %v1678
    %v1810 = vpop.f32.mrb[0].mxu0
    %v1811 = vadd.f32 %v1732, %v1810
    %v1812 = vpop.f32.mrb[0].mxu0
    %v1813 = vadd.f32 %v1736, %v1812
    %1814 = vdwg.mxu0
    %1815 = vmatprep.subr.mxu0 0.0
    %1816 = vmatpush1.msra.mxu0 %v1681
    %1817 = vmatprep.subr.mxu0 0.0
    %1818 = vmatpush1.msra.mxu0 %v1684
    %1819 = vmatprep.subr.mxu0 0.0
    %1820 = vmatpush1.msra.mxu0 %v1687
    %1821 = vmatprep.subr.mxu0 0.0
    %1822 = vmatpush1.msra.mxu0 %v1690
    %1823 = vmatprep.subr.mxu0 0.0
    %1824 = vmatpush1.msra.mxu0 %v1693
    %1825 = vmatprep.subr.mxu0 0.0
    %1826 = vmatpush1.msra.mxu0 %v1696
    %1827 = vmatprep.subr.mxu0 0.0
    %1828 = vmatpush1.msra.mxu0 %v1699
    %1829 = vmatprep.subr.mxu0 0.0
    %1830 = vmatpush1.msra.mxu0 %v1702
    %1831 = vmatprep.subr.mxu0 0.0
    %1832 = vmatpush1.msra.mxu0 %v1705
    %1833 = vmatprep.subr.mxu0 0.0
    %1834 = vmatpush1.msra.mxu0 %v1708
    %1835 = vmatprep.subr.mxu0 0.0
    %1836 = vmatpush1.msra.mxu0 %v1711
    %1837 = vmatprep.subr.mxu0 0.0
    %1838 = vmatpush1.msra.mxu0 %v1714
    %1839 = vmatprep.subr.mxu0 0.0
    %1840 = vmatpush1.msra.mxu0 %v1717
    %1841 = vmatprep.subr.mxu0 0.0
    %1842 = vmatpush1.msra.mxu0 %v1720
    %1843 = vmatprep.subr.mxu0 0.0
    %1844 = vmatpush1.msra.mxu0 %v1723
    %1845 = vmatprep.subr.mxu0 0.0
    %1846 = vmatpush1.msra.mxu0 %v1726
    %1847 = vmatprep.subr.mxu0 0.0
    %1848 = vmatpush1.msra.mxu0 0.0
    %1849 = vmatprep.subr.mxu0 0.0
    %1850 = vmatpush1.msra.mxu0 0.0
    %1851 = vmatprep.subr.mxu0 0.0
    %1852 = vmatpush1.msra.mxu0 0.0
    %1853 = vmatprep.subr.mxu0 0.0
    %1854 = vmatpush1.msra.mxu0 0.0
    %1855 = vmatprep.subr.mxu0 0.0
    %1856 = vmatpush1.msra.mxu0 0.0
    %1857 = vmatprep.subr.mxu0 0.0
    %1858 = vmatpush1.msra.mxu0 0.0
    %1859 = vmatprep.subr.mxu0 0.0
    %1860 = vmatpush1.msra.mxu0 0.0
    %1861 = vmatprep.subr.mxu0 0.0
    %1862 = vmatpush1.msra.mxu0 0.0
    %1863 = vmatprep.subr.mxu0 0.0
    %1864 = vmatpush1.msra.mxu0 0.0
    %1865 = vmatprep.subr.mxu0 0.0
    %1866 = vmatpush1.msra.mxu0 0.0
    %1867 = vmatprep.subr.mxu0 0.0
    %1868 = vmatpush1.msra.mxu0 0.0
    %1869 = vmatprep.subr.mxu0 0.0
    %1870 = vmatpush1.msra.mxu0 0.0
    %1871 = vmatprep.subr.mxu0 0.0
    %1872 = vmatpush1.msra.mxu0 0.0
    %1873 = vmatprep.subr.mxu0 0.0
    %1874 = vmatpush1.msra.mxu0 0.0
    %1875 = vmatprep.subr.mxu0 0.0
    %1876 = vmatpush1.msra.mxu0 0.0
    %1877 = vmatprep.subr.mxu0 0.0
    %1878 = vmatpush1.msra.mxu0 0.0
    %1879 = vmatprep.mubr.f32.mxu0 0.0
    %1880 = vmatmul.mubr.f32.gmra.mrb[0].mxu0 %v1678
    %v1881 = vpop.f32.mrb[0].mxu0
    %v1882 = vadd.f32 %v1740, %v1881
    %v1883 = vpop.f32.mrb[0].mxu0
    %1884 = vdwg.mxu0
    %v1885 = vld [vmem:[#allocation20] sm:$0xff]
    %v1886 = vld [vmem:[#allocation20 + $0x8] sm:$0xff]
    %v1887 = vld [vmem:[#allocation20 + $0x10] sm:$0xff]
    %v1888 = vld [vmem:[#allocation20 + $0x18] sm:$0xff]
    %v1889 = vld [vmem:[#allocation20 + $0x20] sm:$0xff]
    %v1890 = vld [vmem:[#allocation20 + $0x28] sm:$0xff]
    %v1891 = vld [vmem:[#allocation20 + $0x30] sm:$0xff]
    %v1892 = vld [vmem:[#allocation20 + $0x38] sm:$0xff]
    %v1893 = vld [vmem:[#allocation20 + $0x40] sm:$0xff]
    %v1894 = vld [vmem:[#allocation20 + $0x48] sm:$0xff]
    %v1895 = vld [vmem:[#allocation20 + $0x50] sm:$0xff]
    %v1896 = vld [vmem:[#allocation20 + $0x58] sm:$0xff]
    %v1897 = vld [vmem:[#allocation20 + $0x60] sm:$0xff]
    %v1898 = vld [vmem:[#allocation20 + $0x68] sm:$0xff]
    %v1899 = vld [vmem:[#allocation20 + $0x70] sm:$0xff]
    %v1900 = vld [vmem:[#allocation20 + $0x78] sm:$0xff]
    %v1901 = vld [vmem:[#allocation20 + $0x80] sm:$0xff]
    %v1902 = vld [vmem:[#allocation20 + $0x88] sm:$0xff]
    %v1903 = vld [vmem:[#allocation20 + $0x90] sm:$0xff]
    %v1904 = vld [vmem:[#allocation20 + $0x98] sm:$0xff]
    %v1905 = vld [vmem:[#allocation20 + $0xa0] sm:$0xff]
    %v1906 = vld [vmem:[#allocation20 + $0xa8] sm:$0xff]
    %v1907 = vld [vmem:[#allocation20 + $0xb0] sm:$0xff]
    %v1908 = vld [vmem:[#allocation20 + $0xb8] sm:$0xff]
    %v1909 = vld [vmem:[#allocation20 + $0xc0] sm:$0xff]
    %v1910 = vld [vmem:[#allocation20 + $0xc8] sm:$0xff]
    %v1911 = vld [vmem:[#allocation20 + $0xd0] sm:$0xff]
    %v1912 = vld [vmem:[#allocation20 + $0xd8] sm:$0xff]
    %v1913 = vld [vmem:[#allocation20 + $0xe0] sm:$0xff]
    %v1914 = vld [vmem:[#allocation20 + $0xe8] sm:$0xff]
    %v1915 = vld [vmem:[#allocation20 + $0xf0] sm:$0xff]
    %v1916 = vld [vmem:[#allocation20 + $0xf8] sm:$0xff]
    %v1917 = vld [vmem:[#allocation20 + $0x100] sm:$0xff]
    %v1918 = vld [vmem:[#allocation20 + $0x108] sm:$0xff]
    %v1919 = vld [vmem:[#allocation20 + $0x110] sm:$0xff]
    %v1920 = vld [vmem:[#allocation20 + $0x118] sm:$0xff]
    %v1921 = vld [vmem:[#allocation20 + $0x120] sm:$0xff]
    %v1922 = vld [vmem:[#allocation20 + $0x128] sm:$0xff]
    %v1923 = vld [vmem:[#allocation20 + $0x130] sm:$0xff]
    %v1924 = vld [vmem:[#allocation20 + $0x138] sm:$0xff]
    %v1925 = vld [vmem:[#allocation20 + $0x140] sm:$0xff]
    %v1926 = vld [vmem:[#allocation20 + $0x148] sm:$0xff]
    %v1927 = vld [vmem:[#allocation20 + $0x150] sm:$0xff]
    %v1928 = vld [vmem:[#allocation20 + $0x158] sm:$0xff]
    %v1929 = vld [vmem:[#allocation20 + $0x160] sm:$0xff]
    %v1930 = vld [vmem:[#allocation20 + $0x168] sm:$0xff]
    %v1931 = vld [vmem:[#allocation20 + $0x170] sm:$0xff]
    %v1932 = vld [vmem:[#allocation20 + $0x178] sm:$0xff]
    %v1933 = vld [vmem:[%s17] sm:$0x7]
    %v1935 = vlaneseq
    %v1936 = vshrl.u32 %v1935, 7
    %v1937 = vsub.s32 0, %v1936
    %v1938 = vrot.slane %v1933, %v1937
    %v1939 = vlaneseq
    %v1940 = vshrl.u32 %v1939, 7
    %v1941 = vsub.s32 1, %v1940
    %v1942 = vrot.slane %v1933, %v1941
    %v1943 = vlaneseq
    %v1944 = vshrl.u32 %v1943, 7
    %v1945 = vsub.s32 2, %v1944
    %v1946 = vrot.slane %v1933, %v1945
    %1950 = vmatprep.subr.mxu0 %v1886
    %1951 = vmatpush1.msra.mxu0 %v1885
    %1952 = vmatprep.subr.mxu0 %v1889
    %1953 = vmatpush1.msra.mxu0 %v1888
    %1954 = vmatprep.subr.mxu0 %v1892
    %1955 = vmatpush1.msra.mxu0 %v1891
    %1956 = vmatprep.subr.mxu0 %v1895
    %1957 = vmatpush1.msra.mxu0 %v1894
    %1958 = vmatprep.subr.mxu0 %v1898
    %1959 = vmatpush1.msra.mxu0 %v1897
    %1960 = vmatprep.subr.mxu0 %v1901
    %1961 = vmatpush1.msra.mxu0 %v1900
    %1962 = vmatprep.subr.mxu0 %v1904
    %1963 = vmatpush1.msra.mxu0 %v1903
    %1964 = vmatprep.subr.mxu0 %v1907
    %1965 = vmatpush1.msra.mxu0 %v1906
    %1966 = vmatprep.subr.mxu0 %v1910
    %1967 = vmatpush1.msra.mxu0 %v1909
    %1968 = vmatprep.subr.mxu0 %v1913
    %1969 = vmatpush1.msra.mxu0 %v1912
    %1970 = vmatprep.subr.mxu0 %v1916
    %1971 = vmatpush1.msra.mxu0 %v1915
    %1972 = vmatprep.subr.mxu0 %v1919
    %1973 = vmatpush1.msra.mxu0 %v1918
    %1974 = vmatprep.subr.mxu0 %v1922
    %1975 = vmatpush1.msra.mxu0 %v1921
    %1976 = vmatprep.subr.mxu0 %v1925
    %1977 = vmatpush1.msra.mxu0 %v1924
    %1978 = vmatprep.subr.mxu0 %v1928
    %1979 = vmatpush1.msra.mxu0 %v1927
    %1980 = vmatprep.subr.mxu0 %v1931
    %1981 = vmatpush1.msra.mxu0 %v1930
    %1982 = vmatprep.subr.mxu0 0.0
    %1983 = vmatpush1.msra.mxu0 0.0
    %1984 = vmatprep.subr.mxu0 0.0
    %1985 = vmatpush1.msra.mxu0 0.0
    %1986 = vmatprep.subr.mxu0 0.0
    %1987 = vmatpush1.msra.mxu0 0.0
    %1988 = vmatprep.subr.mxu0 0.0
    %1989 = vmatpush1.msra.mxu0 0.0
    %1990 = vmatprep.subr.mxu0 0.0
    %1991 = vmatpush1.msra.mxu0 0.0
    %1992 = vmatprep.subr.mxu0 0.0
    %1993 = vmatpush1.msra.mxu0 0.0
    %1994 = vmatprep.subr.mxu0 0.0
    %1995 = vmatpush1.msra.mxu0 0.0
    %1996 = vmatprep.subr.mxu0 0.0
    %1997 = vmatpush1.msra.mxu0 0.0
    %1998 = vmatprep.subr.mxu0 0.0
    %1999 = vmatpush1.msra.mxu0 0.0
    %2000 = vmatprep.subr.mxu0 0.0
    %2001 = vmatpush1.msra.mxu0 0.0
    %2002 = vmatprep.subr.mxu0 0.0
    %2003 = vmatpush1.msra.mxu0 0.0
    %2004 = vmatprep.subr.mxu0 0.0
    %2005 = vmatpush1.msra.mxu0 0.0
    %2006 = vmatprep.subr.mxu0 0.0
    %2007 = vmatpush1.msra.mxu0 0.0
    %2008 = vmatprep.subr.mxu0 0.0
    %2009 = vmatpush1.msra.mxu0 0.0
    %2010 = vmatprep.subr.mxu0 0.0
    %2011 = vmatpush1.msra.mxu0 0.0
    %2012 = vmatprep.subr.mxu0 0.0
    %2013 = vmatpush1.msra.mxu0 0.0
    %2014 = vmatprep.mubr.f32.mxu0 0.0
    %2015 = vmatmul.mubr.f32.gmra.mrb[0].mxu0 %v776
    %v2016 = vpop.f32.mrb[0].mxu0
    %v2017 = vadd.f32 %v1938, %v2016
    %v2018 = vpop.f32.mrb[0].mxu0
    %v2019 = vadd.f32 %v1942, %v2018
    %2020 = vdwg.mxu0
    %2021 = vmatprep.subr.mxu0 0.0
    %2022 = vmatpush1.msra.mxu0 %v1887
    %2023 = vmatprep.subr.mxu0 0.0
    %2024 = vmatpush1.msra.mxu0 %v1890
    %2025 = vmatprep.subr.mxu0 0.0
    %2026 = vmatpush1.msra.mxu0 %v1893
    %2027 = vmatprep.subr.mxu0 0.0
    %2028 = vmatpush1.msra.mxu0 %v1896
    %2029 = vmatprep.subr.mxu0 0.0
    %2030 = vmatpush1.msra.mxu0 %v1899
    %2031 = vmatprep.subr.mxu0 0.0
    %2032 = vmatpush1.msra.mxu0 %v1902
    %2033 = vmatprep.subr.mxu0 0.0
    %2034 = vmatpush1.msra.mxu0 %v1905
    %2035 = vmatprep.subr.mxu0 0.0
    %2036 = vmatpush1.msra.mxu0 %v1908
    %2037 = vmatprep.subr.mxu0 0.0
    %2038 = vmatpush1.msra.mxu0 %v1911
    %2039 = vmatprep.subr.mxu0 0.0
    %2040 = vmatpush1.msra.mxu0 %v1914
    %2041 = vmatprep.subr.mxu0 0.0
    %2042 = vmatpush1.msra.mxu0 %v1917
    %2043 = vmatprep.subr.mxu0 0.0
    %2044 = vmatpush1.msra.mxu0 %v1920
    %2045 = vmatprep.subr.mxu0 0.0
    %2046 = vmatpush1.msra.mxu0 %v1923
    %2047 = vmatprep.subr.mxu0 0.0
    %2048 = vmatpush1.msra.mxu0 %v1926
    %2049 = vmatprep.subr.mxu0 0.0
    %2050 = vmatpush1.msra.mxu0 %v1929
    %2051 = vmatprep.subr.mxu0 0.0
    %2052 = vmatpush1.msra.mxu0 %v1932
    %2053 = vmatprep.subr.mxu0 0.0
    %2054 = vmatpush1.msra.mxu0 0.0
    %2055 = vmatprep.subr.mxu0 0.0
    %2056 = vmatpush1.msra.mxu0 0.0
    %2057 = vmatprep.subr.mxu0 0.0
    %2058 = vmatpush1.msra.mxu0 0.0
    %2059 = vmatprep.subr.mxu0 0.0
    %2060 = vmatpush1.msra.mxu0 0.0
    %2061 = vmatprep.subr.mxu0 0.0
    %2062 = vmatpush1.msra.mxu0 0.0
    %2063 = vmatprep.subr.mxu0 0.0
    %2064 = vmatpush1.msra.mxu0 0.0
    %2065 = vmatprep.subr.mxu0 0.0
    %2066 = vmatpush1.msra.mxu0 0.0
    %2067 = vmatprep.subr.mxu0 0.0
    %2068 = vmatpush1.msra.mxu0 0.0
    %2069 = vmatprep.subr.mxu0 0.0
    %2070 = vmatpush1.msra.mxu0 0.0
    %2071 = vmatprep.subr.mxu0 0.0
    %2072 = vmatpush1.msra.mxu0 0.0
    %2073 = vmatprep.subr.mxu0 0.0
    %2074 = vmatpush1.msra.mxu0 0.0
    %2075 = vmatprep.subr.mxu0 0.0
    %2076 = vmatpush1.msra.mxu0 0.0
    %2077 = vmatprep.subr.mxu0 0.0
    %2078 = vmatpush1.msra.mxu0 0.0
    %2079 = vmatprep.subr.mxu0 0.0
    %2080 = vmatpush1.msra.mxu0 0.0
    %2081 = vmatprep.subr.mxu0 0.0
    %2082 = vmatpush1.msra.mxu0 0.0
    %2083 = vmatprep.subr.mxu0 0.0
    %2084 = vmatpush1.msra.mxu0 0.0
    %2085 = vmatprep.mubr.f32.mxu0 0.0
    %2086 = vmatmul.mubr.f32.gmra.mrb[0].mxu0 %v776
    %v2087 = vpop.f32.mrb[0].mxu0
    %v2088 = vadd.f32 %v1946, %v2087
    %v2089 = vpop.f32.mrb[0].mxu0
    %2090 = vdwg.mxu0
    %v2091 = vadd.f32 %v1811, %v2017
    %v2092 = vxor.u32 %v2091, 2147483648
    %v2093 = vmul.f32 %v2092, 1.442695
    %v2094 = vpow.pop %v2093
    %v2095 = vadd.f32 %v2094, 1.0
    %v2096 = vrcp.pop %v2095
    %v2097 = vmul.f32 1.0, %v2096
    %v2098 = vadd.f32 %v1813, %v2019
    %v2099 = vxor.u32 %v2098, 2147483648
    %v2100 = vmul.f32 %v2099, 1.442695
    %v2101 = vpow.pop %v2100
    %v2102 = vadd.f32 %v2101, 1.0
    %v2103 = vrcp.pop %v2102
    %v2104 = vmul.f32 1.0, %v2103
    %v2105 = vmul.f32 %v2097, %v2088
    %v2106 = vadd.f32 %v1882, %v2105
    %v2107 = vtanh.pop %v2106
    %v2108 = vsub.f32 1.0, %v2104
    %v2109 = vmul.f32 %v2108, %v2107
    %v2110 = vmul.f32 %v2104, %v776
    %v2111 = vadd.f32 %v2109, %v2110
    %v2114 = vunpack.c.l.s4 1966171168
    %v2115 = vunpack.c.0.s8 %v2114
    %v2116 = vlaneseq
    %v2117 = vshrl.u32 %v2116, 7
    %v2118 = vsub.s32 %v2115, %v2117
    %v2119 = vrot.slane %v2111, %v2118
    %v2120 = vcombine.high %v2119, %v2119
    %v2122 = vunpack.c.l.s4 1966171168
    %v2123 = vunpack.c.0.s8 %v2122
    %v2124 = vlaneseq
    %v2125 = vshrl.u32 %v2124, 7
    %v2126 = vsub.s32 %v2123, %v2125
    %v2127 = vrot.slane %v2119, %v2126
    %v2129 = vunpack.c.l.s4 1966171168
    %v2130 = vunpack.c.0.s8 %v2129
    %v2131 = vlaneseq
    %v2132 = vshrl.u32 %v2131, 7
    %v2133 = vsub.s32 %v2130, %v2132
    %v2134 = vrot.slane %v2120, %v2133
    %2137 = vmatprep.subr.mxu0 0.0
    %2138 = vmatpush1.xpose.msra.mxu0 %v1281
    %2139 = vmatprep.subr.mxu0 0.0
    %2140 = vmatpush1.xpose.msra.mxu0 0.0
    %2141 = vmatprep.subr.mxu0 0.0
    %2142 = vmatpush1.xpose.msra.mxu0 0.0
    %2143 = vmatprep.subr.mxu0 0.0
    %2144 = vmatpush1.xpose.msra.mxu0 0.0
    %2145 = vmatprep.subr.mxu0 0.0
    %2146 = vmatpush1.xpose.msra.mxu0 0.0
    %2147 = vmatprep.subr.mxu0 0.0
    %2148 = vmatpush1.xpose.msra.mxu0 0.0
    %2149 = vmatprep.subr.mxu0 0.0
    %2150 = vmatpush1.xpose.msra.mxu0 0.0
    %2151 = vmatprep.subr.mxu0 0.0
    %2152 = vmatpush1.xpose.msra.mxu0 0.0
    %2153 = vmatprep.subr.mxu0 0.0
    %2154 = vmatpush1.xpose.msra.mxu0 0.0
    %2155 = vmatprep.subr.mxu0 0.0
    %2156 = vmatpush1.xpose.msra.mxu0 0.0
    %2157 = vmatprep.subr.mxu0 0.0
    %2158 = vmatpush1.xpose.msra.mxu0 0.0
    %2159 = vmatprep.subr.mxu0 0.0
    %2160 = vmatpush1.xpose.msra.mxu0 0.0
    %2161 = vmatprep.subr.mxu0 0.0
    %2162 = vmatpush1.xpose.msra.mxu0 0.0
    %2163 = vmatprep.subr.mxu0 0.0
    %2164 = vmatpush1.xpose.msra.mxu0 0.0
    %2165 = vmatprep.subr.mxu0 0.0
    %2166 = vmatpush1.xpose.msra.mxu0 0.0
    %2167 = vmatprep.subr.mxu0 0.0
    %2168 = vmatpush1.xpose.msra.mxu0 0.0
    %2169 = vmatprep.subr.mxu0 0.0
    %2170 = vmatpush1.xpose.msra.mxu0 0.0
    %2171 = vmatprep.subr.mxu0 0.0
    %2172 = vmatpush1.xpose.msra.mxu0 0.0
    %2173 = vmatprep.subr.mxu0 0.0
    %2174 = vmatpush1.xpose.msra.mxu0 0.0
    %2175 = vmatprep.subr.mxu0 0.0
    %2176 = vmatpush1.xpose.msra.mxu0 0.0
    %2177 = vmatprep.subr.mxu0 0.0
    %2178 = vmatpush1.xpose.msra.mxu0 0.0
    %2179 = vmatprep.subr.mxu0 0.0
    %2180 = vmatpush1.xpose.msra.mxu0 0.0
    %2181 = vmatprep.subr.mxu0 0.0
    %2182 = vmatpush1.xpose.msra.mxu0 0.0
    %2183 = vmatprep.subr.mxu0 0.0
    %2184 = vmatpush1.xpose.msra.mxu0 0.0
    %2185 = vmatprep.subr.mxu0 0.0
    %2186 = vmatpush1.xpose.msra.mxu0 0.0
    %2187 = vmatprep.subr.mxu0 0.0
    %2188 = vmatpush1.xpose.msra.mxu0 0.0
    %2189 = vmatprep.subr.mxu0 0.0
    %2190 = vmatpush1.xpose.msra.mxu0 0.0
    %2191 = vmatprep.subr.mxu0 0.0
    %2192 = vmatpush1.xpose.msra.mxu0 0.0
    %2193 = vmatprep.subr.mxu0 0.0
    %2194 = vmatpush1.xpose.msra.mxu0 0.0
    %2195 = vmatprep.subr.mxu0 0.0
    %2196 = vmatpush1.xpose.msra.mxu0 0.0
    %2197 = vmatprep.subr.mxu0 0.0
    %2198 = vmatpush1.xpose.msra.mxu0 0.0
    %2199 = vmatprep.subr.mxu0 0.0
    %2200 = vmatpush1.xpose.msra.mxu0 0.0
    %2201 = vmatprep.mubr.f32.mxu0 0.0
    %2202 = vmatmul.mubr.f32.gmra.mrb[0].mxu0 %v2127
    %v2203 = vpop.f32.mrb[0].mxu0
    %v2204 = vadd.f32 0.0, %v2203
    %v2205 = vpop.f32.mrb[0].mxu0
    %2206 = vdwg.mxu0
    %2207 = vmatprep.subr.mxu0 0.0
    %2208 = vmatpush1.xpose.msra.mxu0 %v1282
    %2209 = vmatprep.subr.mxu0 0.0
    %2210 = vmatpush1.xpose.msra.mxu0 0.0
    %2211 = vmatprep.subr.mxu0 0.0
    %2212 = vmatpush1.xpose.msra.mxu0 0.0
    %2213 = vmatprep.subr.mxu0 0.0
    %2214 = vmatpush1.xpose.msra.mxu0 0.0
    %2215 = vmatprep.subr.mxu0 0.0
    %2216 = vmatpush1.xpose.msra.mxu0 0.0
    %2217 = vmatprep.subr.mxu0 0.0
    %2218 = vmatpush1.xpose.msra.mxu0 0.0
    %2219 = vmatprep.subr.mxu0 0.0
    %2220 = vmatpush1.xpose.msra.mxu0 0.0
    %2221 = vmatprep.subr.mxu0 0.0
    %2222 = vmatpush1.xpose.msra.mxu0 0.0
    %2223 = vmatprep.subr.mxu0 0.0
    %2224 = vmatpush1.xpose.msra.mxu0 0.0
    %2225 = vmatprep.subr.mxu0 0.0
    %2226 = vmatpush1.xpose.msra.mxu0 0.0
    %2227 = vmatprep.subr.mxu0 0.0
    %2228 = vmatpush1.xpose.msra.mxu0 0.0
    %2229 = vmatprep.subr.mxu0 0.0
    %2230 = vmatpush1.xpose.msra.mxu0 0.0
    %2231 = vmatprep.subr.mxu0 0.0
    %2232 = vmatpush1.xpose.msra.mxu0 0.0
    %2233 = vmatprep.subr.mxu0 0.0
    %2234 = vmatpush1.xpose.msra.mxu0 0.0
    %2235 = vmatprep.subr.mxu0 0.0
    %2236 = vmatpush1.xpose.msra.mxu0 0.0
    %2237 = vmatprep.subr.mxu0 0.0
    %2238 = vmatpush1.xpose.msra.mxu0 0.0
    %2239 = vmatprep.subr.mxu0 0.0
    %2240 = vmatpush1.xpose.msra.mxu0 0.0
    %2241 = vmatprep.subr.mxu0 0.0
    %2242 = vmatpush1.xpose.msra.mxu0 0.0
    %2243 = vmatprep.subr.mxu0 0.0
    %2244 = vmatpush1.xpose.msra.mxu0 0.0
    %2245 = vmatprep.subr.mxu0 0.0
    %2246 = vmatpush1.xpose.msra.mxu0 0.0
    %2247 = vmatprep.subr.mxu0 0.0
    %2248 = vmatpush1.xpose.msra.mxu0 0.0
    %2249 = vmatprep.subr.mxu0 0.0
    %2250 = vmatpush1.xpose.msra.mxu0 0.0
    %2251 = vmatprep.subr.mxu0 0.0
    %2252 = vmatpush1.xpose.msra.mxu0 0.0
    %2253 = vmatprep.subr.mxu0 0.0
    %2254 = vmatpush1.xpose.msra.mxu0 0.0
    %2255 = vmatprep.subr.mxu0 0.0
    %2256 = vmatpush1.xpose.msra.mxu0 0.0
    %2257 = vmatprep.subr.mxu0 0.0
    %2258 = vmatpush1.xpose.msra.mxu0 0.0
    %2259 = vmatprep.subr.mxu0 0.0
    %2260 = vmatpush1.xpose.msra.mxu0 0.0
    %2261 = vmatprep.subr.mxu0 0.0
    %2262 = vmatpush1.xpose.msra.mxu0 0.0
    %2263 = vmatprep.subr.mxu0 0.0
    %2264 = vmatpush1.xpose.msra.mxu0 0.0
    %2265 = vmatprep.subr.mxu0 0.0
    %2266 = vmatpush1.xpose.msra.mxu0 0.0
    %2267 = vmatprep.subr.mxu0 0.0
    %2268 = vmatpush1.xpose.msra.mxu0 0.0
    %2269 = vmatprep.subr.mxu0 0.0
    %2270 = vmatpush1.xpose.msra.mxu0 0.0
    %2271 = vmatprep.mubr.f32.mxu0 0.0
    %2272 = vmatmul.mubr.f32.gmra.mrb[0].mxu0 %v2134
    %v2273 = vpop.f32.mrb[0].mxu0
    %v2274 = vadd.f32 0.0, %v2273
    %v2275 = vpop.f32.mrb[0].mxu0
    %2276 = vdwg.mxu0
    %vm2277 = vcmask 57344
    %v2278 = vsel %vm2277, %v2204, -inf
    %2279 = vmax.xlane.f32.xlu0 %v2278
    %v2280 = vpop.xlane.xlu0 %2279
    %v2281 = vsel %vm2277, %v2274, -inf
    %2282 = vmax.xlane.f32.xlu0 %v2281
    %v2283 = vpop.xlane.xlu0 %2282
    %v2284 = vsub.f32 %v2204, %v2280
    %v2285 = vsub.f32 %v2274, %v2283
    %v2286 = vmul.f32 %v2284, 1.442695
    %v2287 = vpow.pop %v2286
    %v2288 = vmul.f32 %v2285, 1.442695
    %v2289 = vpow.pop %v2288
    %v2290 = vsel %vm2277, %v2287, 0.0
    %2291 = vadd.xlane.f32.xlu0 %v2290
    %v2292 = vpop.xlane.xlu0 %2291
    %v2293 = vsel %vm2277, %v2289, 0.0
    %2294 = vadd.xlane.f32.xlu0 %v2293
    %v2295 = vpop.xlane.xlu0 %2294
    %v2296 = vrcp.pop %v2292
    %v2297 = vrcp.pop %v2295
    %v2298 = vmul.f32 %v2287, %v2296
    %v2299 = vmul.f32 %v2289, %v2297
    %vm2300 = vcmask 64512
    %v2302 = vsel %vm2300, %v2298, 0
    %2304 = vmatprep.subr.mxu0 0.0
    %2305 = vmatpush1.msra.mxu0 %v1281
    %2306 = vmatprep.subr.mxu0 0.0
    %2307 = vmatpush1.msra.mxu0 0.0
    %2308 = vmatprep.subr.mxu0 0.0
    %2309 = vmatpush1.msra.mxu0 0.0
    %2310 = vmatprep.subr.mxu0 0.0
    %2311 = vmatpush1.msra.mxu0 0.0
    %2312 = vmatprep.subr.mxu0 0.0
    %2313 = vmatpush1.msra.mxu0 0.0
    %2314 = vmatprep.subr.mxu0 0.0
    %2315 = vmatpush1.msra.mxu0 0.0
    %2316 = vmatprep.subr.mxu0 0.0
    %2317 = vmatpush1.msra.mxu0 0.0
    %2318 = vmatprep.subr.mxu0 0.0
    %2319 = vmatpush1.msra.mxu0 0.0
    %2320 = vmatprep.subr.mxu0 0.0
    %2321 = vmatpush1.msra.mxu0 0.0
    %2322 = vmatprep.subr.mxu0 0.0
    %2323 = vmatpush1.msra.mxu0 0.0
    %2324 = vmatprep.subr.mxu0 0.0
    %2325 = vmatpush1.msra.mxu0 0.0
    %2326 = vmatprep.subr.mxu0 0.0
    %2327 = vmatpush1.msra.mxu0 0.0
    %2328 = vmatprep.subr.mxu0 0.0
    %2329 = vmatpush1.msra.mxu0 0.0
    %2330 = vmatprep.subr.mxu0 0.0
    %2331 = vmatpush1.msra.mxu0 0.0
    %2332 = vmatprep.subr.mxu0 0.0
    %2333 = vmatpush1.msra.mxu0 0.0
    %2334 = vmatprep.subr.mxu0 0.0
    %2335 = vmatpush1.msra.mxu0 0.0
    %2336 = vmatprep.subr.mxu0 0.0
    %2337 = vmatpush1.msra.mxu0 0.0
    %2338 = vmatprep.subr.mxu0 0.0
    %2339 = vmatpush1.msra.mxu0 0.0
    %2340 = vmatprep.subr.mxu0 0.0
    %2341 = vmatpush1.msra.mxu0 0.0
    %2342 = vmatprep.subr.mxu0 0.0
    %2343 = vmatpush1.msra.mxu0 0.0
    %2344 = vmatprep.subr.mxu0 0.0
    %2345 = vmatpush1.msra.mxu0 0.0
    %2346 = vmatprep.subr.mxu0 0.0
    %2347 = vmatpush1.msra.mxu0 0.0
    %2348 = vmatprep.subr.mxu0 0.0
    %2349 = vmatpush1.msra.mxu0 0.0
    %2350 = vmatprep.subr.mxu0 0.0
    %2351 = vmatpush1.msra.mxu0 0.0
    %2352 = vmatprep.subr.mxu0 0.0
    %2353 = vmatpush1.msra.mxu0 0.0
    %2354 = vmatprep.subr.mxu0 0.0
    %2355 = vmatpush1.msra.mxu0 0.0
    %2356 = vmatprep.subr.mxu0 0.0
    %2357 = vmatpush1.msra.mxu0 0.0
    %2358 = vmatprep.subr.mxu0 0.0
    %2359 = vmatpush1.msra.mxu0 0.0
    %2360 = vmatprep.subr.mxu0 0.0
    %2361 = vmatpush1.msra.mxu0 0.0
    %2362 = vmatprep.subr.mxu0 0.0
    %2363 = vmatpush1.msra.mxu0 0.0
    %2364 = vmatprep.subr.mxu0 0.0
    %2365 = vmatpush1.msra.mxu0 0.0
    %2366 = vmatprep.subr.mxu0 0.0
    %2367 = vmatpush1.msra.mxu0 0.0
    %2368 = vmatprep.mubr.f32.mxu0 0.0
    %2369 = vmatmul.mubr.f32.gmra.mrb[0].mxu0 %v2302
    %v2370 = vpop.f32.mrb[0].mxu0
    %v2371 = vadd.f32 0.0, %v2370
    %v2372 = vpop.f32.mrb[0].mxu0
    %2373 = vdwg.mxu0
    %v2375 = vsel %vm2300, %v2299, 0
    %2377 = vmatprep.subr.mxu0 0.0
    %2378 = vmatpush1.msra.mxu0 %v1282
    %2379 = vmatprep.subr.mxu0 0.0
    %2380 = vmatpush1.msra.mxu0 0.0
    %2381 = vmatprep.subr.mxu0 0.0
    %2382 = vmatpush1.msra.mxu0 0.0
    %2383 = vmatprep.subr.mxu0 0.0
    %2384 = vmatpush1.msra.mxu0 0.0
    %2385 = vmatprep.subr.mxu0 0.0
    %2386 = vmatpush1.msra.mxu0 0.0
    %2387 = vmatprep.subr.mxu0 0.0
    %2388 = vmatpush1.msra.mxu0 0.0
    %2389 = vmatprep.subr.mxu0 0.0
    %2390 = vmatpush1.msra.mxu0 0.0
    %2391 = vmatprep.subr.mxu0 0.0
    %2392 = vmatpush1.msra.mxu0 0.0
    %2393 = vmatprep.subr.mxu0 0.0
    %2394 = vmatpush1.msra.mxu0 0.0
    %2395 = vmatprep.subr.mxu0 0.0
    %2396 = vmatpush1.msra.mxu0 0.0
    %2397 = vmatprep.subr.mxu0 0.0
    %2398 = vmatpush1.msra.mxu0 0.0
    %2399 = vmatprep.subr.mxu0 0.0
    %2400 = vmatpush1.msra.mxu0 0.0
    %2401 = vmatprep.subr.mxu0 0.0
    %2402 = vmatpush1.msra.mxu0 0.0
    %2403 = vmatprep.subr.mxu0 0.0
    %2404 = vmatpush1.msra.mxu0 0.0
    %2405 = vmatprep.subr.mxu0 0.0
    %2406 = vmatpush1.msra.mxu0 0.0
    %2407 = vmatprep.subr.mxu0 0.0
    %2408 = vmatpush1.msra.mxu0 0.0
    %2409 = vmatprep.subr.mxu0 0.0
    %2410 = vmatpush1.msra.mxu0 0.0
    %2411 = vmatprep.subr.mxu0 0.0
    %2412 = vmatpush1.msra.mxu0 0.0
    %2413 = vmatprep.subr.mxu0 0.0
    %2414 = vmatpush1.msra.mxu0 0.0
    %2415 = vmatprep.subr.mxu0 0.0
    %2416 = vmatpush1.msra.mxu0 0.0
    %2417 = vmatprep.subr.mxu0 0.0
    %2418 = vmatpush1.msra.mxu0 0.0
    %2419 = vmatprep.subr.mxu0 0.0
    %2420 = vmatpush1.msra.mxu0 0.0
    %2421 = vmatprep.subr.mxu0 0.0
    %2422 = vmatpush1.msra.mxu0 0.0
    %2423 = vmatprep.subr.mxu0 0.0
    %2424 = vmatpush1.msra.mxu0 0.0
    %2425 = vmatprep.subr.mxu0 0.0
    %2426 = vmatpush1.msra.mxu0 0.0
    %2427 = vmatprep.subr.mxu0 0.0
    %2428 = vmatpush1.msra.mxu0 0.0
    %2429 = vmatprep.subr.mxu0 0.0
    %2430 = vmatpush1.msra.mxu0 0.0
    %2431 = vmatprep.subr.mxu0 0.0
    %2432 = vmatpush1.msra.mxu0 0.0
    %2433 = vmatprep.subr.mxu0 0.0
    %2434 = vmatpush1.msra.mxu0 0.0
    %2435 = vmatprep.subr.mxu0 0.0
    %2436 = vmatpush1.msra.mxu0 0.0
    %2437 = vmatprep.subr.mxu0 0.0
    %2438 = vmatpush1.msra.mxu0 0.0
    %2439 = vmatprep.subr.mxu0 0.0
    %2440 = vmatpush1.msra.mxu0 0.0
    %2441 = vmatprep.mubr.f32.mxu0 0.0
    %2442 = vmatmul.mubr.f32.gmra.mrb[0].mxu0 %v2375
    %v2443 = vpop.f32.mrb[0].mxu0
    %v2444 = vadd.f32 0.0, %v2443
    %v2445 = vpop.f32.mrb[0].mxu0
    %2446 = vdwg.mxu0
    %v2447 = vld [vmem:[#allocation21] sm:$0xff]
    %v2448 = vld [vmem:[#allocation21 + $0x8] sm:$0xff]
    %v2449 = vld [vmem:[#allocation21 + $0x10] sm:$0xff]
    %v2450 = vld [vmem:[#allocation21 + $0x18] sm:$0xff]
    %v2451 = vld [vmem:[#allocation21 + $0x20] sm:$0xff]
    %v2452 = vld [vmem:[#allocation21 + $0x28] sm:$0xff]
    %v2453 = vld [vmem:[#allocation21 + $0x30] sm:$0xff]
    %v2454 = vld [vmem:[#allocation21 + $0x38] sm:$0xff]
    %v2455 = vld [vmem:[#allocation21 + $0x40] sm:$0xff]
    %v2456 = vld [vmem:[#allocation21 + $0x48] sm:$0xff]
    %v2457 = vld [vmem:[#allocation21 + $0x50] sm:$0xff]
    %v2458 = vld [vmem:[#allocation21 + $0x58] sm:$0xff]
    %v2459 = vld [vmem:[#allocation21 + $0x60] sm:$0xff]
    %v2460 = vld [vmem:[#allocation21 + $0x68] sm:$0xff]
    %v2461 = vld [vmem:[#allocation21 + $0x70] sm:$0xff]
    %v2462 = vld [vmem:[#allocation21 + $0x78] sm:$0xff]
    %v2463 = vld [vmem:[#allocation23] sm:$0xff]
    %v2464 = vld [vmem:[#allocation23 + $0x8] sm:$0xff]
    %v2465 = vld [vmem:[#allocation23 + $0x10] sm:$0xff]
    %v2466 = vld [vmem:[#allocation23 + $0x18] sm:$0xff]
    %v2467 = vld [vmem:[#allocation23 + $0x20] sm:$0xff]
    %v2468 = vld [vmem:[#allocation23 + $0x28] sm:$0xff]
    %v2469 = vld [vmem:[#allocation23 + $0x30] sm:$0xff]
    %v2470 = vld [vmem:[#allocation23 + $0x38] sm:$0xff]
    %v2471 = vld [vmem:[#allocation23 + $0x40] sm:$0xff]
    %v2472 = vld [vmem:[#allocation23 + $0x48] sm:$0xff]
    %v2473 = vld [vmem:[#allocation23 + $0x50] sm:$0xff]
    %v2474 = vld [vmem:[#allocation23 + $0x58] sm:$0xff]
    %v2475 = vld [vmem:[#allocation23 + $0x60] sm:$0xff]
    %v2476 = vld [vmem:[#allocation23 + $0x68] sm:$0xff]
    %v2477 = vld [vmem:[#allocation23 + $0x70] sm:$0xff]
    %v2478 = vld [vmem:[#allocation23 + $0x78] sm:$0xff]
    %2479 = vmatprep.subr.mxu0 0.0
    %2480 = vmatpush1.msra.mxu0 %v2463
    %2481 = vmatprep.subr.mxu0 0.0
    %2482 = vmatpush1.msra.mxu0 %v2464
    %2483 = vmatprep.subr.mxu0 0.0
    %2484 = vmatpush1.msra.mxu0 %v2465
    %2485 = vmatprep.subr.mxu0 0.0
    %2486 = vmatpush1.msra.mxu0 %v2466
    %2487 = vmatprep.subr.mxu0 0.0
    %2488 = vmatpush1.msra.mxu0 %v2467
    %2489 = vmatprep.subr.mxu0 0.0
    %2490 = vmatpush1.msra.mxu0 %v2468
    %2491 = vmatprep.subr.mxu0 0.0
    %2492 = vmatpush1.msra.mxu0 %v2469
    %2493 = vmatprep.subr.mxu0 0.0
    %2494 = vmatpush1.msra.mxu0 %v2470
    %2495 = vmatprep.subr.mxu0 0.0
    %2496 = vmatpush1.msra.mxu0 %v2471
    %2497 = vmatprep.subr.mxu0 0.0
    %2498 = vmatpush1.msra.mxu0 %v2472
    %2499 = vmatprep.subr.mxu0 0.0
    %2500 = vmatpush1.msra.mxu0 %v2473
    %2501 = vmatprep.subr.mxu0 0.0
    %2502 = vmatpush1.msra.mxu0 %v2474
    %2503 = vmatprep.subr.mxu0 0.0
    %2504 = vmatpush1.msra.mxu0 %v2475
    %2505 = vmatprep.subr.mxu0 0.0
    %2506 = vmatpush1.msra.mxu0 %v2476
    %2507 = vmatprep.subr.mxu0 0.0
    %2508 = vmatpush1.msra.mxu0 %v2477
    %2509 = vmatprep.subr.mxu0 0.0
    %2510 = vmatpush1.msra.mxu0 %v2478
    %2511 = vmatprep.subr.mxu0 0.0
    %2512 = vmatpush1.msra.mxu0 0.0
    %2513 = vmatprep.subr.mxu0 0.0
    %2514 = vmatpush1.msra.mxu0 0.0
    %2515 = vmatprep.subr.mxu0 0.0
    %2516 = vmatpush1.msra.mxu0 0.0
    %2517 = vmatprep.subr.mxu0 0.0
    %2518 = vmatpush1.msra.mxu0 0.0
    %2519 = vmatprep.subr.mxu0 0.0
    %2520 = vmatpush1.msra.mxu0 0.0
    %2521 = vmatprep.subr.mxu0 0.0
    %2522 = vmatpush1.msra.mxu0 0.0
    %2523 = vmatprep.subr.mxu0 0.0
    %2524 = vmatpush1.msra.mxu0 0.0
    %2525 = vmatprep.subr.mxu0 0.0
    %2526 = vmatpush1.msra.mxu0 0.0
    %2527 = vmatprep.subr.mxu0 0.0
    %2528 = vmatpush1.msra.mxu0 0.0
    %2529 = vmatprep.subr.mxu0 0.0
    %2530 = vmatpush1.msra.mxu0 0.0
    %2531 = vmatprep.subr.mxu0 0.0
    %2532 = vmatpush1.msra.mxu0 0.0
    %2533 = vmatprep.subr.mxu0 0.0
    %2534 = vmatpush1.msra.mxu0 0.0
    %2535 = vmatprep.subr.mxu0 0.0
    %2536 = vmatpush1.msra.mxu0 0.0
    %2537 = vmatprep.subr.mxu0 0.0
    %2538 = vmatpush1.msra.mxu0 0.0
    %2539 = vmatprep.subr.mxu0 0.0
    %2540 = vmatpush1.msra.mxu0 0.0
    %2541 = vmatprep.subr.mxu0 0.0
    %2542 = vmatpush1.msra.mxu0 0.0
    %2543 = vmatprep.mubr.f32.mxu0 0.0
    %2544 = vmatmul.mubr.f32.gmra.mrb[0].mxu0 %v2111
    %v2545 = vpop.f32.mrb[0].mxu0
    %v2546 = vadd.f32 0.0, %v2545
    %v2547 = vpop.f32.mrb[0].mxu0
    %2548 = vdwg.mxu0
    %v2551 = vrot.slane %v2444, 7
    %v2552 = vsel %vm695, %v2551, %v2371
    %2554 = vmatprep.subr.mxu0 0.0
    %2555 = vmatpush1.msra.mxu0 %v2447
    %2556 = vmatprep.subr.mxu0 0.0
    %2557 = vmatpush1.msra.mxu0 %v2448
    %2558 = vmatprep.subr.mxu0 0.0
    %2559 = vmatpush1.msra.mxu0 %v2449
    %2560 = vmatprep.subr.mxu0 0.0
    %2561 = vmatpush1.msra.mxu0 %v2450
    %2562 = vmatprep.subr.mxu0 0.0
    %2563 = vmatpush1.msra.mxu0 %v2451
    %2564 = vmatprep.subr.mxu0 0.0
    %2565 = vmatpush1.msra.mxu0 %v2452
    %2566 = vmatprep.subr.mxu0 0.0
    %2567 = vmatpush1.msra.mxu0 %v2453
    %2568 = vmatprep.subr.mxu0 0.0
    %2569 = vmatpush1.msra.mxu0 %v2454
    %2570 = vmatprep.subr.mxu0 0.0
    %2571 = vmatpush1.msra.mxu0 %v2455
    %2572 = vmatprep.subr.mxu0 0.0
    %2573 = vmatpush1.msra.mxu0 %v2456
    %2574 = vmatprep.subr.mxu0 0.0
    %2575 = vmatpush1.msra.mxu0 %v2457
    %2576 = vmatprep.subr.mxu0 0.0
    %2577 = vmatpush1.msra.mxu0 %v2458
    %2578 = vmatprep.subr.mxu0 0.0
    %2579 = vmatpush1.msra.mxu0 %v2459
    %2580 = vmatprep.subr.mxu0 0.0
    %2581 = vmatpush1.msra.mxu0 %v2460
    %2582 = vmatprep.subr.mxu0 0.0
    %2583 = vmatpush1.msra.mxu0 %v2461
    %2584 = vmatprep.subr.mxu0 0.0
    %2585 = vmatpush1.msra.mxu0 %v2462
    %2586 = vmatprep.subr.mxu0 0.0
    %2587 = vmatpush1.msra.mxu0 0.0
    %2588 = vmatprep.subr.mxu0 0.0
    %2589 = vmatpush1.msra.mxu0 0.0
    %2590 = vmatprep.subr.mxu0 0.0
    %2591 = vmatpush1.msra.mxu0 0.0
    %2592 = vmatprep.subr.mxu0 0.0
    %2593 = vmatpush1.msra.mxu0 0.0
    %2594 = vmatprep.subr.mxu0 0.0
    %2595 = vmatpush1.msra.mxu0 0.0
    %2596 = vmatprep.subr.mxu0 0.0
    %2597 = vmatpush1.msra.mxu0 0.0
    %2598 = vmatprep.subr.mxu0 0.0
    %2599 = vmatpush1.msra.mxu0 0.0
    %2600 = vmatprep.subr.mxu0 0.0
    %2601 = vmatpush1.msra.mxu0 0.0
    %2602 = vmatprep.subr.mxu0 0.0
    %2603 = vmatpush1.msra.mxu0 0.0
    %2604 = vmatprep.subr.mxu0 0.0
    %2605 = vmatpush1.msra.mxu0 0.0
    %2606 = vmatprep.subr.mxu0 0.0
    %2607 = vmatpush1.msra.mxu0 0.0
    %2608 = vmatprep.subr.mxu0 0.0
    %2609 = vmatpush1.msra.mxu0 0.0
    %2610 = vmatprep.subr.mxu0 0.0
    %2611 = vmatpush1.msra.mxu0 0.0
    %2612 = vmatprep.subr.mxu0 0.0
    %2613 = vmatpush1.msra.mxu0 0.0
    %2614 = vmatprep.subr.mxu0 0.0
    %2615 = vmatpush1.msra.mxu0 0.0
    %2616 = vmatprep.subr.mxu0 0.0
    %2617 = vmatpush1.msra.mxu0 0.0
    %2618 = vmatprep.mubr.f32.mxu0 0.0
    %2619 = vmatmul.mubr.f32.gmra.mrb[0].mxu0 %v2552
    %v2620 = vpop.f32.mrb[0].mxu0
    %v2621 = vadd.f32 %v2546, %v2620
    %v2622 = vpop.f32.mrb[0].mxu0
    %2623 = vdwg.mxu0
    %v2624 = vld [vmem:[%s20] sm:$0x1]
    %v2626 = vlaneseq
    %v2627 = vshrl.u32 %v2626, 7
    %v2628 = vsub.s32 0, %v2627
    %v2629 = vrot.slane %v2624, %v2628
    %v2631 = vadd.f32 %v2621, %v2629
    %v2632 = vtanh.pop %v2631
    %2633 = vst [vmem:[#allocation24] sm:$0x3] %v2632
    %s2634 = scalar_lea.vmem [#allocation3], 2
    %v2635 = vld [vmem:[%s2634] sm:$0x3]
    %v2636 = vld [vmem:[#allocation15] sm:$0xff]
    %v2637 = vld [vmem:[#allocation15 + $0x8] sm:$0xff]
    %v2638 = vld [vmem:[#allocation15 + $0x10] sm:$0xff]
    %v2639 = vld [vmem:[#allocation15 + $0x18] sm:$0xff]
    %v2640 = vld [vmem:[#allocation15 + $0x20] sm:$0xff]
    %v2641 = vld [vmem:[#allocation15 + $0x28] sm:$0xff]
    %v2642 = vld [vmem:[%s12] sm:$0x7]
    %v2644 = vlaneseq
    %v2645 = vshrl.u32 %v2644, 7
    %v2646 = vsub.s32 0, %v2645
    %v2647 = vrot.slane %v2642, %v2646
    %v2648 = vlaneseq
    %v2649 = vshrl.u32 %v2648, 7
    %v2650 = vsub.s32 1, %v2649
    %v2651 = vrot.slane %v2642, %v2650
    %v2652 = vlaneseq
    %v2653 = vshrl.u32 %v2652, 7
    %v2654 = vsub.s32 2, %v2653
    %v2655 = vrot.slane %v2642, %v2654
    %v2660 = vsel %vm1307, %v2635, 0
    %2662 = vmatprep.subr.mxu0 %v2637
    %2663 = vmatpush1.msra.mxu0 %v2636
    %2664 = vmatprep.subr.mxu0 %v2640
    %2665 = vmatpush1.msra.mxu0 %v2639
    %2666 = vmatprep.subr.mxu0 0.0
    %2667 = vmatpush1.msra.mxu0 0.0
    %2668 = vmatprep.subr.mxu0 0.0
    %2669 = vmatpush1.msra.mxu0 0.0
    %2670 = vmatprep.subr.mxu0 0.0
    %2671 = vmatpush1.msra.mxu0 0.0
    %2672 = vmatprep.subr.mxu0 0.0
    %2673 = vmatpush1.msra.mxu0 0.0
    %2674 = vmatprep.subr.mxu0 0.0
    %2675 = vmatpush1.msra.mxu0 0.0
    %2676 = vmatprep.subr.mxu0 0.0
    %2677 = vmatpush1.msra.mxu0 0.0
    %2678 = vmatprep.subr.mxu0 0.0
    %2679 = vmatpush1.msra.mxu0 0.0
    %2680 = vmatprep.subr.mxu0 0.0
    %2681 = vmatpush1.msra.mxu0 0.0
    %2682 = vmatprep.subr.mxu0 0.0
    %2683 = vmatpush1.msra.mxu0 0.0
    %2684 = vmatprep.subr.mxu0 0.0
    %2685 = vmatpush1.msra.mxu0 0.0
    %2686 = vmatprep.subr.mxu0 0.0
    %2687 = vmatpush1.msra.mxu0 0.0
    %2688 = vmatprep.subr.mxu0 0.0
    %2689 = vmatpush1.msra.mxu0 0.0
    %2690 = vmatprep.subr.mxu0 0.0
    %2691 = vmatpush1.msra.mxu0 0.0
    %2692 = vmatprep.subr.mxu0 0.0
    %2693 = vmatpush1.msra.mxu0 0.0
    %2694 = vmatprep.subr.mxu0 0.0
    %2695 = vmatpush1.msra.mxu0 0.0
    %2696 = vmatprep.subr.mxu0 0.0
    %2697 = vmatpush1.msra.mxu0 0.0
    %2698 = vmatprep.subr.mxu0 0.0
    %2699 = vmatpush1.msra.mxu0 0.0
    %2700 = vmatprep.subr.mxu0 0.0
    %2701 = vmatpush1.msra.mxu0 0.0
    %2702 = vmatprep.subr.mxu0 0.0
    %2703 = vmatpush1.msra.mxu0 0.0
    %2704 = vmatprep.subr.mxu0 0.0
    %2705 = vmatpush1.msra.mxu0 0.0
    %2706 = vmatprep.subr.mxu0 0.0
    %2707 = vmatpush1.msra.mxu0 0.0
    %2708 = vmatprep.subr.mxu0 0.0
    %2709 = vmatpush1.msra.mxu0 0.0
    %2710 = vmatprep.subr.mxu0 0.0
    %2711 = vmatpush1.msra.mxu0 0.0
    %2712 = vmatprep.subr.mxu0 0.0
    %2713 = vmatpush1.msra.mxu0 0.0
    %2714 = vmatprep.subr.mxu0 0.0
    %2715 = vmatpush1.msra.mxu0 0.0
    %2716 = vmatprep.subr.mxu0 0.0
    %2717 = vmatpush1.msra.mxu0 0.0
    %2718 = vmatprep.subr.mxu0 0.0
    %2719 = vmatpush1.msra.mxu0 0.0
    %2720 = vmatprep.subr.mxu0 0.0
    %2721 = vmatpush1.msra.mxu0 0.0
    %2722 = vmatprep.subr.mxu0 0.0
    %2723 = vmatpush1.msra.mxu0 0.0
    %2724 = vmatprep.subr.mxu0 0.0
    %2725 = vmatpush1.msra.mxu0 0.0
    %2726 = vmatprep.mubr.f32.mxu0 0.0
    %2727 = vmatmul.mubr.f32.gmra.mrb[0].mxu0 %v2660
    %v2728 = vpop.f32.mrb[0].mxu0
    %v2729 = vadd.f32 %v2647, %v2728
    %v2730 = vpop.f32.mrb[0].mxu0
    %v2731 = vadd.f32 %v2651, %v2730
    %2732 = vdwg.mxu0
    %2733 = vmatprep.subr.mxu0 0.0
    %2734 = vmatpush1.msra.mxu0 %v2638
    %2735 = vmatprep.subr.mxu0 0.0
    %2736 = vmatpush1.msra.mxu0 %v2641
    %2737 = vmatprep.subr.mxu0 0.0
    %2738 = vmatpush1.msra.mxu0 0.0
    %2739 = vmatprep.subr.mxu0 0.0
    %2740 = vmatpush1.msra.mxu0 0.0
    %2741 = vmatprep.subr.mxu0 0.0
    %2742 = vmatpush1.msra.mxu0 0.0
    %2743 = vmatprep.subr.mxu0 0.0
    %2744 = vmatpush1.msra.mxu0 0.0
    %2745 = vmatprep.subr.mxu0 0.0
    %2746 = vmatpush1.msra.mxu0 0.0
    %2747 = vmatprep.subr.mxu0 0.0
    %2748 = vmatpush1.msra.mxu0 0.0
    %2749 = vmatprep.subr.mxu0 0.0
    %2750 = vmatpush1.msra.mxu0 0.0
    %2751 = vmatprep.subr.mxu0 0.0
    %2752 = vmatpush1.msra.mxu0 0.0
    %2753 = vmatprep.subr.mxu0 0.0
    %2754 = vmatpush1.msra.mxu0 0.0
    %2755 = vmatprep.subr.mxu0 0.0
    %2756 = vmatpush1.msra.mxu0 0.0
    %2757 = vmatprep.subr.mxu0 0.0
    %2758 = vmatpush1.msra.mxu0 0.0
    %2759 = vmatprep.subr.mxu0 0.0
    %2760 = vmatpush1.msra.mxu0 0.0
    %2761 = vmatprep.subr.mxu0 0.0
    %2762 = vmatpush1.msra.mxu0 0.0
    %2763 = vmatprep.subr.mxu0 0.0
    %2764 = vmatpush1.msra.mxu0 0.0
    %2765 = vmatprep.subr.mxu0 0.0
    %2766 = vmatpush1.msra.mxu0 0.0
    %2767 = vmatprep.subr.mxu0 0.0
    %2768 = vmatpush1.msra.mxu0 0.0
    %2769 = vmatprep.subr.mxu0 0.0
    %2770 = vmatpush1.msra.mxu0 0.0
    %2771 = vmatprep.subr.mxu0 0.0
    %2772 = vmatpush1.msra.mxu0 0.0
    %2773 = vmatprep.subr.mxu0 0.0
    %2774 = vmatpush1.msra.mxu0 0.0
    %2775 = vmatprep.subr.mxu0 0.0
    %2776 = vmatpush1.msra.mxu0 0.0
    %2777 = vmatprep.subr.mxu0 0.0
    %2778 = vmatpush1.msra.mxu0 0.0
    %2779 = vmatprep.subr.mxu0 0.0
    %2780 = vmatpush1.msra.mxu0 0.0
    %2781 = vmatprep.subr.mxu0 0.0
    %2782 = vmatpush1.msra.mxu0 0.0
    %2783 = vmatprep.subr.mxu0 0.0
    %2784 = vmatpush1.msra.mxu0 0.0
    %2785 = vmatprep.subr.mxu0 0.0
    %2786 = vmatpush1.msra.mxu0 0.0
    %2787 = vmatprep.subr.mxu0 0.0
    %2788 = vmatpush1.msra.mxu0 0.0
    %2789 = vmatprep.subr.mxu0 0.0
    %2790 = vmatpush1.msra.mxu0 0.0
    %2791 = vmatprep.subr.mxu0 0.0
    %2792 = vmatpush1.msra.mxu0 0.0
    %2793 = vmatprep.subr.mxu0 0.0
    %2794 = vmatpush1.msra.mxu0 0.0
    %2795 = vmatprep.subr.mxu0 0.0
    %2796 = vmatpush1.msra.mxu0 0.0
    %2797 = vmatprep.mubr.f32.mxu0 0.0
    %2798 = vmatmul.mubr.f32.gmra.mrb[0].mxu0 %v2660
    %v2799 = vpop.f32.mrb[0].mxu0
    %v2800 = vadd.f32 %v2655, %v2799
    %v2801 = vpop.f32.mrb[0].mxu0
    %2802 = vdwg.mxu0
    %v2803 = vld [vmem:[#allocation17] sm:$0xff]
    %v2804 = vld [vmem:[#allocation17 + $0x8] sm:$0xff]
    %v2805 = vld [vmem:[#allocation17 + $0x10] sm:$0xff]
    %v2806 = vld [vmem:[#allocation17 + $0x18] sm:$0xff]
    %v2807 = vld [vmem:[#allocation17 + $0x20] sm:$0xff]
    %v2808 = vld [vmem:[#allocation17 + $0x28] sm:$0xff]
    %v2809 = vld [vmem:[#allocation17 + $0x30] sm:$0xff]
    %v2810 = vld [vmem:[#allocation17 + $0x38] sm:$0xff]
    %v2811 = vld [vmem:[#allocation17 + $0x40] sm:$0xff]
    %v2812 = vld [vmem:[#allocation17 + $0x48] sm:$0xff]
    %v2813 = vld [vmem:[#allocation17 + $0x50] sm:$0xff]
    %v2814 = vld [vmem:[#allocation17 + $0x58] sm:$0xff]
    %v2815 = vld [vmem:[#allocation17 + $0x60] sm:$0xff]
    %v2816 = vld [vmem:[#allocation17 + $0x68] sm:$0xff]
    %v2817 = vld [vmem:[#allocation17 + $0x70] sm:$0xff]
    %v2818 = vld [vmem:[#allocation17 + $0x78] sm:$0xff]
    %v2819 = vld [vmem:[#allocation17 + $0x80] sm:$0xff]
    %v2820 = vld [vmem:[#allocation17 + $0x88] sm:$0xff]
    %v2821 = vld [vmem:[#allocation17 + $0x90] sm:$0xff]
    %v2822 = vld [vmem:[#allocation17 + $0x98] sm:$0xff]
    %v2823 = vld [vmem:[#allocation17 + $0xa0] sm:$0xff]
    %v2824 = vld [vmem:[#allocation17 + $0xa8] sm:$0xff]
    %v2825 = vld [vmem:[#allocation17 + $0xb0] sm:$0xff]
    %v2826 = vld [vmem:[#allocation17 + $0xb8] sm:$0xff]
    %v2827 = vld [vmem:[#allocation17 + $0xc0] sm:$0xff]
    %v2828 = vld [vmem:[#allocation17 + $0xc8] sm:$0xff]
    %v2829 = vld [vmem:[#allocation17 + $0xd0] sm:$0xff]
    %v2830 = vld [vmem:[#allocation17 + $0xd8] sm:$0xff]
    %v2831 = vld [vmem:[#allocation17 + $0xe0] sm:$0xff]
    %v2832 = vld [vmem:[#allocation17 + $0xe8] sm:$0xff]
    %v2833 = vld [vmem:[#allocation17 + $0xf0] sm:$0xff]
    %v2834 = vld [vmem:[#allocation17 + $0xf8] sm:$0xff]
    %v2835 = vld [vmem:[#allocation17 + $0x100] sm:$0xff]
    %v2836 = vld [vmem:[#allocation17 + $0x108] sm:$0xff]
    %v2837 = vld [vmem:[#allocation17 + $0x110] sm:$0xff]
    %v2838 = vld [vmem:[#allocation17 + $0x118] sm:$0xff]
    %v2839 = vld [vmem:[#allocation17 + $0x120] sm:$0xff]
    %v2840 = vld [vmem:[#allocation17 + $0x128] sm:$0xff]
    %v2841 = vld [vmem:[#allocation17 + $0x130] sm:$0xff]
    %v2842 = vld [vmem:[#allocation17 + $0x138] sm:$0xff]
    %v2843 = vld [vmem:[#allocation17 + $0x140] sm:$0xff]
    %v2844 = vld [vmem:[#allocation17 + $0x148] sm:$0xff]
    %v2845 = vld [vmem:[#allocation17 + $0x150] sm:$0xff]
    %v2846 = vld [vmem:[#allocation17 + $0x158] sm:$0xff]
    %v2847 = vld [vmem:[#allocation17 + $0x160] sm:$0xff]
    %v2848 = vld [vmem:[#allocation17 + $0x168] sm:$0xff]
    %v2849 = vld [vmem:[#allocation17 + $0x170] sm:$0xff]
    %v2850 = vld [vmem:[#allocation17 + $0x178] sm:$0xff]
    %v2851 = vld [vmem:[%s13] sm:$0x7]
    %v2853 = vlaneseq
    %v2854 = vshrl.u32 %v2853, 7
    %v2855 = vsub.s32 0, %v2854
    %v2856 = vrot.slane %v2851, %v2855
    %v2857 = vlaneseq
    %v2858 = vshrl.u32 %v2857, 7
    %v2859 = vsub.s32 1, %v2858
    %v2860 = vrot.slane %v2851, %v2859
    %v2861 = vlaneseq
    %v2862 = vshrl.u32 %v2861, 7
    %v2863 = vsub.s32 2, %v2862
    %v2864 = vrot.slane %v2851, %v2863
    %2868 = vmatprep.subr.mxu0 %v2804
    %2869 = vmatpush1.msra.mxu0 %v2803
    %2870 = vmatprep.subr.mxu0 %v2807
    %2871 = vmatpush1.msra.mxu0 %v2806
    %2872 = vmatprep.subr.mxu0 %v2810
    %2873 = vmatpush1.msra.mxu0 %v2809
    %2874 = vmatprep.subr.mxu0 %v2813
    %2875 = vmatpush1.msra.mxu0 %v2812
    %2876 = vmatprep.subr.mxu0 %v2816
    %2877 = vmatpush1.msra.mxu0 %v2815
    %2878 = vmatprep.subr.mxu0 %v2819
    %2879 = vmatpush1.msra.mxu0 %v2818
    %2880 = vmatprep.subr.mxu0 %v2822
    %2881 = vmatpush1.msra.mxu0 %v2821
    %2882 = vmatprep.subr.mxu0 %v2825
    %2883 = vmatpush1.msra.mxu0 %v2824
    %2884 = vmatprep.subr.mxu0 %v2828
    %2885 = vmatpush1.msra.mxu0 %v2827
    %2886 = vmatprep.subr.mxu0 %v2831
    %2887 = vmatpush1.msra.mxu0 %v2830
    %2888 = vmatprep.subr.mxu0 %v2834
    %2889 = vmatpush1.msra.mxu0 %v2833
    %2890 = vmatprep.subr.mxu0 %v2837
    %2891 = vmatpush1.msra.mxu0 %v2836
    %2892 = vmatprep.subr.mxu0 %v2840
    %2893 = vmatpush1.msra.mxu0 %v2839
    %2894 = vmatprep.subr.mxu0 %v2843
    %2895 = vmatpush1.msra.mxu0 %v2842
    %2896 = vmatprep.subr.mxu0 %v2846
    %2897 = vmatpush1.msra.mxu0 %v2845
    %2898 = vmatprep.subr.mxu0 %v2849
    %2899 = vmatpush1.msra.mxu0 %v2848
    %2900 = vmatprep.subr.mxu0 0.0
    %2901 = vmatpush1.msra.mxu0 0.0
    %2902 = vmatprep.subr.mxu0 0.0
    %2903 = vmatpush1.msra.mxu0 0.0
    %2904 = vmatprep.subr.mxu0 0.0
    %2905 = vmatpush1.msra.mxu0 0.0
    %2906 = vmatprep.subr.mxu0 0.0
    %2907 = vmatpush1.msra.mxu0 0.0
    %2908 = vmatprep.subr.mxu0 0.0
    %2909 = vmatpush1.msra.mxu0 0.0
    %2910 = vmatprep.subr.mxu0 0.0
    %2911 = vmatpush1.msra.mxu0 0.0
    %2912 = vmatprep.subr.mxu0 0.0
    %2913 = vmatpush1.msra.mxu0 0.0
    %2914 = vmatprep.subr.mxu0 0.0
    %2915 = vmatpush1.msra.mxu0 0.0
    %2916 = vmatprep.subr.mxu0 0.0
    %2917 = vmatpush1.msra.mxu0 0.0
    %2918 = vmatprep.subr.mxu0 0.0
    %2919 = vmatpush1.msra.mxu0 0.0
    %2920 = vmatprep.subr.mxu0 0.0
    %2921 = vmatpush1.msra.mxu0 0.0
    %2922 = vmatprep.subr.mxu0 0.0
    %2923 = vmatpush1.msra.mxu0 0.0
    %2924 = vmatprep.subr.mxu0 0.0
    %2925 = vmatpush1.msra.mxu0 0.0
    %2926 = vmatprep.subr.mxu0 0.0
    %2927 = vmatpush1.msra.mxu0 0.0
    %2928 = vmatprep.subr.mxu0 0.0
    %2929 = vmatpush1.msra.mxu0 0.0
    %2930 = vmatprep.subr.mxu0 0.0
    %2931 = vmatpush1.msra.mxu0 0.0
    %2932 = vmatprep.mubr.f32.mxu0 0.0
    %2933 = vmatmul.mubr.f32.gmra.mrb[0].mxu0 %v1678
    %v2934 = vpop.f32.mrb[0].mxu0
    %v2935 = vadd.f32 %v2856, %v2934
    %v2936 = vpop.f32.mrb[0].mxu0
    %v2937 = vadd.f32 %v2860, %v2936
    %2938 = vdwg.mxu0
    %2939 = vmatprep.subr.mxu0 0.0
    %2940 = vmatpush1.msra.mxu0 %v2805
    %2941 = vmatprep.subr.mxu0 0.0
    %2942 = vmatpush1.msra.mxu0 %v2808
    %2943 = vmatprep.subr.mxu0 0.0
    %2944 = vmatpush1.msra.mxu0 %v2811
    %2945 = vmatprep.subr.mxu0 0.0
    %2946 = vmatpush1.msra.mxu0 %v2814
    %2947 = vmatprep.subr.mxu0 0.0
    %2948 = vmatpush1.msra.mxu0 %v2817
    %2949 = vmatprep.subr.mxu0 0.0
    %2950 = vmatpush1.msra.mxu0 %v2820
    %2951 = vmatprep.subr.mxu0 0.0
    %2952 = vmatpush1.msra.mxu0 %v2823
    %2953 = vmatprep.subr.mxu0 0.0
    %2954 = vmatpush1.msra.mxu0 %v2826
    %2955 = vmatprep.subr.mxu0 0.0
    %2956 = vmatpush1.msra.mxu0 %v2829
    %2957 = vmatprep.subr.mxu0 0.0
    %2958 = vmatpush1.msra.mxu0 %v2832
    %2959 = vmatprep.subr.mxu0 0.0
    %2960 = vmatpush1.msra.mxu0 %v2835
    %2961 = vmatprep.subr.mxu0 0.0
    %2962 = vmatpush1.msra.mxu0 %v2838
    %2963 = vmatprep.subr.mxu0 0.0
    %2964 = vmatpush1.msra.mxu0 %v2841
    %2965 = vmatprep.subr.mxu0 0.0
    %2966 = vmatpush1.msra.mxu0 %v2844
    %2967 = vmatprep.subr.mxu0 0.0
    %2968 = vmatpush1.msra.mxu0 %v2847
    %2969 = vmatprep.subr.mxu0 0.0
    %2970 = vmatpush1.msra.mxu0 %v2850
    %2971 = vmatprep.subr.mxu0 0.0
    %2972 = vmatpush1.msra.mxu0 0.0
    %2973 = vmatprep.subr.mxu0 0.0
    %2974 = vmatpush1.msra.mxu0 0.0
    %2975 = vmatprep.subr.mxu0 0.0
    %2976 = vmatpush1.msra.mxu0 0.0
    %2977 = vmatprep.subr.mxu0 0.0
    %2978 = vmatpush1.msra.mxu0 0.0
    %2979 = vmatprep.subr.mxu0 0.0
    %2980 = vmatpush1.msra.mxu0 0.0
    %2981 = vmatprep.subr.mxu0 0.0
    %2982 = vmatpush1.msra.mxu0 0.0
    %2983 = vmatprep.subr.mxu0 0.0
    %2984 = vmatpush1.msra.mxu0 0.0
    %2985 = vmatprep.subr.mxu0 0.0
    %2986 = vmatpush1.msra.mxu0 0.0
    %2987 = vmatprep.subr.mxu0 0.0
    %2988 = vmatpush1.msra.mxu0 0.0
    %2989 = vmatprep.subr.mxu0 0.0
    %2990 = vmatpush1.msra.mxu0 0.0
    %2991 = vmatprep.subr.mxu0 0.0
    %2992 = vmatpush1.msra.mxu0 0.0
    %2993 = vmatprep.subr.mxu0 0.0
    %2994 = vmatpush1.msra.mxu0 0.0
    %2995 = vmatprep.subr.mxu0 0.0
    %2996 = vmatpush1.msra.mxu0 0.0
    %2997 = vmatprep.subr.mxu0 0.0
    %2998 = vmatpush1.msra.mxu0 0.0
    %2999 = vmatprep.subr.mxu0 0.0
    %3000 = vmatpush1.msra.mxu0 0.0
    %3001 = vmatprep.subr.mxu0 0.0
    %3002 = vmatpush1.msra.mxu0 0.0
    %3003 = vmatprep.mubr.f32.mxu0 0.0
    %3004 = vmatmul.mubr.f32.gmra.mrb[0].mxu0 %v1678
    %v3005 = vpop.f32.mrb[0].mxu0
    %v3006 = vadd.f32 %v2864, %v3005
    %v3007 = vpop.f32.mrb[0].mxu0
    %3008 = vdwg.mxu0
    %v3009 = vadd.f32 %v2729, %v2935
    %v3010 = vxor.u32 %v3009, 2147483648
    %v3011 = vmul.f32 %v3010, 1.442695
    %v3012 = vpow.pop %v3011
    %v3013 = vadd.f32 %v3012, 1.0
    %v3014 = vrcp.pop %v3013
    %v3015 = vmul.f32 1.0, %v3014
    %v3016 = vadd.f32 %v2731, %v2937
    %v3017 = vxor.u32 %v3016, 2147483648
    %v3018 = vmul.f32 %v3017, 1.442695
    %v3019 = vpow.pop %v3018
    %v3020 = vadd.f32 %v3019, 1.0
    %v3021 = vrcp.pop %v3020
    %v3022 = vmul.f32 1.0, %v3021
    %v3023 = vmul.f32 %v3015, %v3006
    %v3024 = vadd.f32 %v2800, %v3023
    %v3025 = vtanh.pop %v3024
    %v3026 = vsub.f32 1.0, %v3022
    %v3027 = vmul.f32 %v3026, %v3025
    %v3028 = vmul.f32 %v3022, %v1678
    %v3029 = vadd.f32 %v3027, %v3028
    %v3030 = vld [vmem:[#allocation18] sm:$0xff]
    %v3031 = vld [vmem:[#allocation18 + $0x8] sm:$0xff]
    %v3032 = vld [vmem:[#allocation18 + $0x10] sm:$0xff]
    %v3033 = vld [vmem:[#allocation18 + $0x18] sm:$0xff]
    %v3034 = vld [vmem:[#allocation18 + $0x20] sm:$0xff]
    %v3035 = vld [vmem:[#allocation18 + $0x28] sm:$0xff]
    %v3036 = vld [vmem:[#allocation18 + $0x30] sm:$0xff]
    %v3037 = vld [vmem:[#allocation18 + $0x38] sm:$0xff]
    %v3038 = vld [vmem:[#allocation18 + $0x40] sm:$0xff]
    %v3039 = vld [vmem:[#allocation18 + $0x48] sm:$0xff]
    %v3040 = vld [vmem:[#allocation18 + $0x50] sm:$0xff]
    %v3041 = vld [vmem:[#allocation18 + $0x58] sm:$0xff]
    %v3042 = vld [vmem:[#allocation18 + $0x60] sm:$0xff]
    %v3043 = vld [vmem:[#allocation18 + $0x68] sm:$0xff]
    %v3044 = vld [vmem:[#allocation18 + $0x70] sm:$0xff]
    %v3045 = vld [vmem:[#allocation18 + $0x78] sm:$0xff]
    %v3046 = vld [vmem:[#allocation18 + $0x80] sm:$0xff]
    %v3047 = vld [vmem:[#allocation18 + $0x88] sm:$0xff]
    %v3048 = vld [vmem:[#allocation18 + $0x90] sm:$0xff]
    %v3049 = vld [vmem:[#allocation18 + $0x98] sm:$0xff]
    %v3050 = vld [vmem:[#allocation18 + $0xa0] sm:$0xff]
    %v3051 = vld [vmem:[#allocation18 + $0xa8] sm:$0xff]
    %v3052 = vld [vmem:[#allocation18 + $0xb0] sm:$0xff]
    %v3053 = vld [vmem:[#allocation18 + $0xb8] sm:$0xff]
    %v3054 = vld [vmem:[#allocation18 + $0xc0] sm:$0xff]
    %v3055 = vld [vmem:[#allocation18 + $0xc8] sm:$0xff]
    %v3056 = vld [vmem:[#allocation18 + $0xd0] sm:$0xff]
    %v3057 = vld [vmem:[#allocation18 + $0xd8] sm:$0xff]
    %v3058 = vld [vmem:[#allocation18 + $0xe0] sm:$0xff]
    %v3059 = vld [vmem:[#allocation18 + $0xe8] sm:$0xff]
    %v3060 = vld [vmem:[#allocation18 + $0xf0] sm:$0xff]
    %v3061 = vld [vmem:[#allocation18 + $0xf8] sm:$0xff]
    %v3062 = vld [vmem:[#allocation18 + $0x100] sm:$0xff]
    %v3063 = vld [vmem:[#allocation18 + $0x108] sm:$0xff]
    %v3064 = vld [vmem:[#allocation18 + $0x110] sm:$0xff]
    %v3065 = vld [vmem:[#allocation18 + $0x118] sm:$0xff]
    %v3066 = vld [vmem:[#allocation18 + $0x120] sm:$0xff]
    %v3067 = vld [vmem:[#allocation18 + $0x128] sm:$0xff]
    %v3068 = vld [vmem:[#allocation18 + $0x130] sm:$0xff]
    %v3069 = vld [vmem:[#allocation18 + $0x138] sm:$0xff]
    %v3070 = vld [vmem:[#allocation18 + $0x140] sm:$0xff]
    %v3071 = vld [vmem:[#allocation18 + $0x148] sm:$0xff]
    %v3072 = vld [vmem:[#allocation18 + $0x150] sm:$0xff]
    %v3073 = vld [vmem:[#allocation18 + $0x158] sm:$0xff]
    %v3074 = vld [vmem:[#allocation18 + $0x160] sm:$0xff]
    %v3075 = vld [vmem:[#allocation18 + $0x168] sm:$0xff]
    %v3076 = vld [vmem:[#allocation18 + $0x170] sm:$0xff]
    %v3077 = vld [vmem:[#allocation18 + $0x178] sm:$0xff]
    %v3078 = vld [vmem:[%s16] sm:$0x7]
    %v3080 = vlaneseq
    %v3081 = vshrl.u32 %v3080, 7
    %v3082 = vsub.s32 0, %v3081
    %v3083 = vrot.slane %v3078, %v3082
    %v3084 = vlaneseq
    %v3085 = vshrl.u32 %v3084, 7
    %v3086 = vsub.s32 1, %v3085
    %v3087 = vrot.slane %v3078, %v3086
    %v3088 = vlaneseq
    %v3089 = vshrl.u32 %v3088, 7
    %v3090 = vsub.s32 2, %v3089
    %v3091 = vrot.slane %v3078, %v3090
    %3095 = vmatprep.subr.mxu0 %v3031
    %3096 = vmatpush1.msra.mxu0 %v3030
    %3097 = vmatprep.subr.mxu0 %v3034
    %3098 = vmatpush1.msra.mxu0 %v3033
    %3099 = vmatprep.subr.mxu0 %v3037
    %3100 = vmatpush1.msra.mxu0 %v3036
    %3101 = vmatprep.subr.mxu0 %v3040
    %3102 = vmatpush1.msra.mxu0 %v3039
    %3103 = vmatprep.subr.mxu0 %v3043
    %3104 = vmatpush1.msra.mxu0 %v3042
    %3105 = vmatprep.subr.mxu0 %v3046
    %3106 = vmatpush1.msra.mxu0 %v3045
    %3107 = vmatprep.subr.mxu0 %v3049
    %3108 = vmatpush1.msra.mxu0 %v3048
    %3109 = vmatprep.subr.mxu0 %v3052
    %3110 = vmatpush1.msra.mxu0 %v3051
    %3111 = vmatprep.subr.mxu0 %v3055
    %3112 = vmatpush1.msra.mxu0 %v3054
    %3113 = vmatprep.subr.mxu0 %v3058
    %3114 = vmatpush1.msra.mxu0 %v3057
    %3115 = vmatprep.subr.mxu0 %v3061
    %3116 = vmatpush1.msra.mxu0 %v3060
    %3117 = vmatprep.subr.mxu0 %v3064
    %3118 = vmatpush1.msra.mxu0 %v3063
    %3119 = vmatprep.subr.mxu0 %v3067
    %3120 = vmatpush1.msra.mxu0 %v3066
    %3121 = vmatprep.subr.mxu0 %v3070
    %3122 = vmatpush1.msra.mxu0 %v3069
    %3123 = vmatprep.subr.mxu0 %v3073
    %3124 = vmatpush1.msra.mxu0 %v3072
    %3125 = vmatprep.subr.mxu0 %v3076
    %3126 = vmatpush1.msra.mxu0 %v3075
    %3127 = vmatprep.subr.mxu0 0.0
    %3128 = vmatpush1.msra.mxu0 0.0
    %3129 = vmatprep.subr.mxu0 0.0
    %3130 = vmatpush1.msra.mxu0 0.0
    %3131 = vmatprep.subr.mxu0 0.0
    %3132 = vmatpush1.msra.mxu0 0.0
    %3133 = vmatprep.subr.mxu0 0.0
    %3134 = vmatpush1.msra.mxu0 0.0
    %3135 = vmatprep.subr.mxu0 0.0
    %3136 = vmatpush1.msra.mxu0 0.0
    %3137 = vmatprep.subr.mxu0 0.0
    %3138 = vmatpush1.msra.mxu0 0.0
    %3139 = vmatprep.subr.mxu0 0.0
    %3140 = vmatpush1.msra.mxu0 0.0
    %3141 = vmatprep.subr.mxu0 0.0
    %3142 = vmatpush1.msra.mxu0 0.0
    %3143 = vmatprep.subr.mxu0 0.0
    %3144 = vmatpush1.msra.mxu0 0.0
    %3145 = vmatprep.subr.mxu0 0.0
    %3146 = vmatpush1.msra.mxu0 0.0
    %3147 = vmatprep.subr.mxu0 0.0
    %3148 = vmatpush1.msra.mxu0 0.0
    %3149 = vmatprep.subr.mxu0 0.0
    %3150 = vmatpush1.msra.mxu0 0.0
    %3151 = vmatprep.subr.mxu0 0.0
    %3152 = vmatpush1.msra.mxu0 0.0
    %3153 = vmatprep.subr.mxu0 0.0
    %3154 = vmatpush1.msra.mxu0 0.0
    %3155 = vmatprep.subr.mxu0 0.0
    %3156 = vmatpush1.msra.mxu0 0.0
    %3157 = vmatprep.subr.mxu0 0.0
    %3158 = vmatpush1.msra.mxu0 0.0
    %3159 = vmatprep.mubr.f32.mxu0 0.0
    %3160 = vmatmul.mubr.f32.gmra.mrb[0].mxu0 %v3029
    %v3161 = vpop.f32.mrb[0].mxu0
    %v3162 = vadd.f32 %v3083, %v3161
    %v3163 = vpop.f32.mrb[0].mxu0
    %v3164 = vadd.f32 %v3087, %v3163
    %3165 = vdwg.mxu0
    %3166 = vmatprep.subr.mxu0 0.0
    %3167 = vmatpush1.msra.mxu0 %v3032
    %3168 = vmatprep.subr.mxu0 0.0
    %3169 = vmatpush1.msra.mxu0 %v3035
    %3170 = vmatprep.subr.mxu0 0.0
    %3171 = vmatpush1.msra.mxu0 %v3038
    %3172 = vmatprep.subr.mxu0 0.0
    %3173 = vmatpush1.msra.mxu0 %v3041
    %3174 = vmatprep.subr.mxu0 0.0
    %3175 = vmatpush1.msra.mxu0 %v3044
    %3176 = vmatprep.subr.mxu0 0.0
    %3177 = vmatpush1.msra.mxu0 %v3047
    %3178 = vmatprep.subr.mxu0 0.0
    %3179 = vmatpush1.msra.mxu0 %v3050
    %3180 = vmatprep.subr.mxu0 0.0
    %3181 = vmatpush1.msra.mxu0 %v3053
    %3182 = vmatprep.subr.mxu0 0.0
    %3183 = vmatpush1.msra.mxu0 %v3056
    %3184 = vmatprep.subr.mxu0 0.0
    %3185 = vmatpush1.msra.mxu0 %v3059
    %3186 = vmatprep.subr.mxu0 0.0
    %3187 = vmatpush1.msra.mxu0 %v3062
    %3188 = vmatprep.subr.mxu0 0.0
    %3189 = vmatpush1.msra.mxu0 %v3065
    %3190 = vmatprep.subr.mxu0 0.0
    %3191 = vmatpush1.msra.mxu0 %v3068
    %3192 = vmatprep.subr.mxu0 0.0
    %3193 = vmatpush1.msra.mxu0 %v3071
    %3194 = vmatprep.subr.mxu0 0.0
    %3195 = vmatpush1.msra.mxu0 %v3074
    %3196 = vmatprep.subr.mxu0 0.0
    %3197 = vmatpush1.msra.mxu0 %v3077
    %3198 = vmatprep.subr.mxu0 0.0
    %3199 = vmatpush1.msra.mxu0 0.0
    %3200 = vmatprep.subr.mxu0 0.0
    %3201 = vmatpush1.msra.mxu0 0.0
    %3202 = vmatprep.subr.mxu0 0.0
    %3203 = vmatpush1.msra.mxu0 0.0
    %3204 = vmatprep.subr.mxu0 0.0
    %3205 = vmatpush1.msra.mxu0 0.0
    %3206 = vmatprep.subr.mxu0 0.0
    %3207 = vmatpush1.msra.mxu0 0.0
    %3208 = vmatprep.subr.mxu0 0.0
    %3209 = vmatpush1.msra.mxu0 0.0
    %3210 = vmatprep.subr.mxu0 0.0
    %3211 = vmatpush1.msra.mxu0 0.0
    %3212 = vmatprep.subr.mxu0 0.0
    %3213 = vmatpush1.msra.mxu0 0.0
    %3214 = vmatprep.subr.mxu0 0.0
    %3215 = vmatpush1.msra.mxu0 0.0
    %3216 = vmatprep.subr.mxu0 0.0
    %3217 = vmatpush1.msra.mxu0 0.0
    %3218 = vmatprep.subr.mxu0 0.0
    %3219 = vmatpush1.msra.mxu0 0.0
    %3220 = vmatprep.subr.mxu0 0.0
    %3221 = vmatpush1.msra.mxu0 0.0
    %3222 = vmatprep.subr.mxu0 0.0
    %3223 = vmatpush1.msra.mxu0 0.0
    %3224 = vmatprep.subr.mxu0 0.0
    %3225 = vmatpush1.msra.mxu0 0.0
    %3226 = vmatprep.subr.mxu0 0.0
    %3227 = vmatpush1.msra.mxu0 0.0
    %3228 = vmatprep.subr.mxu0 0.0
    %3229 = vmatpush1.msra.mxu0 0.0
    %3230 = vmatprep.mubr.f32.mxu0 0.0
    %3231 = vmatmul.mubr.f32.gmra.mrb[0].mxu0 %v3029
    %v3232 = vpop.f32.mrb[0].mxu0
    %v3233 = vadd.f32 %v3091, %v3232
    %v3234 = vpop.f32.mrb[0].mxu0
    %3235 = vdwg.mxu0
    %v3236 = vld [vmem:[#allocation20] sm:$0xff]
    %v3237 = vld [vmem:[#allocation20 + $0x8] sm:$0xff]
    %v3238 = vld [vmem:[#allocation20 + $0x10] sm:$0xff]
    %v3239 = vld [vmem:[#allocation20 + $0x18] sm:$0xff]
    %v3240 = vld [vmem:[#allocation20 + $0x20] sm:$0xff]
    %v3241 = vld [vmem:[#allocation20 + $0x28] sm:$0xff]
    %v3242 = vld [vmem:[#allocation20 + $0x30] sm:$0xff]
    %v3243 = vld [vmem:[#allocation20 + $0x38] sm:$0xff]
    %v3244 = vld [vmem:[#allocation20 + $0x40] sm:$0xff]
    %v3245 = vld [vmem:[#allocation20 + $0x48] sm:$0xff]
    %v3246 = vld [vmem:[#allocation20 + $0x50] sm:$0xff]
    %v3247 = vld [vmem:[#allocation20 + $0x58] sm:$0xff]
    %v3248 = vld [vmem:[#allocation20 + $0x60] sm:$0xff]
    %v3249 = vld [vmem:[#allocation20 + $0x68] sm:$0xff]
    %v3250 = vld [vmem:[#allocation20 + $0x70] sm:$0xff]
    %v3251 = vld [vmem:[#allocation20 + $0x78] sm:$0xff]
    %v3252 = vld [vmem:[#allocation20 + $0x80] sm:$0xff]
    %v3253 = vld [vmem:[#allocation20 + $0x88] sm:$0xff]
    %v3254 = vld [vmem:[#allocation20 + $0x90] sm:$0xff]
    %v3255 = vld [vmem:[#allocation20 + $0x98] sm:$0xff]
    %v3256 = vld [vmem:[#allocation20 + $0xa0] sm:$0xff]
    %v3257 = vld [vmem:[#allocation20 + $0xa8] sm:$0xff]
    %v3258 = vld [vmem:[#allocation20 + $0xb0] sm:$0xff]
    %v3259 = vld [vmem:[#allocation20 + $0xb8] sm:$0xff]
    %v3260 = vld [vmem:[#allocation20 + $0xc0] sm:$0xff]
    %v3261 = vld [vmem:[#allocation20 + $0xc8] sm:$0xff]
    %v3262 = vld [vmem:[#allocation20 + $0xd0] sm:$0xff]
    %v3263 = vld [vmem:[#allocation20 + $0xd8] sm:$0xff]
    %v3264 = vld [vmem:[#allocation20 + $0xe0] sm:$0xff]
    %v3265 = vld [vmem:[#allocation20 + $0xe8] sm:$0xff]
    %v3266 = vld [vmem:[#allocation20 + $0xf0] sm:$0xff]
    %v3267 = vld [vmem:[#allocation20 + $0xf8] sm:$0xff]
    %v3268 = vld [vmem:[#allocation20 + $0x100] sm:$0xff]
    %v3269 = vld [vmem:[#allocation20 + $0x108] sm:$0xff]
    %v3270 = vld [vmem:[#allocation20 + $0x110] sm:$0xff]
    %v3271 = vld [vmem:[#allocation20 + $0x118] sm:$0xff]
    %v3272 = vld [vmem:[#allocation20 + $0x120] sm:$0xff]
    %v3273 = vld [vmem:[#allocation20 + $0x128] sm:$0xff]
    %v3274 = vld [vmem:[#allocation20 + $0x130] sm:$0xff]
    %v3275 = vld [vmem:[#allocation20 + $0x138] sm:$0xff]
    %v3276 = vld [vmem:[#allocation20 + $0x140] sm:$0xff]
    %v3277 = vld [vmem:[#allocation20 + $0x148] sm:$0xff]
    %v3278 = vld [vmem:[#allocation20 + $0x150] sm:$0xff]
    %v3279 = vld [vmem:[#allocation20 + $0x158] sm:$0xff]
    %v3280 = vld [vmem:[#allocation20 + $0x160] sm:$0xff]
    %v3281 = vld [vmem:[#allocation20 + $0x168] sm:$0xff]
    %v3282 = vld [vmem:[#allocation20 + $0x170] sm:$0xff]
    %v3283 = vld [vmem:[#allocation20 + $0x178] sm:$0xff]
    %v3284 = vld [vmem:[%s17] sm:$0x7]
    %v3286 = vlaneseq
    %v3287 = vshrl.u32 %v3286, 7
    %v3288 = vsub.s32 0, %v3287
    %v3289 = vrot.slane %v3284, %v3288
    %v3290 = vlaneseq
    %v3291 = vshrl.u32 %v3290, 7
    %v3292 = vsub.s32 1, %v3291
    %v3293 = vrot.slane %v3284, %v3292
    %v3294 = vlaneseq
    %v3295 = vshrl.u32 %v3294, 7
    %v3296 = vsub.s32 2, %v3295
    %v3297 = vrot.slane %v3284, %v3296
    %3301 = vmatprep.subr.mxu0 %v3237
    %3302 = vmatpush1.msra.mxu0 %v3236
    %3303 = vmatprep.subr.mxu0 %v3240
    %3304 = vmatpush1.msra.mxu0 %v3239
    %3305 = vmatprep.subr.mxu0 %v3243
    %3306 = vmatpush1.msra.mxu0 %v3242
    %3307 = vmatprep.subr.mxu0 %v3246
    %3308 = vmatpush1.msra.mxu0 %v3245
    %3309 = vmatprep.subr.mxu0 %v3249
    %3310 = vmatpush1.msra.mxu0 %v3248
    %3311 = vmatprep.subr.mxu0 %v3252
    %3312 = vmatpush1.msra.mxu0 %v3251
    %3313 = vmatprep.subr.mxu0 %v3255
    %3314 = vmatpush1.msra.mxu0 %v3254
    %3315 = vmatprep.subr.mxu0 %v3258
    %3316 = vmatpush1.msra.mxu0 %v3257
    %3317 = vmatprep.subr.mxu0 %v3261
    %3318 = vmatpush1.msra.mxu0 %v3260
    %3319 = vmatprep.subr.mxu0 %v3264
    %3320 = vmatpush1.msra.mxu0 %v3263
    %3321 = vmatprep.subr.mxu0 %v3267
    %3322 = vmatpush1.msra.mxu0 %v3266
    %3323 = vmatprep.subr.mxu0 %v3270
    %3324 = vmatpush1.msra.mxu0 %v3269
    %3325 = vmatprep.subr.mxu0 %v3273
    %3326 = vmatpush1.msra.mxu0 %v3272
    %3327 = vmatprep.subr.mxu0 %v3276
    %3328 = vmatpush1.msra.mxu0 %v3275
    %3329 = vmatprep.subr.mxu0 %v3279
    %3330 = vmatpush1.msra.mxu0 %v3278
    %3331 = vmatprep.subr.mxu0 %v3282
    %3332 = vmatpush1.msra.mxu0 %v3281
    %3333 = vmatprep.subr.mxu0 0.0
    %3334 = vmatpush1.msra.mxu0 0.0
    %3335 = vmatprep.subr.mxu0 0.0
    %3336 = vmatpush1.msra.mxu0 0.0
    %3337 = vmatprep.subr.mxu0 0.0
    %3338 = vmatpush1.msra.mxu0 0.0
    %3339 = vmatprep.subr.mxu0 0.0
    %3340 = vmatpush1.msra.mxu0 0.0
    %3341 = vmatprep.subr.mxu0 0.0
    %3342 = vmatpush1.msra.mxu0 0.0
    %3343 = vmatprep.subr.mxu0 0.0
    %3344 = vmatpush1.msra.mxu0 0.0
    %3345 = vmatprep.subr.mxu0 0.0
    %3346 = vmatpush1.msra.mxu0 0.0
    %3347 = vmatprep.subr.mxu0 0.0
    %3348 = vmatpush1.msra.mxu0 0.0
    %3349 = vmatprep.subr.mxu0 0.0
    %3350 = vmatpush1.msra.mxu0 0.0
    %3351 = vmatprep.subr.mxu0 0.0
    %3352 = vmatpush1.msra.mxu0 0.0
    %3353 = vmatprep.subr.mxu0 0.0
    %3354 = vmatpush1.msra.mxu0 0.0
    %3355 = vmatprep.subr.mxu0 0.0
    %3356 = vmatpush1.msra.mxu0 0.0
    %3357 = vmatprep.subr.mxu0 0.0
    %3358 = vmatpush1.msra.mxu0 0.0
    %3359 = vmatprep.subr.mxu0 0.0
    %3360 = vmatpush1.msra.mxu0 0.0
    %3361 = vmatprep.subr.mxu0 0.0
    %3362 = vmatpush1.msra.mxu0 0.0
    %3363 = vmatprep.subr.mxu0 0.0
    %3364 = vmatpush1.msra.mxu0 0.0
    %3365 = vmatprep.mubr.f32.mxu0 0.0
    %3366 = vmatmul.mubr.f32.gmra.mrb[0].mxu0 %v2111
    %v3367 = vpop.f32.mrb[0].mxu0
    %v3368 = vadd.f32 %v3289, %v3367
    %v3369 = vpop.f32.mrb[0].mxu0
    %v3370 = vadd.f32 %v3293, %v3369
    %3371 = vdwg.mxu0
    %3372 = vmatprep.subr.mxu0 0.0
    %3373 = vmatpush1.msra.mxu0 %v3238
    %3374 = vmatprep.subr.mxu0 0.0
    %3375 = vmatpush1.msra.mxu0 %v3241
    %3376 = vmatprep.subr.mxu0 0.0
    %3377 = vmatpush1.msra.mxu0 %v3244
    %3378 = vmatprep.subr.mxu0 0.0
    %3379 = vmatpush1.msra.mxu0 %v3247
    %3380 = vmatprep.subr.mxu0 0.0
    %3381 = vmatpush1.msra.mxu0 %v3250
    %3382 = vmatprep.subr.mxu0 0.0
    %3383 = vmatpush1.msra.mxu0 %v3253
    %3384 = vmatprep.subr.mxu0 0.0
    %3385 = vmatpush1.msra.mxu0 %v3256
    %3386 = vmatprep.subr.mxu0 0.0
    %3387 = vmatpush1.msra.mxu0 %v3259
    %3388 = vmatprep.subr.mxu0 0.0
    %3389 = vmatpush1.msra.mxu0 %v3262
    %3390 = vmatprep.subr.mxu0 0.0
    %3391 = vmatpush1.msra.mxu0 %v3265
    %3392 = vmatprep.subr.mxu0 0.0
    %3393 = vmatpush1.msra.mxu0 %v3268
    %3394 = vmatprep.subr.mxu0 0.0
    %3395 = vmatpush1.msra.mxu0 %v3271
    %3396 = vmatprep.subr.mxu0 0.0
    %3397 = vmatpush1.msra.mxu0 %v3274
    %3398 = vmatprep.subr.mxu0 0.0
    %3399 = vmatpush1.msra.mxu0 %v3277
    %3400 = vmatprep.subr.mxu0 0.0
    %3401 = vmatpush1.msra.mxu0 %v3280
    %3402 = vmatprep.subr.mxu0 0.0
    %3403 = vmatpush1.msra.mxu0 %v3283
    %3404 = vmatprep.subr.mxu0 0.0
    %3405 = vmatpush1.msra.mxu0 0.0
    %3406 = vmatprep.subr.mxu0 0.0
    %3407 = vmatpush1.msra.mxu0 0.0
    %3408 = vmatprep.subr.mxu0 0.0
    %3409 = vmatpush1.msra.mxu0 0.0
    %3410 = vmatprep.subr.mxu0 0.0
    %3411 = vmatpush1.msra.mxu0 0.0
    %3412 = vmatprep.subr.mxu0 0.0
    %3413 = vmatpush1.msra.mxu0 0.0
    %3414 = vmatprep.subr.mxu0 0.0
    %3415 = vmatpush1.msra.mxu0 0.0
    %3416 = vmatprep.subr.mxu0 0.0
    %3417 = vmatpush1.msra.mxu0 0.0
    %3418 = vmatprep.subr.mxu0 0.0
    %3419 = vmatpush1.msra.mxu0 0.0
    %3420 = vmatprep.subr.mxu0 0.0
    %3421 = vmatpush1.msra.mxu0 0.0
    %3422 = vmatprep.subr.mxu0 0.0
    %3423 = vmatpush1.msra.mxu0 0.0
    %3424 = vmatprep.subr.mxu0 0.0
    %3425 = vmatpush1.msra.mxu0 0.0
    %3426 = vmatprep.subr.mxu0 0.0
    %3427 = vmatpush1.msra.mxu0 0.0
    %3428 = vmatprep.subr.mxu0 0.0
    %3429 = vmatpush1.msra.mxu0 0.0
    %3430 = vmatprep.subr.mxu0 0.0
    %3431 = vmatpush1.msra.mxu0 0.0
    %3432 = vmatprep.subr.mxu0 0.0
    %3433 = vmatpush1.msra.mxu0 0.0
    %3434 = vmatprep.subr.mxu0 0.0
    %3435 = vmatpush1.msra.mxu0 0.0
    %3436 = vmatprep.mubr.f32.mxu0 0.0
    %3437 = vmatmul.mubr.f32.gmra.mrb[0].mxu0 %v2111
    %v3438 = vpop.f32.mrb[0].mxu0
    %v3439 = vadd.f32 %v3297, %v3438
    %v3440 = vpop.f32.mrb[0].mxu0
    %3441 = vdwg.mxu0
    %v3442 = vadd.f32 %v3162, %v3368
    %v3443 = vxor.u32 %v3442, 2147483648
    %v3444 = vmul.f32 %v3443, 1.442695
    %v3445 = vpow.pop %v3444
    %v3446 = vadd.f32 %v3445, 1.0
    %v3447 = vrcp.pop %v3446
    %v3448 = vmul.f32 1.0, %v3447
    %v3449 = vadd.f32 %v3164, %v3370
    %v3450 = vxor.u32 %v3449, 2147483648
    %v3451 = vmul.f32 %v3450, 1.442695
    %v3452 = vpow.pop %v3451
    %v3453 = vadd.f32 %v3452, 1.0
    %v3454 = vrcp.pop %v3453
    %v3455 = vmul.f32 1.0, %v3454
    %v3456 = vmul.f32 %v3448, %v3439
    %v3457 = vadd.f32 %v3233, %v3456
    %v3458 = vtanh.pop %v3457
    %v3459 = vsub.f32 1.0, %v3455
    %v3460 = vmul.f32 %v3459, %v3458
    %v3461 = vmul.f32 %v3455, %v2111
    %v3462 = vadd.f32 %v3460, %v3461
    %v3465 = vunpack.c.l.s4 1966171168
    %v3466 = vunpack.c.0.s8 %v3465
    %v3467 = vlaneseq
    %v3468 = vshrl.u32 %v3467, 7
    %v3469 = vsub.s32 %v3466, %v3468
    %v3470 = vrot.slane %v3462, %v3469
    %v3471 = vcombine.high %v3470, %v3470
    %v3473 = vunpack.c.l.s4 1966171168
    %v3474 = vunpack.c.0.s8 %v3473
    %v3475 = vlaneseq
    %v3476 = vshrl.u32 %v3475, 7
    %v3477 = vsub.s32 %v3474, %v3476
    %v3478 = vrot.slane %v3470, %v3477
    %v3480 = vunpack.c.l.s4 1966171168
    %v3481 = vunpack.c.0.s8 %v3480
    %v3482 = vlaneseq
    %v3483 = vshrl.u32 %v3482, 7
    %v3484 = vsub.s32 %v3481, %v3483
    %v3485 = vrot.slane %v3471, %v3484
    %3488 = vmatprep.subr.mxu0 0.0
    %3489 = vmatpush1.xpose.msra.mxu0 %v1281
    %3490 = vmatprep.subr.mxu0 0.0
    %3491 = vmatpush1.xpose.msra.mxu0 0.0
    %3492 = vmatprep.subr.mxu0 0.0
    %3493 = vmatpush1.xpose.msra.mxu0 0.0
    %3494 = vmatprep.subr.mxu0 0.0
    %3495 = vmatpush1.xpose.msra.mxu0 0.0
    %3496 = vmatprep.subr.mxu0 0.0
    %3497 = vmatpush1.xpose.msra.mxu0 0.0
    %3498 = vmatprep.subr.mxu0 0.0
    %3499 = vmatpush1.xpose.msra.mxu0 0.0
    %3500 = vmatprep.subr.mxu0 0.0
    %3501 = vmatpush1.xpose.msra.mxu0 0.0
    %3502 = vmatprep.subr.mxu0 0.0
    %3503 = vmatpush1.xpose.msra.mxu0 0.0
    %3504 = vmatprep.subr.mxu0 0.0
    %3505 = vmatpush1.xpose.msra.mxu0 0.0
    %3506 = vmatprep.subr.mxu0 0.0
    %3507 = vmatpush1.xpose.msra.mxu0 0.0
    %3508 = vmatprep.subr.mxu0 0.0
    %3509 = vmatpush1.xpose.msra.mxu0 0.0
    %3510 = vmatprep.subr.mxu0 0.0
    %3511 = vmatpush1.xpose.msra.mxu0 0.0
    %3512 = vmatprep.subr.mxu0 0.0
    %3513 = vmatpush1.xpose.msra.mxu0 0.0
    %3514 = vmatprep.subr.mxu0 0.0
    %3515 = vmatpush1.xpose.msra.mxu0 0.0
    %3516 = vmatprep.subr.mxu0 0.0
    %3517 = vmatpush1.xpose.msra.mxu0 0.0
    %3518 = vmatprep.subr.mxu0 0.0
    %3519 = vmatpush1.xpose.msra.mxu0 0.0
    %3520 = vmatprep.subr.mxu0 0.0
    %3521 = vmatpush1.xpose.msra.mxu0 0.0
    %3522 = vmatprep.subr.mxu0 0.0
    %3523 = vmatpush1.xpose.msra.mxu0 0.0
    %3524 = vmatprep.subr.mxu0 0.0
    %3525 = vmatpush1.xpose.msra.mxu0 0.0
    %3526 = vmatprep.subr.mxu0 0.0
    %3527 = vmatpush1.xpose.msra.mxu0 0.0
    %3528 = vmatprep.subr.mxu0 0.0
    %3529 = vmatpush1.xpose.msra.mxu0 0.0
    %3530 = vmatprep.subr.mxu0 0.0
    %3531 = vmatpush1.xpose.msra.mxu0 0.0
    %3532 = vmatprep.subr.mxu0 0.0
    %3533 = vmatpush1.xpose.msra.mxu0 0.0
    %3534 = vmatprep.subr.mxu0 0.0
    %3535 = vmatpush1.xpose.msra.mxu0 0.0
    %3536 = vmatprep.subr.mxu0 0.0
    %3537 = vmatpush1.xpose.msra.mxu0 0.0
    %3538 = vmatprep.subr.mxu0 0.0
    %3539 = vmatpush1.xpose.msra.mxu0 0.0
    %3540 = vmatprep.subr.mxu0 0.0
    %3541 = vmatpush1.xpose.msra.mxu0 0.0
    %3542 = vmatprep.subr.mxu0 0.0
    %3543 = vmatpush1.xpose.msra.mxu0 0.0
    %3544 = vmatprep.subr.mxu0 0.0
    %3545 = vmatpush1.xpose.msra.mxu0 0.0
    %3546 = vmatprep.subr.mxu0 0.0
    %3547 = vmatpush1.xpose.msra.mxu0 0.0
    %3548 = vmatprep.subr.mxu0 0.0
    %3549 = vmatpush1.xpose.msra.mxu0 0.0
    %3550 = vmatprep.subr.mxu0 0.0
    %3551 = vmatpush1.xpose.msra.mxu0 0.0
    %3552 = vmatprep.mubr.f32.mxu0 0.0
    %3553 = vmatmul.mubr.f32.gmra.mrb[0].mxu0 %v3478
    %v3554 = vpop.f32.mrb[0].mxu0
    %v3555 = vadd.f32 0.0, %v3554
    %v3556 = vpop.f32.mrb[0].mxu0
    %3557 = vdwg.mxu0
    %3558 = vmatprep.subr.mxu0 0.0
    %3559 = vmatpush1.xpose.msra.mxu0 %v1282
    %3560 = vmatprep.subr.mxu0 0.0
    %3561 = vmatpush1.xpose.msra.mxu0 0.0
    %3562 = vmatprep.subr.mxu0 0.0
    %3563 = vmatpush1.xpose.msra.mxu0 0.0
    %3564 = vmatprep.subr.mxu0 0.0
    %3565 = vmatpush1.xpose.msra.mxu0 0.0
    %3566 = vmatprep.subr.mxu0 0.0
    %3567 = vmatpush1.xpose.msra.mxu0 0.0
    %3568 = vmatprep.subr.mxu0 0.0
    %3569 = vmatpush1.xpose.msra.mxu0 0.0
    %3570 = vmatprep.subr.mxu0 0.0
    %3571 = vmatpush1.xpose.msra.mxu0 0.0
    %3572 = vmatprep.subr.mxu0 0.0
    %3573 = vmatpush1.xpose.msra.mxu0 0.0
    %3574 = vmatprep.subr.mxu0 0.0
    %3575 = vmatpush1.xpose.msra.mxu0 0.0
    %3576 = vmatprep.subr.mxu0 0.0
    %3577 = vmatpush1.xpose.msra.mxu0 0.0
    %3578 = vmatprep.subr.mxu0 0.0
    %3579 = vmatpush1.xpose.msra.mxu0 0.0
    %3580 = vmatprep.subr.mxu0 0.0
    %3581 = vmatpush1.xpose.msra.mxu0 0.0
    %3582 = vmatprep.subr.mxu0 0.0
    %3583 = vmatpush1.xpose.msra.mxu0 0.0
    %3584 = vmatprep.subr.mxu0 0.0
    %3585 = vmatpush1.xpose.msra.mxu0 0.0
    %3586 = vmatprep.subr.mxu0 0.0
    %3587 = vmatpush1.xpose.msra.mxu0 0.0
    %3588 = vmatprep.subr.mxu0 0.0
    %3589 = vmatpush1.xpose.msra.mxu0 0.0
    %3590 = vmatprep.subr.mxu0 0.0
    %3591 = vmatpush1.xpose.msra.mxu0 0.0
    %3592 = vmatprep.subr.mxu0 0.0
    %3593 = vmatpush1.xpose.msra.mxu0 0.0
    %3594 = vmatprep.subr.mxu0 0.0
    %3595 = vmatpush1.xpose.msra.mxu0 0.0
    %3596 = vmatprep.subr.mxu0 0.0
    %3597 = vmatpush1.xpose.msra.mxu0 0.0
    %3598 = vmatprep.subr.mxu0 0.0
    %3599 = vmatpush1.xpose.msra.mxu0 0.0
    %3600 = vmatprep.subr.mxu0 0.0
    %3601 = vmatpush1.xpose.msra.mxu0 0.0
    %3602 = vmatprep.subr.mxu0 0.0
    %3603 = vmatpush1.xpose.msra.mxu0 0.0
    %3604 = vmatprep.subr.mxu0 0.0
    %3605 = vmatpush1.xpose.msra.mxu0 0.0
    %3606 = vmatprep.subr.mxu0 0.0
    %3607 = vmatpush1.xpose.msra.mxu0 0.0
    %3608 = vmatprep.subr.mxu0 0.0
    %3609 = vmatpush1.xpose.msra.mxu0 0.0
    %3610 = vmatprep.subr.mxu0 0.0
    %3611 = vmatpush1.xpose.msra.mxu0 0.0
    %3612 = vmatprep.subr.mxu0 0.0
    %3613 = vmatpush1.xpose.msra.mxu0 0.0
    %3614 = vmatprep.subr.mxu0 0.0
    %3615 = vmatpush1.xpose.msra.mxu0 0.0
    %3616 = vmatprep.subr.mxu0 0.0
    %3617 = vmatpush1.xpose.msra.mxu0 0.0
    %3618 = vmatprep.subr.mxu0 0.0
    %3619 = vmatpush1.xpose.msra.mxu0 0.0
    %3620 = vmatprep.subr.mxu0 0.0
    %3621 = vmatpush1.xpose.msra.mxu0 0.0
    %3622 = vmatprep.mubr.f32.mxu0 0.0
    %3623 = vmatmul.mubr.f32.gmra.mrb[0].mxu0 %v3485
    %v3624 = vpop.f32.mrb[0].mxu0
    %v3625 = vadd.f32 0.0, %v3624
    %v3626 = vpop.f32.mrb[0].mxu0
    %3627 = vdwg.mxu0
    %v3628 = vsel %vm2277, %v3555, -inf
    %3629 = vmax.xlane.f32.xlu0 %v3628
    %v3630 = vpop.xlane.xlu0 %3629
    %v3631 = vsel %vm2277, %v3625, -inf
    %3632 = vmax.xlane.f32.xlu0 %v3631
    %v3633 = vpop.xlane.xlu0 %3632
    %v3634 = vsub.f32 %v3555, %v3630
    %v3635 = vsub.f32 %v3625, %v3633
    %v3636 = vmul.f32 %v3634, 1.442695
    %v3637 = vpow.pop %v3636
    %v3638 = vmul.f32 %v3635, 1.442695
    %v3639 = vpow.pop %v3638
    %v3640 = vsel %vm2277, %v3637, 0.0
    %3641 = vadd.xlane.f32.xlu0 %v3640
    %v3642 = vpop.xlane.xlu0 %3641
    %v3643 = vsel %vm2277, %v3639, 0.0
    %3644 = vadd.xlane.f32.xlu0 %v3643
    %v3645 = vpop.xlane.xlu0 %3644
    %v3646 = vrcp.pop %v3642
    %v3647 = vrcp.pop %v3645
    %v3648 = vmul.f32 %v3637, %v3646
    %v3649 = vmul.f32 %v3639, %v3647
    %v3651 = vsel %vm2300, %v3648, 0
    %3653 = vmatprep.subr.mxu0 0.0
    %3654 = vmatpush1.msra.mxu0 %v1281
    %3655 = vmatprep.subr.mxu0 0.0
    %3656 = vmatpush1.msra.mxu0 0.0
    %3657 = vmatprep.subr.mxu0 0.0
    %3658 = vmatpush1.msra.mxu0 0.0
    %3659 = vmatprep.subr.mxu0 0.0
    %3660 = vmatpush1.msra.mxu0 0.0
    %3661 = vmatprep.subr.mxu0 0.0
    %3662 = vmatpush1.msra.mxu0 0.0
    %3663 = vmatprep.subr.mxu0 0.0
    %3664 = vmatpush1.msra.mxu0 0.0
    %3665 = vmatprep.subr.mxu0 0.0
    %3666 = vmatpush1.msra.mxu0 0.0
    %3667 = vmatprep.subr.mxu0 0.0
    %3668 = vmatpush1.msra.mxu0 0.0
    %3669 = vmatprep.subr.mxu0 0.0
    %3670 = vmatpush1.msra.mxu0 0.0
    %3671 = vmatprep.subr.mxu0 0.0
    %3672 = vmatpush1.msra.mxu0 0.0
    %3673 = vmatprep.subr.mxu0 0.0
    %3674 = vmatpush1.msra.mxu0 0.0
    %3675 = vmatprep.subr.mxu0 0.0
    %3676 = vmatpush1.msra.mxu0 0.0
    %3677 = vmatprep.subr.mxu0 0.0
    %3678 = vmatpush1.msra.mxu0 0.0
    %3679 = vmatprep.subr.mxu0 0.0
    %3680 = vmatpush1.msra.mxu0 0.0
    %3681 = vmatprep.subr.mxu0 0.0
    %3682 = vmatpush1.msra.mxu0 0.0
    %3683 = vmatprep.subr.mxu0 0.0
    %3684 = vmatpush1.msra.mxu0 0.0
    %3685 = vmatprep.subr.mxu0 0.0
    %3686 = vmatpush1.msra.mxu0 0.0
    %3687 = vmatprep.subr.mxu0 0.0
    %3688 = vmatpush1.msra.mxu0 0.0
    %3689 = vmatprep.subr.mxu0 0.0
    %3690 = vmatpush1.msra.mxu0 0.0
    %3691 = vmatprep.subr.mxu0 0.0
    %3692 = vmatpush1.msra.mxu0 0.0
    %3693 = vmatprep.subr.mxu0 0.0
    %3694 = vmatpush1.msra.mxu0 0.0
    %3695 = vmatprep.subr.mxu0 0.0
    %3696 = vmatpush1.msra.mxu0 0.0
    %3697 = vmatprep.subr.mxu0 0.0
    %3698 = vmatpush1.msra.mxu0 0.0
    %3699 = vmatprep.subr.mxu0 0.0
    %3700 = vmatpush1.msra.mxu0 0.0
    %3701 = vmatprep.subr.mxu0 0.0
    %3702 = vmatpush1.msra.mxu0 0.0
    %3703 = vmatprep.subr.mxu0 0.0
    %3704 = vmatpush1.msra.mxu0 0.0
    %3705 = vmatprep.subr.mxu0 0.0
    %3706 = vmatpush1.msra.mxu0 0.0
    %3707 = vmatprep.subr.mxu0 0.0
    %3708 = vmatpush1.msra.mxu0 0.0
    %3709 = vmatprep.subr.mxu0 0.0
    %3710 = vmatpush1.msra.mxu0 0.0
    %3711 = vmatprep.subr.mxu0 0.0
    %3712 = vmatpush1.msra.mxu0 0.0
    %3713 = vmatprep.subr.mxu0 0.0
    %3714 = vmatpush1.msra.mxu0 0.0
    %3715 = vmatprep.subr.mxu0 0.0
    %3716 = vmatpush1.msra.mxu0 0.0
    %3717 = vmatprep.mubr.f32.mxu0 0.0
    %3718 = vmatmul.mubr.f32.gmra.mrb[0].mxu0 %v3651
    %v3719 = vpop.f32.mrb[0].mxu0
    %v3720 = vadd.f32 0.0, %v3719
    %v3721 = vpop.f32.mrb[0].mxu0
    %3722 = vdwg.mxu0
    %v3724 = vsel %vm2300, %v3649, 0
    %3726 = vmatprep.subr.mxu0 0.0
    %3727 = vmatpush1.msra.mxu0 %v1282
    %3728 = vmatprep.subr.mxu0 0.0
    %3729 = vmatpush1.msra.mxu0 0.0
    %3730 = vmatprep.subr.mxu0 0.0
    %3731 = vmatpush1.msra.mxu0 0.0
    %3732 = vmatprep.subr.mxu0 0.0
    %3733 = vmatpush1.msra.mxu0 0.0
    %3734 = vmatprep.subr.mxu0 0.0
    %3735 = vmatpush1.msra.mxu0 0.0
    %3736 = vmatprep.subr.mxu0 0.0
    %3737 = vmatpush1.msra.mxu0 0.0
    %3738 = vmatprep.subr.mxu0 0.0
    %3739 = vmatpush1.msra.mxu0 0.0
    %3740 = vmatprep.subr.mxu0 0.0
    %3741 = vmatpush1.msra.mxu0 0.0
    %3742 = vmatprep.subr.mxu0 0.0
    %3743 = vmatpush1.msra.mxu0 0.0
    %3744 = vmatprep.subr.mxu0 0.0
    %3745 = vmatpush1.msra.mxu0 0.0
    %3746 = vmatprep.subr.mxu0 0.0
    %3747 = vmatpush1.msra.mxu0 0.0
    %3748 = vmatprep.subr.mxu0 0.0
    %3749 = vmatpush1.msra.mxu0 0.0
    %3750 = vmatprep.subr.mxu0 0.0
    %3751 = vmatpush1.msra.mxu0 0.0
    %3752 = vmatprep.subr.mxu0 0.0
    %3753 = vmatpush1.msra.mxu0 0.0
    %3754 = vmatprep.subr.mxu0 0.0
    %3755 = vmatpush1.msra.mxu0 0.0
    %3756 = vmatprep.subr.mxu0 0.0
    %3757 = vmatpush1.msra.mxu0 0.0
    %3758 = vmatprep.subr.mxu0 0.0
    %3759 = vmatpush1.msra.mxu0 0.0
    %3760 = vmatprep.subr.mxu0 0.0
    %3761 = vmatpush1.msra.mxu0 0.0
    %3762 = vmatprep.subr.mxu0 0.0
    %3763 = vmatpush1.msra.mxu0 0.0
    %3764 = vmatprep.subr.mxu0 0.0
    %3765 = vmatpush1.msra.mxu0 0.0
    %3766 = vmatprep.subr.mxu0 0.0
    %3767 = vmatpush1.msra.mxu0 0.0
    %3768 = vmatprep.subr.mxu0 0.0
    %3769 = vmatpush1.msra.mxu0 0.0
    %3770 = vmatprep.subr.mxu0 0.0
    %3771 = vmatpush1.msra.mxu0 0.0
    %3772 = vmatprep.subr.mxu0 0.0
    %3773 = vmatpush1.msra.mxu0 0.0
    %3774 = vmatprep.subr.mxu0 0.0
    %3775 = vmatpush1.msra.mxu0 0.0
    %3776 = vmatprep.subr.mxu0 0.0
    %3777 = vmatpush1.msra.mxu0 0.0
    %3778 = vmatprep.subr.mxu0 0.0
    %3779 = vmatpush1.msra.mxu0 0.0
    %3780 = vmatprep.subr.mxu0 0.0
    %3781 = vmatpush1.msra.mxu0 0.0
    %3782 = vmatprep.subr.mxu0 0.0
    %3783 = vmatpush1.msra.mxu0 0.0
    %3784 = vmatprep.subr.mxu0 0.0
    %3785 = vmatpush1.msra.mxu0 0.0
    %3786 = vmatprep.subr.mxu0 0.0
    %3787 = vmatpush1.msra.mxu0 0.0
    %3788 = vmatprep.subr.mxu0 0.0
    %3789 = vmatpush1.msra.mxu0 0.0
    %3790 = vmatprep.mubr.f32.mxu0 0.0
    %3791 = vmatmul.mubr.f32.gmra.mrb[0].mxu0 %v3724
    %v3792 = vpop.f32.mrb[0].mxu0
    %v3793 = vadd.f32 0.0, %v3792
    %v3794 = vpop.f32.mrb[0].mxu0
    %3795 = vdwg.mxu0
    %v3796 = vld [vmem:[#allocation21] sm:$0xff]
    %v3797 = vld [vmem:[#allocation21 + $0x8] sm:$0xff]
    %v3798 = vld [vmem:[#allocation21 + $0x10] sm:$0xff]
    %v3799 = vld [vmem:[#allocation21 + $0x18] sm:$0xff]
    %v3800 = vld [vmem:[#allocation21 + $0x20] sm:$0xff]
    %v3801 = vld [vmem:[#allocation21 + $0x28] sm:$0xff]
    %v3802 = vld [vmem:[#allocation21 + $0x30] sm:$0xff]
    %v3803 = vld [vmem:[#allocation21 + $0x38] sm:$0xff]
    %v3804 = vld [vmem:[#allocation21 + $0x40] sm:$0xff]
    %v3805 = vld [vmem:[#allocation21 + $0x48] sm:$0xff]
    %v3806 = vld [vmem:[#allocation21 + $0x50] sm:$0xff]
    %v3807 = vld [vmem:[#allocation21 + $0x58] sm:$0xff]
    %v3808 = vld [vmem:[#allocation21 + $0x60] sm:$0xff]
    %v3809 = vld [vmem:[#allocation21 + $0x68] sm:$0xff]
    %v3810 = vld [vmem:[#allocation21 + $0x70] sm:$0xff]
    %v3811 = vld [vmem:[#allocation21 + $0x78] sm:$0xff]
    %v3812 = vld [vmem:[#allocation23] sm:$0xff]
    %v3813 = vld [vmem:[#allocation23 + $0x8] sm:$0xff]
    %v3814 = vld [vmem:[#allocation23 + $0x10] sm:$0xff]
    %v3815 = vld [vmem:[#allocation23 + $0x18] sm:$0xff]
    %v3816 = vld [vmem:[#allocation23 + $0x20] sm:$0xff]
    %v3817 = vld [vmem:[#allocation23 + $0x28] sm:$0xff]
    %v3818 = vld [vmem:[#allocation23 + $0x30] sm:$0xff]
    %v3819 = vld [vmem:[#allocation23 + $0x38] sm:$0xff]
    %v3820 = vld [vmem:[#allocation23 + $0x40] sm:$0xff]
    %v3821 = vld [vmem:[#allocation23 + $0x48] sm:$0xff]
    %v3822 = vld [vmem:[#allocation23 + $0x50] sm:$0xff]
    %v3823 = vld [vmem:[#allocation23 + $0x58] sm:$0xff]
    %v3824 = vld [vmem:[#allocation23 + $0x60] sm:$0xff]
    %v3825 = vld [vmem:[#allocation23 + $0x68] sm:$0xff]
    %v3826 = vld [vmem:[#allocation23 + $0x70] sm:$0xff]
    %v3827 = vld [vmem:[#allocation23 + $0x78] sm:$0xff]
    %3828 = vmatprep.subr.mxu0 0.0
    %3829 = vmatpush1.msra.mxu0 %v3812
    %3830 = vmatprep.subr.mxu0 0.0
    %3831 = vmatpush1.msra.mxu0 %v3813
    %3832 = vmatprep.subr.mxu0 0.0
    %3833 = vmatpush1.msra.mxu0 %v3814
    %3834 = vmatprep.subr.mxu0 0.0
    %3835 = vmatpush1.msra.mxu0 %v3815
    %3836 = vmatprep.subr.mxu0 0.0
    %3837 = vmatpush1.msra.mxu0 %v3816
    %3838 = vmatprep.subr.mxu0 0.0
    %3839 = vmatpush1.msra.mxu0 %v3817
    %3840 = vmatprep.subr.mxu0 0.0
    %3841 = vmatpush1.msra.mxu0 %v3818
    %3842 = vmatprep.subr.mxu0 0.0
    %3843 = vmatpush1.msra.mxu0 %v3819
    %3844 = vmatprep.subr.mxu0 0.0
    %3845 = vmatpush1.msra.mxu0 %v3820
    %3846 = vmatprep.subr.mxu0 0.0
    %3847 = vmatpush1.msra.mxu0 %v3821
    %3848 = vmatprep.subr.mxu0 0.0
    %3849 = vmatpush1.msra.mxu0 %v3822
    %3850 = vmatprep.subr.mxu0 0.0
    %3851 = vmatpush1.msra.mxu0 %v3823
    %3852 = vmatprep.subr.mxu0 0.0
    %3853 = vmatpush1.msra.mxu0 %v3824
    %3854 = vmatprep.subr.mxu0 0.0
    %3855 = vmatpush1.msra.mxu0 %v3825
    %3856 = vmatprep.subr.mxu0 0.0
    %3857 = vmatpush1.msra.mxu0 %v3826
    %3858 = vmatprep.subr.mxu0 0.0
    %3859 = vmatpush1.msra.mxu0 %v3827
    %3860 = vmatprep.subr.mxu0 0.0
    %3861 = vmatpush1.msra.mxu0 0.0
    %3862 = vmatprep.subr.mxu0 0.0
    %3863 = vmatpush1.msra.mxu0 0.0
    %3864 = vmatprep.subr.mxu0 0.0
    %3865 = vmatpush1.msra.mxu0 0.0
    %3866 = vmatprep.subr.mxu0 0.0
    %3867 = vmatpush1.msra.mxu0 0.0
    %3868 = vmatprep.subr.mxu0 0.0
    %3869 = vmatpush1.msra.mxu0 0.0
    %3870 = vmatprep.subr.mxu0 0.0
    %3871 = vmatpush1.msra.mxu0 0.0
    %3872 = vmatprep.subr.mxu0 0.0
    %3873 = vmatpush1.msra.mxu0 0.0
    %3874 = vmatprep.subr.mxu0 0.0
    %3875 = vmatpush1.msra.mxu0 0.0
    %3876 = vmatprep.subr.mxu0 0.0
    %3877 = vmatpush1.msra.mxu0 0.0
    %3878 = vmatprep.subr.mxu0 0.0
    %3879 = vmatpush1.msra.mxu0 0.0
    %3880 = vmatprep.subr.mxu0 0.0
    %3881 = vmatpush1.msra.mxu0 0.0
    %3882 = vmatprep.subr.mxu0 0.0
    %3883 = vmatpush1.msra.mxu0 0.0
    %3884 = vmatprep.subr.mxu0 0.0
    %3885 = vmatpush1.msra.mxu0 0.0
    %3886 = vmatprep.subr.mxu0 0.0
    %3887 = vmatpush1.msra.mxu0 0.0
    %3888 = vmatprep.subr.mxu0 0.0
    %3889 = vmatpush1.msra.mxu0 0.0
    %3890 = vmatprep.subr.mxu0 0.0
    %3891 = vmatpush1.msra.mxu0 0.0
    %3892 = vmatprep.mubr.f32.mxu0 0.0
    %3893 = vmatmul.mubr.f32.gmra.mrb[0].mxu0 %v3462
    %v3894 = vpop.f32.mrb[0].mxu0
    %v3895 = vadd.f32 0.0, %v3894
    %v3896 = vpop.f32.mrb[0].mxu0
    %3897 = vdwg.mxu0
    %v3900 = vrot.slane %v3793, 7
    %v3901 = vsel %vm695, %v3900, %v3720
    %3903 = vmatprep.subr.mxu0 0.0
    %3904 = vmatpush1.msra.mxu0 %v3796
    %3905 = vmatprep.subr.mxu0 0.0
    %3906 = vmatpush1.msra.mxu0 %v3797
    %3907 = vmatprep.subr.mxu0 0.0
    %3908 = vmatpush1.msra.mxu0 %v3798
    %3909 = vmatprep.subr.mxu0 0.0
    %3910 = vmatpush1.msra.mxu0 %v3799
    %3911 = vmatprep.subr.mxu0 0.0
    %3912 = vmatpush1.msra.mxu0 %v3800
    %3913 = vmatprep.subr.mxu0 0.0
    %3914 = vmatpush1.msra.mxu0 %v3801
    %3915 = vmatprep.subr.mxu0 0.0
    %3916 = vmatpush1.msra.mxu0 %v3802
    %3917 = vmatprep.subr.mxu0 0.0
    %3918 = vmatpush1.msra.mxu0 %v3803
    %3919 = vmatprep.subr.mxu0 0.0
    %3920 = vmatpush1.msra.mxu0 %v3804
    %3921 = vmatprep.subr.mxu0 0.0
    %3922 = vmatpush1.msra.mxu0 %v3805
    %3923 = vmatprep.subr.mxu0 0.0
    %3924 = vmatpush1.msra.mxu0 %v3806
    %3925 = vmatprep.subr.mxu0 0.0
    %3926 = vmatpush1.msra.mxu0 %v3807
    %3927 = vmatprep.subr.mxu0 0.0
    %3928 = vmatpush1.msra.mxu0 %v3808
    %3929 = vmatprep.subr.mxu0 0.0
    %3930 = vmatpush1.msra.mxu0 %v3809
    %3931 = vmatprep.subr.mxu0 0.0
    %3932 = vmatpush1.msra.mxu0 %v3810
    %3933 = vmatprep.subr.mxu0 0.0
    %3934 = vmatpush1.msra.mxu0 %v3811
    %3935 = vmatprep.subr.mxu0 0.0
    %3936 = vmatpush1.msra.mxu0 0.0
    %3937 = vmatprep.subr.mxu0 0.0
    %3938 = vmatpush1.msra.mxu0 0.0
    %3939 = vmatprep.subr.mxu0 0.0
    %3940 = vmatpush1.msra.mxu0 0.0
    %3941 = vmatprep.subr.mxu0 0.0
    %3942 = vmatpush1.msra.mxu0 0.0
    %3943 = vmatprep.subr.mxu0 0.0
    %3944 = vmatpush1.msra.mxu0 0.0
    %3945 = vmatprep.subr.mxu0 0.0
    %3946 = vmatpush1.msra.mxu0 0.0
    %3947 = vmatprep.subr.mxu0 0.0
    %3948 = vmatpush1.msra.mxu0 0.0
    %3949 = vmatprep.subr.mxu0 0.0
    %3950 = vmatpush1.msra.mxu0 0.0
    %3951 = vmatprep.subr.mxu0 0.0
    %3952 = vmatpush1.msra.mxu0 0.0
    %3953 = vmatprep.subr.mxu0 0.0
    %3954 = vmatpush1.msra.mxu0 0.0
    %3955 = vmatprep.subr.mxu0 0.0
    %3956 = vmatpush1.msra.mxu0 0.0
    %3957 = vmatprep.subr.mxu0 0.0
    %3958 = vmatpush1.msra.mxu0 0.0
    %3959 = vmatprep.subr.mxu0 0.0
    %3960 = vmatpush1.msra.mxu0 0.0
    %3961 = vmatprep.subr.mxu0 0.0
    %3962 = vmatpush1.msra.mxu0 0.0
    %3963 = vmatprep.subr.mxu0 0.0
    %3964 = vmatpush1.msra.mxu0 0.0
    %3965 = vmatprep.subr.mxu0 0.0
    %3966 = vmatpush1.msra.mxu0 0.0
    %3967 = vmatprep.mubr.f32.mxu0 0.0
    %3968 = vmatmul.mubr.f32.gmra.mrb[0].mxu0 %v3901
    %v3969 = vpop.f32.mrb[0].mxu0
    %v3970 = vadd.f32 %v3895, %v3969
    %v3971 = vpop.f32.mrb[0].mxu0
    %3972 = vdwg.mxu0
    %v3973 = vld [vmem:[%s20] sm:$0x1]
    %v3975 = vlaneseq
    %v3976 = vshrl.u32 %v3975, 7
    %v3977 = vsub.s32 0, %v3976
    %v3978 = vrot.slane %v3973, %v3977
    %v3980 = vadd.f32 %v3970, %v3978
    %v3981 = vtanh.pop %v3980
    %s3982 = scalar_lea.vmem [#allocation24], 2
    %3983 = vst [vmem:[%s3982] sm:$0x3] %v3981
    %s3984 = scalar_lea.vmem [#allocation3], 4
    %v3985 = vld [vmem:[%s3984] sm:$0x3]
    %v3986 = vld [vmem:[#allocation15] sm:$0xff]
    %v3987 = vld [vmem:[#allocation15 + $0x8] sm:$0xff]
    %v3988 = vld [vmem:[#allocation15 + $0x10] sm:$0xff]
    %v3989 = vld [vmem:[#allocation15 + $0x18] sm:$0xff]
    %v3990 = vld [vmem:[#allocation15 + $0x20] sm:$0xff]
    %v3991 = vld [vmem:[#allocation15 + $0x28] sm:$0xff]
    %v3992 = vld [vmem:[%s12] sm:$0x7]
    %v3994 = vlaneseq
    %v3995 = vshrl.u32 %v3994, 7
    %v3996 = vsub.s32 0, %v3995
    %v3997 = vrot.slane %v3992, %v3996
    %v3998 = vlaneseq
    %v3999 = vshrl.u32 %v3998, 7
    %v4000 = vsub.s32 1, %v3999
    %v4001 = vrot.slane %v3992, %v4000
    %v4002 = vlaneseq
    %v4003 = vshrl.u32 %v4002, 7
    %v4004 = vsub.s32 2, %v4003
    %v4005 = vrot.slane %v3992, %v4004
    %v4010 = vsel %vm1307, %v3985, 0
    %4012 = vmatprep.subr.mxu0 %v3987
    %4013 = vmatpush1.msra.mxu0 %v3986
    %4014 = vmatprep.subr.mxu0 %v3990
    %4015 = vmatpush1.msra.mxu0 %v3989
    %4016 = vmatprep.subr.mxu0 0.0
    %4017 = vmatpush1.msra.mxu0 0.0
    %4018 = vmatprep.subr.mxu0 0.0
    %4019 = vmatpush1.msra.mxu0 0.0
    %4020 = vmatprep.subr.mxu0 0.0
    %4021 = vmatpush1.msra.mxu0 0.0
    %4022 = vmatprep.subr.mxu0 0.0
    %4023 = vmatpush1.msra.mxu0 0.0
    %4024 = vmatprep.subr.mxu0 0.0
    %4025 = vmatpush1.msra.mxu0 0.0
    %4026 = vmatprep.subr.mxu0 0.0
    %4027 = vmatpush1.msra.mxu0 0.0
    %4028 = vmatprep.subr.mxu0 0.0
    %4029 = vmatpush1.msra.mxu0 0.0
    %4030 = vmatprep.subr.mxu0 0.0
    %4031 = vmatpush1.msra.mxu0 0.0
    %4032 = vmatprep.subr.mxu0 0.0
    %4033 = vmatpush1.msra.mxu0 0.0
    %4034 = vmatprep.subr.mxu0 0.0
    %4035 = vmatpush1.msra.mxu0 0.0
    %4036 = vmatprep.subr.mxu0 0.0
    %4037 = vmatpush1.msra.mxu0 0.0
    %4038 = vmatprep.subr.mxu0 0.0
    %4039 = vmatpush1.msra.mxu0 0.0
    %4040 = vmatprep.subr.mxu0 0.0
    %4041 = vmatpush1.msra.mxu0 0.0
    %4042 = vmatprep.subr.mxu0 0.0
    %4043 = vmatpush1.msra.mxu0 0.0
    %4044 = vmatprep.subr.mxu0 0.0
    %4045 = vmatpush1.msra.mxu0 0.0
    %4046 = vmatprep.subr.mxu0 0.0
    %4047 = vmatpush1.msra.mxu0 0.0
    %4048 = vmatprep.subr.mxu0 0.0
    %4049 = vmatpush1.msra.mxu0 0.0
    %4050 = vmatprep.subr.mxu0 0.0
    %4051 = vmatpush1.msra.mxu0 0.0
    %4052 = vmatprep.subr.mxu0 0.0
    %4053 = vmatpush1.msra.mxu0 0.0
    %4054 = vmatprep.subr.mxu0 0.0
    %4055 = vmatpush1.msra.mxu0 0.0
    %4056 = vmatprep.subr.mxu0 0.0
    %4057 = vmatpush1.msra.mxu0 0.0
    %4058 = vmatprep.subr.mxu0 0.0
    %4059 = vmatpush1.msra.mxu0 0.0
    %4060 = vmatprep.subr.mxu0 0.0
    %4061 = vmatpush1.msra.mxu0 0.0
    %4062 = vmatprep.subr.mxu0 0.0
    %4063 = vmatpush1.msra.mxu0 0.0
    %4064 = vmatprep.subr.mxu0 0.0
    %4065 = vmatpush1.msra.mxu0 0.0
    %4066 = vmatprep.subr.mxu0 0.0
    %4067 = vmatpush1.msra.mxu0 0.0
    %4068 = vmatprep.subr.mxu0 0.0
    %4069 = vmatpush1.msra.mxu0 0.0
    %4070 = vmatprep.subr.mxu0 0.0
    %4071 = vmatpush1.msra.mxu0 0.0
    %4072 = vmatprep.subr.mxu0 0.0
    %4073 = vmatpush1.msra.mxu0 0.0
    %4074 = vmatprep.subr.mxu0 0.0
    %4075 = vmatpush1.msra.mxu0 0.0
    %4076 = vmatprep.mubr.f32.mxu0 0.0
    %4077 = vmatmul.mubr.f32.gmra.mrb[0].mxu0 %v4010
    %v4078 = vpop.f32.mrb[0].mxu0
    %v4079 = vadd.f32 %v3997, %v4078
    %v4080 = vpop.f32.mrb[0].mxu0
    %v4081 = vadd.f32 %v4001, %v4080
    %4082 = vdwg.mxu0
    %4083 = vmatprep.subr.mxu0 0.0
    %4084 = vmatpush1.msra.mxu0 %v3988
    %4085 = vmatprep.subr.mxu0 0.0
    %4086 = vmatpush1.msra.mxu0 %v3991
    %4087 = vmatprep.subr.mxu0 0.0
    %4088 = vmatpush1.msra.mxu0 0.0
    %4089 = vmatprep.subr.mxu0 0.0
    %4090 = vmatpush1.msra.mxu0 0.0
    %4091 = vmatprep.subr.mxu0 0.0
    %4092 = vmatpush1.msra.mxu0 0.0
    %4093 = vmatprep.subr.mxu0 0.0
    %4094 = vmatpush1.msra.mxu0 0.0
    %4095 = vmatprep.subr.mxu0 0.0
    %4096 = vmatpush1.msra.mxu0 0.0
    %4097 = vmatprep.subr.mxu0 0.0
    %4098 = vmatpush1.msra.mxu0 0.0
    %4099 = vmatprep.subr.mxu0 0.0
    %4100 = vmatpush1.msra.mxu0 0.0
    %4101 = vmatprep.subr.mxu0 0.0
    %4102 = vmatpush1.msra.mxu0 0.0
    %4103 = vmatprep.subr.mxu0 0.0
    %4104 = vmatpush1.msra.mxu0 0.0
    %4105 = vmatprep.subr.mxu0 0.0
    %4106 = vmatpush1.msra.mxu0 0.0
    %4107 = vmatprep.subr.mxu0 0.0
    %4108 = vmatpush1.msra.mxu0 0.0
    %4109 = vmatprep.subr.mxu0 0.0
    %4110 = vmatpush1.msra.mxu0 0.0
    %4111 = vmatprep.subr.mxu0 0.0
    %4112 = vmatpush1.msra.mxu0 0.0
    %4113 = vmatprep.subr.mxu0 0.0
    %4114 = vmatpush1.msra.mxu0 0.0
    %4115 = vmatprep.subr.mxu0 0.0
    %4116 = vmatpush1.msra.mxu0 0.0
    %4117 = vmatprep.subr.mxu0 0.0
    %4118 = vmatpush1.msra.mxu0 0.0
    %4119 = vmatprep.subr.mxu0 0.0
    %4120 = vmatpush1.msra.mxu0 0.0
    %4121 = vmatprep.subr.mxu0 0.0
    %4122 = vmatpush1.msra.mxu0 0.0
    %4123 = vmatprep.subr.mxu0 0.0
    %4124 = vmatpush1.msra.mxu0 0.0
    %4125 = vmatprep.subr.mxu0 0.0
    %4126 = vmatpush1.msra.mxu0 0.0
    %4127 = vmatprep.subr.mxu0 0.0
    %4128 = vmatpush1.msra.mxu0 0.0
    %4129 = vmatprep.subr.mxu0 0.0
    %4130 = vmatpush1.msra.mxu0 0.0
    %4131 = vmatprep.subr.mxu0 0.0
    %4132 = vmatpush1.msra.mxu0 0.0
    %4133 = vmatprep.subr.mxu0 0.0
    %4134 = vmatpush1.msra.mxu0 0.0
    %4135 = vmatprep.subr.mxu0 0.0
    %4136 = vmatpush1.msra.mxu0 0.0
    %4137 = vmatprep.subr.mxu0 0.0
    %4138 = vmatpush1.msra.mxu0 0.0
    %4139 = vmatprep.subr.mxu0 0.0
    %4140 = vmatpush1.msra.mxu0 0.0
    %4141 = vmatprep.subr.mxu0 0.0
    %4142 = vmatpush1.msra.mxu0 0.0
    %4143 = vmatprep.subr.mxu0 0.0
    %4144 = vmatpush1.msra.mxu0 0.0
    %4145 = vmatprep.subr.mxu0 0.0
    %4146 = vmatpush1.msra.mxu0 0.0
    %4147 = vmatprep.mubr.f32.mxu0 0.0
    %4148 = vmatmul.mubr.f32.gmra.mrb[0].mxu0 %v4010
    %v4149 = vpop.f32.mrb[0].mxu0
    %v4150 = vadd.f32 %v4005, %v4149
    %v4151 = vpop.f32.mrb[0].mxu0
    %4152 = vdwg.mxu0
    %v4153 = vld [vmem:[#allocation17] sm:$0xff]
    %v4154 = vld [vmem:[#allocation17 + $0x8] sm:$0xff]
    %v4155 = vld [vmem:[#allocation17 + $0x10] sm:$0xff]
    %v4156 = vld [vmem:[#allocation17 + $0x18] sm:$0xff]
    %v4157 = vld [vmem:[#allocation17 + $0x20] sm:$0xff]
    %v4158 = vld [vmem:[#allocation17 + $0x28] sm:$0xff]
    %v4159 = vld [vmem:[#allocation17 + $0x30] sm:$0xff]
    %v4160 = vld [vmem:[#allocation17 + $0x38] sm:$0xff]
    %v4161 = vld [vmem:[#allocation17 + $0x40] sm:$0xff]
    %v4162 = vld [vmem:[#allocation17 + $0x48] sm:$0xff]
    %v4163 = vld [vmem:[#allocation17 + $0x50] sm:$0xff]
    %v4164 = vld [vmem:[#allocation17 + $0x58] sm:$0xff]
    %v4165 = vld [vmem:[#allocation17 + $0x60] sm:$0xff]
    %v4166 = vld [vmem:[#allocation17 + $0x68] sm:$0xff]
    %v4167 = vld [vmem:[#allocation17 + $0x70] sm:$0xff]
    %v4168 = vld [vmem:[#allocation17 + $0x78] sm:$0xff]
    %v4169 = vld [vmem:[#allocation17 + $0x80] sm:$0xff]
    %v4170 = vld [vmem:[#allocation17 + $0x88] sm:$0xff]
    %v4171 = vld [vmem:[#allocation17 + $0x90] sm:$0xff]
    %v4172 = vld [vmem:[#allocation17 + $0x98] sm:$0xff]
    %v4173 = vld [vmem:[#allocation17 + $0xa0] sm:$0xff]
    %v4174 = vld [vmem:[#allocation17 + $0xa8] sm:$0xff]
    %v4175 = vld [vmem:[#allocation17 + $0xb0] sm:$0xff]
    %v4176 = vld [vmem:[#allocation17 + $0xb8] sm:$0xff]
    %v4177 = vld [vmem:[#allocation17 + $0xc0] sm:$0xff]
    %v4178 = vld [vmem:[#allocation17 + $0xc8] sm:$0xff]
    %v4179 = vld [vmem:[#allocation17 + $0xd0] sm:$0xff]
    %v4180 = vld [vmem:[#allocation17 + $0xd8] sm:$0xff]
    %v4181 = vld [vmem:[#allocation17 + $0xe0] sm:$0xff]
    %v4182 = vld [vmem:[#allocation17 + $0xe8] sm:$0xff]
    %v4183 = vld [vmem:[#allocation17 + $0xf0] sm:$0xff]
    %v4184 = vld [vmem:[#allocation17 + $0xf8] sm:$0xff]
    %v4185 = vld [vmem:[#allocation17 + $0x100] sm:$0xff]
    %v4186 = vld [vmem:[#allocation17 + $0x108] sm:$0xff]
    %v4187 = vld [vmem:[#allocation17 + $0x110] sm:$0xff]
    %v4188 = vld [vmem:[#allocation17 + $0x118] sm:$0xff]
    %v4189 = vld [vmem:[#allocation17 + $0x120] sm:$0xff]
    %v4190 = vld [vmem:[#allocation17 + $0x128] sm:$0xff]
    %v4191 = vld [vmem:[#allocation17 + $0x130] sm:$0xff]
    %v4192 = vld [vmem:[#allocation17 + $0x138] sm:$0xff]
    %v4193 = vld [vmem:[#allocation17 + $0x140] sm:$0xff]
    %v4194 = vld [vmem:[#allocation17 + $0x148] sm:$0xff]
    %v4195 = vld [vmem:[#allocation17 + $0x150] sm:$0xff]
    %v4196 = vld [vmem:[#allocation17 + $0x158] sm:$0xff]
    %v4197 = vld [vmem:[#allocation17 + $0x160] sm:$0xff]
    %v4198 = vld [vmem:[#allocation17 + $0x168] sm:$0xff]
    %v4199 = vld [vmem:[#allocation17 + $0x170] sm:$0xff]
    %v4200 = vld [vmem:[#allocation17 + $0x178] sm:$0xff]
    %v4201 = vld [vmem:[%s13] sm:$0x7]
    %v4203 = vlaneseq
    %v4204 = vshrl.u32 %v4203, 7
    %v4205 = vsub.s32 0, %v4204
    %v4206 = vrot.slane %v4201, %v4205
    %v4207 = vlaneseq
    %v4208 = vshrl.u32 %v4207, 7
    %v4209 = vsub.s32 1, %v4208
    %v4210 = vrot.slane %v4201, %v4209
    %v4211 = vlaneseq
    %v4212 = vshrl.u32 %v4211, 7
    %v4213 = vsub.s32 2, %v4212
    %v4214 = vrot.slane %v4201, %v4213
    %4218 = vmatprep.subr.mxu0 %v4154
    %4219 = vmatpush1.msra.mxu0 %v4153
    %4220 = vmatprep.subr.mxu0 %v4157
    %4221 = vmatpush1.msra.mxu0 %v4156
    %4222 = vmatprep.subr.mxu0 %v4160
    %4223 = vmatpush1.msra.mxu0 %v4159
    %4224 = vmatprep.subr.mxu0 %v4163
    %4225 = vmatpush1.msra.mxu0 %v4162
    %4226 = vmatprep.subr.mxu0 %v4166
    %4227 = vmatpush1.msra.mxu0 %v4165
    %4228 = vmatprep.subr.mxu0 %v4169
    %4229 = vmatpush1.msra.mxu0 %v4168
    %4230 = vmatprep.subr.mxu0 %v4172
    %4231 = vmatpush1.msra.mxu0 %v4171
    %4232 = vmatprep.subr.mxu0 %v4175
    %4233 = vmatpush1.msra.mxu0 %v4174
    %4234 = vmatprep.subr.mxu0 %v4178
    %4235 = vmatpush1.msra.mxu0 %v4177
    %4236 = vmatprep.subr.mxu0 %v4181
    %4237 = vmatpush1.msra.mxu0 %v4180
    %4238 = vmatprep.subr.mxu0 %v4184
    %4239 = vmatpush1.msra.mxu0 %v4183
    %4240 = vmatprep.subr.mxu0 %v4187
    %4241 = vmatpush1.msra.mxu0 %v4186
    %4242 = vmatprep.subr.mxu0 %v4190
    %4243 = vmatpush1.msra.mxu0 %v4189
    %4244 = vmatprep.subr.mxu0 %v4193
    %4245 = vmatpush1.msra.mxu0 %v4192
    %4246 = vmatprep.subr.mxu0 %v4196
    %4247 = vmatpush1.msra.mxu0 %v4195
    %4248 = vmatprep.subr.mxu0 %v4199
    %4249 = vmatpush1.msra.mxu0 %v4198
    %4250 = vmatprep.subr.mxu0 0.0
    %4251 = vmatpush1.msra.mxu0 0.0
    %4252 = vmatprep.subr.mxu0 0.0
    %4253 = vmatpush1.msra.mxu0 0.0
    %4254 = vmatprep.subr.mxu0 0.0
    %4255 = vmatpush1.msra.mxu0 0.0
    %4256 = vmatprep.subr.mxu0 0.0
    %4257 = vmatpush1.msra.mxu0 0.0
    %4258 = vmatprep.subr.mxu0 0.0
    %4259 = vmatpush1.msra.mxu0 0.0
    %4260 = vmatprep.subr.mxu0 0.0
    %4261 = vmatpush1.msra.mxu0 0.0
    %4262 = vmatprep.subr.mxu0 0.0
    %4263 = vmatpush1.msra.mxu0 0.0
    %4264 = vmatprep.subr.mxu0 0.0
    %4265 = vmatpush1.msra.mxu0 0.0
    %4266 = vmatprep.subr.mxu0 0.0
    %4267 = vmatpush1.msra.mxu0 0.0
    %4268 = vmatprep.subr.mxu0 0.0
    %4269 = vmatpush1.msra.mxu0 0.0
    %4270 = vmatprep.subr.mxu0 0.0
    %4271 = vmatpush1.msra.mxu0 0.0
    %4272 = vmatprep.subr.mxu0 0.0
    %4273 = vmatpush1.msra.mxu0 0.0
    %4274 = vmatprep.subr.mxu0 0.0
    %4275 = vmatpush1.msra.mxu0 0.0
    %4276 = vmatprep.subr.mxu0 0.0
    %4277 = vmatpush1.msra.mxu0 0.0
    %4278 = vmatprep.subr.mxu0 0.0
    %4279 = vmatpush1.msra.mxu0 0.0
    %4280 = vmatprep.subr.mxu0 0.0
    %4281 = vmatpush1.msra.mxu0 0.0
    %4282 = vmatprep.mubr.f32.mxu0 0.0
    %4283 = vmatmul.mubr.f32.gmra.mrb[0].mxu0 %v3029
    %v4284 = vpop.f32.mrb[0].mxu0
    %v4285 = vadd.f32 %v4206, %v4284
    %v4286 = vpop.f32.mrb[0].mxu0
    %v4287 = vadd.f32 %v4210, %v4286
    %4288 = vdwg.mxu0
    %4289 = vmatprep.subr.mxu0 0.0
    %4290 = vmatpush1.msra.mxu0 %v4155
    %4291 = vmatprep.subr.mxu0 0.0
    %4292 = vmatpush1.msra.mxu0 %v4158
    %4293 = vmatprep.subr.mxu0 0.0
    %4294 = vmatpush1.msra.mxu0 %v4161
    %4295 = vmatprep.subr.mxu0 0.0
    %4296 = vmatpush1.msra.mxu0 %v4164
    %4297 = vmatprep.subr.mxu0 0.0
    %4298 = vmatpush1.msra.mxu0 %v4167
    %4299 = vmatprep.subr.mxu0 0.0
    %4300 = vmatpush1.msra.mxu0 %v4170
    %4301 = vmatprep.subr.mxu0 0.0
    %4302 = vmatpush1.msra.mxu0 %v4173
    %4303 = vmatprep.subr.mxu0 0.0
    %4304 = vmatpush1.msra.mxu0 %v4176
    %4305 = vmatprep.subr.mxu0 0.0
    %4306 = vmatpush1.msra.mxu0 %v4179
    %4307 = vmatprep.subr.mxu0 0.0
    %4308 = vmatpush1.msra.mxu0 %v4182
    %4309 = vmatprep.subr.mxu0 0.0
    %4310 = vmatpush1.msra.mxu0 %v4185
    %4311 = vmatprep.subr.mxu0 0.0
    %4312 = vmatpush1.msra.mxu0 %v4188
    %4313 = vmatprep.subr.mxu0 0.0
    %4314 = vmatpush1.msra.mxu0 %v4191
    %4315 = vmatprep.subr.mxu0 0.0
    %4316 = vmatpush1.msra.mxu0 %v4194
    %4317 = vmatprep.subr.mxu0 0.0
    %4318 = vmatpush1.msra.mxu0 %v4197
    %4319 = vmatprep.subr.mxu0 0.0
    %4320 = vmatpush1.msra.mxu0 %v4200
    %4321 = vmatprep.subr.mxu0 0.0
    %4322 = vmatpush1.msra.mxu0 0.0
    %4323 = vmatprep.subr.mxu0 0.0
    %4324 = vmatpush1.msra.mxu0 0.0
    %4325 = vmatprep.subr.mxu0 0.0
    %4326 = vmatpush1.msra.mxu0 0.0
    %4327 = vmatprep.subr.mxu0 0.0
    %4328 = vmatpush1.msra.mxu0 0.0
    %4329 = vmatprep.subr.mxu0 0.0
    %4330 = vmatpush1.msra.mxu0 0.0
    %4331 = vmatprep.subr.mxu0 0.0
    %4332 = vmatpush1.msra.mxu0 0.0
    %4333 = vmatprep.subr.mxu0 0.0
    %4334 = vmatpush1.msra.mxu0 0.0
    %4335 = vmatprep.subr.mxu0 0.0
    %4336 = vmatpush1.msra.mxu0 0.0
    %4337 = vmatprep.subr.mxu0 0.0
    %4338 = vmatpush1.msra.mxu0 0.0
    %4339 = vmatprep.subr.mxu0 0.0
    %4340 = vmatpush1.msra.mxu0 0.0
    %4341 = vmatprep.subr.mxu0 0.0
    %4342 = vmatpush1.msra.mxu0 0.0
    %4343 = vmatprep.subr.mxu0 0.0
    %4344 = vmatpush1.msra.mxu0 0.0
    %4345 = vmatprep.subr.mxu0 0.0
    %4346 = vmatpush1.msra.mxu0 0.0
    %4347 = vmatprep.subr.mxu0 0.0
    %4348 = vmatpush1.msra.mxu0 0.0
    %4349 = vmatprep.subr.mxu0 0.0
    %4350 = vmatpush1.msra.mxu0 0.0
    %4351 = vmatprep.subr.mxu0 0.0
    %4352 = vmatpush1.msra.mxu0 0.0
    %4353 = vmatprep.mubr.f32.mxu0 0.0
    %4354 = vmatmul.mubr.f32.gmra.mrb[0].mxu0 %v3029
    %v4355 = vpop.f32.mrb[0].mxu0
    %v4356 = vadd.f32 %v4214, %v4355
    %v4357 = vpop.f32.mrb[0].mxu0
    %4358 = vdwg.mxu0
    %v4359 = vadd.f32 %v4079, %v4285
    %v4360 = vxor.u32 %v4359, 2147483648
    %v4361 = vmul.f32 %v4360, 1.442695
    %v4362 = vpow.pop %v4361
    %v4363 = vadd.f32 %v4362, 1.0
    %v4364 = vrcp.pop %v4363
    %v4365 = vmul.f32 1.0, %v4364
    %v4366 = vadd.f32 %v4081, %v4287
    %v4367 = vxor.u32 %v4366, 2147483648
    %v4368 = vmul.f32 %v4367, 1.442695
    %v4369 = vpow.pop %v4368
    %v4370 = vadd.f32 %v4369, 1.0
    %v4371 = vrcp.pop %v4370
    %v4372 = vmul.f32 1.0, %v4371
    %v4373 = vmul.f32 %v4365, %v4356
    %v4374 = vadd.f32 %v4150, %v4373
    %v4375 = vtanh.pop %v4374
    %v4376 = vsub.f32 1.0, %v4372
    %v4377 = vmul.f32 %v4376, %v4375
    %v4378 = vmul.f32 %v4372, %v3029
    %v4379 = vadd.f32 %v4377, %v4378
    %v4380 = vld [vmem:[#allocation18] sm:$0xff]
    %v4381 = vld [vmem:[#allocation18 + $0x8] sm:$0xff]
    %v4382 = vld [vmem:[#allocation18 + $0x10] sm:$0xff]
    %v4383 = vld [vmem:[#allocation18 + $0x18] sm:$0xff]
    %v4384 = vld [vmem:[#allocation18 + $0x20] sm:$0xff]
    %v4385 = vld [vmem:[#allocation18 + $0x28] sm:$0xff]
    %v4386 = vld [vmem:[#allocation18 + $0x30] sm:$0xff]
    %v4387 = vld [vmem:[#allocation18 + $0x38] sm:$0xff]
    %v4388 = vld [vmem:[#allocation18 + $0x40] sm:$0xff]
    %v4389 = vld [vmem:[#allocation18 + $0x48] sm:$0xff]
    %v4390 = vld [vmem:[#allocation18 + $0x50] sm:$0xff]
    %v4391 = vld [vmem:[#allocation18 + $0x58] sm:$0xff]
    %v4392 = vld [vmem:[#allocation18 + $0x60] sm:$0xff]
    %v4393 = vld [vmem:[#allocation18 + $0x68] sm:$0xff]
    %v4394 = vld [vmem:[#allocation18 + $0x70] sm:$0xff]
    %v4395 = vld [vmem:[#allocation18 + $0x78] sm:$0xff]
    %v4396 = vld [vmem:[#allocation18 + $0x80] sm:$0xff]
    %v4397 = vld [vmem:[#allocation18 + $0x88] sm:$0xff]
    %v4398 = vld [vmem:[#allocation18 + $0x90] sm:$0xff]
    %v4399 = vld [vmem:[#allocation18 + $0x98] sm:$0xff]
    %v4400 = vld [vmem:[#allocation18 + $0xa0] sm:$0xff]
    %v4401 = vld [vmem:[#allocation18 + $0xa8] sm:$0xff]
    %v4402 = vld [vmem:[#allocation18 + $0xb0] sm:$0xff]
    %v4403 = vld [vmem:[#allocation18 + $0xb8] sm:$0xff]
    %v4404 = vld [vmem:[#allocation18 + $0xc0] sm:$0xff]
    %v4405 = vld [vmem:[#allocation18 + $0xc8] sm:$0xff]
    %v4406 = vld [vmem:[#allocation18 + $0xd0] sm:$0xff]
    %v4407 = vld [vmem:[#allocation18 + $0xd8] sm:$0xff]
    %v4408 = vld [vmem:[#allocation18 + $0xe0] sm:$0xff]
    %v4409 = vld [vmem:[#allocation18 + $0xe8] sm:$0xff]
    %v4410 = vld [vmem:[#allocation18 + $0xf0] sm:$0xff]
    %v4411 = vld [vmem:[#allocation18 + $0xf8] sm:$0xff]
    %v4412 = vld [vmem:[#allocation18 + $0x100] sm:$0xff]
    %v4413 = vld [vmem:[#allocation18 + $0x108] sm:$0xff]
    %v4414 = vld [vmem:[#allocation18 + $0x110] sm:$0xff]
    %v4415 = vld [vmem:[#allocation18 + $0x118] sm:$0xff]
    %v4416 = vld [vmem:[#allocation18 + $0x120] sm:$0xff]
    %v4417 = vld [vmem:[#allocation18 + $0x128] sm:$0xff]
    %v4418 = vld [vmem:[#allocation18 + $0x130] sm:$0xff]
    %v4419 = vld [vmem:[#allocation18 + $0x138] sm:$0xff]
    %v4420 = vld [vmem:[#allocation18 + $0x140] sm:$0xff]
    %v4421 = vld [vmem:[#allocation18 + $0x148] sm:$0xff]
    %v4422 = vld [vmem:[#allocation18 + $0x150] sm:$0xff]
    %v4423 = vld [vmem:[#allocation18 + $0x158] sm:$0xff]
    %v4424 = vld [vmem:[#allocation18 + $0x160] sm:$0xff]
    %v4425 = vld [vmem:[#allocation18 + $0x168] sm:$0xff]
    %v4426 = vld [vmem:[#allocation18 + $0x170] sm:$0xff]
    %v4427 = vld [vmem:[#allocation18 + $0x178] sm:$0xff]
    %v4428 = vld [vmem:[%s16] sm:$0x7]
    %v4430 = vlaneseq
    %v4431 = vshrl.u32 %v4430, 7
    %v4432 = vsub.s32 0, %v4431
    %v4433 = vrot.slane %v4428, %v4432
    %v4434 = vlaneseq
    %v4435 = vshrl.u32 %v4434, 7
    %v4436 = vsub.s32 1, %v4435
    %v4437 = vrot.slane %v4428, %v4436
    %v4438 = vlaneseq
    %v4439 = vshrl.u32 %v4438, 7
    %v4440 = vsub.s32 2, %v4439
    %v4441 = vrot.slane %v4428, %v4440
    %4445 = vmatprep.subr.mxu0 %v4381
    %4446 = vmatpush1.msra.mxu0 %v4380
    %4447 = vmatprep.subr.mxu0 %v4384
    %4448 = vmatpush1.msra.mxu0 %v4383
    %4449 = vmatprep.subr.mxu0 %v4387
    %4450 = vmatpush1.msra.mxu0 %v4386
    %4451 = vmatprep.subr.mxu0 %v4390
    %4452 = vmatpush1.msra.mxu0 %v4389
    %4453 = vmatprep.subr.mxu0 %v4393
    %4454 = vmatpush1.msra.mxu0 %v4392
    %4455 = vmatprep.subr.mxu0 %v4396
    %4456 = vmatpush1.msra.mxu0 %v4395
    %4457 = vmatprep.subr.mxu0 %v4399
    %4458 = vmatpush1.msra.mxu0 %v4398
    %4459 = vmatprep.subr.mxu0 %v4402
    %4460 = vmatpush1.msra.mxu0 %v4401
    %4461 = vmatprep.subr.mxu0 %v4405
    %4462 = vmatpush1.msra.mxu0 %v4404
    %4463 = vmatprep.subr.mxu0 %v4408
    %4464 = vmatpush1.msra.mxu0 %v4407
    %4465 = vmatprep.subr.mxu0 %v4411
    %4466 = vmatpush1.msra.mxu0 %v4410
    %4467 = vmatprep.subr.mxu0 %v4414
    %4468 = vmatpush1.msra.mxu0 %v4413
    %4469 = vmatprep.subr.mxu0 %v4417
    %4470 = vmatpush1.msra.mxu0 %v4416
    %4471 = vmatprep.subr.mxu0 %v4420
    %4472 = vmatpush1.msra.mxu0 %v4419
    %4473 = vmatprep.subr.mxu0 %v4423
    %4474 = vmatpush1.msra.mxu0 %v4422
    %4475 = vmatprep.subr.mxu0 %v4426
    %4476 = vmatpush1.msra.mxu0 %v4425
    %4477 = vmatprep.subr.mxu0 0.0
    %4478 = vmatpush1.msra.mxu0 0.0
    %4479 = vmatprep.subr.mxu0 0.0
    %4480 = vmatpush1.msra.mxu0 0.0
    %4481 = vmatprep.subr.mxu0 0.0
    %4482 = vmatpush1.msra.mxu0 0.0
    %4483 = vmatprep.subr.mxu0 0.0
    %4484 = vmatpush1.msra.mxu0 0.0
    %4485 = vmatprep.subr.mxu0 0.0
    %4486 = vmatpush1.msra.mxu0 0.0
    %4487 = vmatprep.subr.mxu0 0.0
    %4488 = vmatpush1.msra.mxu0 0.0
    %4489 = vmatprep.subr.mxu0 0.0
    %4490 = vmatpush1.msra.mxu0 0.0
    %4491 = vmatprep.subr.mxu0 0.0
    %4492 = vmatpush1.msra.mxu0 0.0
    %4493 = vmatprep.subr.mxu0 0.0
    %4494 = vmatpush1.msra.mxu0 0.0
    %4495 = vmatprep.subr.mxu0 0.0
    %4496 = vmatpush1.msra.mxu0 0.0
    %4497 = vmatprep.subr.mxu0 0.0
    %4498 = vmatpush1.msra.mxu0 0.0
    %4499 = vmatprep.subr.mxu0 0.0
    %4500 = vmatpush1.msra.mxu0 0.0
    %4501 = vmatprep.subr.mxu0 0.0
    %4502 = vmatpush1.msra.mxu0 0.0
    %4503 = vmatprep.subr.mxu0 0.0
    %4504 = vmatpush1.msra.mxu0 0.0
    %4505 = vmatprep.subr.mxu0 0.0
    %4506 = vmatpush1.msra.mxu0 0.0
    %4507 = vmatprep.subr.mxu0 0.0
    %4508 = vmatpush1.msra.mxu0 0.0
    %4509 = vmatprep.mubr.f32.mxu0 0.0
    %4510 = vmatmul.mubr.f32.gmra.mrb[0].mxu0 %v4379
    %v4511 = vpop.f32.mrb[0].mxu0
    %v4512 = vadd.f32 %v4433, %v4511
    %v4513 = vpop.f32.mrb[0].mxu0
    %v4514 = vadd.f32 %v4437, %v4513
    %4515 = vdwg.mxu0
    %4516 = vmatprep.subr.mxu0 0.0
    %4517 = vmatpush1.msra.mxu0 %v4382
    %4518 = vmatprep.subr.mxu0 0.0
    %4519 = vmatpush1.msra.mxu0 %v4385
    %4520 = vmatprep.subr.mxu0 0.0
    %4521 = vmatpush1.msra.mxu0 %v4388
    %4522 = vmatprep.subr.mxu0 0.0
    %4523 = vmatpush1.msra.mxu0 %v4391
    %4524 = vmatprep.subr.mxu0 0.0
    %4525 = vmatpush1.msra.mxu0 %v4394
    %4526 = vmatprep.subr.mxu0 0.0
    %4527 = vmatpush1.msra.mxu0 %v4397
    %4528 = vmatprep.subr.mxu0 0.0
    %4529 = vmatpush1.msra.mxu0 %v4400
    %4530 = vmatprep.subr.mxu0 0.0
    %4531 = vmatpush1.msra.mxu0 %v4403
    %4532 = vmatprep.subr.mxu0 0.0
    %4533 = vmatpush1.msra.mxu0 %v4406
    %4534 = vmatprep.subr.mxu0 0.0
    %4535 = vmatpush1.msra.mxu0 %v4409
    %4536 = vmatprep.subr.mxu0 0.0
    %4537 = vmatpush1.msra.mxu0 %v4412
    %4538 = vmatprep.subr.mxu0 0.0
    %4539 = vmatpush1.msra.mxu0 %v4415
    %4540 = vmatprep.subr.mxu0 0.0
    %4541 = vmatpush1.msra.mxu0 %v4418
    %4542 = vmatprep.subr.mxu0 0.0
    %4543 = vmatpush1.msra.mxu0 %v4421
    %4544 = vmatprep.subr.mxu0 0.0
    %4545 = vmatpush1.msra.mxu0 %v4424
    %4546 = vmatprep.subr.mxu0 0.0
    %4547 = vmatpush1.msra.mxu0 %v4427
    %4548 = vmatprep.subr.mxu0 0.0
    %4549 = vmatpush1.msra.mxu0 0.0
    %4550 = vmatprep.subr.mxu0 0.0
    %4551 = vmatpush1.msra.mxu0 0.0
    %4552 = vmatprep.subr.mxu0 0.0
    %4553 = vmatpush1.msra.mxu0 0.0
    %4554 = vmatprep.subr.mxu0 0.0
    %4555 = vmatpush1.msra.mxu0 0.0
    %4556 = vmatprep.subr.mxu0 0.0
    %4557 = vmatpush1.msra.mxu0 0.0
    %4558 = vmatprep.subr.mxu0 0.0
    %4559 = vmatpush1.msra.mxu0 0.0
    %4560 = vmatprep.subr.mxu0 0.0
    %4561 = vmatpush1.msra.mxu0 0.0
    %4562 = vmatprep.subr.mxu0 0.0
    %4563 = vmatpush1.msra.mxu0 0.0
    %4564 = vmatprep.subr.mxu0 0.0
    %4565 = vmatpush1.msra.mxu0 0.0
    %4566 = vmatprep.subr.mxu0 0.0
    %4567 = vmatpush1.msra.mxu0 0.0
    %4568 = vmatprep.subr.mxu0 0.0
    %4569 = vmatpush1.msra.mxu0 0.0
    %4570 = vmatprep.subr.mxu0 0.0
    %4571 = vmatpush1.msra.mxu0 0.0
    %4572 = vmatprep.subr.mxu0 0.0
    %4573 = vmatpush1.msra.mxu0 0.0
    %4574 = vmatprep.subr.mxu0 0.0
    %4575 = vmatpush1.msra.mxu0 0.0
    %4576 = vmatprep.subr.mxu0 0.0
    %4577 = vmatpush1.msra.mxu0 0.0
    %4578 = vmatprep.subr.mxu0 0.0
    %4579 = vmatpush1.msra.mxu0 0.0
    %4580 = vmatprep.mubr.f32.mxu0 0.0
    %4581 = vmatmul.mubr.f32.gmra.mrb[0].mxu0 %v4379
    %v4582 = vpop.f32.mrb[0].mxu0
    %v4583 = vadd.f32 %v4441, %v4582
    %v4584 = vpop.f32.mrb[0].mxu0
    %4585 = vdwg.mxu0
    %v4586 = vld [vmem:[#allocation20] sm:$0xff]
    %v4587 = vld [vmem:[#allocation20 + $0x8] sm:$0xff]
    %v4588 = vld [vmem:[#allocation20 + $0x10] sm:$0xff]
    %v4589 = vld [vmem:[#allocation20 + $0x18] sm:$0xff]
    %v4590 = vld [vmem:[#allocation20 + $0x20] sm:$0xff]
    %v4591 = vld [vmem:[#allocation20 + $0x28] sm:$0xff]
    %v4592 = vld [vmem:[#allocation20 + $0x30] sm:$0xff]
    %v4593 = vld [vmem:[#allocation20 + $0x38] sm:$0xff]
    %v4594 = vld [vmem:[#allocation20 + $0x40] sm:$0xff]
    %v4595 = vld [vmem:[#allocation20 + $0x48] sm:$0xff]
    %v4596 = vld [vmem:[#allocation20 + $0x50] sm:$0xff]
    %v4597 = vld [vmem:[#allocation20 + $0x58] sm:$0xff]
    %v4598 = vld [vmem:[#allocation20 + $0x60] sm:$0xff]
    %v4599 = vld [vmem:[#allocation20 + $0x68] sm:$0xff]
    %v4600 = vld [vmem:[#allocation20 + $0x70] sm:$0xff]
    %v4601 = vld [vmem:[#allocation20 + $0x78] sm:$0xff]
    %v4602 = vld [vmem:[#allocation20 + $0x80] sm:$0xff]
    %v4603 = vld [vmem:[#allocation20 + $0x88] sm:$0xff]
    %v4604 = vld [vmem:[#allocation20 + $0x90] sm:$0xff]
    %v4605 = vld [vmem:[#allocation20 + $0x98] sm:$0xff]
    %v4606 = vld [vmem:[#allocation20 + $0xa0] sm:$0xff]
    %v4607 = vld [vmem:[#allocation20 + $0xa8] sm:$0xff]
    %v4608 = vld [vmem:[#allocation20 + $0xb0] sm:$0xff]
    %v4609 = vld [vmem:[#allocation20 + $0xb8] sm:$0xff]
    %v4610 = vld [vmem:[#allocation20 + $0xc0] sm:$0xff]
    %v4611 = vld [vmem:[#allocation20 + $0xc8] sm:$0xff]
    %v4612 = vld [vmem:[#allocation20 + $0xd0] sm:$0xff]
    %v4613 = vld [vmem:[#allocation20 + $0xd8] sm:$0xff]
    %v4614 = vld [vmem:[#allocation20 + $0xe0] sm:$0xff]
    %v4615 = vld [vmem:[#allocation20 + $0xe8] sm:$0xff]
    %v4616 = vld [vmem:[#allocation20 + $0xf0] sm:$0xff]
    %v4617 = vld [vmem:[#allocation20 + $0xf8] sm:$0xff]
    %v4618 = vld [vmem:[#allocation20 + $0x100] sm:$0xff]
    %v4619 = vld [vmem:[#allocation20 + $0x108] sm:$0xff]
    %v4620 = vld [vmem:[#allocation20 + $0x110] sm:$0xff]
    %v4621 = vld [vmem:[#allocation20 + $0x118] sm:$0xff]
    %v4622 = vld [vmem:[#allocation20 + $0x120] sm:$0xff]
    %v4623 = vld [vmem:[#allocation20 + $0x128] sm:$0xff]
    %v4624 = vld [vmem:[#allocation20 + $0x130] sm:$0xff]
    %v4625 = vld [vmem:[#allocation20 + $0x138] sm:$0xff]
    %v4626 = vld [vmem:[#allocation20 + $0x140] sm:$0xff]
    %v4627 = vld [vmem:[#allocation20 + $0x148] sm:$0xff]
    %v4628 = vld [vmem:[#allocation20 + $0x150] sm:$0xff]
    %v4629 = vld [vmem:[#allocation20 + $0x158] sm:$0xff]
    %v4630 = vld [vmem:[#allocation20 + $0x160] sm:$0xff]
    %v4631 = vld [vmem:[#allocation20 + $0x168] sm:$0xff]
    %v4632 = vld [vmem:[#allocation20 + $0x170] sm:$0xff]
    %v4633 = vld [vmem:[#allocation20 + $0x178] sm:$0xff]
    %v4634 = vld [vmem:[%s17] sm:$0x7]
    %v4636 = vlaneseq
    %v4637 = vshrl.u32 %v4636, 7
    %v4638 = vsub.s32 0, %v4637
    %v4639 = vrot.slane %v4634, %v4638
    %v4640 = vlaneseq
    %v4641 = vshrl.u32 %v4640, 7
    %v4642 = vsub.s32 1, %v4641
    %v4643 = vrot.slane %v4634, %v4642
    %v4644 = vlaneseq
    %v4645 = vshrl.u32 %v4644, 7
    %v4646 = vsub.s32 2, %v4645
    %v4647 = vrot.slane %v4634, %v4646
    %4651 = vmatprep.subr.mxu0 %v4587
    %4652 = vmatpush1.msra.mxu0 %v4586
    %4653 = vmatprep.subr.mxu0 %v4590
    %4654 = vmatpush1.msra.mxu0 %v4589
    %4655 = vmatprep.subr.mxu0 %v4593
    %4656 = vmatpush1.msra.mxu0 %v4592
    %4657 = vmatprep.subr.mxu0 %v4596
    %4658 = vmatpush1.msra.mxu0 %v4595
    %4659 = vmatprep.subr.mxu0 %v4599
    %4660 = vmatpush1.msra.mxu0 %v4598
    %4661 = vmatprep.subr.mxu0 %v4602
    %4662 = vmatpush1.msra.mxu0 %v4601
    %4663 = vmatprep.subr.mxu0 %v4605
    %4664 = vmatpush1.msra.mxu0 %v4604
    %4665 = vmatprep.subr.mxu0 %v4608
    %4666 = vmatpush1.msra.mxu0 %v4607
    %4667 = vmatprep.subr.mxu0 %v4611
    %4668 = vmatpush1.msra.mxu0 %v4610
    %4669 = vmatprep.subr.mxu0 %v4614
    %4670 = vmatpush1.msra.mxu0 %v4613
    %4671 = vmatprep.subr.mxu0 %v4617
    %4672 = vmatpush1.msra.mxu0 %v4616
    %4673 = vmatprep.subr.mxu0 %v4620
    %4674 = vmatpush1.msra.mxu0 %v4619
    %4675 = vmatprep.subr.mxu0 %v4623
    %4676 = vmatpush1.msra.mxu0 %v4622
    %4677 = vmatprep.subr.mxu0 %v4626
    %4678 = vmatpush1.msra.mxu0 %v4625
    %4679 = vmatprep.subr.mxu0 %v4629
    %4680 = vmatpush1.msra.mxu0 %v4628
    %4681 = vmatprep.subr.mxu0 %v4632
    %4682 = vmatpush1.msra.mxu0 %v4631
    %4683 = vmatprep.subr.mxu0 0.0
    %4684 = vmatpush1.msra.mxu0 0.0
    %4685 = vmatprep.subr.mxu0 0.0
    %4686 = vmatpush1.msra.mxu0 0.0
    %4687 = vmatprep.subr.mxu0 0.0
    %4688 = vmatpush1.msra.mxu0 0.0
    %4689 = vmatprep.subr.mxu0 0.0
    %4690 = vmatpush1.msra.mxu0 0.0
    %4691 = vmatprep.subr.mxu0 0.0
    %4692 = vmatpush1.msra.mxu0 0.0
    %4693 = vmatprep.subr.mxu0 0.0
    %4694 = vmatpush1.msra.mxu0 0.0
    %4695 = vmatprep.subr.mxu0 0.0
    %4696 = vmatpush1.msra.mxu0 0.0
    %4697 = vmatprep.subr.mxu0 0.0
    %4698 = vmatpush1.msra.mxu0 0.0
    %4699 = vmatprep.subr.mxu0 0.0
    %4700 = vmatpush1.msra.mxu0 0.0
    %4701 = vmatprep.subr.mxu0 0.0
    %4702 = vmatpush1.msra.mxu0 0.0
    %4703 = vmatprep.subr.mxu0 0.0
    %4704 = vmatpush1.msra.mxu0 0.0
    %4705 = vmatprep.subr.mxu0 0.0
    %4706 = vmatpush1.msra.mxu0 0.0
    %4707 = vmatprep.subr.mxu0 0.0
    %4708 = vmatpush1.msra.mxu0 0.0
    %4709 = vmatprep.subr.mxu0 0.0
    %4710 = vmatpush1.msra.mxu0 0.0
    %4711 = vmatprep.subr.mxu0 0.0
    %4712 = vmatpush1.msra.mxu0 0.0
    %4713 = vmatprep.subr.mxu0 0.0
    %4714 = vmatpush1.msra.mxu0 0.0
    %4715 = vmatprep.mubr.f32.mxu0 0.0
    %4716 = vmatmul.mubr.f32.gmra.mrb[0].mxu0 %v3462
    %v4717 = vpop.f32.mrb[0].mxu0
    %v4718 = vadd.f32 %v4639, %v4717
    %v4719 = vpop.f32.mrb[0].mxu0
    %v4720 = vadd.f32 %v4643, %v4719
    %4721 = vdwg.mxu0
    %4722 = vmatprep.subr.mxu0 0.0
    %4723 = vmatpush1.msra.mxu0 %v4588
    %4724 = vmatprep.subr.mxu0 0.0
    %4725 = vmatpush1.msra.mxu0 %v4591
    %4726 = vmatprep.subr.mxu0 0.0
    %4727 = vmatpush1.msra.mxu0 %v4594
    %4728 = vmatprep.subr.mxu0 0.0
    %4729 = vmatpush1.msra.mxu0 %v4597
    %4730 = vmatprep.subr.mxu0 0.0
    %4731 = vmatpush1.msra.mxu0 %v4600
    %4732 = vmatprep.subr.mxu0 0.0
    %4733 = vmatpush1.msra.mxu0 %v4603
    %4734 = vmatprep.subr.mxu0 0.0
    %4735 = vmatpush1.msra.mxu0 %v4606
    %4736 = vmatprep.subr.mxu0 0.0
    %4737 = vmatpush1.msra.mxu0 %v4609
    %4738 = vmatprep.subr.mxu0 0.0
    %4739 = vmatpush1.msra.mxu0 %v4612
    %4740 = vmatprep.subr.mxu0 0.0
    %4741 = vmatpush1.msra.mxu0 %v4615
    %4742 = vmatprep.subr.mxu0 0.0
    %4743 = vmatpush1.msra.mxu0 %v4618
    %4744 = vmatprep.subr.mxu0 0.0
    %4745 = vmatpush1.msra.mxu0 %v4621
    %4746 = vmatprep.subr.mxu0 0.0
    %4747 = vmatpush1.msra.mxu0 %v4624
    %4748 = vmatprep.subr.mxu0 0.0
    %4749 = vmatpush1.msra.mxu0 %v4627
    %4750 = vmatprep.subr.mxu0 0.0
    %4751 = vmatpush1.msra.mxu0 %v4630
    %4752 = vmatprep.subr.mxu0 0.0
    %4753 = vmatpush1.msra.mxu0 %v4633
    %4754 = vmatprep.subr.mxu0 0.0
    %4755 = vmatpush1.msra.mxu0 0.0
    %4756 = vmatprep.subr.mxu0 0.0
    %4757 = vmatpush1.msra.mxu0 0.0
    %4758 = vmatprep.subr.mxu0 0.0
    %4759 = vmatpush1.msra.mxu0 0.0
    %4760 = vmatprep.subr.mxu0 0.0
    %4761 = vmatpush1.msra.mxu0 0.0
    %4762 = vmatprep.subr.mxu0 0.0
    %4763 = vmatpush1.msra.mxu0 0.0
    %4764 = vmatprep.subr.mxu0 0.0
    %4765 = vmatpush1.msra.mxu0 0.0
    %4766 = vmatprep.subr.mxu0 0.0
    %4767 = vmatpush1.msra.mxu0 0.0
    %4768 = vmatprep.subr.mxu0 0.0
    %4769 = vmatpush1.msra.mxu0 0.0
    %4770 = vmatprep.subr.mxu0 0.0
    %4771 = vmatpush1.msra.mxu0 0.0
    %4772 = vmatprep.subr.mxu0 0.0
    %4773 = vmatpush1.msra.mxu0 0.0
    %4774 = vmatprep.subr.mxu0 0.0
    %4775 = vmatpush1.msra.mxu0 0.0
    %4776 = vmatprep.subr.mxu0 0.0
    %4777 = vmatpush1.msra.mxu0 0.0
    %4778 = vmatprep.subr.mxu0 0.0
    %4779 = vmatpush1.msra.mxu0 0.0
    %4780 = vmatprep.subr.mxu0 0.0
    %4781 = vmatpush1.msra.mxu0 0.0
    %4782 = vmatprep.subr.mxu0 0.0
    %4783 = vmatpush1.msra.mxu0 0.0
    %4784 = vmatprep.subr.mxu0 0.0
    %4785 = vmatpush1.msra.mxu0 0.0
    %4786 = vmatprep.mubr.f32.mxu0 0.0
    %4787 = vmatmul.mubr.f32.gmra.mrb[0].mxu0 %v3462
    %v4788 = vpop.f32.mrb[0].mxu0
    %v4789 = vadd.f32 %v4647, %v4788
    %v4790 = vpop.f32.mrb[0].mxu0
    %4791 = vdwg.mxu0
    %v4792 = vadd.f32 %v4512, %v4718
    %v4793 = vxor.u32 %v4792, 2147483648
    %v4794 = vmul.f32 %v4793, 1.442695
    %v4795 = vpow.pop %v4794
    %v4796 = vadd.f32 %v4795, 1.0
    %v4797 = vrcp.pop %v4796
    %v4798 = vmul.f32 1.0, %v4797
    %v4799 = vadd.f32 %v4514, %v4720
    %v4800 = vxor.u32 %v4799, 2147483648
    %v4801 = vmul.f32 %v4800, 1.442695
    %v4802 = vpow.pop %v4801
    %v4803 = vadd.f32 %v4802, 1.0
    %v4804 = vrcp.pop %v4803
    %v4805 = vmul.f32 1.0, %v4804
    %v4806 = vmul.f32 %v4798, %v4789
    %v4807 = vadd.f32 %v4583, %v4806
    %v4808 = vtanh.pop %v4807
    %v4809 = vsub.f32 1.0, %v4805
    %v4810 = vmul.f32 %v4809, %v4808
    %v4811 = vmul.f32 %v4805, %v3462
    %v4812 = vadd.f32 %v4810, %v4811
    %v4815 = vunpack.c.l.s4 1966171168
    %v4816 = vunpack.c.0.s8 %v4815
    %v4817 = vlaneseq
    %v4818 = vshrl.u32 %v4817, 7
    %v4819 = vsub.s32 %v4816, %v4818
    %v4820 = vrot.slane %v4812, %v4819
    %v4821 = vcombine.high %v4820, %v4820
    %v4823 = vunpack.c.l.s4 1966171168
    %v4824 = vunpack.c.0.s8 %v4823
    %v4825 = vlaneseq
    %v4826 = vshrl.u32 %v4825, 7
    %v4827 = vsub.s32 %v4824, %v4826
    %v4828 = vrot.slane %v4820, %v4827
    %v4830 = vunpack.c.l.s4 1966171168
    %v4831 = vunpack.c.0.s8 %v4830
    %v4832 = vlaneseq
    %v4833 = vshrl.u32 %v4832, 7
    %v4834 = vsub.s32 %v4831, %v4833
    %v4835 = vrot.slane %v4821, %v4834
    %4838 = vmatprep.subr.mxu0 0.0
    %4839 = vmatpush1.xpose.msra.mxu0 %v1281
    %4840 = vmatprep.subr.mxu0 0.0
    %4841 = vmatpush1.xpose.msra.mxu0 0.0
    %4842 = vmatprep.subr.mxu0 0.0
    %4843 = vmatpush1.xpose.msra.mxu0 0.0
    %4844 = vmatprep.subr.mxu0 0.0
    %4845 = vmatpush1.xpose.msra.mxu0 0.0
    %4846 = vmatprep.subr.mxu0 0.0
    %4847 = vmatpush1.xpose.msra.mxu0 0.0
    %4848 = vmatprep.subr.mxu0 0.0
    %4849 = vmatpush1.xpose.msra.mxu0 0.0
    %4850 = vmatprep.subr.mxu0 0.0
    %4851 = vmatpush1.xpose.msra.mxu0 0.0
    %4852 = vmatprep.subr.mxu0 0.0
    %4853 = vmatpush1.xpose.msra.mxu0 0.0
    %4854 = vmatprep.subr.mxu0 0.0
    %4855 = vmatpush1.xpose.msra.mxu0 0.0
    %4856 = vmatprep.subr.mxu0 0.0
    %4857 = vmatpush1.xpose.msra.mxu0 0.0
    %4858 = vmatprep.subr.mxu0 0.0
    %4859 = vmatpush1.xpose.msra.mxu0 0.0
    %4860 = vmatprep.subr.mxu0 0.0
    %4861 = vmatpush1.xpose.msra.mxu0 0.0
    %4862 = vmatprep.subr.mxu0 0.0
    %4863 = vmatpush1.xpose.msra.mxu0 0.0
    %4864 = vmatprep.subr.mxu0 0.0
    %4865 = vmatpush1.xpose.msra.mxu0 0.0
    %4866 = vmatprep.subr.mxu0 0.0
    %4867 = vmatpush1.xpose.msra.mxu0 0.0
    %4868 = vmatprep.subr.mxu0 0.0
    %4869 = vmatpush1.xpose.msra.mxu0 0.0
    %4870 = vmatprep.subr.mxu0 0.0
    %4871 = vmatpush1.xpose.msra.mxu0 0.0
    %4872 = vmatprep.subr.mxu0 0.0
    %4873 = vmatpush1.xpose.msra.mxu0 0.0
    %4874 = vmatprep.subr.mxu0 0.0
    %4875 = vmatpush1.xpose.msra.mxu0 0.0
    %4876 = vmatprep.subr.mxu0 0.0
    %4877 = vmatpush1.xpose.msra.mxu0 0.0
    %4878 = vmatprep.subr.mxu0 0.0
    %4879 = vmatpush1.xpose.msra.mxu0 0.0
    %4880 = vmatprep.subr.mxu0 0.0
    %4881 = vmatpush1.xpose.msra.mxu0 0.0
    %4882 = vmatprep.subr.mxu0 0.0
    %4883 = vmatpush1.xpose.msra.mxu0 0.0
    %4884 = vmatprep.subr.mxu0 0.0
    %4885 = vmatpush1.xpose.msra.mxu0 0.0
    %4886 = vmatprep.subr.mxu0 0.0
    %4887 = vmatpush1.xpose.msra.mxu0 0.0
    %4888 = vmatprep.subr.mxu0 0.0
    %4889 = vmatpush1.xpose.msra.mxu0 0.0
    %4890 = vmatprep.subr.mxu0 0.0
    %4891 = vmatpush1.xpose.msra.mxu0 0.0
    %4892 = vmatprep.subr.mxu0 0.0
    %4893 = vmatpush1.xpose.msra.mxu0 0.0
    %4894 = vmatprep.subr.mxu0 0.0
    %4895 = vmatpush1.xpose.msra.mxu0 0.0
    %4896 = vmatprep.subr.mxu0 0.0
    %4897 = vmatpush1.xpose.msra.mxu0 0.0
    %4898 = vmatprep.subr.mxu0 0.0
    %4899 = vmatpush1.xpose.msra.mxu0 0.0
    %4900 = vmatprep.subr.mxu0 0.0
    %4901 = vmatpush1.xpose.msra.mxu0 0.0
    %4902 = vmatprep.mubr.f32.mxu0 0.0
    %4903 = vmatmul.mubr.f32.gmra.mrb[0].mxu0 %v4828
    %v4904 = vpop.f32.mrb[0].mxu0
    %v4905 = vadd.f32 0.0, %v4904
    %v4906 = vpop.f32.mrb[0].mxu0
    %4907 = vdwg.mxu0
    %4908 = vmatprep.subr.mxu0 0.0
    %4909 = vmatpush1.xpose.msra.mxu0 %v1282
    %4910 = vmatprep.subr.mxu0 0.0
    %4911 = vmatpush1.xpose.msra.mxu0 0.0
    %4912 = vmatprep.subr.mxu0 0.0
    %4913 = vmatpush1.xpose.msra.mxu0 0.0
    %4914 = vmatprep.subr.mxu0 0.0
    %4915 = vmatpush1.xpose.msra.mxu0 0.0
    %4916 = vmatprep.subr.mxu0 0.0
    %4917 = vmatpush1.xpose.msra.mxu0 0.0
    %4918 = vmatprep.subr.mxu0 0.0
    %4919 = vmatpush1.xpose.msra.mxu0 0.0
    %4920 = vmatprep.subr.mxu0 0.0
    %4921 = vmatpush1.xpose.msra.mxu0 0.0
    %4922 = vmatprep.subr.mxu0 0.0
    %4923 = vmatpush1.xpose.msra.mxu0 0.0
    %4924 = vmatprep.subr.mxu0 0.0
    %4925 = vmatpush1.xpose.msra.mxu0 0.0
    %4926 = vmatprep.subr.mxu0 0.0
    %4927 = vmatpush1.xpose.msra.mxu0 0.0
    %4928 = vmatprep.subr.mxu0 0.0
    %4929 = vmatpush1.xpose.msra.mxu0 0.0
    %4930 = vmatprep.subr.mxu0 0.0
    %4931 = vmatpush1.xpose.msra.mxu0 0.0
    %4932 = vmatprep.subr.mxu0 0.0
    %4933 = vmatpush1.xpose.msra.mxu0 0.0
    %4934 = vmatprep.subr.mxu0 0.0
    %4935 = vmatpush1.xpose.msra.mxu0 0.0
    %4936 = vmatprep.subr.mxu0 0.0
    %4937 = vmatpush1.xpose.msra.mxu0 0.0
    %4938 = vmatprep.subr.mxu0 0.0
    %4939 = vmatpush1.xpose.msra.mxu0 0.0
    %4940 = vmatprep.subr.mxu0 0.0
    %4941 = vmatpush1.xpose.msra.mxu0 0.0
    %4942 = vmatprep.subr.mxu0 0.0
    %4943 = vmatpush1.xpose.msra.mxu0 0.0
    %4944 = vmatprep.subr.mxu0 0.0
    %4945 = vmatpush1.xpose.msra.mxu0 0.0
    %4946 = vmatprep.subr.mxu0 0.0
    %4947 = vmatpush1.xpose.msra.mxu0 0.0
    %4948 = vmatprep.subr.mxu0 0.0
    %4949 = vmatpush1.xpose.msra.mxu0 0.0
    %4950 = vmatprep.subr.mxu0 0.0
    %4951 = vmatpush1.xpose.msra.mxu0 0.0
    %4952 = vmatprep.subr.mxu0 0.0
    %4953 = vmatpush1.xpose.msra.mxu0 0.0
    %4954 = vmatprep.subr.mxu0 0.0
    %4955 = vmatpush1.xpose.msra.mxu0 0.0
    %4956 = vmatprep.subr.mxu0 0.0
    %4957 = vmatpush1.xpose.msra.mxu0 0.0
    %4958 = vmatprep.subr.mxu0 0.0
    %4959 = vmatpush1.xpose.msra.mxu0 0.0
    %4960 = vmatprep.subr.mxu0 0.0
    %4961 = vmatpush1.xpose.msra.mxu0 0.0
    %4962 = vmatprep.subr.mxu0 0.0
    %4963 = vmatpush1.xpose.msra.mxu0 0.0
    %4964 = vmatprep.subr.mxu0 0.0
    %4965 = vmatpush1.xpose.msra.mxu0 0.0
    %4966 = vmatprep.subr.mxu0 0.0
    %4967 = vmatpush1.xpose.msra.mxu0 0.0
    %4968 = vmatprep.subr.mxu0 0.0
    %4969 = vmatpush1.xpose.msra.mxu0 0.0
    %4970 = vmatprep.subr.mxu0 0.0
    %4971 = vmatpush1.xpose.msra.mxu0 0.0
    %4972 = vmatprep.mubr.f32.mxu0 0.0
    %4973 = vmatmul.mubr.f32.gmra.mrb[0].mxu0 %v4835
    %v4974 = vpop.f32.mrb[0].mxu0
    %v4975 = vadd.f32 0.0, %v4974
    %v4976 = vpop.f32.mrb[0].mxu0
    %4977 = vdwg.mxu0
    %v4978 = vsel %vm2277, %v4905, -inf
    %4979 = vmax.xlane.f32.xlu0 %v4978
    %v4980 = vpop.xlane.xlu0 %4979
    %v4981 = vsel %vm2277, %v4975, -inf
    %4982 = vmax.xlane.f32.xlu0 %v4981
    %v4983 = vpop.xlane.xlu0 %4982
    %v4984 = vsub.f32 %v4905, %v4980
    %v4985 = vsub.f32 %v4975, %v4983
    %v4986 = vmul.f32 %v4984, 1.442695
    %v4987 = vpow.pop %v4986
    %v4988 = vmul.f32 %v4985, 1.442695
    %v4989 = vpow.pop %v4988
    %v4990 = vsel %vm2277, %v4987, 0.0
    %4991 = vadd.xlane.f32.xlu0 %v4990
    %v4992 = vpop.xlane.xlu0 %4991
    %v4993 = vsel %vm2277, %v4989, 0.0
    %4994 = vadd.xlane.f32.xlu0 %v4993
    %v4995 = vpop.xlane.xlu0 %4994
    %v4996 = vrcp.pop %v4992
    %v4997 = vrcp.pop %v4995
    %v4998 = vmul.f32 %v4987, %v4996
    %v4999 = vmul.f32 %v4989, %v4997
    %v5001 = vsel %vm2300, %v4998, 0
    %5003 = vmatprep.subr.mxu0 0.0
    %5004 = vmatpush1.msra.mxu0 %v1281
    %5005 = vmatprep.subr.mxu0 0.0
    %5006 = vmatpush1.msra.mxu0 0.0
    %5007 = vmatprep.subr.mxu0 0.0
    %5008 = vmatpush1.msra.mxu0 0.0
    %5009 = vmatprep.subr.mxu0 0.0
    %5010 = vmatpush1.msra.mxu0 0.0
    %5011 = vmatprep.subr.mxu0 0.0
    %5012 = vmatpush1.msra.mxu0 0.0
    %5013 = vmatprep.subr.mxu0 0.0
    %5014 = vmatpush1.msra.mxu0 0.0
    %5015 = vmatprep.subr.mxu0 0.0
    %5016 = vmatpush1.msra.mxu0 0.0
    %5017 = vmatprep.subr.mxu0 0.0
    %5018 = vmatpush1.msra.mxu0 0.0
    %5019 = vmatprep.subr.mxu0 0.0
    %5020 = vmatpush1.msra.mxu0 0.0
    %5021 = vmatprep.subr.mxu0 0.0
    %5022 = vmatpush1.msra.mxu0 0.0
    %5023 = vmatprep.subr.mxu0 0.0
    %5024 = vmatpush1.msra.mxu0 0.0
    %5025 = vmatprep.subr.mxu0 0.0
    %5026 = vmatpush1.msra.mxu0 0.0
    %5027 = vmatprep.subr.mxu0 0.0
    %5028 = vmatpush1.msra.mxu0 0.0
    %5029 = vmatprep.subr.mxu0 0.0
    %5030 = vmatpush1.msra.mxu0 0.0
    %5031 = vmatprep.subr.mxu0 0.0
    %5032 = vmatpush1.msra.mxu0 0.0
    %5033 = vmatprep.subr.mxu0 0.0
    %5034 = vmatpush1.msra.mxu0 0.0
    %5035 = vmatprep.subr.mxu0 0.0
    %5036 = vmatpush1.msra.mxu0 0.0
    %5037 = vmatprep.subr.mxu0 0.0
    %5038 = vmatpush1.msra.mxu0 0.0
    %5039 = vmatprep.subr.mxu0 0.0
    %5040 = vmatpush1.msra.mxu0 0.0
    %5041 = vmatprep.subr.mxu0 0.0
    %5042 = vmatpush1.msra.mxu0 0.0
    %5043 = vmatprep.subr.mxu0 0.0
    %5044 = vmatpush1.msra.mxu0 0.0
    %5045 = vmatprep.subr.mxu0 0.0
    %5046 = vmatpush1.msra.mxu0 0.0
    %5047 = vmatprep.subr.mxu0 0.0
    %5048 = vmatpush1.msra.mxu0 0.0
    %5049 = vmatprep.subr.mxu0 0.0
    %5050 = vmatpush1.msra.mxu0 0.0
    %5051 = vmatprep.subr.mxu0 0.0
    %5052 = vmatpush1.msra.mxu0 0.0
    %5053 = vmatprep.subr.mxu0 0.0
    %5054 = vmatpush1.msra.mxu0 0.0
    %5055 = vmatprep.subr.mxu0 0.0
    %5056 = vmatpush1.msra.mxu0 0.0
    %5057 = vmatprep.subr.mxu0 0.0
    %5058 = vmatpush1.msra.mxu0 0.0
    %5059 = vmatprep.subr.mxu0 0.0
    %5060 = vmatpush1.msra.mxu0 0.0
    %5061 = vmatprep.subr.mxu0 0.0
    %5062 = vmatpush1.msra.mxu0 0.0
    %5063 = vmatprep.subr.mxu0 0.0
    %5064 = vmatpush1.msra.mxu0 0.0
    %5065 = vmatprep.subr.mxu0 0.0
    %5066 = vmatpush1.msra.mxu0 0.0
    %5067 = vmatprep.mubr.f32.mxu0 0.0
    %5068 = vmatmul.mubr.f32.gmra.mrb[0].mxu0 %v5001
    %v5069 = vpop.f32.mrb[0].mxu0
    %v5070 = vadd.f32 0.0, %v5069
    %v5071 = vpop.f32.mrb[0].mxu0
    %5072 = vdwg.mxu0
    %v5074 = vsel %vm2300, %v4999, 0
    %5076 = vmatprep.subr.mxu0 0.0
    %5077 = vmatpush1.msra.mxu0 %v1282
    %5078 = vmatprep.subr.mxu0 0.0
    %5079 = vmatpush1.msra.mxu0 0.0
    %5080 = vmatprep.subr.mxu0 0.0
    %5081 = vmatpush1.msra.mxu0 0.0
    %5082 = vmatprep.subr.mxu0 0.0
    %5083 = vmatpush1.msra.mxu0 0.0
    %5084 = vmatprep.subr.mxu0 0.0
    %5085 = vmatpush1.msra.mxu0 0.0
    %5086 = vmatprep.subr.mxu0 0.0
    %5087 = vmatpush1.msra.mxu0 0.0
    %5088 = vmatprep.subr.mxu0 0.0
    %5089 = vmatpush1.msra.mxu0 0.0
    %5090 = vmatprep.subr.mxu0 0.0
    %5091 = vmatpush1.msra.mxu0 0.0
    %5092 = vmatprep.subr.mxu0 0.0
    %5093 = vmatpush1.msra.mxu0 0.0
    %5094 = vmatprep.subr.mxu0 0.0
    %5095 = vmatpush1.msra.mxu0 0.0
    %5096 = vmatprep.subr.mxu0 0.0
    %5097 = vmatpush1.msra.mxu0 0.0
    %5098 = vmatprep.subr.mxu0 0.0
    %5099 = vmatpush1.msra.mxu0 0.0
    %5100 = vmatprep.subr.mxu0 0.0
    %5101 = vmatpush1.msra.mxu0 0.0
    %5102 = vmatprep.subr.mxu0 0.0
    %5103 = vmatpush1.msra.mxu0 0.0
    %5104 = vmatprep.subr.mxu0 0.0
    %5105 = vmatpush1.msra.mxu0 0.0
    %5106 = vmatprep.subr.mxu0 0.0
    %5107 = vmatpush1.msra.mxu0 0.0
    %5108 = vmatprep.subr.mxu0 0.0
    %5109 = vmatpush1.msra.mxu0 0.0
    %5110 = vmatprep.subr.mxu0 0.0
    %5111 = vmatpush1.msra.mxu0 0.0
    %5112 = vmatprep.subr.mxu0 0.0
    %5113 = vmatpush1.msra.mxu0 0.0
    %5114 = vmatprep.subr.mxu0 0.0
    %5115 = vmatpush1.msra.mxu0 0.0
    %5116 = vmatprep.subr.mxu0 0.0
    %5117 = vmatpush1.msra.mxu0 0.0
    %5118 = vmatprep.subr.mxu0 0.0
    %5119 = vmatpush1.msra.mxu0 0.0
    %5120 = vmatprep.subr.mxu0 0.0
    %5121 = vmatpush1.msra.mxu0 0.0
    %5122 = vmatprep.subr.mxu0 0.0
    %5123 = vmatpush1.msra.mxu0 0.0
    %5124 = vmatprep.subr.mxu0 0.0
    %5125 = vmatpush1.msra.mxu0 0.0
    %5126 = vmatprep.subr.mxu0 0.0
    %5127 = vmatpush1.msra.mxu0 0.0
    %5128 = vmatprep.subr.mxu0 0.0
    %5129 = vmatpush1.msra.mxu0 0.0
    %5130 = vmatprep.subr.mxu0 0.0
    %5131 = vmatpush1.msra.mxu0 0.0
    %5132 = vmatprep.subr.mxu0 0.0
    %5133 = vmatpush1.msra.mxu0 0.0
    %5134 = vmatprep.subr.mxu0 0.0
    %5135 = vmatpush1.msra.mxu0 0.0
    %5136 = vmatprep.subr.mxu0 0.0
    %5137 = vmatpush1.msra.mxu0 0.0
    %5138 = vmatprep.subr.mxu0 0.0
    %5139 = vmatpush1.msra.mxu0 0.0
    %5140 = vmatprep.mubr.f32.mxu0 0.0
    %5141 = vmatmul.mubr.f32.gmra.mrb[0].mxu0 %v5074
    %v5142 = vpop.f32.mrb[0].mxu0
    %v5143 = vadd.f32 0.0, %v5142
    %v5144 = vpop.f32.mrb[0].mxu0
    %5145 = vdwg.mxu0
    %v5146 = vld [vmem:[#allocation21] sm:$0xff]
    %v5147 = vld [vmem:[#allocation21 + $0x8] sm:$0xff]
    %v5148 = vld [vmem:[#allocation21 + $0x10] sm:$0xff]
    %v5149 = vld [vmem:[#allocation21 + $0x18] sm:$0xff]
    %v5150 = vld [vmem:[#allocation21 + $0x20] sm:$0xff]
    %v5151 = vld [vmem:[#allocation21 + $0x28] sm:$0xff]
    %v5152 = vld [vmem:[#allocation21 + $0x30] sm:$0xff]
    %v5153 = vld [vmem:[#allocation21 + $0x38] sm:$0xff]
    %v5154 = vld [vmem:[#allocation21 + $0x40] sm:$0xff]
    %v5155 = vld [vmem:[#allocation21 + $0x48] sm:$0xff]
    %v5156 = vld [vmem:[#allocation21 + $0x50] sm:$0xff]
    %v5157 = vld [vmem:[#allocation21 + $0x58] sm:$0xff]
    %v5158 = vld [vmem:[#allocation21 + $0x60] sm:$0xff]
    %v5159 = vld [vmem:[#allocation21 + $0x68] sm:$0xff]
    %v5160 = vld [vmem:[#allocation21 + $0x70] sm:$0xff]
    %v5161 = vld [vmem:[#allocation21 + $0x78] sm:$0xff]
    %v5162 = vld [vmem:[#allocation23] sm:$0xff]
    %v5163 = vld [vmem:[#allocation23 + $0x8] sm:$0xff]
    %v5164 = vld [vmem:[#allocation23 + $0x10] sm:$0xff]
    %v5165 = vld [vmem:[#allocation23 + $0x18] sm:$0xff]
    %v5166 = vld [vmem:[#allocation23 + $0x20] sm:$0xff]
    %v5167 = vld [vmem:[#allocation23 + $0x28] sm:$0xff]
    %v5168 = vld [vmem:[#allocation23 + $0x30] sm:$0xff]
    %v5169 = vld [vmem:[#allocation23 + $0x38] sm:$0xff]
    %v5170 = vld [vmem:[#allocation23 + $0x40] sm:$0xff]
    %v5171 = vld [vmem:[#allocation23 + $0x48] sm:$0xff]
    %v5172 = vld [vmem:[#allocation23 + $0x50] sm:$0xff]
    %v5173 = vld [vmem:[#allocation23 + $0x58] sm:$0xff]
    %v5174 = vld [vmem:[#allocation23 + $0x60] sm:$0xff]
    %v5175 = vld [vmem:[#allocation23 + $0x68] sm:$0xff]
    %v5176 = vld [vmem:[#allocation23 + $0x70] sm:$0xff]
    %v5177 = vld [vmem:[#allocation23 + $0x78] sm:$0xff]
    %5178 = vmatprep.subr.mxu0 0.0
    %5179 = vmatpush1.msra.mxu0 %v5162
    %5180 = vmatprep.subr.mxu0 0.0
    %5181 = vmatpush1.msra.mxu0 %v5163
    %5182 = vmatprep.subr.mxu0 0.0
    %5183 = vmatpush1.msra.mxu0 %v5164
    %5184 = vmatprep.subr.mxu0 0.0
    %5185 = vmatpush1.msra.mxu0 %v5165
    %5186 = vmatprep.subr.mxu0 0.0
    %5187 = vmatpush1.msra.mxu0 %v5166
    %5188 = vmatprep.subr.mxu0 0.0
    %5189 = vmatpush1.msra.mxu0 %v5167
    %5190 = vmatprep.subr.mxu0 0.0
    %5191 = vmatpush1.msra.mxu0 %v5168
    %5192 = vmatprep.subr.mxu0 0.0
    %5193 = vmatpush1.msra.mxu0 %v5169
    %5194 = vmatprep.subr.mxu0 0.0
    %5195 = vmatpush1.msra.mxu0 %v5170
    %5196 = vmatprep.subr.mxu0 0.0
    %5197 = vmatpush1.msra.mxu0 %v5171
    %5198 = vmatprep.subr.mxu0 0.0
    %5199 = vmatpush1.msra.mxu0 %v5172
    %5200 = vmatprep.subr.mxu0 0.0
    %5201 = vmatpush1.msra.mxu0 %v5173
    %5202 = vmatprep.subr.mxu0 0.0
    %5203 = vmatpush1.msra.mxu0 %v5174
    %5204 = vmatprep.subr.mxu0 0.0
    %5205 = vmatpush1.msra.mxu0 %v5175
    %5206 = vmatprep.subr.mxu0 0.0
    %5207 = vmatpush1.msra.mxu0 %v5176
    %5208 = vmatprep.subr.mxu0 0.0
    %5209 = vmatpush1.msra.mxu0 %v5177
    %5210 = vmatprep.subr.mxu0 0.0
    %5211 = vmatpush1.msra.mxu0 0.0
    %5212 = vmatprep.subr.mxu0 0.0
    %5213 = vmatpush1.msra.mxu0 0.0
    %5214 = vmatprep.subr.mxu0 0.0
    %5215 = vmatpush1.msra.mxu0 0.0
    %5216 = vmatprep.subr.mxu0 0.0
    %5217 = vmatpush1.msra.mxu0 0.0
    %5218 = vmatprep.subr.mxu0 0.0
    %5219 = vmatpush1.msra.mxu0 0.0
    %5220 = vmatprep.subr.mxu0 0.0
    %5221 = vmatpush1.msra.mxu0 0.0
    %5222 = vmatprep.subr.mxu0 0.0
    %5223 = vmatpush1.msra.mxu0 0.0
    %5224 = vmatprep.subr.mxu0 0.0
    %5225 = vmatpush1.msra.mxu0 0.0
    %5226 = vmatprep.subr.mxu0 0.0
    %5227 = vmatpush1.msra.mxu0 0.0
    %5228 = vmatprep.subr.mxu0 0.0
    %5229 = vmatpush1.msra.mxu0 0.0
    %5230 = vmatprep.subr.mxu0 0.0
    %5231 = vmatpush1.msra.mxu0 0.0
    %5232 = vmatprep.subr.mxu0 0.0
    %5233 = vmatpush1.msra.mxu0 0.0
    %5234 = vmatprep.subr.mxu0 0.0
    %5235 = vmatpush1.msra.mxu0 0.0
    %5236 = vmatprep.subr.mxu0 0.0
    %5237 = vmatpush1.msra.mxu0 0.0
    %5238 = vmatprep.subr.mxu0 0.0
    %5239 = vmatpush1.msra.mxu0 0.0
    %5240 = vmatprep.subr.mxu0 0.0
    %5241 = vmatpush1.msra.mxu0 0.0
    %5242 = vmatprep.mubr.f32.mxu0 0.0
    %5243 = vmatmul.mubr.f32.gmra.mrb[0].mxu0 %v4812
    %v5244 = vpop.f32.mrb[0].mxu0
    %v5245 = vadd.f32 0.0, %v5244
    %v5246 = vpop.f32.mrb[0].mxu0
    %5247 = vdwg.mxu0
    %v5250 = vrot.slane %v5143, 7
    %v5251 = vsel %vm695, %v5250, %v5070
    %5253 = vmatprep.subr.mxu0 0.0
    %5254 = vmatpush1.msra.mxu0 %v5146
    %5255 = vmatprep.subr.mxu0 0.0
    %5256 = vmatpush1.msra.mxu0 %v5147
    %5257 = vmatprep.subr.mxu0 0.0
    %5258 = vmatpush1.msra.mxu0 %v5148
    %5259 = vmatprep.subr.mxu0 0.0
    %5260 = vmatpush1.msra.mxu0 %v5149
    %5261 = vmatprep.subr.mxu0 0.0
    %5262 = vmatpush1.msra.mxu0 %v5150
    %5263 = vmatprep.subr.mxu0 0.0
    %5264 = vmatpush1.msra.mxu0 %v5151
    %5265 = vmatprep.subr.mxu0 0.0
    %5266 = vmatpush1.msra.mxu0 %v5152
    %5267 = vmatprep.subr.mxu0 0.0
    %5268 = vmatpush1.msra.mxu0 %v5153
    %5269 = vmatprep.subr.mxu0 0.0
    %5270 = vmatpush1.msra.mxu0 %v5154
    %5271 = vmatprep.subr.mxu0 0.0
    %5272 = vmatpush1.msra.mxu0 %v5155
    %5273 = vmatprep.subr.mxu0 0.0
    %5274 = vmatpush1.msra.mxu0 %v5156
    %5275 = vmatprep.subr.mxu0 0.0
    %5276 = vmatpush1.msra.mxu0 %v5157
    %5277 = vmatprep.subr.mxu0 0.0
    %5278 = vmatpush1.msra.mxu0 %v5158
    %5279 = vmatprep.subr.mxu0 0.0
    %5280 = vmatpush1.msra.mxu0 %v5159
    %5281 = vmatprep.subr.mxu0 0.0
    %5282 = vmatpush1.msra.mxu0 %v5160
    %5283 = vmatprep.subr.mxu0 0.0
    %5284 = vmatpush1.msra.mxu0 %v5161
    %5285 = vmatprep.subr.mxu0 0.0
    %5286 = vmatpush1.msra.mxu0 0.0
    %5287 = vmatprep.subr.mxu0 0.0
    %5288 = vmatpush1.msra.mxu0 0.0
    %5289 = vmatprep.subr.mxu0 0.0
    %5290 = vmatpush1.msra.mxu0 0.0
    %5291 = vmatprep.subr.mxu0 0.0
    %5292 = vmatpush1.msra.mxu0 0.0
    %5293 = vmatprep.subr.mxu0 0.0
    %5294 = vmatpush1.msra.mxu0 0.0
    %5295 = vmatprep.subr.mxu0 0.0
    %5296 = vmatpush1.msra.mxu0 0.0
    %5297 = vmatprep.subr.mxu0 0.0
    %5298 = vmatpush1.msra.mxu0 0.0
    %5299 = vmatprep.subr.mxu0 0.0
    %5300 = vmatpush1.msra.mxu0 0.0
    %5301 = vmatprep.subr.mxu0 0.0
    %5302 = vmatpush1.msra.mxu0 0.0
    %5303 = vmatprep.subr.mxu0 0.0
    %5304 = vmatpush1.msra.mxu0 0.0
    %5305 = vmatprep.subr.mxu0 0.0
    %5306 = vmatpush1.msra.mxu0 0.0
    %5307 = vmatprep.subr.mxu0 0.0
    %5308 = vmatpush1.msra.mxu0 0.0
    %5309 = vmatprep.subr.mxu0 0.0
    %5310 = vmatpush1.msra.mxu0 0.0
    %5311 = vmatprep.subr.mxu0 0.0
    %5312 = vmatpush1.msra.mxu0 0.0
    %5313 = vmatprep.subr.mxu0 0.0
    %5314 = vmatpush1.msra.mxu0 0.0
    %5315 = vmatprep.subr.mxu0 0.0
    %5316 = vmatpush1.msra.mxu0 0.0
    %5317 = vmatprep.mubr.f32.mxu0 0.0
    %5318 = vmatmul.mubr.f32.gmra.mrb[0].mxu0 %v5251
    %v5319 = vpop.f32.mrb[0].mxu0
    %v5320 = vadd.f32 %v5245, %v5319
    %v5321 = vpop.f32.mrb[0].mxu0
    %5322 = vdwg.mxu0
    %v5323 = vld [vmem:[%s20] sm:$0x1]
    %v5325 = vlaneseq
    %v5326 = vshrl.u32 %v5325, 7
    %v5327 = vsub.s32 0, %v5326
    %v5328 = vrot.slane %v5323, %v5327
    %v5330 = vadd.f32 %v5320, %v5328
    %v5331 = vtanh.pop %v5330
    %s5332 = scalar_lea.vmem [#allocation24], 4
    %5333 = vst [vmem:[%s5332] sm:$0x3] %v5331
    %s5334 = scalar_lea.vmem [#allocation3], 6
    %v5335 = vld [vmem:[%s5334] sm:$0x3]
    %v5336 = vld [vmem:[#allocation15] sm:$0xff]
    %v5337 = vld [vmem:[#allocation15 + $0x8] sm:$0xff]
    %v5338 = vld [vmem:[#allocation15 + $0x10] sm:$0xff]
    %v5339 = vld [vmem:[#allocation15 + $0x18] sm:$0xff]
    %v5340 = vld [vmem:[#allocation15 + $0x20] sm:$0xff]
    %v5341 = vld [vmem:[#allocation15 + $0x28] sm:$0xff]
    %v5342 = vld [vmem:[%s12] sm:$0x7]
    %v5344 = vlaneseq
    %v5345 = vshrl.u32 %v5344, 7
    %v5346 = vsub.s32 0, %v5345
    %v5347 = vrot.slane %v5342, %v5346
    %v5348 = vlaneseq
    %v5349 = vshrl.u32 %v5348, 7
    %v5350 = vsub.s32 1, %v5349
    %v5351 = vrot.slane %v5342, %v5350
    %v5352 = vlaneseq
    %v5353 = vshrl.u32 %v5352, 7
    %v5354 = vsub.s32 2, %v5353
    %v5355 = vrot.slane %v5342, %v5354
    %v5360 = vsel %vm1307, %v5335, 0
    %5362 = vmatprep.subr.mxu0 %v5337
    %5363 = vmatpush1.msra.mxu0 %v5336
    %5364 = vmatprep.subr.mxu0 %v5340
    %5365 = vmatpush1.msra.mxu0 %v5339
    %5366 = vmatprep.subr.mxu0 0.0
    %5367 = vmatpush1.msra.mxu0 0.0
    %5368 = vmatprep.subr.mxu0 0.0
    %5369 = vmatpush1.msra.mxu0 0.0
    %5370 = vmatprep.subr.mxu0 0.0
    %5371 = vmatpush1.msra.mxu0 0.0
    %5372 = vmatprep.subr.mxu0 0.0
    %5373 = vmatpush1.msra.mxu0 0.0
    %5374 = vmatprep.subr.mxu0 0.0
    %5375 = vmatpush1.msra.mxu0 0.0
    %5376 = vmatprep.subr.mxu0 0.0
    %5377 = vmatpush1.msra.mxu0 0.0
    %5378 = vmatprep.subr.mxu0 0.0
    %5379 = vmatpush1.msra.mxu0 0.0
    %5380 = vmatprep.subr.mxu0 0.0
    %5381 = vmatpush1.msra.mxu0 0.0
    %5382 = vmatprep.subr.mxu0 0.0
    %5383 = vmatpush1.msra.mxu0 0.0
    %5384 = vmatprep.subr.mxu0 0.0
    %5385 = vmatpush1.msra.mxu0 0.0
    %5386 = vmatprep.subr.mxu0 0.0
    %5387 = vmatpush1.msra.mxu0 0.0
    %5388 = vmatprep.subr.mxu0 0.0
    %5389 = vmatpush1.msra.mxu0 0.0
    %5390 = vmatprep.subr.mxu0 0.0
    %5391 = vmatpush1.msra.mxu0 0.0
    %5392 = vmatprep.subr.mxu0 0.0
    %5393 = vmatpush1.msra.mxu0 0.0
    %5394 = vmatprep.subr.mxu0 0.0
    %5395 = vmatpush1.msra.mxu0 0.0
    %5396 = vmatprep.subr.mxu0 0.0
    %5397 = vmatpush1.msra.mxu0 0.0
    %5398 = vmatprep.subr.mxu0 0.0
    %5399 = vmatpush1.msra.mxu0 0.0
    %5400 = vmatprep.subr.mxu0 0.0
    %5401 = vmatpush1.msra.mxu0 0.0
    %5402 = vmatprep.subr.mxu0 0.0
    %5403 = vmatpush1.msra.mxu0 0.0
    %5404 = vmatprep.subr.mxu0 0.0
    %5405 = vmatpush1.msra.mxu0 0.0
    %5406 = vmatprep.subr.mxu0 0.0
    %5407 = vmatpush1.msra.mxu0 0.0
    %5408 = vmatprep.subr.mxu0 0.0
    %5409 = vmatpush1.msra.mxu0 0.0
    %5410 = vmatprep.subr.mxu0 0.0
    %5411 = vmatpush1.msra.mxu0 0.0
    %5412 = vmatprep.subr.mxu0 0.0
    %5413 = vmatpush1.msra.mxu0 0.0
    %5414 = vmatprep.subr.mxu0 0.0
    %5415 = vmatpush1.msra.mxu0 0.0
    %5416 = vmatprep.subr.mxu0 0.0
    %5417 = vmatpush1.msra.mxu0 0.0
    %5418 = vmatprep.subr.mxu0 0.0
    %5419 = vmatpush1.msra.mxu0 0.0
    %5420 = vmatprep.subr.mxu0 0.0
    %5421 = vmatpush1.msra.mxu0 0.0
    %5422 = vmatprep.subr.mxu0 0.0
    %5423 = vmatpush1.msra.mxu0 0.0
    %5424 = vmatprep.subr.mxu0 0.0
    %5425 = vmatpush1.msra.mxu0 0.0
    %5426 = vmatprep.mubr.f32.mxu0 0.0
    %5427 = vmatmul.mubr.f32.gmra.mrb[0].mxu0 %v5360
    %v5428 = vpop.f32.mrb[0].mxu0
    %v5429 = vadd.f32 %v5347, %v5428
    %v5430 = vpop.f32.mrb[0].mxu0
    %v5431 = vadd.f32 %v5351, %v5430
    %5432 = vdwg.mxu0
    %5433 = vmatprep.subr.mxu0 0.0
    %5434 = vmatpush1.msra.mxu0 %v5338
    %5435 = vmatprep.subr.mxu0 0.0
    %5436 = vmatpush1.msra.mxu0 %v5341
    %5437 = vmatprep.subr.mxu0 0.0
    %5438 = vmatpush1.msra.mxu0 0.0
    %5439 = vmatprep.subr.mxu0 0.0
    %5440 = vmatpush1.msra.mxu0 0.0
    %5441 = vmatprep.subr.mxu0 0.0
    %5442 = vmatpush1.msra.mxu0 0.0
    %5443 = vmatprep.subr.mxu0 0.0
    %5444 = vmatpush1.msra.mxu0 0.0
    %5445 = vmatprep.subr.mxu0 0.0
    %5446 = vmatpush1.msra.mxu0 0.0
    %5447 = vmatprep.subr.mxu0 0.0
    %5448 = vmatpush1.msra.mxu0 0.0
    %5449 = vmatprep.subr.mxu0 0.0
    %5450 = vmatpush1.msra.mxu0 0.0
    %5451 = vmatprep.subr.mxu0 0.0
    %5452 = vmatpush1.msra.mxu0 0.0
    %5453 = vmatprep.subr.mxu0 0.0
    %5454 = vmatpush1.msra.mxu0 0.0
    %5455 = vmatprep.subr.mxu0 0.0
    %5456 = vmatpush1.msra.mxu0 0.0
    %5457 = vmatprep.subr.mxu0 0.0
    %5458 = vmatpush1.msra.mxu0 0.0
    %5459 = vmatprep.subr.mxu0 0.0
    %5460 = vmatpush1.msra.mxu0 0.0
    %5461 = vmatprep.subr.mxu0 0.0
    %5462 = vmatpush1.msra.mxu0 0.0
    %5463 = vmatprep.subr.mxu0 0.0
    %5464 = vmatpush1.msra.mxu0 0.0
    %5465 = vmatprep.subr.mxu0 0.0
    %5466 = vmatpush1.msra.mxu0 0.0
    %5467 = vmatprep.subr.mxu0 0.0
    %5468 = vmatpush1.msra.mxu0 0.0
    %5469 = vmatprep.subr.mxu0 0.0
    %5470 = vmatpush1.msra.mxu0 0.0
    %5471 = vmatprep.subr.mxu0 0.0
    %5472 = vmatpush1.msra.mxu0 0.0
    %5473 = vmatprep.subr.mxu0 0.0
    %5474 = vmatpush1.msra.mxu0 0.0
    %5475 = vmatprep.subr.mxu0 0.0
    %5476 = vmatpush1.msra.mxu0 0.0
    %5477 = vmatprep.subr.mxu0 0.0
    %5478 = vmatpush1.msra.mxu0 0.0
    %5479 = vmatprep.subr.mxu0 0.0
    %5480 = vmatpush1.msra.mxu0 0.0
    %5481 = vmatprep.subr.mxu0 0.0
    %5482 = vmatpush1.msra.mxu0 0.0
    %5483 = vmatprep.subr.mxu0 0.0
    %5484 = vmatpush1.msra.mxu0 0.0
    %5485 = vmatprep.subr.mxu0 0.0
    %5486 = vmatpush1.msra.mxu0 0.0
    %5487 = vmatprep.subr.mxu0 0.0
    %5488 = vmatpush1.msra.mxu0 0.0
    %5489 = vmatprep.subr.mxu0 0.0
    %5490 = vmatpush1.msra.mxu0 0.0
    %5491 = vmatprep.subr.mxu0 0.0
    %5492 = vmatpush1.msra.mxu0 0.0
    %5493 = vmatprep.subr.mxu0 0.0
    %5494 = vmatpush1.msra.mxu0 0.0
    %5495 = vmatprep.subr.mxu0 0.0
    %5496 = vmatpush1.msra.mxu0 0.0
    %5497 = vmatprep.mubr.f32.mxu0 0.0
    %5498 = vmatmul.mubr.f32.gmra.mrb[0].mxu0 %v5360
    %v5499 = vpop.f32.mrb[0].mxu0
    %v5500 = vadd.f32 %v5355, %v5499
    %v5501 = vpop.f32.mrb[0].mxu0
    %5502 = vdwg.mxu0
    %v5503 = vld [vmem:[#allocation17] sm:$0xff]
    %v5504 = vld [vmem:[#allocation17 + $0x8] sm:$0xff]
    %v5505 = vld [vmem:[#allocation17 + $0x10] sm:$0xff]
    %v5506 = vld [vmem:[#allocation17 + $0x18] sm:$0xff]
    %v5507 = vld [vmem:[#allocation17 + $0x20] sm:$0xff]
    %v5508 = vld [vmem:[#allocation17 + $0x28] sm:$0xff]
    %v5509 = vld [vmem:[#allocation17 + $0x30] sm:$0xff]
    %v5510 = vld [vmem:[#allocation17 + $0x38] sm:$0xff]
    %v5511 = vld [vmem:[#allocation17 + $0x40] sm:$0xff]
    %v5512 = vld [vmem:[#allocation17 + $0x48] sm:$0xff]
    %v5513 = vld [vmem:[#allocation17 + $0x50] sm:$0xff]
    %v5514 = vld [vmem:[#allocation17 + $0x58] sm:$0xff]
    %v5515 = vld [vmem:[#allocation17 + $0x60] sm:$0xff]
    %v5516 = vld [vmem:[#allocation17 + $0x68] sm:$0xff]
    %v5517 = vld [vmem:[#allocation17 + $0x70] sm:$0xff]
    %v5518 = vld [vmem:[#allocation17 + $0x78] sm:$0xff]
    %v5519 = vld [vmem:[#allocation17 + $0x80] sm:$0xff]
    %v5520 = vld [vmem:[#allocation17 + $0x88] sm:$0xff]
    %v5521 = vld [vmem:[#allocation17 + $0x90] sm:$0xff]
    %v5522 = vld [vmem:[#allocation17 + $0x98] sm:$0xff]
    %v5523 = vld [vmem:[#allocation17 + $0xa0] sm:$0xff]
    %v5524 = vld [vmem:[#allocation17 + $0xa8] sm:$0xff]
    %v5525 = vld [vmem:[#allocation17 + $0xb0] sm:$0xff]
    %v5526 = vld [vmem:[#allocation17 + $0xb8] sm:$0xff]
    %v5527 = vld [vmem:[#allocation17 + $0xc0] sm:$0xff]
    %v5528 = vld [vmem:[#allocation17 + $0xc8] sm:$0xff]
    %v5529 = vld [vmem:[#allocation17 + $0xd0] sm:$0xff]
    %v5530 = vld [vmem:[#allocation17 + $0xd8] sm:$0xff]
    %v5531 = vld [vmem:[#allocation17 + $0xe0] sm:$0xff]
    %v5532 = vld [vmem:[#allocation17 + $0xe8] sm:$0xff]
    %v5533 = vld [vmem:[#allocation17 + $0xf0] sm:$0xff]
    %v5534 = vld [vmem:[#allocation17 + $0xf8] sm:$0xff]
    %v5535 = vld [vmem:[#allocation17 + $0x100] sm:$0xff]
    %v5536 = vld [vmem:[#allocation17 + $0x108] sm:$0xff]
    %v5537 = vld [vmem:[#allocation17 + $0x110] sm:$0xff]
    %v5538 = vld [vmem:[#allocation17 + $0x118] sm:$0xff]
    %v5539 = vld [vmem:[#allocation17 + $0x120] sm:$0xff]
    %v5540 = vld [vmem:[#allocation17 + $0x128] sm:$0xff]
    %v5541 = vld [vmem:[#allocation17 + $0x130] sm:$0xff]
    %v5542 = vld [vmem:[#allocation17 + $0x138] sm:$0xff]
    %v5543 = vld [vmem:[#allocation17 + $0x140] sm:$0xff]
    %v5544 = vld [vmem:[#allocation17 + $0x148] sm:$0xff]
    %v5545 = vld [vmem:[#allocation17 + $0x150] sm:$0xff]
    %v5546 = vld [vmem:[#allocation17 + $0x158] sm:$0xff]
    %v5547 = vld [vmem:[#allocation17 + $0x160] sm:$0xff]
    %v5548 = vld [vmem:[#allocation17 + $0x168] sm:$0xff]
    %v5549 = vld [vmem:[#allocation17 + $0x170] sm:$0xff]
    %v5550 = vld [vmem:[#allocation17 + $0x178] sm:$0xff]
    %v5551 = vld [vmem:[%s13] sm:$0x7]
    %v5553 = vlaneseq
    %v5554 = vshrl.u32 %v5553, 7
    %v5555 = vsub.s32 0, %v5554
    %v5556 = vrot.slane %v5551, %v5555
    %v5557 = vlaneseq
    %v5558 = vshrl.u32 %v5557, 7
    %v5559 = vsub.s32 1, %v5558
    %v5560 = vrot.slane %v5551, %v5559
    %v5561 = vlaneseq
    %v5562 = vshrl.u32 %v5561, 7
    %v5563 = vsub.s32 2, %v5562
    %v5564 = vrot.slane %v5551, %v5563
    %5568 = vmatprep.subr.mxu0 %v5504
    %5569 = vmatpush1.msra.mxu0 %v5503
    %5570 = vmatprep.subr.mxu0 %v5507
    %5571 = vmatpush1.msra.mxu0 %v5506
    %5572 = vmatprep.subr.mxu0 %v5510
    %5573 = vmatpush1.msra.mxu0 %v5509
    %5574 = vmatprep.subr.mxu0 %v5513
    %5575 = vmatpush1.msra.mxu0 %v5512
    %5576 = vmatprep.subr.mxu0 %v5516
    %5577 = vmatpush1.msra.mxu0 %v5515
    %5578 = vmatprep.subr.mxu0 %v5519
    %5579 = vmatpush1.msra.mxu0 %v5518
    %5580 = vmatprep.subr.mxu0 %v5522
    %5581 = vmatpush1.msra.mxu0 %v5521
    %5582 = vmatprep.subr.mxu0 %v5525
    %5583 = vmatpush1.msra.mxu0 %v5524
    %5584 = vmatprep.subr.mxu0 %v5528
    %5585 = vmatpush1.msra.mxu0 %v5527
    %5586 = vmatprep.subr.mxu0 %v5531
    %5587 = vmatpush1.msra.mxu0 %v5530
    %5588 = vmatprep.subr.mxu0 %v5534
    %5589 = vmatpush1.msra.mxu0 %v5533
    %5590 = vmatprep.subr.mxu0 %v5537
    %5591 = vmatpush1.msra.mxu0 %v5536
    %5592 = vmatprep.subr.mxu0 %v5540
    %5593 = vmatpush1.msra.mxu0 %v5539
    %5594 = vmatprep.subr.mxu0 %v5543
    %5595 = vmatpush1.msra.mxu0 %v5542
    %5596 = vmatprep.subr.mxu0 %v5546
    %5597 = vmatpush1.msra.mxu0 %v5545
    %5598 = vmatprep.subr.mxu0 %v5549
    %5599 = vmatpush1.msra.mxu0 %v5548
    %5600 = vmatprep.subr.mxu0 0.0
    %5601 = vmatpush1.msra.mxu0 0.0
    %5602 = vmatprep.subr.mxu0 0.0
    %5603 = vmatpush1.msra.mxu0 0.0
    %5604 = vmatprep.subr.mxu0 0.0
    %5605 = vmatpush1.msra.mxu0 0.0
    %5606 = vmatprep.subr.mxu0 0.0
    %5607 = vmatpush1.msra.mxu0 0.0
    %5608 = vmatprep.subr.mxu0 0.0
    %5609 = vmatpush1.msra.mxu0 0.0
    %5610 = vmatprep.subr.mxu0 0.0
    %5611 = vmatpush1.msra.mxu0 0.0
    %5612 = vmatprep.subr.mxu0 0.0
    %5613 = vmatpush1.msra.mxu0 0.0
    %5614 = vmatprep.subr.mxu0 0.0
    %5615 = vmatpush1.msra.mxu0 0.0
    %5616 = vmatprep.subr.mxu0 0.0
    %5617 = vmatpush1.msra.mxu0 0.0
    %5618 = vmatprep.subr.mxu0 0.0
    %5619 = vmatpush1.msra.mxu0 0.0
    %5620 = vmatprep.subr.mxu0 0.0
    %5621 = vmatpush1.msra.mxu0 0.0
    %5622 = vmatprep.subr.mxu0 0.0
    %5623 = vmatpush1.msra.mxu0 0.0
    %5624 = vmatprep.subr.mxu0 0.0
    %5625 = vmatpush1.msra.mxu0 0.0
    %5626 = vmatprep.subr.mxu0 0.0
    %5627 = vmatpush1.msra.mxu0 0.0
    %5628 = vmatprep.subr.mxu0 0.0
    %5629 = vmatpush1.msra.mxu0 0.0
    %5630 = vmatprep.subr.mxu0 0.0
    %5631 = vmatpush1.msra.mxu0 0.0
    %5632 = vmatprep.mubr.f32.mxu0 0.0
    %5633 = vmatmul.mubr.f32.gmra.mrb[0].mxu0 %v4379
    %v5634 = vpop.f32.mrb[0].mxu0
    %v5635 = vadd.f32 %v5556, %v5634
    %v5636 = vpop.f32.mrb[0].mxu0
    %v5637 = vadd.f32 %v5560, %v5636
    %5638 = vdwg.mxu0
    %5639 = vmatprep.subr.mxu0 0.0
    %5640 = vmatpush1.msra.mxu0 %v5505
    %5641 = vmatprep.subr.mxu0 0.0
    %5642 = vmatpush1.msra.mxu0 %v5508
    %5643 = vmatprep.subr.mxu0 0.0
    %5644 = vmatpush1.msra.mxu0 %v5511
    %5645 = vmatprep.subr.mxu0 0.0
    %5646 = vmatpush1.msra.mxu0 %v5514
    %5647 = vmatprep.subr.mxu0 0.0
    %5648 = vmatpush1.msra.mxu0 %v5517
    %5649 = vmatprep.subr.mxu0 0.0
    %5650 = vmatpush1.msra.mxu0 %v5520
    %5651 = vmatprep.subr.mxu0 0.0
    %5652 = vmatpush1.msra.mxu0 %v5523
    %5653 = vmatprep.subr.mxu0 0.0
    %5654 = vmatpush1.msra.mxu0 %v5526
    %5655 = vmatprep.subr.mxu0 0.0
    %5656 = vmatpush1.msra.mxu0 %v5529
    %5657 = vmatprep.subr.mxu0 0.0
    %5658 = vmatpush1.msra.mxu0 %v5532
    %5659 = vmatprep.subr.mxu0 0.0
    %5660 = vmatpush1.msra.mxu0 %v5535
    %5661 = vmatprep.subr.mxu0 0.0
    %5662 = vmatpush1.msra.mxu0 %v5538
    %5663 = vmatprep.subr.mxu0 0.0
    %5664 = vmatpush1.msra.mxu0 %v5541
    %5665 = vmatprep.subr.mxu0 0.0
    %5666 = vmatpush1.msra.mxu0 %v5544
    %5667 = vmatprep.subr.mxu0 0.0
    %5668 = vmatpush1.msra.mxu0 %v5547
    %5669 = vmatprep.subr.mxu0 0.0
    %5670 = vmatpush1.msra.mxu0 %v5550
    %5671 = vmatprep.subr.mxu0 0.0
    %5672 = vmatpush1.msra.mxu0 0.0
    %5673 = vmatprep.subr.mxu0 0.0
    %5674 = vmatpush1.msra.mxu0 0.0
    %5675 = vmatprep.subr.mxu0 0.0
    %5676 = vmatpush1.msra.mxu0 0.0
    %5677 = vmatprep.subr.mxu0 0.0
    %5678 = vmatpush1.msra.mxu0 0.0
    %5679 = vmatprep.subr.mxu0 0.0
    %5680 = vmatpush1.msra.mxu0 0.0
    %5681 = vmatprep.subr.mxu0 0.0
    %5682 = vmatpush1.msra.mxu0 0.0
    %5683 = vmatprep.subr.mxu0 0.0
    %5684 = vmatpush1.msra.mxu0 0.0
    %5685 = vmatprep.subr.mxu0 0.0
    %5686 = vmatpush1.msra.mxu0 0.0
    %5687 = vmatprep.subr.mxu0 0.0
    %5688 = vmatpush1.msra.mxu0 0.0
    %5689 = vmatprep.subr.mxu0 0.0
    %5690 = vmatpush1.msra.mxu0 0.0
    %5691 = vmatprep.subr.mxu0 0.0
    %5692 = vmatpush1.msra.mxu0 0.0
    %5693 = vmatprep.subr.mxu0 0.0
    %5694 = vmatpush1.msra.mxu0 0.0
    %5695 = vmatprep.subr.mxu0 0.0
    %5696 = vmatpush1.msra.mxu0 0.0
    %5697 = vmatprep.subr.mxu0 0.0
    %5698 = vmatpush1.msra.mxu0 0.0
    %5699 = vmatprep.subr.mxu0 0.0
    %5700 = vmatpush1.msra.mxu0 0.0
    %5701 = vmatprep.subr.mxu0 0.0
    %5702 = vmatpush1.msra.mxu0 0.0
    %5703 = vmatprep.mubr.f32.mxu0 0.0
    %5704 = vmatmul.mubr.f32.gmra.mrb[0].mxu0 %v4379
    %v5705 = vpop.f32.mrb[0].mxu0
    %v5706 = vadd.f32 %v5564, %v5705
    %v5707 = vpop.f32.mrb[0].mxu0
    %5708 = vdwg.mxu0
    %v5709 = vadd.f32 %v5429, %v5635
    %v5710 = vxor.u32 %v5709, 2147483648
    %v5711 = vmul.f32 %v5710, 1.442695
    %v5712 = vpow.pop %v5711
    %v5713 = vadd.f32 %v5712, 1.0
    %v5714 = vrcp.pop %v5713
    %v5715 = vmul.f32 1.0, %v5714
    %v5716 = vadd.f32 %v5431, %v5637
    %v5717 = vxor.u32 %v5716, 2147483648
    %v5718 = vmul.f32 %v5717, 1.442695
    %v5719 = vpow.pop %v5718
    %v5720 = vadd.f32 %v5719, 1.0
    %v5721 = vrcp.pop %v5720
    %v5722 = vmul.f32 1.0, %v5721
    %v5723 = vmul.f32 %v5715, %v5706
    %v5724 = vadd.f32 %v5500, %v5723
    %v5725 = vtanh.pop %v5724
    %v5726 = vsub.f32 1.0, %v5722
    %v5727 = vmul.f32 %v5726, %v5725
    %v5728 = vmul.f32 %v5722, %v4379
    %v5729 = vadd.f32 %v5727, %v5728
    %v5730 = vld [vmem:[#allocation18] sm:$0xff]
    %v5731 = vld [vmem:[#allocation18 + $0x8] sm:$0xff]
    %v5732 = vld [vmem:[#allocation18 + $0x10] sm:$0xff]
    %v5733 = vld [vmem:[#allocation18 + $0x18] sm:$0xff]
    %v5734 = vld [vmem:[#allocation18 + $0x20] sm:$0xff]
    %v5735 = vld [vmem:[#allocation18 + $0x28] sm:$0xff]
    %v5736 = vld [vmem:[#allocation18 + $0x30] sm:$0xff]
    %v5737 = vld [vmem:[#allocation18 + $0x38] sm:$0xff]
    %v5738 = vld [vmem:[#allocation18 + $0x40] sm:$0xff]
    %v5739 = vld [vmem:[#allocation18 + $0x48] sm:$0xff]
    %v5740 = vld [vmem:[#allocation18 + $0x50] sm:$0xff]
    %v5741 = vld [vmem:[#allocation18 + $0x58] sm:$0xff]
    %v5742 = vld [vmem:[#allocation18 + $0x60] sm:$0xff]
    %v5743 = vld [vmem:[#allocation18 + $0x68] sm:$0xff]
    %v5744 = vld [vmem:[#allocation18 + $0x70] sm:$0xff]
    %v5745 = vld [vmem:[#allocation18 + $0x78] sm:$0xff]
    %v5746 = vld [vmem:[#allocation18 + $0x80] sm:$0xff]
    %v5747 = vld [vmem:[#allocation18 + $0x88] sm:$0xff]
    %v5748 = vld [vmem:[#allocation18 + $0x90] sm:$0xff]
    %v5749 = vld [vmem:[#allocation18 + $0x98] sm:$0xff]
    %v5750 = vld [vmem:[#allocation18 + $0xa0] sm:$0xff]
    %v5751 = vld [vmem:[#allocation18 + $0xa8] sm:$0xff]
    %v5752 = vld [vmem:[#allocation18 + $0xb0] sm:$0xff]
    %v5753 = vld [vmem:[#allocation18 + $0xb8] sm:$0xff]
    %v5754 = vld [vmem:[#allocation18 + $0xc0] sm:$0xff]
    %v5755 = vld [vmem:[#allocation18 + $0xc8] sm:$0xff]
    %v5756 = vld [vmem:[#allocation18 + $0xd0] sm:$0xff]
    %v5757 = vld [vmem:[#allocation18 + $0xd8] sm:$0xff]
    %v5758 = vld [vmem:[#allocation18 + $0xe0] sm:$0xff]
    %v5759 = vld [vmem:[#allocation18 + $0xe8] sm:$0xff]
    %v5760 = vld [vmem:[#allocation18 + $0xf0] sm:$0xff]
    %v5761 = vld [vmem:[#allocation18 + $0xf8] sm:$0xff]
    %v5762 = vld [vmem:[#allocation18 + $0x100] sm:$0xff]
    %v5763 = vld [vmem:[#allocation18 + $0x108] sm:$0xff]
    %v5764 = vld [vmem:[#allocation18 + $0x110] sm:$0xff]
    %v5765 = vld [vmem:[#allocation18 + $0x118] sm:$0xff]
    %v5766 = vld [vmem:[#allocation18 + $0x120] sm:$0xff]
    %v5767 = vld [vmem:[#allocation18 + $0x128] sm:$0xff]
    %v5768 = vld [vmem:[#allocation18 + $0x130] sm:$0xff]
    %v5769 = vld [vmem:[#allocation18 + $0x138] sm:$0xff]
    %v5770 = vld [vmem:[#allocation18 + $0x140] sm:$0xff]
    %v5771 = vld [vmem:[#allocation18 + $0x148] sm:$0xff]
    %v5772 = vld [vmem:[#allocation18 + $0x150] sm:$0xff]
    %v5773 = vld [vmem:[#allocation18 + $0x158] sm:$0xff]
    %v5774 = vld [vmem:[#allocation18 + $0x160] sm:$0xff]
    %v5775 = vld [vmem:[#allocation18 + $0x168] sm:$0xff]
    %v5776 = vld [vmem:[#allocation18 + $0x170] sm:$0xff]
    %v5777 = vld [vmem:[#allocation18 + $0x178] sm:$0xff]
    %v5778 = vld [vmem:[%s16] sm:$0x7]
    %v5780 = vlaneseq
    %v5781 = vshrl.u32 %v5780, 7
    %v5782 = vsub.s32 0, %v5781
    %v5783 = vrot.slane %v5778, %v5782
    %v5784 = vlaneseq
    %v5785 = vshrl.u32 %v5784, 7
    %v5786 = vsub.s32 1, %v5785
    %v5787 = vrot.slane %v5778, %v5786
    %v5788 = vlaneseq
    %v5789 = vshrl.u32 %v5788, 7
    %v5790 = vsub.s32 2, %v5789
    %v5791 = vrot.slane %v5778, %v5790
    %5795 = vmatprep.subr.mxu0 %v5731
    %5796 = vmatpush1.msra.mxu0 %v5730
    %5797 = vmatprep.subr.mxu0 %v5734
    %5798 = vmatpush1.msra.mxu0 %v5733
    %5799 = vmatprep.subr.mxu0 %v5737
    %5800 = vmatpush1.msra.mxu0 %v5736
    %5801 = vmatprep.subr.mxu0 %v5740
    %5802 = vmatpush1.msra.mxu0 %v5739
    %5803 = vmatprep.subr.mxu0 %v5743
    %5804 = vmatpush1.msra.mxu0 %v5742
    %5805 = vmatprep.subr.mxu0 %v5746
    %5806 = vmatpush1.msra.mxu0 %v5745
    %5807 = vmatprep.subr.mxu0 %v5749
    %5808 = vmatpush1.msra.mxu0 %v5748
    %5809 = vmatprep.subr.mxu0 %v5752
    %5810 = vmatpush1.msra.mxu0 %v5751
    %5811 = vmatprep.subr.mxu0 %v5755
    %5812 = vmatpush1.msra.mxu0 %v5754
    %5813 = vmatprep.subr.mxu0 %v5758
    %5814 = vmatpush1.msra.mxu0 %v5757
    %5815 = vmatprep.subr.mxu0 %v5761
    %5816 = vmatpush1.msra.mxu0 %v5760
    %5817 = vmatprep.subr.mxu0 %v5764
    %5818 = vmatpush1.msra.mxu0 %v5763
    %5819 = vmatprep.subr.mxu0 %v5767
    %5820 = vmatpush1.msra.mxu0 %v5766
    %5821 = vmatprep.subr.mxu0 %v5770
    %5822 = vmatpush1.msra.mxu0 %v5769
    %5823 = vmatprep.subr.mxu0 %v5773
    %5824 = vmatpush1.msra.mxu0 %v5772
    %5825 = vmatprep.subr.mxu0 %v5776
    %5826 = vmatpush1.msra.mxu0 %v5775
    %5827 = vmatprep.subr.mxu0 0.0
    %5828 = vmatpush1.msra.mxu0 0.0
    %5829 = vmatprep.subr.mxu0 0.0
    %5830 = vmatpush1.msra.mxu0 0.0
    %5831 = vmatprep.subr.mxu0 0.0
    %5832 = vmatpush1.msra.mxu0 0.0
    %5833 = vmatprep.subr.mxu0 0.0
    %5834 = vmatpush1.msra.mxu0 0.0
    %5835 = vmatprep.subr.mxu0 0.0
    %5836 = vmatpush1.msra.mxu0 0.0
    %5837 = vmatprep.subr.mxu0 0.0
    %5838 = vmatpush1.msra.mxu0 0.0
    %5839 = vmatprep.subr.mxu0 0.0
    %5840 = vmatpush1.msra.mxu0 0.0
    %5841 = vmatprep.subr.mxu0 0.0
    %5842 = vmatpush1.msra.mxu0 0.0
    %5843 = vmatprep.subr.mxu0 0.0
    %5844 = vmatpush1.msra.mxu0 0.0
    %5845 = vmatprep.subr.mxu0 0.0
    %5846 = vmatpush1.msra.mxu0 0.0
    %5847 = vmatprep.subr.mxu0 0.0
    %5848 = vmatpush1.msra.mxu0 0.0
    %5849 = vmatprep.subr.mxu0 0.0
    %5850 = vmatpush1.msra.mxu0 0.0
    %5851 = vmatprep.subr.mxu0 0.0
    %5852 = vmatpush1.msra.mxu0 0.0
    %5853 = vmatprep.subr.mxu0 0.0
    %5854 = vmatpush1.msra.mxu0 0.0
    %5855 = vmatprep.subr.mxu0 0.0
    %5856 = vmatpush1.msra.mxu0 0.0
    %5857 = vmatprep.subr.mxu0 0.0
    %5858 = vmatpush1.msra.mxu0 0.0
    %5859 = vmatprep.mubr.f32.mxu0 0.0
    %5860 = vmatmul.mubr.f32.gmra.mrb[0].mxu0 %v5729
    %v5861 = vpop.f32.mrb[0].mxu0
    %v5862 = vadd.f32 %v5783, %v5861
    %v5863 = vpop.f32.mrb[0].mxu0
    %v5864 = vadd.f32 %v5787, %v5863
    %5865 = vdwg.mxu0
    %5866 = vmatprep.subr.mxu0 0.0
    %5867 = vmatpush1.msra.mxu0 %v5732
    %5868 = vmatprep.subr.mxu0 0.0
    %5869 = vmatpush1.msra.mxu0 %v5735
    %5870 = vmatprep.subr.mxu0 0.0
    %5871 = vmatpush1.msra.mxu0 %v5738
    %5872 = vmatprep.subr.mxu0 0.0
    %5873 = vmatpush1.msra.mxu0 %v5741
    %5874 = vmatprep.subr.mxu0 0.0
    %5875 = vmatpush1.msra.mxu0 %v5744
    %5876 = vmatprep.subr.mxu0 0.0
    %5877 = vmatpush1.msra.mxu0 %v5747
    %5878 = vmatprep.subr.mxu0 0.0
    %5879 = vmatpush1.msra.mxu0 %v5750
    %5880 = vmatprep.subr.mxu0 0.0
    %5881 = vmatpush1.msra.mxu0 %v5753
    %5882 = vmatprep.subr.mxu0 0.0
    %5883 = vmatpush1.msra.mxu0 %v5756
    %5884 = vmatprep.subr.mxu0 0.0
    %5885 = vmatpush1.msra.mxu0 %v5759
    %5886 = vmatprep.subr.mxu0 0.0
    %5887 = vmatpush1.msra.mxu0 %v5762
    %5888 = vmatprep.subr.mxu0 0.0
    %5889 = vmatpush1.msra.mxu0 %v5765
    %5890 = vmatprep.subr.mxu0 0.0
    %5891 = vmatpush1.msra.mxu0 %v5768
    %5892 = vmatprep.subr.mxu0 0.0
    %5893 = vmatpush1.msra.mxu0 %v5771
    %5894 = vmatprep.subr.mxu0 0.0
    %5895 = vmatpush1.msra.mxu0 %v5774
    %5896 = vmatprep.subr.mxu0 0.0
    %5897 = vmatpush1.msra.mxu0 %v5777
    %5898 = vmatprep.subr.mxu0 0.0
    %5899 = vmatpush1.msra.mxu0 0.0
    %5900 = vmatprep.subr.mxu0 0.0
    %5901 = vmatpush1.msra.mxu0 0.0
    %5902 = vmatprep.subr.mxu0 0.0
    %5903 = vmatpush1.msra.mxu0 0.0
    %5904 = vmatprep.subr.mxu0 0.0
    %5905 = vmatpush1.msra.mxu0 0.0
    %5906 = vmatprep.subr.mxu0 0.0
    %5907 = vmatpush1.msra.mxu0 0.0
    %5908 = vmatprep.subr.mxu0 0.0
    %5909 = vmatpush1.msra.mxu0 0.0
    %5910 = vmatprep.subr.mxu0 0.0
    %5911 = vmatpush1.msra.mxu0 0.0
    %5912 = vmatprep.subr.mxu0 0.0
    %5913 = vmatpush1.msra.mxu0 0.0
    %5914 = vmatprep.subr.mxu0 0.0
    %5915 = vmatpush1.msra.mxu0 0.0
    %5916 = vmatprep.subr.mxu0 0.0
    %5917 = vmatpush1.msra.mxu0 0.0
    %5918 = vmatprep.subr.mxu0 0.0
    %5919 = vmatpush1.msra.mxu0 0.0
    %5920 = vmatprep.subr.mxu0 0.0
    %5921 = vmatpush1.msra.mxu0 0.0
    %5922 = vmatprep.subr.mxu0 0.0
    %5923 = vmatpush1.msra.mxu0 0.0
    %5924 = vmatprep.subr.mxu0 0.0
    %5925 = vmatpush1.msra.mxu0 0.0
    %5926 = vmatprep.subr.mxu0 0.0
    %5927 = vmatpush1.msra.mxu0 0.0
    %5928 = vmatprep.subr.mxu0 0.0
    %5929 = vmatpush1.msra.mxu0 0.0
    %5930 = vmatprep.mubr.f32.mxu0 0.0
    %5931 = vmatmul.mubr.f32.gmra.mrb[0].mxu0 %v5729
    %v5932 = vpop.f32.mrb[0].mxu0
    %v5933 = vadd.f32 %v5791, %v5932
    %v5934 = vpop.f32.mrb[0].mxu0
    %5935 = vdwg.mxu0
    %v5936 = vld [vmem:[#allocation20] sm:$0xff]
    %v5937 = vld [vmem:[#allocation20 + $0x8] sm:$0xff]
    %v5938 = vld [vmem:[#allocation20 + $0x10] sm:$0xff]
    %v5939 = vld [vmem:[#allocation20 + $0x18] sm:$0xff]
    %v5940 = vld [vmem:[#allocation20 + $0x20] sm:$0xff]
    %v5941 = vld [vmem:[#allocation20 + $0x28] sm:$0xff]
    %v5942 = vld [vmem:[#allocation20 + $0x30] sm:$0xff]
    %v5943 = vld [vmem:[#allocation20 + $0x38] sm:$0xff]
    %v5944 = vld [vmem:[#allocation20 + $0x40] sm:$0xff]
    %v5945 = vld [vmem:[#allocation20 + $0x48] sm:$0xff]
    %v5946 = vld [vmem:[#allocation20 + $0x50] sm:$0xff]
    %v5947 = vld [vmem:[#allocation20 + $0x58] sm:$0xff]
    %v5948 = vld [vmem:[#allocation20 + $0x60] sm:$0xff]
    %v5949 = vld [vmem:[#allocation20 + $0x68] sm:$0xff]
    %v5950 = vld [vmem:[#allocation20 + $0x70] sm:$0xff]
    %v5951 = vld [vmem:[#allocation20 + $0x78] sm:$0xff]
    %v5952 = vld [vmem:[#allocation20 + $0x80] sm:$0xff]
    %v5953 = vld [vmem:[#allocation20 + $0x88] sm:$0xff]
    %v5954 = vld [vmem:[#allocation20 + $0x90] sm:$0xff]
    %v5955 = vld [vmem:[#allocation20 + $0x98] sm:$0xff]
    %v5956 = vld [vmem:[#allocation20 + $0xa0] sm:$0xff]
    %v5957 = vld [vmem:[#allocation20 + $0xa8] sm:$0xff]
    %v5958 = vld [vmem:[#allocation20 + $0xb0] sm:$0xff]
    %v5959 = vld [vmem:[#allocation20 + $0xb8] sm:$0xff]
    %v5960 = vld [vmem:[#allocation20 + $0xc0] sm:$0xff]
    %v5961 = vld [vmem:[#allocation20 + $0xc8] sm:$0xff]
    %v5962 = vld [vmem:[#allocation20 + $0xd0] sm:$0xff]
    %v5963 = vld [vmem:[#allocation20 + $0xd8] sm:$0xff]
    %v5964 = vld [vmem:[#allocation20 + $0xe0] sm:$0xff]
    %v5965 = vld [vmem:[#allocation20 + $0xe8] sm:$0xff]
    %v5966 = vld [vmem:[#allocation20 + $0xf0] sm:$0xff]
    %v5967 = vld [vmem:[#allocation20 + $0xf8] sm:$0xff]
    %v5968 = vld [vmem:[#allocation20 + $0x100] sm:$0xff]
    %v5969 = vld [vmem:[#allocation20 + $0x108] sm:$0xff]
    %v5970 = vld [vmem:[#allocation20 + $0x110] sm:$0xff]
    %v5971 = vld [vmem:[#allocation20 + $0x118] sm:$0xff]
    %v5972 = vld [vmem:[#allocation20 + $0x120] sm:$0xff]
    %v5973 = vld [vmem:[#allocation20 + $0x128] sm:$0xff]
    %v5974 = vld [vmem:[#allocation20 + $0x130] sm:$0xff]
    %v5975 = vld [vmem:[#allocation20 + $0x138] sm:$0xff]
    %v5976 = vld [vmem:[#allocation20 + $0x140] sm:$0xff]
    %v5977 = vld [vmem:[#allocation20 + $0x148] sm:$0xff]
    %v5978 = vld [vmem:[#allocation20 + $0x150] sm:$0xff]
    %v5979 = vld [vmem:[#allocation20 + $0x158] sm:$0xff]
    %v5980 = vld [vmem:[#allocation20 + $0x160] sm:$0xff]
    %v5981 = vld [vmem:[#allocation20 + $0x168] sm:$0xff]
    %v5982 = vld [vmem:[#allocation20 + $0x170] sm:$0xff]
    %v5983 = vld [vmem:[#allocation20 + $0x178] sm:$0xff]
    %v5984 = vld [vmem:[%s17] sm:$0x7]
    %v5986 = vlaneseq
    %v5987 = vshrl.u32 %v5986, 7
    %v5988 = vsub.s32 0, %v5987
    %v5989 = vrot.slane %v5984, %v5988
    %v5990 = vlaneseq
    %v5991 = vshrl.u32 %v5990, 7
    %v5992 = vsub.s32 1, %v5991
    %v5993 = vrot.slane %v5984, %v5992
    %v5994 = vlaneseq
    %v5995 = vshrl.u32 %v5994, 7
    %v5996 = vsub.s32 2, %v5995
    %v5997 = vrot.slane %v5984, %v5996
    %6001 = vmatprep.subr.mxu0 %v5937
    %6002 = vmatpush1.msra.mxu0 %v5936
    %6003 = vmatprep.subr.mxu0 %v5940
    %6004 = vmatpush1.msra.mxu0 %v5939
    %6005 = vmatprep.subr.mxu0 %v5943
    %6006 = vmatpush1.msra.mxu0 %v5942
    %6007 = vmatprep.subr.mxu0 %v5946
    %6008 = vmatpush1.msra.mxu0 %v5945
    %6009 = vmatprep.subr.mxu0 %v5949
    %6010 = vmatpush1.msra.mxu0 %v5948
    %6011 = vmatprep.subr.mxu0 %v5952
    %6012 = vmatpush1.msra.mxu0 %v5951
    %6013 = vmatprep.subr.mxu0 %v5955
    %6014 = vmatpush1.msra.mxu0 %v5954
    %6015 = vmatprep.subr.mxu0 %v5958
    %6016 = vmatpush1.msra.mxu0 %v5957
    %6017 = vmatprep.subr.mxu0 %v5961
    %6018 = vmatpush1.msra.mxu0 %v5960
    %6019 = vmatprep.subr.mxu0 %v5964
    %6020 = vmatpush1.msra.mxu0 %v5963
    %6021 = vmatprep.subr.mxu0 %v5967
    %6022 = vmatpush1.msra.mxu0 %v5966
    %6023 = vmatprep.subr.mxu0 %v5970
    %6024 = vmatpush1.msra.mxu0 %v5969
    %6025 = vmatprep.subr.mxu0 %v5973
    %6026 = vmatpush1.msra.mxu0 %v5972
    %6027 = vmatprep.subr.mxu0 %v5976
    %6028 = vmatpush1.msra.mxu0 %v5975
    %6029 = vmatprep.subr.mxu0 %v5979
    %6030 = vmatpush1.msra.mxu0 %v5978
    %6031 = vmatprep.subr.mxu0 %v5982
    %6032 = vmatpush1.msra.mxu0 %v5981
    %6033 = vmatprep.subr.mxu0 0.0
    %6034 = vmatpush1.msra.mxu0 0.0
    %6035 = vmatprep.subr.mxu0 0.0
    %6036 = vmatpush1.msra.mxu0 0.0
    %6037 = vmatprep.subr.mxu0 0.0
    %6038 = vmatpush1.msra.mxu0 0.0
    %6039 = vmatprep.subr.mxu0 0.0
    %6040 = vmatpush1.msra.mxu0 0.0
    %6041 = vmatprep.subr.mxu0 0.0
    %6042 = vmatpush1.msra.mxu0 0.0
    %6043 = vmatprep.subr.mxu0 0.0
    %6044 = vmatpush1.msra.mxu0 0.0
    %6045 = vmatprep.subr.mxu0 0.0
    %6046 = vmatpush1.msra.mxu0 0.0
    %6047 = vmatprep.subr.mxu0 0.0
    %6048 = vmatpush1.msra.mxu0 0.0
    %6049 = vmatprep.subr.mxu0 0.0
    %6050 = vmatpush1.msra.mxu0 0.0
    %6051 = vmatprep.subr.mxu0 0.0
    %6052 = vmatpush1.msra.mxu0 0.0
    %6053 = vmatprep.subr.mxu0 0.0
    %6054 = vmatpush1.msra.mxu0 0.0
    %6055 = vmatprep.subr.mxu0 0.0
    %6056 = vmatpush1.msra.mxu0 0.0
    %6057 = vmatprep.subr.mxu0 0.0
    %6058 = vmatpush1.msra.mxu0 0.0
    %6059 = vmatprep.subr.mxu0 0.0
    %6060 = vmatpush1.msra.mxu0 0.0
    %6061 = vmatprep.subr.mxu0 0.0
    %6062 = vmatpush1.msra.mxu0 0.0
    %6063 = vmatprep.subr.mxu0 0.0
    %6064 = vmatpush1.msra.mxu0 0.0
    %6065 = vmatprep.mubr.f32.mxu0 0.0
    %6066 = vmatmul.mubr.f32.gmra.mrb[0].mxu0 %v4812
    %v6067 = vpop.f32.mrb[0].mxu0
    %v6068 = vadd.f32 %v5989, %v6067
    %v6069 = vpop.f32.mrb[0].mxu0
    %v6070 = vadd.f32 %v5993, %v6069
    %6071 = vdwg.mxu0
    %6072 = vmatprep.subr.mxu0 0.0
    %6073 = vmatpush1.msra.mxu0 %v5938
    %6074 = vmatprep.subr.mxu0 0.0
    %6075 = vmatpush1.msra.mxu0 %v5941
    %6076 = vmatprep.subr.mxu0 0.0
    %6077 = vmatpush1.msra.mxu0 %v5944
    %6078 = vmatprep.subr.mxu0 0.0
    %6079 = vmatpush1.msra.mxu0 %v5947
    %6080 = vmatprep.subr.mxu0 0.0
    %6081 = vmatpush1.msra.mxu0 %v5950
    %6082 = vmatprep.subr.mxu0 0.0
    %6083 = vmatpush1.msra.mxu0 %v5953
    %6084 = vmatprep.subr.mxu0 0.0
    %6085 = vmatpush1.msra.mxu0 %v5956
    %6086 = vmatprep.subr.mxu0 0.0
    %6087 = vmatpush1.msra.mxu0 %v5959
    %6088 = vmatprep.subr.mxu0 0.0
    %6089 = vmatpush1.msra.mxu0 %v5962
    %6090 = vmatprep.subr.mxu0 0.0
    %6091 = vmatpush1.msra.mxu0 %v5965
    %6092 = vmatprep.subr.mxu0 0.0
    %6093 = vmatpush1.msra.mxu0 %v5968
    %6094 = vmatprep.subr.mxu0 0.0
    %6095 = vmatpush1.msra.mxu0 %v5971
    %6096 = vmatprep.subr.mxu0 0.0
    %6097 = vmatpush1.msra.mxu0 %v5974
    %6098 = vmatprep.subr.mxu0 0.0
    %6099 = vmatpush1.msra.mxu0 %v5977
    %6100 = vmatprep.subr.mxu0 0.0
    %6101 = vmatpush1.msra.mxu0 %v5980
    %6102 = vmatprep.subr.mxu0 0.0
    %6103 = vmatpush1.msra.mxu0 %v5983
    %6104 = vmatprep.subr.mxu0 0.0
    %6105 = vmatpush1.msra.mxu0 0.0
    %6106 = vmatprep.subr.mxu0 0.0
    %6107 = vmatpush1.msra.mxu0 0.0
    %6108 = vmatprep.subr.mxu0 0.0
    %6109 = vmatpush1.msra.mxu0 0.0
    %6110 = vmatprep.subr.mxu0 0.0
    %6111 = vmatpush1.msra.mxu0 0.0
    %6112 = vmatprep.subr.mxu0 0.0
    %6113 = vmatpush1.msra.mxu0 0.0
    %6114 = vmatprep.subr.mxu0 0.0
    %6115 = vmatpush1.msra.mxu0 0.0
    %6116 = vmatprep.subr.mxu0 0.0
    %6117 = vmatpush1.msra.mxu0 0.0
    %6118 = vmatprep.subr.mxu0 0.0
    %6119 = vmatpush1.msra.mxu0 0.0
    %6120 = vmatprep.subr.mxu0 0.0
    %6121 = vmatpush1.msra.mxu0 0.0
    %6122 = vmatprep.subr.mxu0 0.0
    %6123 = vmatpush1.msra.mxu0 0.0
    %6124 = vmatprep.subr.mxu0 0.0
    %6125 = vmatpush1.msra.mxu0 0.0
    %6126 = vmatprep.subr.mxu0 0.0
    %6127 = vmatpush1.msra.mxu0 0.0
    %6128 = vmatprep.subr.mxu0 0.0
    %6129 = vmatpush1.msra.mxu0 0.0
    %6130 = vmatprep.subr.mxu0 0.0
    %6131 = vmatpush1.msra.mxu0 0.0
    %6132 = vmatprep.subr.mxu0 0.0
    %6133 = vmatpush1.msra.mxu0 0.0
    %6134 = vmatprep.subr.mxu0 0.0
    %6135 = vmatpush1.msra.mxu0 0.0
    %6136 = vmatprep.mubr.f32.mxu0 0.0
    %6137 = vmatmul.mubr.f32.gmra.mrb[0].mxu0 %v4812
    %v6138 = vpop.f32.mrb[0].mxu0
    %v6139 = vadd.f32 %v5997, %v6138
    %v6140 = vpop.f32.mrb[0].mxu0
    %6141 = vdwg.mxu0
    %v6142 = vadd.f32 %v5862, %v6068
    %v6143 = vxor.u32 %v6142, 2147483648
    %v6144 = vmul.f32 %v6143, 1.442695
    %v6145 = vpow.pop %v6144
    %v6146 = vadd.f32 %v6145, 1.0
    %v6147 = vrcp.pop %v6146
    %v6148 = vmul.f32 1.0, %v6147
    %v6149 = vadd.f32 %v5864, %v6070
    %v6150 = vxor.u32 %v6149, 2147483648
    %v6151 = vmul.f32 %v6150, 1.442695
    %v6152 = vpow.pop %v6151
    %v6153 = vadd.f32 %v6152, 1.0
    %v6154 = vrcp.pop %v6153
    %v6155 = vmul.f32 1.0, %v6154
    %v6156 = vmul.f32 %v6148, %v6139
    %v6157 = vadd.f32 %v5933, %v6156
    %v6158 = vtanh.pop %v6157
    %v6159 = vsub.f32 1.0, %v6155
    %v6160 = vmul.f32 %v6159, %v6158
    %v6161 = vmul.f32 %v6155, %v4812
    %v6162 = vadd.f32 %v6160, %v6161
    %v6165 = vunpack.c.l.s4 1966171168
    %v6166 = vunpack.c.0.s8 %v6165
    %v6167 = vlaneseq
    %v6168 = vshrl.u32 %v6167, 7
    %v6169 = vsub.s32 %v6166, %v6168
    %v6170 = vrot.slane %v6162, %v6169
    %v6171 = vcombine.high %v6170, %v6170
    %v6173 = vunpack.c.l.s4 1966171168
    %v6174 = vunpack.c.0.s8 %v6173
    %v6175 = vlaneseq
    %v6176 = vshrl.u32 %v6175, 7
    %v6177 = vsub.s32 %v6174, %v6176
    %v6178 = vrot.slane %v6170, %v6177
    %v6180 = vunpack.c.l.s4 1966171168
    %v6181 = vunpack.c.0.s8 %v6180
    %v6182 = vlaneseq
    %v6183 = vshrl.u32 %v6182, 7
    %v6184 = vsub.s32 %v6181, %v6183
    %v6185 = vrot.slane %v6171, %v6184
    %6188 = vmatprep.subr.mxu0 0.0
    %6189 = vmatpush1.xpose.msra.mxu0 %v1281
    %6190 = vmatprep.subr.mxu0 0.0
    %6191 = vmatpush1.xpose.msra.mxu0 0.0
    %6192 = vmatprep.subr.mxu0 0.0
    %6193 = vmatpush1.xpose.msra.mxu0 0.0
    %6194 = vmatprep.subr.mxu0 0.0
    %6195 = vmatpush1.xpose.msra.mxu0 0.0
    %6196 = vmatprep.subr.mxu0 0.0
    %6197 = vmatpush1.xpose.msra.mxu0 0.0
    %6198 = vmatprep.subr.mxu0 0.0
    %6199 = vmatpush1.xpose.msra.mxu0 0.0
    %6200 = vmatprep.subr.mxu0 0.0
    %6201 = vmatpush1.xpose.msra.mxu0 0.0
    %6202 = vmatprep.subr.mxu0 0.0
    %6203 = vmatpush1.xpose.msra.mxu0 0.0
    %6204 = vmatprep.subr.mxu0 0.0
    %6205 = vmatpush1.xpose.msra.mxu0 0.0
    %6206 = vmatprep.subr.mxu0 0.0
    %6207 = vmatpush1.xpose.msra.mxu0 0.0
    %6208 = vmatprep.subr.mxu0 0.0
    %6209 = vmatpush1.xpose.msra.mxu0 0.0
    %6210 = vmatprep.subr.mxu0 0.0
    %6211 = vmatpush1.xpose.msra.mxu0 0.0
    %6212 = vmatprep.subr.mxu0 0.0
    %6213 = vmatpush1.xpose.msra.mxu0 0.0
    %6214 = vmatprep.subr.mxu0 0.0
    %6215 = vmatpush1.xpose.msra.mxu0 0.0
    %6216 = vmatprep.subr.mxu0 0.0
    %6217 = vmatpush1.xpose.msra.mxu0 0.0
    %6218 = vmatprep.subr.mxu0 0.0
    %6219 = vmatpush1.xpose.msra.mxu0 0.0
    %6220 = vmatprep.subr.mxu0 0.0
    %6221 = vmatpush1.xpose.msra.mxu0 0.0
    %6222 = vmatprep.subr.mxu0 0.0
    %6223 = vmatpush1.xpose.msra.mxu0 0.0
    %6224 = vmatprep.subr.mxu0 0.0
    %6225 = vmatpush1.xpose.msra.mxu0 0.0
    %6226 = vmatprep.subr.mxu0 0.0
    %6227 = vmatpush1.xpose.msra.mxu0 0.0
    %6228 = vmatprep.subr.mxu0 0.0
    %6229 = vmatpush1.xpose.msra.mxu0 0.0
    %6230 = vmatprep.subr.mxu0 0.0
    %6231 = vmatpush1.xpose.msra.mxu0 0.0
    %6232 = vmatprep.subr.mxu0 0.0
    %6233 = vmatpush1.xpose.msra.mxu0 0.0
    %6234 = vmatprep.subr.mxu0 0.0
    %6235 = vmatpush1.xpose.msra.mxu0 0.0
    %6236 = vmatprep.subr.mxu0 0.0
    %6237 = vmatpush1.xpose.msra.mxu0 0.0
    %6238 = vmatprep.subr.mxu0 0.0
    %6239 = vmatpush1.xpose.msra.mxu0 0.0
    %6240 = vmatprep.subr.mxu0 0.0
    %6241 = vmatpush1.xpose.msra.mxu0 0.0
    %6242 = vmatprep.subr.mxu0 0.0
    %6243 = vmatpush1.xpose.msra.mxu0 0.0
    %6244 = vmatprep.subr.mxu0 0.0
    %6245 = vmatpush1.xpose.msra.mxu0 0.0
    %6246 = vmatprep.subr.mxu0 0.0
    %6247 = vmatpush1.xpose.msra.mxu0 0.0
    %6248 = vmatprep.subr.mxu0 0.0
    %6249 = vmatpush1.xpose.msra.mxu0 0.0
    %6250 = vmatprep.subr.mxu0 0.0
    %6251 = vmatpush1.xpose.msra.mxu0 0.0
    %6252 = vmatprep.mubr.f32.mxu0 0.0
    %6253 = vmatmul.mubr.f32.gmra.mrb[0].mxu0 %v6178
    %v6254 = vpop.f32.mrb[0].mxu0
    %v6255 = vadd.f32 0.0, %v6254
    %v6256 = vpop.f32.mrb[0].mxu0
    %6257 = vdwg.mxu0
    %6258 = vmatprep.subr.mxu0 0.0
    %6259 = vmatpush1.xpose.msra.mxu0 %v1282
    %6260 = vmatprep.subr.mxu0 0.0
    %6261 = vmatpush1.xpose.msra.mxu0 0.0
    %6262 = vmatprep.subr.mxu0 0.0
    %6263 = vmatpush1.xpose.msra.mxu0 0.0
    %6264 = vmatprep.subr.mxu0 0.0
    %6265 = vmatpush1.xpose.msra.mxu0 0.0
    %6266 = vmatprep.subr.mxu0 0.0
    %6267 = vmatpush1.xpose.msra.mxu0 0.0
    %6268 = vmatprep.subr.mxu0 0.0
    %6269 = vmatpush1.xpose.msra.mxu0 0.0
    %6270 = vmatprep.subr.mxu0 0.0
    %6271 = vmatpush1.xpose.msra.mxu0 0.0
    %6272 = vmatprep.subr.mxu0 0.0
    %6273 = vmatpush1.xpose.msra.mxu0 0.0
    %6274 = vmatprep.subr.mxu0 0.0
    %6275 = vmatpush1.xpose.msra.mxu0 0.0
    %6276 = vmatprep.subr.mxu0 0.0
    %6277 = vmatpush1.xpose.msra.mxu0 0.0
    %6278 = vmatprep.subr.mxu0 0.0
    %6279 = vmatpush1.xpose.msra.mxu0 0.0
    %6280 = vmatprep.subr.mxu0 0.0
    %6281 = vmatpush1.xpose.msra.mxu0 0.0
    %6282 = vmatprep.subr.mxu0 0.0
    %6283 = vmatpush1.xpose.msra.mxu0 0.0
    %6284 = vmatprep.subr.mxu0 0.0
    %6285 = vmatpush1.xpose.msra.mxu0 0.0
    %6286 = vmatprep.subr.mxu0 0.0
    %6287 = vmatpush1.xpose.msra.mxu0 0.0
    %6288 = vmatprep.subr.mxu0 0.0
    %6289 = vmatpush1.xpose.msra.mxu0 0.0
    %6290 = vmatprep.subr.mxu0 0.0
    %6291 = vmatpush1.xpose.msra.mxu0 0.0
    %6292 = vmatprep.subr.mxu0 0.0
    %6293 = vmatpush1.xpose.msra.mxu0 0.0
    %6294 = vmatprep.subr.mxu0 0.0
    %6295 = vmatpush1.xpose.msra.mxu0 0.0
    %6296 = vmatprep.subr.mxu0 0.0
    %6297 = vmatpush1.xpose.msra.mxu0 0.0
    %6298 = vmatprep.subr.mxu0 0.0
    %6299 = vmatpush1.xpose.msra.mxu0 0.0
    %6300 = vmatprep.subr.mxu0 0.0
    %6301 = vmatpush1.xpose.msra.mxu0 0.0
    %6302 = vmatprep.subr.mxu0 0.0
    %6303 = vmatpush1.xpose.msra.mxu0 0.0
    %6304 = vmatprep.subr.mxu0 0.0
    %6305 = vmatpush1.xpose.msra.mxu0 0.0
    %6306 = vmatprep.subr.mxu0 0.0
    %6307 = vmatpush1.xpose.msra.mxu0 0.0
    %6308 = vmatprep.subr.mxu0 0.0
    %6309 = vmatpush1.xpose.msra.mxu0 0.0
    %6310 = vmatprep.subr.mxu0 0.0
    %6311 = vmatpush1.xpose.msra.mxu0 0.0
    %6312 = vmatprep.subr.mxu0 0.0
    %6313 = vmatpush1.xpose.msra.mxu0 0.0
    %6314 = vmatprep.subr.mxu0 0.0
    %6315 = vmatpush1.xpose.msra.mxu0 0.0
    %6316 = vmatprep.subr.mxu0 0.0
    %6317 = vmatpush1.xpose.msra.mxu0 0.0
    %6318 = vmatprep.subr.mxu0 0.0
    %6319 = vmatpush1.xpose.msra.mxu0 0.0
    %6320 = vmatprep.subr.mxu0 0.0
    %6321 = vmatpush1.xpose.msra.mxu0 0.0
    %6322 = vmatprep.mubr.f32.mxu0 0.0
    %6323 = vmatmul.mubr.f32.gmra.mrb[0].mxu0 %v6185
    %v6324 = vpop.f32.mrb[0].mxu0
    %v6325 = vadd.f32 0.0, %v6324
    %v6326 = vpop.f32.mrb[0].mxu0
    %6327 = vdwg.mxu0
    %v6328 = vsel %vm2277, %v6255, -inf
    %6329 = vmax.xlane.f32.xlu0 %v6328
    %v6330 = vpop.xlane.xlu0 %6329
    %v6331 = vsel %vm2277, %v6325, -inf
    %6332 = vmax.xlane.f32.xlu0 %v6331
    %v6333 = vpop.xlane.xlu0 %6332
    %v6334 = vsub.f32 %v6255, %v6330
    %v6335 = vsub.f32 %v6325, %v6333
    %v6336 = vmul.f32 %v6334, 1.442695
    %v6337 = vpow.pop %v6336
    %v6338 = vmul.f32 %v6335, 1.442695
    %v6339 = vpow.pop %v6338
    %v6340 = vsel %vm2277, %v6337, 0.0
    %6341 = vadd.xlane.f32.xlu0 %v6340
    %v6342 = vpop.xlane.xlu0 %6341
    %v6343 = vsel %vm2277, %v6339, 0.0
    %6344 = vadd.xlane.f32.xlu0 %v6343
    %v6345 = vpop.xlane.xlu0 %6344
    %v6346 = vrcp.pop %v6342
    %v6347 = vrcp.pop %v6345
    %v6348 = vmul.f32 %v6337, %v6346
    %v6349 = vmul.f32 %v6339, %v6347
    %v6351 = vsel %vm2300, %v6348, 0
    %6353 = vmatprep.subr.mxu0 0.0
    %6354 = vmatpush1.msra.mxu0 %v1281
    %6355 = vmatprep.subr.mxu0 0.0
    %6356 = vmatpush1.msra.mxu0 0.0
    %6357 = vmatprep.subr.mxu0 0.0
    %6358 = vmatpush1.msra.mxu0 0.0
    %6359 = vmatprep.subr.mxu0 0.0
    %6360 = vmatpush1.msra.mxu0 0.0
    %6361 = vmatprep.subr.mxu0 0.0
    %6362 = vmatpush1.msra.mxu0 0.0
    %6363 = vmatprep.subr.mxu0 0.0
    %6364 = vmatpush1.msra.mxu0 0.0
    %6365 = vmatprep.subr.mxu0 0.0
    %6366 = vmatpush1.msra.mxu0 0.0
    %6367 = vmatprep.subr.mxu0 0.0
    %6368 = vmatpush1.msra.mxu0 0.0
    %6369 = vmatprep.subr.mxu0 0.0
    %6370 = vmatpush1.msra.mxu0 0.0
    %6371 = vmatprep.subr.mxu0 0.0
    %6372 = vmatpush1.msra.mxu0 0.0
    %6373 = vmatprep.subr.mxu0 0.0
    %6374 = vmatpush1.msra.mxu0 0.0
    %6375 = vmatprep.subr.mxu0 0.0
    %6376 = vmatpush1.msra.mxu0 0.0
    %6377 = vmatprep.subr.mxu0 0.0
    %6378 = vmatpush1.msra.mxu0 0.0
    %6379 = vmatprep.subr.mxu0 0.0
    %6380 = vmatpush1.msra.mxu0 0.0
    %6381 = vmatprep.subr.mxu0 0.0
    %6382 = vmatpush1.msra.mxu0 0.0
    %6383 = vmatprep.subr.mxu0 0.0
    %6384 = vmatpush1.msra.mxu0 0.0
    %6385 = vmatprep.subr.mxu0 0.0
    %6386 = vmatpush1.msra.mxu0 0.0
    %6387 = vmatprep.subr.mxu0 0.0
    %6388 = vmatpush1.msra.mxu0 0.0
    %6389 = vmatprep.subr.mxu0 0.0
    %6390 = vmatpush1.msra.mxu0 0.0
    %6391 = vmatprep.subr.mxu0 0.0
    %6392 = vmatpush1.msra.mxu0 0.0
    %6393 = vmatprep.subr.mxu0 0.0
    %6394 = vmatpush1.msra.mxu0 0.0
    %6395 = vmatprep.subr.mxu0 0.0
    %6396 = vmatpush1.msra.mxu0 0.0
    %6397 = vmatprep.subr.mxu0 0.0
    %6398 = vmatpush1.msra.mxu0 0.0
    %6399 = vmatprep.subr.mxu0 0.0
    %6400 = vmatpush1.msra.mxu0 0.0
    %6401 = vmatprep.subr.mxu0 0.0
    %6402 = vmatpush1.msra.mxu0 0.0
    %6403 = vmatprep.subr.mxu0 0.0
    %6404 = vmatpush1.msra.mxu0 0.0
    %6405 = vmatprep.subr.mxu0 0.0
    %6406 = vmatpush1.msra.mxu0 0.0
    %6407 = vmatprep.subr.mxu0 0.0
    %6408 = vmatpush1.msra.mxu0 0.0
    %6409 = vmatprep.subr.mxu0 0.0
    %6410 = vmatpush1.msra.mxu0 0.0
    %6411 = vmatprep.subr.mxu0 0.0
    %6412 = vmatpush1.msra.mxu0 0.0
    %6413 = vmatprep.subr.mxu0 0.0
    %6414 = vmatpush1.msra.mxu0 0.0
    %6415 = vmatprep.subr.mxu0 0.0
    %6416 = vmatpush1.msra.mxu0 0.0
    %6417 = vmatprep.mubr.f32.mxu0 0.0
    %6418 = vmatmul.mubr.f32.gmra.mrb[0].mxu0 %v6351
    %v6419 = vpop.f32.mrb[0].mxu0
    %v6420 = vadd.f32 0.0, %v6419
    %v6421 = vpop.f32.mrb[0].mxu0
    %6422 = vdwg.mxu0
    %v6424 = vsel %vm2300, %v6349, 0
    %6426 = vmatprep.subr.mxu0 0.0
    %6427 = vmatpush1.msra.mxu0 %v1282
    %6428 = vmatprep.subr.mxu0 0.0
    %6429 = vmatpush1.msra.mxu0 0.0
    %6430 = vmatprep.subr.mxu0 0.0
    %6431 = vmatpush1.msra.mxu0 0.0
    %6432 = vmatprep.subr.mxu0 0.0
    %6433 = vmatpush1.msra.mxu0 0.0
    %6434 = vmatprep.subr.mxu0 0.0
    %6435 = vmatpush1.msra.mxu0 0.0
    %6436 = vmatprep.subr.mxu0 0.0
    %6437 = vmatpush1.msra.mxu0 0.0
    %6438 = vmatprep.subr.mxu0 0.0
    %6439 = vmatpush1.msra.mxu0 0.0
    %6440 = vmatprep.subr.mxu0 0.0
    %6441 = vmatpush1.msra.mxu0 0.0
    %6442 = vmatprep.subr.mxu0 0.0
    %6443 = vmatpush1.msra.mxu0 0.0
    %6444 = vmatprep.subr.mxu0 0.0
    %6445 = vmatpush1.msra.mxu0 0.0
    %6446 = vmatprep.subr.mxu0 0.0
    %6447 = vmatpush1.msra.mxu0 0.0
    %6448 = vmatprep.subr.mxu0 0.0
    %6449 = vmatpush1.msra.mxu0 0.0
    %6450 = vmatprep.subr.mxu0 0.0
    %6451 = vmatpush1.msra.mxu0 0.0
    %6452 = vmatprep.subr.mxu0 0.0
    %6453 = vmatpush1.msra.mxu0 0.0
    %6454 = vmatprep.subr.mxu0 0.0
    %6455 = vmatpush1.msra.mxu0 0.0
    %6456 = vmatprep.subr.mxu0 0.0
    %6457 = vmatpush1.msra.mxu0 0.0
    %6458 = vmatprep.subr.mxu0 0.0
    %6459 = vmatpush1.msra.mxu0 0.0
    %6460 = vmatprep.subr.mxu0 0.0
    %6461 = vmatpush1.msra.mxu0 0.0
    %6462 = vmatprep.subr.mxu0 0.0
    %6463 = vmatpush1.msra.mxu0 0.0
    %6464 = vmatprep.subr.mxu0 0.0
    %6465 = vmatpush1.msra.mxu0 0.0
    %6466 = vmatprep.subr.mxu0 0.0
    %6467 = vmatpush1.msra.mxu0 0.0
    %6468 = vmatprep.subr.mxu0 0.0
    %6469 = vmatpush1.msra.mxu0 0.0
    %6470 = vmatprep.subr.mxu0 0.0
    %6471 = vmatpush1.msra.mxu0 0.0
    %6472 = vmatprep.subr.mxu0 0.0
    %6473 = vmatpush1.msra.mxu0 0.0
    %6474 = vmatprep.subr.mxu0 0.0
    %6475 = vmatpush1.msra.mxu0 0.0
    %6476 = vmatprep.subr.mxu0 0.0
    %6477 = vmatpush1.msra.mxu0 0.0
    %6478 = vmatprep.subr.mxu0 0.0
    %6479 = vmatpush1.msra.mxu0 0.0
    %6480 = vmatprep.subr.mxu0 0.0
    %6481 = vmatpush1.msra.mxu0 0.0
    %6482 = vmatprep.subr.mxu0 0.0
    %6483 = vmatpush1.msra.mxu0 0.0
    %6484 = vmatprep.subr.mxu0 0.0
    %6485 = vmatpush1.msra.mxu0 0.0
    %6486 = vmatprep.subr.mxu0 0.0
    %6487 = vmatpush1.msra.mxu0 0.0
    %6488 = vmatprep.subr.mxu0 0.0
    %6489 = vmatpush1.msra.mxu0 0.0
    %6490 = vmatprep.mubr.f32.mxu0 0.0
    %6491 = vmatmul.mubr.f32.gmra.mrb[0].mxu0 %v6424
    %v6492 = vpop.f32.mrb[0].mxu0
    %v6493 = vadd.f32 0.0, %v6492
    %v6494 = vpop.f32.mrb[0].mxu0
    %6495 = vdwg.mxu0
    %v6496 = vld [vmem:[#allocation21] sm:$0xff]
    %v6497 = vld [vmem:[#allocation21 + $0x8] sm:$0xff]
    %v6498 = vld [vmem:[#allocation21 + $0x10] sm:$0xff]
    %v6499 = vld [vmem:[#allocation21 + $0x18] sm:$0xff]
    %v6500 = vld [vmem:[#allocation21 + $0x20] sm:$0xff]
    %v6501 = vld [vmem:[#allocation21 + $0x28] sm:$0xff]
    %v6502 = vld [vmem:[#allocation21 + $0x30] sm:$0xff]
    %v6503 = vld [vmem:[#allocation21 + $0x38] sm:$0xff]
    %v6504 = vld [vmem:[#allocation21 + $0x40] sm:$0xff]
    %v6505 = vld [vmem:[#allocation21 + $0x48] sm:$0xff]
    %v6506 = vld [vmem:[#allocation21 + $0x50] sm:$0xff]
    %v6507 = vld [vmem:[#allocation21 + $0x58] sm:$0xff]
    %v6508 = vld [vmem:[#allocation21 + $0x60] sm:$0xff]
    %v6509 = vld [vmem:[#allocation21 + $0x68] sm:$0xff]
    %v6510 = vld [vmem:[#allocation21 + $0x70] sm:$0xff]
    %v6511 = vld [vmem:[#allocation21 + $0x78] sm:$0xff]
    %v6512 = vld [vmem:[#allocation23] sm:$0xff]
    %v6513 = vld [vmem:[#allocation23 + $0x8] sm:$0xff]
    %v6514 = vld [vmem:[#allocation23 + $0x10] sm:$0xff]
    %v6515 = vld [vmem:[#allocation23 + $0x18] sm:$0xff]
    %v6516 = vld [vmem:[#allocation23 + $0x20] sm:$0xff]
    %v6517 = vld [vmem:[#allocation23 + $0x28] sm:$0xff]
    %v6518 = vld [vmem:[#allocation23 + $0x30] sm:$0xff]
    %v6519 = vld [vmem:[#allocation23 + $0x38] sm:$0xff]
    %v6520 = vld [vmem:[#allocation23 + $0x40] sm:$0xff]
    %v6521 = vld [vmem:[#allocation23 + $0x48] sm:$0xff]
    %v6522 = vld [vmem:[#allocation23 + $0x50] sm:$0xff]
    %v6523 = vld [vmem:[#allocation23 + $0x58] sm:$0xff]
    %v6524 = vld [vmem:[#allocation23 + $0x60] sm:$0xff]
    %v6525 = vld [vmem:[#allocation23 + $0x68] sm:$0xff]
    %v6526 = vld [vmem:[#allocation23 + $0x70] sm:$0xff]
    %v6527 = vld [vmem:[#allocation23 + $0x78] sm:$0xff]
    %6528 = vmatprep.subr.mxu0 0.0
    %6529 = vmatpush1.msra.mxu0 %v6512
    %6530 = vmatprep.subr.mxu0 0.0
    %6531 = vmatpush1.msra.mxu0 %v6513
    %6532 = vmatprep.subr.mxu0 0.0
    %6533 = vmatpush1.msra.mxu0 %v6514
    %6534 = vmatprep.subr.mxu0 0.0
    %6535 = vmatpush1.msra.mxu0 %v6515
    %6536 = vmatprep.subr.mxu0 0.0
    %6537 = vmatpush1.msra.mxu0 %v6516
    %6538 = vmatprep.subr.mxu0 0.0
    %6539 = vmatpush1.msra.mxu0 %v6517
    %6540 = vmatprep.subr.mxu0 0.0
    %6541 = vmatpush1.msra.mxu0 %v6518
    %6542 = vmatprep.subr.mxu0 0.0
    %6543 = vmatpush1.msra.mxu0 %v6519
    %6544 = vmatprep.subr.mxu0 0.0
    %6545 = vmatpush1.msra.mxu0 %v6520
    %6546 = vmatprep.subr.mxu0 0.0
    %6547 = vmatpush1.msra.mxu0 %v6521
    %6548 = vmatprep.subr.mxu0 0.0
    %6549 = vmatpush1.msra.mxu0 %v6522
    %6550 = vmatprep.subr.mxu0 0.0
    %6551 = vmatpush1.msra.mxu0 %v6523
    %6552 = vmatprep.subr.mxu0 0.0
    %6553 = vmatpush1.msra.mxu0 %v6524
    %6554 = vmatprep.subr.mxu0 0.0
    %6555 = vmatpush1.msra.mxu0 %v6525
    %6556 = vmatprep.subr.mxu0 0.0
    %6557 = vmatpush1.msra.mxu0 %v6526
    %6558 = vmatprep.subr.mxu0 0.0
    %6559 = vmatpush1.msra.mxu0 %v6527
    %6560 = vmatprep.subr.mxu0 0.0
    %6561 = vmatpush1.msra.mxu0 0.0
    %6562 = vmatprep.subr.mxu0 0.0
    %6563 = vmatpush1.msra.mxu0 0.0
    %6564 = vmatprep.subr.mxu0 0.0
    %6565 = vmatpush1.msra.mxu0 0.0
    %6566 = vmatprep.subr.mxu0 0.0
    %6567 = vmatpush1.msra.mxu0 0.0
    %6568 = vmatprep.subr.mxu0 0.0
    %6569 = vmatpush1.msra.mxu0 0.0
    %6570 = vmatprep.subr.mxu0 0.0
    %6571 = vmatpush1.msra.mxu0 0.0
    %6572 = vmatprep.subr.mxu0 0.0
    %6573 = vmatpush1.msra.mxu0 0.0
    %6574 = vmatprep.subr.mxu0 0.0
    %6575 = vmatpush1.msra.mxu0 0.0
    %6576 = vmatprep.subr.mxu0 0.0
    %6577 = vmatpush1.msra.mxu0 0.0
    %6578 = vmatprep.subr.mxu0 0.0
    %6579 = vmatpush1.msra.mxu0 0.0
    %6580 = vmatprep.subr.mxu0 0.0
    %6581 = vmatpush1.msra.mxu0 0.0
    %6582 = vmatprep.subr.mxu0 0.0
    %6583 = vmatpush1.msra.mxu0 0.0
    %6584 = vmatprep.subr.mxu0 0.0
    %6585 = vmatpush1.msra.mxu0 0.0
    %6586 = vmatprep.subr.mxu0 0.0
    %6587 = vmatpush1.msra.mxu0 0.0
    %6588 = vmatprep.subr.mxu0 0.0
    %6589 = vmatpush1.msra.mxu0 0.0
    %6590 = vmatprep.subr.mxu0 0.0
    %6591 = vmatpush1.msra.mxu0 0.0
    %6592 = vmatprep.mubr.f32.mxu0 0.0
    %6593 = vmatmul.mubr.f32.gmra.mrb[0].mxu0 %v6162
    %v6594 = vpop.f32.mrb[0].mxu0
    %v6595 = vadd.f32 0.0, %v6594
    %v6596 = vpop.f32.mrb[0].mxu0
    %6597 = vdwg.mxu0
    %v6600 = vrot.slane %v6493, 7
    %v6601 = vsel %vm695, %v6600, %v6420
    %6603 = vmatprep.subr.mxu0 0.0
    %6604 = vmatpush1.msra.mxu0 %v6496
    %6605 = vmatprep.subr.mxu0 0.0
    %6606 = vmatpush1.msra.mxu0 %v6497
    %6607 = vmatprep.subr.mxu0 0.0
    %6608 = vmatpush1.msra.mxu0 %v6498
    %6609 = vmatprep.subr.mxu0 0.0
    %6610 = vmatpush1.msra.mxu0 %v6499
    %6611 = vmatprep.subr.mxu0 0.0
    %6612 = vmatpush1.msra.mxu0 %v6500
    %6613 = vmatprep.subr.mxu0 0.0
    %6614 = vmatpush1.msra.mxu0 %v6501
    %6615 = vmatprep.subr.mxu0 0.0
    %6616 = vmatpush1.msra.mxu0 %v6502
    %6617 = vmatprep.subr.mxu0 0.0
    %6618 = vmatpush1.msra.mxu0 %v6503
    %6619 = vmatprep.subr.mxu0 0.0
    %6620 = vmatpush1.msra.mxu0 %v6504
    %6621 = vmatprep.subr.mxu0 0.0
    %6622 = vmatpush1.msra.mxu0 %v6505
    %6623 = vmatprep.subr.mxu0 0.0
    %6624 = vmatpush1.msra.mxu0 %v6506
    %6625 = vmatprep.subr.mxu0 0.0
    %6626 = vmatpush1.msra.mxu0 %v6507
    %6627 = vmatprep.subr.mxu0 0.0
    %6628 = vmatpush1.msra.mxu0 %v6508
    %6629 = vmatprep.subr.mxu0 0.0
    %6630 = vmatpush1.msra.mxu0 %v6509
    %6631 = vmatprep.subr.mxu0 0.0
    %6632 = vmatpush1.msra.mxu0 %v6510
    %6633 = vmatprep.subr.mxu0 0.0
    %6634 = vmatpush1.msra.mxu0 %v6511
    %6635 = vmatprep.subr.mxu0 0.0
    %6636 = vmatpush1.msra.mxu0 0.0
    %6637 = vmatprep.subr.mxu0 0.0
    %6638 = vmatpush1.msra.mxu0 0.0
    %6639 = vmatprep.subr.mxu0 0.0
    %6640 = vmatpush1.msra.mxu0 0.0
    %6641 = vmatprep.subr.mxu0 0.0
    %6642 = vmatpush1.msra.mxu0 0.0
    %6643 = vmatprep.subr.mxu0 0.0
    %6644 = vmatpush1.msra.mxu0 0.0
    %6645 = vmatprep.subr.mxu0 0.0
    %6646 = vmatpush1.msra.mxu0 0.0
    %6647 = vmatprep.subr.mxu0 0.0
    %6648 = vmatpush1.msra.mxu0 0.0
    %6649 = vmatprep.subr.mxu0 0.0
    %6650 = vmatpush1.msra.mxu0 0.0
    %6651 = vmatprep.subr.mxu0 0.0
    %6652 = vmatpush1.msra.mxu0 0.0
    %6653 = vmatprep.subr.mxu0 0.0
    %6654 = vmatpush1.msra.mxu0 0.0
    %6655 = vmatprep.subr.mxu0 0.0
    %6656 = vmatpush1.msra.mxu0 0.0
    %6657 = vmatprep.subr.mxu0 0.0
    %6658 = vmatpush1.msra.mxu0 0.0
    %6659 = vmatprep.subr.mxu0 0.0
    %6660 = vmatpush1.msra.mxu0 0.0
    %6661 = vmatprep.subr.mxu0 0.0
    %6662 = vmatpush1.msra.mxu0 0.0
    %6663 = vmatprep.subr.mxu0 0.0
    %6664 = vmatpush1.msra.mxu0 0.0
    %6665 = vmatprep.subr.mxu0 0.0
    %6666 = vmatpush1.msra.mxu0 0.0
    %6667 = vmatprep.mubr.f32.mxu0 0.0
    %6668 = vmatmul.mubr.f32.gmra.mrb[0].mxu0 %v6601
    %v6669 = vpop.f32.mrb[0].mxu0
    %v6670 = vadd.f32 %v6595, %v6669
    %v6671 = vpop.f32.mrb[0].mxu0
    %6672 = vdwg.mxu0
    %v6673 = vld [vmem:[%s20] sm:$0x1]
    %v6675 = vlaneseq
    %v6676 = vshrl.u32 %v6675, 7
    %v6677 = vsub.s32 0, %v6676
    %v6678 = vrot.slane %v6673, %v6677
    %v6680 = vadd.f32 %v6670, %v6678
    %v6681 = vtanh.pop %v6680
    %s6682 = scalar_lea.vmem [#allocation24], 6
    %6683 = vst [vmem:[%s6682] sm:$0x3] %v6681
    %s6684 = scalar_lea.vmem [#allocation3], 8
    %v6685 = vld [vmem:[%s6684] sm:$0x3]
    %v6686 = vld [vmem:[#allocation15] sm:$0xff]
    %v6687 = vld [vmem:[#allocation15 + $0x8] sm:$0xff]
    %v6688 = vld [vmem:[#allocation15 + $0x10] sm:$0xff]
    %v6689 = vld [vmem:[#allocation15 + $0x18] sm:$0xff]
    %v6690 = vld [vmem:[#allocation15 + $0x20] sm:$0xff]
    %v6691 = vld [vmem:[#allocation15 + $0x28] sm:$0xff]
    %v6692 = vld [vmem:[%s12] sm:$0x7]
    %v6694 = vlaneseq
    %v6695 = vshrl.u32 %v6694, 7
    %v6696 = vsub.s32 0, %v6695
    %v6697 = vrot.slane %v6692, %v6696
    %v6698 = vlaneseq
    %v6699 = vshrl.u32 %v6698, 7
    %v6700 = vsub.s32 1, %v6699
    %v6701 = vrot.slane %v6692, %v6700
    %v6702 = vlaneseq
    %v6703 = vshrl.u32 %v6702, 7
    %v6704 = vsub.s32 2, %v6703
    %v6705 = vrot.slane %v6692, %v6704
    %v6710 = vsel %vm1307, %v6685, 0
    %6712 = vmatprep.subr.mxu0 %v6687
    %6713 = vmatpush1.msra.mxu0 %v6686
    %6714 = vmatprep.subr.mxu0 %v6690
    %6715 = vmatpush1.msra.mxu0 %v6689
    %6716 = vmatprep.subr.mxu0 0.0
    %6717 = vmatpush1.msra.mxu0 0.0
    %6718 = vmatprep.subr.mxu0 0.0
    %6719 = vmatpush1.msra.mxu0 0.0
    %6720 = vmatprep.subr.mxu0 0.0
    %6721 = vmatpush1.msra.mxu0 0.0
    %6722 = vmatprep.subr.mxu0 0.0
    %6723 = vmatpush1.msra.mxu0 0.0
    %6724 = vmatprep.subr.mxu0 0.0
    %6725 = vmatpush1.msra.mxu0 0.0
    %6726 = vmatprep.subr.mxu0 0.0
    %6727 = vmatpush1.msra.mxu0 0.0
    %6728 = vmatprep.subr.mxu0 0.0
    %6729 = vmatpush1.msra.mxu0 0.0
    %6730 = vmatprep.subr.mxu0 0.0
    %6731 = vmatpush1.msra.mxu0 0.0
    %6732 = vmatprep.subr.mxu0 0.0
    %6733 = vmatpush1.msra.mxu0 0.0
    %6734 = vmatprep.subr.mxu0 0.0
    %6735 = vmatpush1.msra.mxu0 0.0
    %6736 = vmatprep.subr.mxu0 0.0
    %6737 = vmatpush1.msra.mxu0 0.0
    %6738 = vmatprep.subr.mxu0 0.0
    %6739 = vmatpush1.msra.mxu0 0.0
    %6740 = vmatprep.subr.mxu0 0.0
    %6741 = vmatpush1.msra.mxu0 0.0
    %6742 = vmatprep.subr.mxu0 0.0
    %6743 = vmatpush1.msra.mxu0 0.0
    %6744 = vmatprep.subr.mxu0 0.0
    %6745 = vmatpush1.msra.mxu0 0.0
    %6746 = vmatprep.subr.mxu0 0.0
    %6747 = vmatpush1.msra.mxu0 0.0
    %6748 = vmatprep.subr.mxu0 0.0
    %6749 = vmatpush1.msra.mxu0 0.0
    %6750 = vmatprep.subr.mxu0 0.0
    %6751 = vmatpush1.msra.mxu0 0.0
    %6752 = vmatprep.subr.mxu0 0.0
    %6753 = vmatpush1.msra.mxu0 0.0
    %6754 = vmatprep.subr.mxu0 0.0
    %6755 = vmatpush1.msra.mxu0 0.0
    %6756 = vmatprep.subr.mxu0 0.0
    %6757 = vmatpush1.msra.mxu0 0.0
    %6758 = vmatprep.subr.mxu0 0.0
    %6759 = vmatpush1.msra.mxu0 0.0
    %6760 = vmatprep.subr.mxu0 0.0
    %6761 = vmatpush1.msra.mxu0 0.0
    %6762 = vmatprep.subr.mxu0 0.0
    %6763 = vmatpush1.msra.mxu0 0.0
    %6764 = vmatprep.subr.mxu0 0.0
    %6765 = vmatpush1.msra.mxu0 0.0
    %6766 = vmatprep.subr.mxu0 0.0
    %6767 = vmatpush1.msra.mxu0 0.0
    %6768 = vmatprep.subr.mxu0 0.0
    %6769 = vmatpush1.msra.mxu0 0.0
    %6770 = vmatprep.subr.mxu0 0.0
    %6771 = vmatpush1.msra.mxu0 0.0
    %6772 = vmatprep.subr.mxu0 0.0
    %6773 = vmatpush1.msra.mxu0 0.0
    %6774 = vmatprep.subr.mxu0 0.0
    %6775 = vmatpush1.msra.mxu0 0.0
    %6776 = vmatprep.mubr.f32.mxu0 0.0
    %6777 = vmatmul.mubr.f32.gmra.mrb[0].mxu0 %v6710
    %v6778 = vpop.f32.mrb[0].mxu0
    %v6779 = vadd.f32 %v6697, %v6778
    %v6780 = vpop.f32.mrb[0].mxu0
    %v6781 = vadd.f32 %v6701, %v6780
    %6782 = vdwg.mxu0
    %6783 = vmatprep.subr.mxu0 0.0
    %6784 = vmatpush1.msra.mxu0 %v6688
    %6785 = vmatprep.subr.mxu0 0.0
    %6786 = vmatpush1.msra.mxu0 %v6691
    %6787 = vmatprep.subr.mxu0 0.0
    %6788 = vmatpush1.msra.mxu0 0.0
    %6789 = vmatprep.subr.mxu0 0.0
    %6790 = vmatpush1.msra.mxu0 0.0
    %6791 = vmatprep.subr.mxu0 0.0
    %6792 = vmatpush1.msra.mxu0 0.0
    %6793 = vmatprep.subr.mxu0 0.0
    %6794 = vmatpush1.msra.mxu0 0.0
    %6795 = vmatprep.subr.mxu0 0.0
    %6796 = vmatpush1.msra.mxu0 0.0
    %6797 = vmatprep.subr.mxu0 0.0
    %6798 = vmatpush1.msra.mxu0 0.0
    %6799 = vmatprep.subr.mxu0 0.0
    %6800 = vmatpush1.msra.mxu0 0.0
    %6801 = vmatprep.subr.mxu0 0.0
    %6802 = vmatpush1.msra.mxu0 0.0
    %6803 = vmatprep.subr.mxu0 0.0
    %6804 = vmatpush1.msra.mxu0 0.0
    %6805 = vmatprep.subr.mxu0 0.0
    %6806 = vmatpush1.msra.mxu0 0.0
    %6807 = vmatprep.subr.mxu0 0.0
    %6808 = vmatpush1.msra.mxu0 0.0
    %6809 = vmatprep.subr.mxu0 0.0
    %6810 = vmatpush1.msra.mxu0 0.0
    %6811 = vmatprep.subr.mxu0 0.0
    %6812 = vmatpush1.msra.mxu0 0.0
    %6813 = vmatprep.subr.mxu0 0.0
    %6814 = vmatpush1.msra.mxu0 0.0
    %6815 = vmatprep.subr.mxu0 0.0
    %6816 = vmatpush1.msra.mxu0 0.0
    %6817 = vmatprep.subr.mxu0 0.0
    %6818 = vmatpush1.msra.mxu0 0.0
    %6819 = vmatprep.subr.mxu0 0.0
    %6820 = vmatpush1.msra.mxu0 0.0
    %6821 = vmatprep.subr.mxu0 0.0
    %6822 = vmatpush1.msra.mxu0 0.0
    %6823 = vmatprep.subr.mxu0 0.0
    %6824 = vmatpush1.msra.mxu0 0.0
    %6825 = vmatprep.subr.mxu0 0.0
    %6826 = vmatpush1.msra.mxu0 0.0
    %6827 = vmatprep.subr.mxu0 0.0
    %6828 = vmatpush1.msra.mxu0 0.0
    %6829 = vmatprep.subr.mxu0 0.0
    %6830 = vmatpush1.msra.mxu0 0.0
    %6831 = vmatprep.subr.mxu0 0.0
    %6832 = vmatpush1.msra.mxu0 0.0
    %6833 = vmatprep.subr.mxu0 0.0
    %6834 = vmatpush1.msra.mxu0 0.0
    %6835 = vmatprep.subr.mxu0 0.0
    %6836 = vmatpush1.msra.mxu0 0.0
    %6837 = vmatprep.subr.mxu0 0.0
    %6838 = vmatpush1.msra.mxu0 0.0
    %6839 = vmatprep.subr.mxu0 0.0
    %6840 = vmatpush1.msra.mxu0 0.0
    %6841 = vmatprep.subr.mxu0 0.0
    %6842 = vmatpush1.msra.mxu0 0.0
    %6843 = vmatprep.subr.mxu0 0.0
    %6844 = vmatpush1.msra.mxu0 0.0
    %6845 = vmatprep.subr.mxu0 0.0
    %6846 = vmatpush1.msra.mxu0 0.0
    %6847 = vmatprep.mubr.f32.mxu0 0.0
    %6848 = vmatmul.mubr.f32.gmra.mrb[0].mxu0 %v6710
    %v6849 = vpop.f32.mrb[0].mxu0
    %v6850 = vadd.f32 %v6705, %v6849
    %v6851 = vpop.f32.mrb[0].mxu0
    %6852 = vdwg.mxu0
    %v6853 = vld [vmem:[#allocation17] sm:$0xff]
    %v6854 = vld [vmem:[#allocation17 + $0x8] sm:$0xff]
    %v6855 = vld [vmem:[#allocation17 + $0x10] sm:$0xff]
    %v6856 = vld [vmem:[#allocation17 + $0x18] sm:$0xff]
    %v6857 = vld [vmem:[#allocation17 + $0x20] sm:$0xff]
    %v6858 = vld [vmem:[#allocation17 + $0x28] sm:$0xff]
    %v6859 = vld [vmem:[#allocation17 + $0x30] sm:$0xff]
    %v6860 = vld [vmem:[#allocation17 + $0x38] sm:$0xff]
    %v6861 = vld [vmem:[#allocation17 + $0x40] sm:$0xff]
    %v6862 = vld [vmem:[#allocation17 + $0x48] sm:$0xff]
    %v6863 = vld [vmem:[#allocation17 + $0x50] sm:$0xff]
    %v6864 = vld [vmem:[#allocation17 + $0x58] sm:$0xff]
    %v6865 = vld [vmem:[#allocation17 + $0x60] sm:$0xff]
    %v6866 = vld [vmem:[#allocation17 + $0x68] sm:$0xff]
    %v6867 = vld [vmem:[#allocation17 + $0x70] sm:$0xff]
    %v6868 = vld [vmem:[#allocation17 + $0x78] sm:$0xff]
    %v6869 = vld [vmem:[#allocation17 + $0x80] sm:$0xff]
    %v6870 = vld [vmem:[#allocation17 + $0x88] sm:$0xff]
    %v6871 = vld [vmem:[#allocation17 + $0x90] sm:$0xff]
    %v6872 = vld [vmem:[#allocation17 + $0x98] sm:$0xff]
    %v6873 = vld [vmem:[#allocation17 + $0xa0] sm:$0xff]
    %v6874 = vld [vmem:[#allocation17 + $0xa8] sm:$0xff]
    %v6875 = vld [vmem:[#allocation17 + $0xb0] sm:$0xff]
    %v6876 = vld [vmem:[#allocation17 + $0xb8] sm:$0xff]
    %v6877 = vld [vmem:[#allocation17 + $0xc0] sm:$0xff]
    %v6878 = vld [vmem:[#allocation17 + $0xc8] sm:$0xff]
    %v6879 = vld [vmem:[#allocation17 + $0xd0] sm:$0xff]
    %v6880 = vld [vmem:[#allocation17 + $0xd8] sm:$0xff]
    %v6881 = vld [vmem:[#allocation17 + $0xe0] sm:$0xff]
    %v6882 = vld [vmem:[#allocation17 + $0xe8] sm:$0xff]
    %v6883 = vld [vmem:[#allocation17 + $0xf0] sm:$0xff]
    %v6884 = vld [vmem:[#allocation17 + $0xf8] sm:$0xff]
    %v6885 = vld [vmem:[#allocation17 + $0x100] sm:$0xff]
    %v6886 = vld [vmem:[#allocation17 + $0x108] sm:$0xff]
    %v6887 = vld [vmem:[#allocation17 + $0x110] sm:$0xff]
    %v6888 = vld [vmem:[#allocation17 + $0x118] sm:$0xff]
    %v6889 = vld [vmem:[#allocation17 + $0x120] sm:$0xff]
    %v6890 = vld [vmem:[#allocation17 + $0x128] sm:$0xff]
    %v6891 = vld [vmem:[#allocation17 + $0x130] sm:$0xff]
    %v6892 = vld [vmem:[#allocation17 + $0x138] sm:$0xff]
    %v6893 = vld [vmem:[#allocation17 + $0x140] sm:$0xff]
    %v6894 = vld [vmem:[#allocation17 + $0x148] sm:$0xff]
    %v6895 = vld [vmem:[#allocation17 + $0x150] sm:$0xff]
    %v6896 = vld [vmem:[#allocation17 + $0x158] sm:$0xff]
    %v6897 = vld [vmem:[#allocation17 + $0x160] sm:$0xff]
    %v6898 = vld [vmem:[#allocation17 + $0x168] sm:$0xff]
    %v6899 = vld [vmem:[#allocation17 + $0x170] sm:$0xff]
    %v6900 = vld [vmem:[#allocation17 + $0x178] sm:$0xff]
    %v6901 = vld [vmem:[%s13] sm:$0x7]
    %v6903 = vlaneseq
    %v6904 = vshrl.u32 %v6903, 7
    %v6905 = vsub.s32 0, %v6904
    %v6906 = vrot.slane %v6901, %v6905
    %v6907 = vlaneseq
    %v6908 = vshrl.u32 %v6907, 7
    %v6909 = vsub.s32 1, %v6908
    %v6910 = vrot.slane %v6901, %v6909
    %v6911 = vlaneseq
    %v6912 = vshrl.u32 %v6911, 7
    %v6913 = vsub.s32 2, %v6912
    %v6914 = vrot.slane %v6901, %v6913
    %6918 = vmatprep.subr.mxu0 %v6854
    %6919 = vmatpush1.msra.mxu0 %v6853
    %6920 = vmatprep.subr.mxu0 %v6857
    %6921 = vmatpush1.msra.mxu0 %v6856
    %6922 = vmatprep.subr.mxu0 %v6860
    %6923 = vmatpush1.msra.mxu0 %v6859
    %6924 = vmatprep.subr.mxu0 %v6863
    %6925 = vmatpush1.msra.mxu0 %v6862
    %6926 = vmatprep.subr.mxu0 %v6866
    %6927 = vmatpush1.msra.mxu0 %v6865
    %6928 = vmatprep.subr.mxu0 %v6869
    %6929 = vmatpush1.msra.mxu0 %v6868
    %6930 = vmatprep.subr.mxu0 %v6872
    %6931 = vmatpush1.msra.mxu0 %v6871
    %6932 = vmatprep.subr.mxu0 %v6875
    %6933 = vmatpush1.msra.mxu0 %v6874
    %6934 = vmatprep.subr.mxu0 %v6878
    %6935 = vmatpush1.msra.mxu0 %v6877
    %6936 = vmatprep.subr.mxu0 %v6881
    %6937 = vmatpush1.msra.mxu0 %v6880
    %6938 = vmatprep.subr.mxu0 %v6884
    %6939 = vmatpush1.msra.mxu0 %v6883
    %6940 = vmatprep.subr.mxu0 %v6887
    %6941 = vmatpush1.msra.mxu0 %v6886
    %6942 = vmatprep.subr.mxu0 %v6890
    %6943 = vmatpush1.msra.mxu0 %v6889
    %6944 = vmatprep.subr.mxu0 %v6893
    %6945 = vmatpush1.msra.mxu0 %v6892
    %6946 = vmatprep.subr.mxu0 %v6896
    %6947 = vmatpush1.msra.mxu0 %v6895
    %6948 = vmatprep.subr.mxu0 %v6899
    %6949 = vmatpush1.msra.mxu0 %v6898
    %6950 = vmatprep.subr.mxu0 0.0
    %6951 = vmatpush1.msra.mxu0 0.0
    %6952 = vmatprep.subr.mxu0 0.0
    %6953 = vmatpush1.msra.mxu0 0.0
    %6954 = vmatprep.subr.mxu0 0.0
    %6955 = vmatpush1.msra.mxu0 0.0
    %6956 = vmatprep.subr.mxu0 0.0
    %6957 = vmatpush1.msra.mxu0 0.0
    %6958 = vmatprep.subr.mxu0 0.0
    %6959 = vmatpush1.msra.mxu0 0.0
    %6960 = vmatprep.subr.mxu0 0.0
    %6961 = vmatpush1.msra.mxu0 0.0
    %6962 = vmatprep.subr.mxu0 0.0
    %6963 = vmatpush1.msra.mxu0 0.0
    %6964 = vmatprep.subr.mxu0 0.0
    %6965 = vmatpush1.msra.mxu0 0.0
    %6966 = vmatprep.subr.mxu0 0.0
    %6967 = vmatpush1.msra.mxu0 0.0
    %6968 = vmatprep.subr.mxu0 0.0
    %6969 = vmatpush1.msra.mxu0 0.0
    %6970 = vmatprep.subr.mxu0 0.0
    %6971 = vmatpush1.msra.mxu0 0.0
    %6972 = vmatprep.subr.mxu0 0.0
    %6973 = vmatpush1.msra.mxu0 0.0
    %6974 = vmatprep.subr.mxu0 0.0
    %6975 = vmatpush1.msra.mxu0 0.0
    %6976 = vmatprep.subr.mxu0 0.0
    %6977 = vmatpush1.msra.mxu0 0.0
    %6978 = vmatprep.subr.mxu0 0.0
    %6979 = vmatpush1.msra.mxu0 0.0
    %6980 = vmatprep.subr.mxu0 0.0
    %6981 = vmatpush1.msra.mxu0 0.0
    %6982 = vmatprep.mubr.f32.mxu0 0.0
    %6983 = vmatmul.mubr.f32.gmra.mrb[0].mxu0 %v5729
    %v6984 = vpop.f32.mrb[0].mxu0
    %v6985 = vadd.f32 %v6906, %v6984
    %v6986 = vpop.f32.mrb[0].mxu0
    %v6987 = vadd.f32 %v6910, %v6986
    %6988 = vdwg.mxu0
    %6989 = vmatprep.subr.mxu0 0.0
    %6990 = vmatpush1.msra.mxu0 %v6855
    %6991 = vmatprep.subr.mxu0 0.0
    %6992 = vmatpush1.msra.mxu0 %v6858
    %6993 = vmatprep.subr.mxu0 0.0
    %6994 = vmatpush1.msra.mxu0 %v6861
    %6995 = vmatprep.subr.mxu0 0.0
    %6996 = vmatpush1.msra.mxu0 %v6864
    %6997 = vmatprep.subr.mxu0 0.0
    %6998 = vmatpush1.msra.mxu0 %v6867
    %6999 = vmatprep.subr.mxu0 0.0
    %7000 = vmatpush1.msra.mxu0 %v6870
    %7001 = vmatprep.subr.mxu0 0.0
    %7002 = vmatpush1.msra.mxu0 %v6873
    %7003 = vmatprep.subr.mxu0 0.0
    %7004 = vmatpush1.msra.mxu0 %v6876
    %7005 = vmatprep.subr.mxu0 0.0
    %7006 = vmatpush1.msra.mxu0 %v6879
    %7007 = vmatprep.subr.mxu0 0.0
    %7008 = vmatpush1.msra.mxu0 %v6882
    %7009 = vmatprep.subr.mxu0 0.0
    %7010 = vmatpush1.msra.mxu0 %v6885
    %7011 = vmatprep.subr.mxu0 0.0
    %7012 = vmatpush1.msra.mxu0 %v6888
    %7013 = vmatprep.subr.mxu0 0.0
    %7014 = vmatpush1.msra.mxu0 %v6891
    %7015 = vmatprep.subr.mxu0 0.0
    %7016 = vmatpush1.msra.mxu0 %v6894
    %7017 = vmatprep.subr.mxu0 0.0
    %7018 = vmatpush1.msra.mxu0 %v6897
    %7019 = vmatprep.subr.mxu0 0.0
    %7020 = vmatpush1.msra.mxu0 %v6900
    %7021 = vmatprep.subr.mxu0 0.0
    %7022 = vmatpush1.msra.mxu0 0.0
    %7023 = vmatprep.subr.mxu0 0.0
    %7024 = vmatpush1.msra.mxu0 0.0
    %7025 = vmatprep.subr.mxu0 0.0
    %7026 = vmatpush1.msra.mxu0 0.0
    %7027 = vmatprep.subr.mxu0 0.0
    %7028 = vmatpush1.msra.mxu0 0.0
    %7029 = vmatprep.subr.mxu0 0.0
    %7030 = vmatpush1.msra.mxu0 0.0
    %7031 = vmatprep.subr.mxu0 0.0
    %7032 = vmatpush1.msra.mxu0 0.0
    %7033 = vmatprep.subr.mxu0 0.0
    %7034 = vmatpush1.msra.mxu0 0.0
    %7035 = vmatprep.subr.mxu0 0.0
    %7036 = vmatpush1.msra.mxu0 0.0
    %7037 = vmatprep.subr.mxu0 0.0
    %7038 = vmatpush1.msra.mxu0 0.0
    %7039 = vmatprep.subr.mxu0 0.0
    %7040 = vmatpush1.msra.mxu0 0.0
    %7041 = vmatprep.subr.mxu0 0.0
    %7042 = vmatpush1.msra.mxu0 0.0
    %7043 = vmatprep.subr.mxu0 0.0
    %7044 = vmatpush1.msra.mxu0 0.0
    %7045 = vmatprep.subr.mxu0 0.0
    %7046 = vmatpush1.msra.mxu0 0.0
    %7047 = vmatprep.subr.mxu0 0.0
    %7048 = vmatpush1.msra.mxu0 0.0
    %7049 = vmatprep.subr.mxu0 0.0
    %7050 = vmatpush1.msra.mxu0 0.0
    %7051 = vmatprep.subr.mxu0 0.0
    %7052 = vmatpush1.msra.mxu0 0.0
    %7053 = vmatprep.mubr.f32.mxu0 0.0
    %7054 = vmatmul.mubr.f32.gmra.mrb[0].mxu0 %v5729
    %v7055 = vpop.f32.mrb[0].mxu0
    %v7056 = vadd.f32 %v6914, %v7055
    %v7057 = vpop.f32.mrb[0].mxu0
    %7058 = vdwg.mxu0
    %v7059 = vadd.f32 %v6779, %v6985
    %v7060 = vxor.u32 %v7059, 2147483648
    %v7061 = vmul.f32 %v7060, 1.442695
    %v7062 = vpow.pop %v7061
    %v7063 = vadd.f32 %v7062, 1.0
    %v7064 = vrcp.pop %v7063
    %v7065 = vmul.f32 1.0, %v7064
    %v7066 = vadd.f32 %v6781, %v6987
    %v7067 = vxor.u32 %v7066, 2147483648
    %v7068 = vmul.f32 %v7067, 1.442695
    %v7069 = vpow.pop %v7068
    %v7070 = vadd.f32 %v7069, 1.0
    %v7071 = vrcp.pop %v7070
    %v7072 = vmul.f32 1.0, %v7071
    %v7073 = vmul.f32 %v7065, %v7056
    %v7074 = vadd.f32 %v6850, %v7073
    %v7075 = vtanh.pop %v7074
    %v7076 = vsub.f32 1.0, %v7072
    %v7077 = vmul.f32 %v7076, %v7075
    %v7078 = vmul.f32 %v7072, %v5729
    %v7079 = vadd.f32 %v7077, %v7078
    %v7080 = vld [vmem:[#allocation18] sm:$0xff]
    %v7081 = vld [vmem:[#allocation18 + $0x8] sm:$0xff]
    %v7082 = vld [vmem:[#allocation18 + $0x10] sm:$0xff]
    %v7083 = vld [vmem:[#allocation18 + $0x18] sm:$0xff]
    %v7084 = vld [vmem:[#allocation18 + $0x20] sm:$0xff]
    %v7085 = vld [vmem:[#allocation18 + $0x28] sm:$0xff]
    %v7086 = vld [vmem:[#allocation18 + $0x30] sm:$0xff]
    %v7087 = vld [vmem:[#allocation18 + $0x38] sm:$0xff]
    %v7088 = vld [vmem:[#allocation18 + $0x40] sm:$0xff]
    %v7089 = vld [vmem:[#allocation18 + $0x48] sm:$0xff]
    %v7090 = vld [vmem:[#allocation18 + $0x50] sm:$0xff]
    %v7091 = vld [vmem:[#allocation18 + $0x58] sm:$0xff]
    %v7092 = vld [vmem:[#allocation18 + $0x60] sm:$0xff]
    %v7093 = vld [vmem:[#allocation18 + $0x68] sm:$0xff]
    %v7094 = vld [vmem:[#allocation18 + $0x70] sm:$0xff]
    %v7095 = vld [vmem:[#allocation18 + $0x78] sm:$0xff]
    %v7096 = vld [vmem:[#allocation18 + $0x80] sm:$0xff]
    %v7097 = vld [vmem:[#allocation18 + $0x88] sm:$0xff]
    %v7098 = vld [vmem:[#allocation18 + $0x90] sm:$0xff]
    %v7099 = vld [vmem:[#allocation18 + $0x98] sm:$0xff]
    %v7100 = vld [vmem:[#allocation18 + $0xa0] sm:$0xff]
    %v7101 = vld [vmem:[#allocation18 + $0xa8] sm:$0xff]
    %v7102 = vld [vmem:[#allocation18 + $0xb0] sm:$0xff]
    %v7103 = vld [vmem:[#allocation18 + $0xb8] sm:$0xff]
    %v7104 = vld [vmem:[#allocation18 + $0xc0] sm:$0xff]
    %v7105 = vld [vmem:[#allocation18 + $0xc8] sm:$0xff]
    %v7106 = vld [vmem:[#allocation18 + $0xd0] sm:$0xff]
    %v7107 = vld [vmem:[#allocation18 + $0xd8] sm:$0xff]
    %v7108 = vld [vmem:[#allocation18 + $0xe0] sm:$0xff]
    %v7109 = vld [vmem:[#allocation18 + $0xe8] sm:$0xff]
    %v7110 = vld [vmem:[#allocation18 + $0xf0] sm:$0xff]
    %v7111 = vld [vmem:[#allocation18 + $0xf8] sm:$0xff]
    %v7112 = vld [vmem:[#allocation18 + $0x100] sm:$0xff]
    %v7113 = vld [vmem:[#allocation18 + $0x108] sm:$0xff]
    %v7114 = vld [vmem:[#allocation18 + $0x110] sm:$0xff]
    %v7115 = vld [vmem:[#allocation18 + $0x118] sm:$0xff]
    %v7116 = vld [vmem:[#allocation18 + $0x120] sm:$0xff]
    %v7117 = vld [vmem:[#allocation18 + $0x128] sm:$0xff]
    %v7118 = vld [vmem:[#allocation18 + $0x130] sm:$0xff]
    %v7119 = vld [vmem:[#allocation18 + $0x138] sm:$0xff]
    %v7120 = vld [vmem:[#allocation18 + $0x140] sm:$0xff]
    %v7121 = vld [vmem:[#allocation18 + $0x148] sm:$0xff]
    %v7122 = vld [vmem:[#allocation18 + $0x150] sm:$0xff]
    %v7123 = vld [vmem:[#allocation18 + $0x158] sm:$0xff]
    %v7124 = vld [vmem:[#allocation18 + $0x160] sm:$0xff]
    %v7125 = vld [vmem:[#allocation18 + $0x168] sm:$0xff]
    %v7126 = vld [vmem:[#allocation18 + $0x170] sm:$0xff]
    %v7127 = vld [vmem:[#allocation18 + $0x178] sm:$0xff]
    %v7128 = vld [vmem:[%s16] sm:$0x7]
    %v7130 = vlaneseq
    %v7131 = vshrl.u32 %v7130, 7
    %v7132 = vsub.s32 0, %v7131
    %v7133 = vrot.slane %v7128, %v7132
    %v7134 = vlaneseq
    %v7135 = vshrl.u32 %v7134, 7
    %v7136 = vsub.s32 1, %v7135
    %v7137 = vrot.slane %v7128, %v7136
    %v7138 = vlaneseq
    %v7139 = vshrl.u32 %v7138, 7
    %v7140 = vsub.s32 2, %v7139
    %v7141 = vrot.slane %v7128, %v7140
    %7145 = vmatprep.subr.mxu0 %v7081
    %7146 = vmatpush1.msra.mxu0 %v7080
    %7147 = vmatprep.subr.mxu0 %v7084
    %7148 = vmatpush1.msra.mxu0 %v7083
    %7149 = vmatprep.subr.mxu0 %v7087
    %7150 = vmatpush1.msra.mxu0 %v7086
    %7151 = vmatprep.subr.mxu0 %v7090
    %7152 = vmatpush1.msra.mxu0 %v7089
    %7153 = vmatprep.subr.mxu0 %v7093
    %7154 = vmatpush1.msra.mxu0 %v7092
    %7155 = vmatprep.subr.mxu0 %v7096
    %7156 = vmatpush1.msra.mxu0 %v7095
    %7157 = vmatprep.subr.mxu0 %v7099
    %7158 = vmatpush1.msra.mxu0 %v7098
    %7159 = vmatprep.subr.mxu0 %v7102
    %7160 = vmatpush1.msra.mxu0 %v7101
    %7161 = vmatprep.subr.mxu0 %v7105
    %7162 = vmatpush1.msra.mxu0 %v7104
    %7163 = vmatprep.subr.mxu0 %v7108
    %7164 = vmatpush1.msra.mxu0 %v7107
    %7165 = vmatprep.subr.mxu0 %v7111
    %7166 = vmatpush1.msra.mxu0 %v7110
    %7167 = vmatprep.subr.mxu0 %v7114
    %7168 = vmatpush1.msra.mxu0 %v7113
    %7169 = vmatprep.subr.mxu0 %v7117
    %7170 = vmatpush1.msra.mxu0 %v7116
    %7171 = vmatprep.subr.mxu0 %v7120
    %7172 = vmatpush1.msra.mxu0 %v7119
    %7173 = vmatprep.subr.mxu0 %v7123
    %7174 = vmatpush1.msra.mxu0 %v7122
    %7175 = vmatprep.subr.mxu0 %v7126
    %7176 = vmatpush1.msra.mxu0 %v7125
    %7177 = vmatprep.subr.mxu0 0.0
    %7178 = vmatpush1.msra.mxu0 0.0
    %7179 = vmatprep.subr.mxu0 0.0
    %7180 = vmatpush1.msra.mxu0 0.0
    %7181 = vmatprep.subr.mxu0 0.0
    %7182 = vmatpush1.msra.mxu0 0.0
    %7183 = vmatprep.subr.mxu0 0.0
    %7184 = vmatpush1.msra.mxu0 0.0
    %7185 = vmatprep.subr.mxu0 0.0
    %7186 = vmatpush1.msra.mxu0 0.0
    %7187 = vmatprep.subr.mxu0 0.0
    %7188 = vmatpush1.msra.mxu0 0.0
    %7189 = vmatprep.subr.mxu0 0.0
    %7190 = vmatpush1.msra.mxu0 0.0
    %7191 = vmatprep.subr.mxu0 0.0
    %7192 = vmatpush1.msra.mxu0 0.0
    %7193 = vmatprep.subr.mxu0 0.0
    %7194 = vmatpush1.msra.mxu0 0.0
    %7195 = vmatprep.subr.mxu0 0.0
    %7196 = vmatpush1.msra.mxu0 0.0
    %7197 = vmatprep.subr.mxu0 0.0
    %7198 = vmatpush1.msra.mxu0 0.0
    %7199 = vmatprep.subr.mxu0 0.0
    %7200 = vmatpush1.msra.mxu0 0.0
    %7201 = vmatprep.subr.mxu0 0.0
    %7202 = vmatpush1.msra.mxu0 0.0
    %7203 = vmatprep.subr.mxu0 0.0
    %7204 = vmatpush1.msra.mxu0 0.0
    %7205 = vmatprep.subr.mxu0 0.0
    %7206 = vmatpush1.msra.mxu0 0.0
    %7207 = vmatprep.subr.mxu0 0.0
    %7208 = vmatpush1.msra.mxu0 0.0
    %7209 = vmatprep.mubr.f32.mxu0 0.0
    %7210 = vmatmul.mubr.f32.gmra.mrb[0].mxu0 %v7079
    %v7211 = vpop.f32.mrb[0].mxu0
    %v7212 = vadd.f32 %v7133, %v7211
    %v7213 = vpop.f32.mrb[0].mxu0
    %v7214 = vadd.f32 %v7137, %v7213
    %7215 = vdwg.mxu0
    %7216 = vmatprep.subr.mxu0 0.0
    %7217 = vmatpush1.msra.mxu0 %v7082
    %7218 = vmatprep.subr.mxu0 0.0
    %7219 = vmatpush1.msra.mxu0 %v7085
    %7220 = vmatprep.subr.mxu0 0.0
    %7221 = vmatpush1.msra.mxu0 %v7088
    %7222 = vmatprep.subr.mxu0 0.0
    %7223 = vmatpush1.msra.mxu0 %v7091
    %7224 = vmatprep.subr.mxu0 0.0
    %7225 = vmatpush1.msra.mxu0 %v7094
    %7226 = vmatprep.subr.mxu0 0.0
    %7227 = vmatpush1.msra.mxu0 %v7097
    %7228 = vmatprep.subr.mxu0 0.0
    %7229 = vmatpush1.msra.mxu0 %v7100
    %7230 = vmatprep.subr.mxu0 0.0
    %7231 = vmatpush1.msra.mxu0 %v7103
    %7232 = vmatprep.subr.mxu0 0.0
    %7233 = vmatpush1.msra.mxu0 %v7106
    %7234 = vmatprep.subr.mxu0 0.0
    %7235 = vmatpush1.msra.mxu0 %v7109
    %7236 = vmatprep.subr.mxu0 0.0
    %7237 = vmatpush1.msra.mxu0 %v7112
    %7238 = vmatprep.subr.mxu0 0.0
    %7239 = vmatpush1.msra.mxu0 %v7115
    %7240 = vmatprep.subr.mxu0 0.0
    %7241 = vmatpush1.msra.mxu0 %v7118
    %7242 = vmatprep.subr.mxu0 0.0
    %7243 = vmatpush1.msra.mxu0 %v7121
    %7244 = vmatprep.subr.mxu0 0.0
    %7245 = vmatpush1.msra.mxu0 %v7124
    %7246 = vmatprep.subr.mxu0 0.0
    %7247 = vmatpush1.msra.mxu0 %v7127
    %7248 = vmatprep.subr.mxu0 0.0
    %7249 = vmatpush1.msra.mxu0 0.0
    %7250 = vmatprep.subr.mxu0 0.0
    %7251 = vmatpush1.msra.mxu0 0.0
    %7252 = vmatprep.subr.mxu0 0.0
    %7253 = vmatpush1.msra.mxu0 0.0
    %7254 = vmatprep.subr.mxu0 0.0
    %7255 = vmatpush1.msra.mxu0 0.0
    %7256 = vmatprep.subr.mxu0 0.0
    %7257 = vmatpush1.msra.mxu0 0.0
    %7258 = vmatprep.subr.mxu0 0.0
    %7259 = vmatpush1.msra.mxu0 0.0
    %7260 = vmatprep.subr.mxu0 0.0
    %7261 = vmatpush1.msra.mxu0 0.0
    %7262 = vmatprep.subr.mxu0 0.0
    %7263 = vmatpush1.msra.mxu0 0.0
    %7264 = vmatprep.subr.mxu0 0.0
    %7265 = vmatpush1.msra.mxu0 0.0
    %7266 = vmatprep.subr.mxu0 0.0
    %7267 = vmatpush1.msra.mxu0 0.0
    %7268 = vmatprep.subr.mxu0 0.0
    %7269 = vmatpush1.msra.mxu0 0.0
    %7270 = vmatprep.subr.mxu0 0.0
    %7271 = vmatpush1.msra.mxu0 0.0
    %7272 = vmatprep.subr.mxu0 0.0
    %7273 = vmatpush1.msra.mxu0 0.0
    %7274 = vmatprep.subr.mxu0 0.0
    %7275 = vmatpush1.msra.mxu0 0.0
    %7276 = vmatprep.subr.mxu0 0.0
    %7277 = vmatpush1.msra.mxu0 0.0
    %7278 = vmatprep.subr.mxu0 0.0
    %7279 = vmatpush1.msra.mxu0 0.0
    %7280 = vmatprep.mubr.f32.mxu0 0.0
    %7281 = vmatmul.mubr.f32.gmra.mrb[0].mxu0 %v7079
    %v7282 = vpop.f32.mrb[0].mxu0
    %v7283 = vadd.f32 %v7141, %v7282
    %v7284 = vpop.f32.mrb[0].mxu0
    %7285 = vdwg.mxu0
    %v7286 = vld [vmem:[#allocation20] sm:$0xff]
    %v7287 = vld [vmem:[#allocation20 + $0x8] sm:$0xff]
    %v7288 = vld [vmem:[#allocation20 + $0x10] sm:$0xff]
    %v7289 = vld [vmem:[#allocation20 + $0x18] sm:$0xff]
    %v7290 = vld [vmem:[#allocation20 + $0x20] sm:$0xff]
    %v7291 = vld [vmem:[#allocation20 + $0x28] sm:$0xff]
    %v7292 = vld [vmem:[#allocation20 + $0x30] sm:$0xff]
    %v7293 = vld [vmem:[#allocation20 + $0x38] sm:$0xff]
    %v7294 = vld [vmem:[#allocation20 + $0x40] sm:$0xff]
    %v7295 = vld [vmem:[#allocation20 + $0x48] sm:$0xff]
    %v7296 = vld [vmem:[#allocation20 + $0x50] sm:$0xff]
    %v7297 = vld [vmem:[#allocation20 + $0x58] sm:$0xff]
    %v7298 = vld [vmem:[#allocation20 + $0x60] sm:$0xff]
    %v7299 = vld [vmem:[#allocation20 + $0x68] sm:$0xff]
    %v7300 = vld [vmem:[#allocation20 + $0x70] sm:$0xff]
    %v7301 = vld [vmem:[#allocation20 + $0x78] sm:$0xff]
    %v7302 = vld [vmem:[#allocation20 + $0x80] sm:$0xff]
    %v7303 = vld [vmem:[#allocation20 + $0x88] sm:$0xff]
    %v7304 = vld [vmem:[#allocation20 + $0x90] sm:$0xff]
    %v7305 = vld [vmem:[#allocation20 + $0x98] sm:$0xff]
    %v7306 = vld [vmem:[#allocation20 + $0xa0] sm:$0xff]
    %v7307 = vld [vmem:[#allocation20 + $0xa8] sm:$0xff]
    %v7308 = vld [vmem:[#allocation20 + $0xb0] sm:$0xff]
    %v7309 = vld [vmem:[#allocation20 + $0xb8] sm:$0xff]
    %v7310 = vld [vmem:[#allocation20 + $0xc0] sm:$0xff]
    %v7311 = vld [vmem:[#allocation20 + $0xc8] sm:$0xff]
    %v7312 = vld [vmem:[#allocation20 + $0xd0] sm:$0xff]
    %v7313 = vld [vmem:[#allocation20 + $0xd8] sm:$0xff]
    %v7314 = vld [vmem:[#allocation20 + $0xe0] sm:$0xff]
    %v7315 = vld [vmem:[#allocation20 + $0xe8] sm:$0xff]
    %v7316 = vld [vmem:[#allocation20 + $0xf0] sm:$0xff]
    %v7317 = vld [vmem:[#allocation20 + $0xf8] sm:$0xff]
    %v7318 = vld [vmem:[#allocation20 + $0x100] sm:$0xff]
    %v7319 = vld [vmem:[#allocation20 + $0x108] sm:$0xff]
    %v7320 = vld [vmem:[#allocation20 + $0x110] sm:$0xff]
    %v7321 = vld [vmem:[#allocation20 + $0x118] sm:$0xff]
    %v7322 = vld [vmem:[#allocation20 + $0x120] sm:$0xff]
    %v7323 = vld [vmem:[#allocation20 + $0x128] sm:$0xff]
    %v7324 = vld [vmem:[#allocation20 + $0x130] sm:$0xff]
    %v7325 = vld [vmem:[#allocation20 + $0x138] sm:$0xff]
    %v7326 = vld [vmem:[#allocation20 + $0x140] sm:$0xff]
    %v7327 = vld [vmem:[#allocation20 + $0x148] sm:$0xff]
    %v7328 = vld [vmem:[#allocation20 + $0x150] sm:$0xff]
    %v7329 = vld [vmem:[#allocation20 + $0x158] sm:$0xff]
    %v7330 = vld [vmem:[#allocation20 + $0x160] sm:$0xff]
    %v7331 = vld [vmem:[#allocation20 + $0x168] sm:$0xff]
    %v7332 = vld [vmem:[#allocation20 + $0x170] sm:$0xff]
    %v7333 = vld [vmem:[#allocation20 + $0x178] sm:$0xff]
    %v7334 = vld [vmem:[%s17] sm:$0x7]
    %v7336 = vlaneseq
    %v7337 = vshrl.u32 %v7336, 7
    %v7338 = vsub.s32 0, %v7337
    %v7339 = vrot.slane %v7334, %v7338
    %v7340 = vlaneseq
    %v7341 = vshrl.u32 %v7340, 7
    %v7342 = vsub.s32 1, %v7341
    %v7343 = vrot.slane %v7334, %v7342
    %v7344 = vlaneseq
    %v7345 = vshrl.u32 %v7344, 7
    %v7346 = vsub.s32 2, %v7345
    %v7347 = vrot.slane %v7334, %v7346
    %7351 = vmatprep.subr.mxu0 %v7287
    %7352 = vmatpush1.msra.mxu0 %v7286
    %7353 = vmatprep.subr.mxu0 %v7290
    %7354 = vmatpush1.msra.mxu0 %v7289
    %7355 = vmatprep.subr.mxu0 %v7293
    %7356 = vmatpush1.msra.mxu0 %v7292
    %7357 = vmatprep.subr.mxu0 %v7296
    %7358 = vmatpush1.msra.mxu0 %v7295
    %7359 = vmatprep.subr.mxu0 %v7299
    %7360 = vmatpush1.msra.mxu0 %v7298
    %7361 = vmatprep.subr.mxu0 %v7302
    %7362 = vmatpush1.msra.mxu0 %v7301
    %7363 = vmatprep.subr.mxu0 %v7305
    %7364 = vmatpush1.msra.mxu0 %v7304
    %7365 = vmatprep.subr.mxu0 %v7308
    %7366 = vmatpush1.msra.mxu0 %v7307
    %7367 = vmatprep.subr.mxu0 %v7311
    %7368 = vmatpush1.msra.mxu0 %v7310
    %7369 = vmatprep.subr.mxu0 %v7314
    %7370 = vmatpush1.msra.mxu0 %v7313
    %7371 = vmatprep.subr.mxu0 %v7317
    %7372 = vmatpush1.msra.mxu0 %v7316
    %7373 = vmatprep.subr.mxu0 %v7320
    %7374 = vmatpush1.msra.mxu0 %v7319
    %7375 = vmatprep.subr.mxu0 %v7323
    %7376 = vmatpush1.msra.mxu0 %v7322
    %7377 = vmatprep.subr.mxu0 %v7326
    %7378 = vmatpush1.msra.mxu0 %v7325
    %7379 = vmatprep.subr.mxu0 %v7329
    %7380 = vmatpush1.msra.mxu0 %v7328
    %7381 = vmatprep.subr.mxu0 %v7332
    %7382 = vmatpush1.msra.mxu0 %v7331
    %7383 = vmatprep.subr.mxu0 0.0
    %7384 = vmatpush1.msra.mxu0 0.0
    %7385 = vmatprep.subr.mxu0 0.0
    %7386 = vmatpush1.msra.mxu0 0.0
    %7387 = vmatprep.subr.mxu0 0.0
    %7388 = vmatpush1.msra.mxu0 0.0
    %7389 = vmatprep.subr.mxu0 0.0
    %7390 = vmatpush1.msra.mxu0 0.0
    %7391 = vmatprep.subr.mxu0 0.0
    %7392 = vmatpush1.msra.mxu0 0.0
    %7393 = vmatprep.subr.mxu0 0.0
    %7394 = vmatpush1.msra.mxu0 0.0
    %7395 = vmatprep.subr.mxu0 0.0
    %7396 = vmatpush1.msra.mxu0 0.0
    %7397 = vmatprep.subr.mxu0 0.0
    %7398 = vmatpush1.msra.mxu0 0.0
    %7399 = vmatprep.subr.mxu0 0.0
    %7400 = vmatpush1.msra.mxu0 0.0
    %7401 = vmatprep.subr.mxu0 0.0
    %7402 = vmatpush1.msra.mxu0 0.0
    %7403 = vmatprep.subr.mxu0 0.0
    %7404 = vmatpush1.msra.mxu0 0.0
    %7405 = vmatprep.subr.mxu0 0.0
    %7406 = vmatpush1.msra.mxu0 0.0
    %7407 = vmatprep.subr.mxu0 0.0
    %7408 = vmatpush1.msra.mxu0 0.0
    %7409 = vmatprep.subr.mxu0 0.0
    %7410 = vmatpush1.msra.mxu0 0.0
    %7411 = vmatprep.subr.mxu0 0.0
    %7412 = vmatpush1.msra.mxu0 0.0
    %7413 = vmatprep.subr.mxu0 0.0
    %7414 = vmatpush1.msra.mxu0 0.0
    %7415 = vmatprep.mubr.f32.mxu0 0.0
    %7416 = vmatmul.mubr.f32.gmra.mrb[0].mxu0 %v6162
    %v7417 = vpop.f32.mrb[0].mxu0
    %v7418 = vadd.f32 %v7339, %v7417
    %v7419 = vpop.f32.mrb[0].mxu0
    %v7420 = vadd.f32 %v7343, %v7419
    %7421 = vdwg.mxu0
    %7422 = vmatprep.subr.mxu0 0.0
    %7423 = vmatpush1.msra.mxu0 %v7288
    %7424 = vmatprep.subr.mxu0 0.0
    %7425 = vmatpush1.msra.mxu0 %v7291
    %7426 = vmatprep.subr.mxu0 0.0
    %7427 = vmatpush1.msra.mxu0 %v7294
    %7428 = vmatprep.subr.mxu0 0.0
    %7429 = vmatpush1.msra.mxu0 %v7297
    %7430 = vmatprep.subr.mxu0 0.0
    %7431 = vmatpush1.msra.mxu0 %v7300
    %7432 = vmatprep.subr.mxu0 0.0
    %7433 = vmatpush1.msra.mxu0 %v7303
    %7434 = vmatprep.subr.mxu0 0.0
    %7435 = vmatpush1.msra.mxu0 %v7306
    %7436 = vmatprep.subr.mxu0 0.0
    %7437 = vmatpush1.msra.mxu0 %v7309
    %7438 = vmatprep.subr.mxu0 0.0
    %7439 = vmatpush1.msra.mxu0 %v7312
    %7440 = vmatprep.subr.mxu0 0.0
    %7441 = vmatpush1.msra.mxu0 %v7315
    %7442 = vmatprep.subr.mxu0 0.0
    %7443 = vmatpush1.msra.mxu0 %v7318
    %7444 = vmatprep.subr.mxu0 0.0
    %7445 = vmatpush1.msra.mxu0 %v7321
    %7446 = vmatprep.subr.mxu0 0.0
    %7447 = vmatpush1.msra.mxu0 %v7324
    %7448 = vmatprep.subr.mxu0 0.0
    %7449 = vmatpush1.msra.mxu0 %v7327
    %7450 = vmatprep.subr.mxu0 0.0
    %7451 = vmatpush1.msra.mxu0 %v7330
    %7452 = vmatprep.subr.mxu0 0.0
    %7453 = vmatpush1.msra.mxu0 %v7333
    %7454 = vmatprep.subr.mxu0 0.0
    %7455 = vmatpush1.msra.mxu0 0.0
    %7456 = vmatprep.subr.mxu0 0.0
    %7457 = vmatpush1.msra.mxu0 0.0
    %7458 = vmatprep.subr.mxu0 0.0
    %7459 = vmatpush1.msra.mxu0 0.0
    %7460 = vmatprep.subr.mxu0 0.0
    %7461 = vmatpush1.msra.mxu0 0.0
    %7462 = vmatprep.subr.mxu0 0.0
    %7463 = vmatpush1.msra.mxu0 0.0
    %7464 = vmatprep.subr.mxu0 0.0
    %7465 = vmatpush1.msra.mxu0 0.0
    %7466 = vmatprep.subr.mxu0 0.0
    %7467 = vmatpush1.msra.mxu0 0.0
    %7468 = vmatprep.subr.mxu0 0.0
    %7469 = vmatpush1.msra.mxu0 0.0
    %7470 = vmatprep.subr.mxu0 0.0
    %7471 = vmatpush1.msra.mxu0 0.0
    %7472 = vmatprep.subr.mxu0 0.0
    %7473 = vmatpush1.msra.mxu0 0.0
    %7474 = vmatprep.subr.mxu0 0.0
    %7475 = vmatpush1.msra.mxu0 0.0
    %7476 = vmatprep.subr.mxu0 0.0
    %7477 = vmatpush1.msra.mxu0 0.0
    %7478 = vmatprep.subr.mxu0 0.0
    %7479 = vmatpush1.msra.mxu0 0.0
    %7480 = vmatprep.subr.mxu0 0.0
    %7481 = vmatpush1.msra.mxu0 0.0
    %7482 = vmatprep.subr.mxu0 0.0
    %7483 = vmatpush1.msra.mxu0 0.0
    %7484 = vmatprep.subr.mxu0 0.0
    %7485 = vmatpush1.msra.mxu0 0.0
    %7486 = vmatprep.mubr.f32.mxu0 0.0
    %7487 = vmatmul.mubr.f32.gmra.mrb[0].mxu0 %v6162
    %v7488 = vpop.f32.mrb[0].mxu0
    %v7489 = vadd.f32 %v7347, %v7488
    %v7490 = vpop.f32.mrb[0].mxu0
    %7491 = vdwg.mxu0
    %v7492 = vadd.f32 %v7212, %v7418
    %v7493 = vxor.u32 %v7492, 2147483648
    %v7494 = vmul.f32 %v7493, 1.442695
    %v7495 = vpow.pop %v7494
    %v7496 = vadd.f32 %v7495, 1.0
    %v7497 = vrcp.pop %v7496
    %v7498 = vmul.f32 1.0, %v7497
    %v7499 = vadd.f32 %v7214, %v7420
    %v7500 = vxor.u32 %v7499, 2147483648
    %v7501 = vmul.f32 %v7500, 1.442695
    %v7502 = vpow.pop %v7501
    %v7503 = vadd.f32 %v7502, 1.0
    %v7504 = vrcp.pop %v7503
    %v7505 = vmul.f32 1.0, %v7504
    %v7506 = vmul.f32 %v7498, %v7489
    %v7507 = vadd.f32 %v7283, %v7506
    %v7508 = vtanh.pop %v7507
    %v7509 = vsub.f32 1.0, %v7505
    %v7510 = vmul.f32 %v7509, %v7508
    %v7511 = vmul.f32 %v7505, %v6162
    %v7512 = vadd.f32 %v7510, %v7511
    %v7515 = vunpack.c.l.s4 1966171168
    %v7516 = vunpack.c.0.s8 %v7515
    %v7517 = vlaneseq
    %v7518 = vshrl.u32 %v7517, 7
    %v7519 = vsub.s32 %v7516, %v7518
    %v7520 = vrot.slane %v7512, %v7519
    %v7521 = vcombine.high %v7520, %v7520
    %v7523 = vunpack.c.l.s4 1966171168
    %v7524 = vunpack.c.0.s8 %v7523
    %v7525 = vlaneseq
    %v7526 = vshrl.u32 %v7525, 7
    %v7527 = vsub.s32 %v7524, %v7526
    %v7528 = vrot.slane %v7520, %v7527
    %v7530 = vunpack.c.l.s4 1966171168
    %v7531 = vunpack.c.0.s8 %v7530
    %v7532 = vlaneseq
    %v7533 = vshrl.u32 %v7532, 7
    %v7534 = vsub.s32 %v7531, %v7533
    %v7535 = vrot.slane %v7521, %v7534
    %7538 = vmatprep.subr.mxu0 0.0
    %7539 = vmatpush1.xpose.msra.mxu0 %v1281
    %7540 = vmatprep.subr.mxu0 0.0
    %7541 = vmatpush1.xpose.msra.mxu0 0.0
    %7542 = vmatprep.subr.mxu0 0.0
    %7543 = vmatpush1.xpose.msra.mxu0 0.0
    %7544 = vmatprep.subr.mxu0 0.0
    %7545 = vmatpush1.xpose.msra.mxu0 0.0
    %7546 = vmatprep.subr.mxu0 0.0
    %7547 = vmatpush1.xpose.msra.mxu0 0.0
    %7548 = vmatprep.subr.mxu0 0.0
    %7549 = vmatpush1.xpose.msra.mxu0 0.0
    %7550 = vmatprep.subr.mxu0 0.0
    %7551 = vmatpush1.xpose.msra.mxu0 0.0
    %7552 = vmatprep.subr.mxu0 0.0
    %7553 = vmatpush1.xpose.msra.mxu0 0.0
    %7554 = vmatprep.subr.mxu0 0.0
    %7555 = vmatpush1.xpose.msra.mxu0 0.0
    %7556 = vmatprep.subr.mxu0 0.0
    %7557 = vmatpush1.xpose.msra.mxu0 0.0
    %7558 = vmatprep.subr.mxu0 0.0
    %7559 = vmatpush1.xpose.msra.mxu0 0.0
    %7560 = vmatprep.subr.mxu0 0.0
    %7561 = vmatpush1.xpose.msra.mxu0 0.0
    %7562 = vmatprep.subr.mxu0 0.0
    %7563 = vmatpush1.xpose.msra.mxu0 0.0
    %7564 = vmatprep.subr.mxu0 0.0
    %7565 = vmatpush1.xpose.msra.mxu0 0.0
    %7566 = vmatprep.subr.mxu0 0.0
    %7567 = vmatpush1.xpose.msra.mxu0 0.0
    %7568 = vmatprep.subr.mxu0 0.0
    %7569 = vmatpush1.xpose.msra.mxu0 0.0
    %7570 = vmatprep.subr.mxu0 0.0
    %7571 = vmatpush1.xpose.msra.mxu0 0.0
    %7572 = vmatprep.subr.mxu0 0.0
    %7573 = vmatpush1.xpose.msra.mxu0 0.0
    %7574 = vmatprep.subr.mxu0 0.0
    %7575 = vmatpush1.xpose.msra.mxu0 0.0
    %7576 = vmatprep.subr.mxu0 0.0
    %7577 = vmatpush1.xpose.msra.mxu0 0.0
    %7578 = vmatprep.subr.mxu0 0.0
    %7579 = vmatpush1.xpose.msra.mxu0 0.0
    %7580 = vmatprep.subr.mxu0 0.0
    %7581 = vmatpush1.xpose.msra.mxu0 0.0
    %7582 = vmatprep.subr.mxu0 0.0
    %7583 = vmatpush1.xpose.msra.mxu0 0.0
    %7584 = vmatprep.subr.mxu0 0.0
    %7585 = vmatpush1.xpose.msra.mxu0 0.0
    %7586 = vmatprep.subr.mxu0 0.0
    %7587 = vmatpush1.xpose.msra.mxu0 0.0
    %7588 = vmatprep.subr.mxu0 0.0
    %7589 = vmatpush1.xpose.msra.mxu0 0.0
    %7590 = vmatprep.subr.mxu0 0.0
    %7591 = vmatpush1.xpose.msra.mxu0 0.0
    %7592 = vmatprep.subr.mxu0 0.0
    %7593 = vmatpush1.xpose.msra.mxu0 0.0
    %7594 = vmatprep.subr.mxu0 0.0
    %7595 = vmatpush1.xpose.msra.mxu0 0.0
    %7596 = vmatprep.subr.mxu0 0.0
    %7597 = vmatpush1.xpose.msra.mxu0 0.0
    %7598 = vmatprep.subr.mxu0 0.0
    %7599 = vmatpush1.xpose.msra.mxu0 0.0
    %7600 = vmatprep.subr.mxu0 0.0
    %7601 = vmatpush1.xpose.msra.mxu0 0.0
    %7602 = vmatprep.mubr.f32.mxu0 0.0
    %7603 = vmatmul.mubr.f32.gmra.mrb[0].mxu0 %v7528
    %v7604 = vpop.f32.mrb[0].mxu0
    %v7605 = vadd.f32 0.0, %v7604
    %v7606 = vpop.f32.mrb[0].mxu0
    %7607 = vdwg.mxu0
    %7608 = vmatprep.subr.mxu0 0.0
    %7609 = vmatpush1.xpose.msra.mxu0 %v1282
    %7610 = vmatprep.subr.mxu0 0.0
    %7611 = vmatpush1.xpose.msra.mxu0 0.0
    %7612 = vmatprep.subr.mxu0 0.0
    %7613 = vmatpush1.xpose.msra.mxu0 0.0
    %7614 = vmatprep.subr.mxu0 0.0
    %7615 = vmatpush1.xpose.msra.mxu0 0.0
    %7616 = vmatprep.subr.mxu0 0.0
    %7617 = vmatpush1.xpose.msra.mxu0 0.0
    %7618 = vmatprep.subr.mxu0 0.0
    %7619 = vmatpush1.xpose.msra.mxu0 0.0
    %7620 = vmatprep.subr.mxu0 0.0
    %7621 = vmatpush1.xpose.msra.mxu0 0.0
    %7622 = vmatprep.subr.mxu0 0.0
    %7623 = vmatpush1.xpose.msra.mxu0 0.0
    %7624 = vmatprep.subr.mxu0 0.0
    %7625 = vmatpush1.xpose.msra.mxu0 0.0
    %7626 = vmatprep.subr.mxu0 0.0
    %7627 = vmatpush1.xpose.msra.mxu0 0.0
    %7628 = vmatprep.subr.mxu0 0.0
    %7629 = vmatpush1.xpose.msra.mxu0 0.0
    %7630 = vmatprep.subr.mxu0 0.0
    %7631 = vmatpush1.xpose.msra.mxu0 0.0
    %7632 = vmatprep.subr.mxu0 0.0
    %7633 = vmatpush1.xpose.msra.mxu0 0.0
    %7634 = vmatprep.subr.mxu0 0.0
    %7635 = vmatpush1.xpose.msra.mxu0 0.0
    %7636 = vmatprep.subr.mxu0 0.0
    %7637 = vmatpush1.xpose.msra.mxu0 0.0
    %7638 = vmatprep.subr.mxu0 0.0
    %7639 = vmatpush1.xpose.msra.mxu0 0.0
    %7640 = vmatprep.subr.mxu0 0.0
    %7641 = vmatpush1.xpose.msra.mxu0 0.0
    %7642 = vmatprep.subr.mxu0 0.0
    %7643 = vmatpush1.xpose.msra.mxu0 0.0
    %7644 = vmatprep.subr.mxu0 0.0
    %7645 = vmatpush1.xpose.msra.mxu0 0.0
    %7646 = vmatprep.subr.mxu0 0.0
    %7647 = vmatpush1.xpose.msra.mxu0 0.0
    %7648 = vmatprep.subr.mxu0 0.0
    %7649 = vmatpush1.xpose.msra.mxu0 0.0
    %7650 = vmatprep.subr.mxu0 0.0
    %7651 = vmatpush1.xpose.msra.mxu0 0.0
    %7652 = vmatprep.subr.mxu0 0.0
    %7653 = vmatpush1.xpose.msra.mxu0 0.0
    %7654 = vmatprep.subr.mxu0 0.0
    %7655 = vmatpush1.xpose.msra.mxu0 0.0
    %7656 = vmatprep.subr.mxu0 0.0
    %7657 = vmatpush1.xpose.msra.mxu0 0.0
    %7658 = vmatprep.subr.mxu0 0.0
    %7659 = vmatpush1.xpose.msra.mxu0 0.0
    %7660 = vmatprep.subr.mxu0 0.0
    %7661 = vmatpush1.xpose.msra.mxu0 0.0
    %7662 = vmatprep.subr.mxu0 0.0
    %7663 = vmatpush1.xpose.msra.mxu0 0.0
    %7664 = vmatprep.subr.mxu0 0.0
    %7665 = vmatpush1.xpose.msra.mxu0 0.0
    %7666 = vmatprep.subr.mxu0 0.0
    %7667 = vmatpush1.xpose.msra.mxu0 0.0
    %7668 = vmatprep.subr.mxu0 0.0
    %7669 = vmatpush1.xpose.msra.mxu0 0.0
    %7670 = vmatprep.subr.mxu0 0.0
    %7671 = vmatpush1.xpose.msra.mxu0 0.0
    %7672 = vmatprep.mubr.f32.mxu0 0.0
    %7673 = vmatmul.mubr.f32.gmra.mrb[0].mxu0 %v7535
    %v7674 = vpop.f32.mrb[0].mxu0
    %v7675 = vadd.f32 0.0, %v7674
    %v7676 = vpop.f32.mrb[0].mxu0
    %7677 = vdwg.mxu0
    %v7678 = vsel %vm2277, %v7605, -inf
    %7679 = vmax.xlane.f32.xlu0 %v7678
    %v7680 = vpop.xlane.xlu0 %7679
    %v7681 = vsel %vm2277, %v7675, -inf
    %7682 = vmax.xlane.f32.xlu0 %v7681
    %v7683 = vpop.xlane.xlu0 %7682
    %v7684 = vsub.f32 %v7605, %v7680
    %v7685 = vsub.f32 %v7675, %v7683
    %v7686 = vmul.f32 %v7684, 1.442695
    %v7687 = vpow.pop %v7686
    %v7688 = vmul.f32 %v7685, 1.442695
    %v7689 = vpow.pop %v7688
    %v7690 = vsel %vm2277, %v7687, 0.0
    %7691 = vadd.xlane.f32.xlu0 %v7690
    %v7692 = vpop.xlane.xlu0 %7691
    %v7693 = vsel %vm2277, %v7689, 0.0
    %7694 = vadd.xlane.f32.xlu0 %v7693
    %v7695 = vpop.xlane.xlu0 %7694
    %v7696 = vrcp.pop %v7692
    %v7697 = vrcp.pop %v7695
    %v7698 = vmul.f32 %v7687, %v7696
    %v7699 = vmul.f32 %v7689, %v7697
    %v7701 = vsel %vm2300, %v7698, 0
    %7703 = vmatprep.subr.mxu0 0.0
    %7704 = vmatpush1.msra.mxu0 %v1281
    %7705 = vmatprep.subr.mxu0 0.0
    %7706 = vmatpush1.msra.mxu0 0.0
    %7707 = vmatprep.subr.mxu0 0.0
    %7708 = vmatpush1.msra.mxu0 0.0
    %7709 = vmatprep.subr.mxu0 0.0
    %7710 = vmatpush1.msra.mxu0 0.0
    %7711 = vmatprep.subr.mxu0 0.0
    %7712 = vmatpush1.msra.mxu0 0.0
    %7713 = vmatprep.subr.mxu0 0.0
    %7714 = vmatpush1.msra.mxu0 0.0
    %7715 = vmatprep.subr.mxu0 0.0
    %7716 = vmatpush1.msra.mxu0 0.0
    %7717 = vmatprep.subr.mxu0 0.0
    %7718 = vmatpush1.msra.mxu0 0.0
    %7719 = vmatprep.subr.mxu0 0.0
    %7720 = vmatpush1.msra.mxu0 0.0
    %7721 = vmatprep.subr.mxu0 0.0
    %7722 = vmatpush1.msra.mxu0 0.0
    %7723 = vmatprep.subr.mxu0 0.0
    %7724 = vmatpush1.msra.mxu0 0.0
    %7725 = vmatprep.subr.mxu0 0.0
    %7726 = vmatpush1.msra.mxu0 0.0
    %7727 = vmatprep.subr.mxu0 0.0
    %7728 = vmatpush1.msra.mxu0 0.0
    %7729 = vmatprep.subr.mxu0 0.0
    %7730 = vmatpush1.msra.mxu0 0.0
    %7731 = vmatprep.subr.mxu0 0.0
    %7732 = vmatpush1.msra.mxu0 0.0
    %7733 = vmatprep.subr.mxu0 0.0
    %7734 = vmatpush1.msra.mxu0 0.0
    %7735 = vmatprep.subr.mxu0 0.0
    %7736 = vmatpush1.msra.mxu0 0.0
    %7737 = vmatprep.subr.mxu0 0.0
    %7738 = vmatpush1.msra.mxu0 0.0
    %7739 = vmatprep.subr.mxu0 0.0
    %7740 = vmatpush1.msra.mxu0 0.0
    %7741 = vmatprep.subr.mxu0 0.0
    %7742 = vmatpush1.msra.mxu0 0.0
    %7743 = vmatprep.subr.mxu0 0.0
    %7744 = vmatpush1.msra.mxu0 0.0
    %7745 = vmatprep.subr.mxu0 0.0
    %7746 = vmatpush1.msra.mxu0 0.0
    %7747 = vmatprep.subr.mxu0 0.0
    %7748 = vmatpush1.msra.mxu0 0.0
    %7749 = vmatprep.subr.mxu0 0.0
    %7750 = vmatpush1.msra.mxu0 0.0
    %7751 = vmatprep.subr.mxu0 0.0
    %7752 = vmatpush1.msra.mxu0 0.0
    %7753 = vmatprep.subr.mxu0 0.0
    %7754 = vmatpush1.msra.mxu0 0.0
    %7755 = vmatprep.subr.mxu0 0.0
    %7756 = vmatpush1.msra.mxu0 0.0
    %7757 = vmatprep.subr.mxu0 0.0
    %7758 = vmatpush1.msra.mxu0 0.0
    %7759 = vmatprep.subr.mxu0 0.0
    %7760 = vmatpush1.msra.mxu0 0.0
    %7761 = vmatprep.subr.mxu0 0.0
    %7762 = vmatpush1.msra.mxu0 0.0
    %7763 = vmatprep.subr.mxu0 0.0
    %7764 = vmatpush1.msra.mxu0 0.0
    %7765 = vmatprep.subr.mxu0 0.0
    %7766 = vmatpush1.msra.mxu0 0.0
    %7767 = vmatprep.mubr.f32.mxu0 0.0
    %7768 = vmatmul.mubr.f32.gmra.mrb[0].mxu0 %v7701
    %v7769 = vpop.f32.mrb[0].mxu0
    %v7770 = vadd.f32 0.0, %v7769
    %v7771 = vpop.f32.mrb[0].mxu0
    %7772 = vdwg.mxu0
    %v7774 = vsel %vm2300, %v7699, 0
    %7776 = vmatprep.subr.mxu0 0.0
    %7777 = vmatpush1.msra.mxu0 %v1282
    %7778 = vmatprep.subr.mxu0 0.0
    %7779 = vmatpush1.msra.mxu0 0.0
    %7780 = vmatprep.subr.mxu0 0.0
    %7781 = vmatpush1.msra.mxu0 0.0
    %7782 = vmatprep.subr.mxu0 0.0
    %7783 = vmatpush1.msra.mxu0 0.0
    %7784 = vmatprep.subr.mxu0 0.0
    %7785 = vmatpush1.msra.mxu0 0.0
    %7786 = vmatprep.subr.mxu0 0.0
    %7787 = vmatpush1.msra.mxu0 0.0
    %7788 = vmatprep.subr.mxu0 0.0
    %7789 = vmatpush1.msra.mxu0 0.0
    %7790 = vmatprep.subr.mxu0 0.0
    %7791 = vmatpush1.msra.mxu0 0.0
    %7792 = vmatprep.subr.mxu0 0.0
    %7793 = vmatpush1.msra.mxu0 0.0
    %7794 = vmatprep.subr.mxu0 0.0
    %7795 = vmatpush1.msra.mxu0 0.0
    %7796 = vmatprep.subr.mxu0 0.0
    %7797 = vmatpush1.msra.mxu0 0.0
    %7798 = vmatprep.subr.mxu0 0.0
    %7799 = vmatpush1.msra.mxu0 0.0
    %7800 = vmatprep.subr.mxu0 0.0
    %7801 = vmatpush1.msra.mxu0 0.0
    %7802 = vmatprep.subr.mxu0 0.0
    %7803 = vmatpush1.msra.mxu0 0.0
    %7804 = vmatprep.subr.mxu0 0.0
    %7805 = vmatpush1.msra.mxu0 0.0
    %7806 = vmatprep.subr.mxu0 0.0
    %7807 = vmatpush1.msra.mxu0 0.0
    %7808 = vmatprep.subr.mxu0 0.0
    %7809 = vmatpush1.msra.mxu0 0.0
    %7810 = vmatprep.subr.mxu0 0.0
    %7811 = vmatpush1.msra.mxu0 0.0
    %7812 = vmatprep.subr.mxu0 0.0
    %7813 = vmatpush1.msra.mxu0 0.0
    %7814 = vmatprep.subr.mxu0 0.0
    %7815 = vmatpush1.msra.mxu0 0.0
    %7816 = vmatprep.subr.mxu0 0.0
    %7817 = vmatpush1.msra.mxu0 0.0
    %7818 = vmatprep.subr.mxu0 0.0
    %7819 = vmatpush1.msra.mxu0 0.0
    %7820 = vmatprep.subr.mxu0 0.0
    %7821 = vmatpush1.msra.mxu0 0.0
    %7822 = vmatprep.subr.mxu0 0.0
    %7823 = vmatpush1.msra.mxu0 0.0
    %7824 = vmatprep.subr.mxu0 0.0
    %7825 = vmatpush1.msra.mxu0 0.0
    %7826 = vmatprep.subr.mxu0 0.0
    %7827 = vmatpush1.msra.mxu0 0.0
    %7828 = vmatprep.subr.mxu0 0.0
    %7829 = vmatpush1.msra.mxu0 0.0
    %7830 = vmatprep.subr.mxu0 0.0
    %7831 = vmatpush1.msra.mxu0 0.0
    %7832 = vmatprep.subr.mxu0 0.0
    %7833 = vmatpush1.msra.mxu0 0.0
    %7834 = vmatprep.subr.mxu0 0.0
    %7835 = vmatpush1.msra.mxu0 0.0
    %7836 = vmatprep.subr.mxu0 0.0
    %7837 = vmatpush1.msra.mxu0 0.0
    %7838 = vmatprep.subr.mxu0 0.0
    %7839 = vmatpush1.msra.mxu0 0.0
    %7840 = vmatprep.mubr.f32.mxu0 0.0
    %7841 = vmatmul.mubr.f32.gmra.mrb[0].mxu0 %v7774
    %v7842 = vpop.f32.mrb[0].mxu0
    %v7843 = vadd.f32 0.0, %v7842
    %v7844 = vpop.f32.mrb[0].mxu0
    %7845 = vdwg.mxu0
    %v7846 = vld [vmem:[#allocation21] sm:$0xff]
    %v7847 = vld [vmem:[#allocation21 + $0x8] sm:$0xff]
    %v7848 = vld [vmem:[#allocation21 + $0x10] sm:$0xff]
    %v7849 = vld [vmem:[#allocation21 + $0x18] sm:$0xff]
    %v7850 = vld [vmem:[#allocation21 + $0x20] sm:$0xff]
    %v7851 = vld [vmem:[#allocation21 + $0x28] sm:$0xff]
    %v7852 = vld [vmem:[#allocation21 + $0x30] sm:$0xff]
    %v7853 = vld [vmem:[#allocation21 + $0x38] sm:$0xff]
    %v7854 = vld [vmem:[#allocation21 + $0x40] sm:$0xff]
    %v7855 = vld [vmem:[#allocation21 + $0x48] sm:$0xff]
    %v7856 = vld [vmem:[#allocation21 + $0x50] sm:$0xff]
    %v7857 = vld [vmem:[#allocation21 + $0x58] sm:$0xff]
    %v7858 = vld [vmem:[#allocation21 + $0x60] sm:$0xff]
    %v7859 = vld [vmem:[#allocation21 + $0x68] sm:$0xff]
    %v7860 = vld [vmem:[#allocation21 + $0x70] sm:$0xff]
    %v7861 = vld [vmem:[#allocation21 + $0x78] sm:$0xff]
    %v7862 = vld [vmem:[#allocation23] sm:$0xff]
    %v7863 = vld [vmem:[#allocation23 + $0x8] sm:$0xff]
    %v7864 = vld [vmem:[#allocation23 + $0x10] sm:$0xff]
    %v7865 = vld [vmem:[#allocation23 + $0x18] sm:$0xff]
    %v7866 = vld [vmem:[#allocation23 + $0x20] sm:$0xff]
    %v7867 = vld [vmem:[#allocation23 + $0x28] sm:$0xff]
    %v7868 = vld [vmem:[#allocation23 + $0x30] sm:$0xff]
    %v7869 = vld [vmem:[#allocation23 + $0x38] sm:$0xff]
    %v7870 = vld [vmem:[#allocation23 + $0x40] sm:$0xff]
    %v7871 = vld [vmem:[#allocation23 + $0x48] sm:$0xff]
    %v7872 = vld [vmem:[#allocation23 + $0x50] sm:$0xff]
    %v7873 = vld [vmem:[#allocation23 + $0x58] sm:$0xff]
    %v7874 = vld [vmem:[#allocation23 + $0x60] sm:$0xff]
    %v7875 = vld [vmem:[#allocation23 + $0x68] sm:$0xff]
    %v7876 = vld [vmem:[#allocation23 + $0x70] sm:$0xff]
    %v7877 = vld [vmem:[#allocation23 + $0x78] sm:$0xff]
    %7878 = vmatprep.subr.mxu0 0.0
    %7879 = vmatpush1.msra.mxu0 %v7862
    %7880 = vmatprep.subr.mxu0 0.0
    %7881 = vmatpush1.msra.mxu0 %v7863
    %7882 = vmatprep.subr.mxu0 0.0
    %7883 = vmatpush1.msra.mxu0 %v7864
    %7884 = vmatprep.subr.mxu0 0.0
    %7885 = vmatpush1.msra.mxu0 %v7865
    %7886 = vmatprep.subr.mxu0 0.0
    %7887 = vmatpush1.msra.mxu0 %v7866
    %7888 = vmatprep.subr.mxu0 0.0
    %7889 = vmatpush1.msra.mxu0 %v7867
    %7890 = vmatprep.subr.mxu0 0.0
    %7891 = vmatpush1.msra.mxu0 %v7868
    %7892 = vmatprep.subr.mxu0 0.0
    %7893 = vmatpush1.msra.mxu0 %v7869
    %7894 = vmatprep.subr.mxu0 0.0
    %7895 = vmatpush1.msra.mxu0 %v7870
    %7896 = vmatprep.subr.mxu0 0.0
    %7897 = vmatpush1.msra.mxu0 %v7871
    %7898 = vmatprep.subr.mxu0 0.0
    %7899 = vmatpush1.msra.mxu0 %v7872
    %7900 = vmatprep.subr.mxu0 0.0
    %7901 = vmatpush1.msra.mxu0 %v7873
    %7902 = vmatprep.subr.mxu0 0.0
    %7903 = vmatpush1.msra.mxu0 %v7874
    %7904 = vmatprep.subr.mxu0 0.0
    %7905 = vmatpush1.msra.mxu0 %v7875
    %7906 = vmatprep.subr.mxu0 0.0
    %7907 = vmatpush1.msra.mxu0 %v7876
    %7908 = vmatprep.subr.mxu0 0.0
    %7909 = vmatpush1.msra.mxu0 %v7877
    %7910 = vmatprep.subr.mxu0 0.0
    %7911 = vmatpush1.msra.mxu0 0.0
    %7912 = vmatprep.subr.mxu0 0.0
    %7913 = vmatpush1.msra.mxu0 0.0
    %7914 = vmatprep.subr.mxu0 0.0
    %7915 = vmatpush1.msra.mxu0 0.0
    %7916 = vmatprep.subr.mxu0 0.0
    %7917 = vmatpush1.msra.mxu0 0.0
    %7918 = vmatprep.subr.mxu0 0.0
    %7919 = vmatpush1.msra.mxu0 0.0
    %7920 = vmatprep.subr.mxu0 0.0
    %7921 = vmatpush1.msra.mxu0 0.0
    %7922 = vmatprep.subr.mxu0 0.0
    %7923 = vmatpush1.msra.mxu0 0.0
    %7924 = vmatprep.subr.mxu0 0.0
    %7925 = vmatpush1.msra.mxu0 0.0
    %7926 = vmatprep.subr.mxu0 0.0
    %7927 = vmatpush1.msra.mxu0 0.0
    %7928 = vmatprep.subr.mxu0 0.0
    %7929 = vmatpush1.msra.mxu0 0.0
    %7930 = vmatprep.subr.mxu0 0.0
    %7931 = vmatpush1.msra.mxu0 0.0
    %7932 = vmatprep.subr.mxu0 0.0
    %7933 = vmatpush1.msra.mxu0 0.0
    %7934 = vmatprep.subr.mxu0 0.0
    %7935 = vmatpush1.msra.mxu0 0.0
    %7936 = vmatprep.subr.mxu0 0.0
    %7937 = vmatpush1.msra.mxu0 0.0
    %7938 = vmatprep.subr.mxu0 0.0
    %7939 = vmatpush1.msra.mxu0 0.0
    %7940 = vmatprep.subr.mxu0 0.0
    %7941 = vmatpush1.msra.mxu0 0.0
    %7942 = vmatprep.mubr.f32.mxu0 0.0
    %7943 = vmatmul.mubr.f32.gmra.mrb[0].mxu0 %v7512
    %v7944 = vpop.f32.mrb[0].mxu0
    %v7945 = vadd.f32 0.0, %v7944
    %v7946 = vpop.f32.mrb[0].mxu0
    %7947 = vdwg.mxu0
    %v7950 = vrot.slane %v7843, 7
    %v7951 = vsel %vm695, %v7950, %v7770
    %7953 = vmatprep.subr.mxu0 0.0
    %7954 = vmatpush1.msra.mxu0 %v7846
    %7955 = vmatprep.subr.mxu0 0.0
    %7956 = vmatpush1.msra.mxu0 %v7847
    %7957 = vmatprep.subr.mxu0 0.0
    %7958 = vmatpush1.msra.mxu0 %v7848
    %7959 = vmatprep.subr.mxu0 0.0
    %7960 = vmatpush1.msra.mxu0 %v7849
    %7961 = vmatprep.subr.mxu0 0.0
    %7962 = vmatpush1.msra.mxu0 %v7850
    %7963 = vmatprep.subr.mxu0 0.0
    %7964 = vmatpush1.msra.mxu0 %v7851
    %7965 = vmatprep.subr.mxu0 0.0
    %7966 = vmatpush1.msra.mxu0 %v7852
    %7967 = vmatprep.subr.mxu0 0.0
    %7968 = vmatpush1.msra.mxu0 %v7853
    %7969 = vmatprep.subr.mxu0 0.0
    %7970 = vmatpush1.msra.mxu0 %v7854
    %7971 = vmatprep.subr.mxu0 0.0
    %7972 = vmatpush1.msra.mxu0 %v7855
    %7973 = vmatprep.subr.mxu0 0.0
    %7974 = vmatpush1.msra.mxu0 %v7856
    %7975 = vmatprep.subr.mxu0 0.0
    %7976 = vmatpush1.msra.mxu0 %v7857
    %7977 = vmatprep.subr.mxu0 0.0
    %7978 = vmatpush1.msra.mxu0 %v7858
    %7979 = vmatprep.subr.mxu0 0.0
    %7980 = vmatpush1.msra.mxu0 %v7859
    %7981 = vmatprep.subr.mxu0 0.0
    %7982 = vmatpush1.msra.mxu0 %v7860
    %7983 = vmatprep.subr.mxu0 0.0
    %7984 = vmatpush1.msra.mxu0 %v7861
    %7985 = vmatprep.subr.mxu0 0.0
    %7986 = vmatpush1.msra.mxu0 0.0
    %7987 = vmatprep.subr.mxu0 0.0
    %7988 = vmatpush1.msra.mxu0 0.0
    %7989 = vmatprep.subr.mxu0 0.0
    %7990 = vmatpush1.msra.mxu0 0.0
    %7991 = vmatprep.subr.mxu0 0.0
    %7992 = vmatpush1.msra.mxu0 0.0
    %7993 = vmatprep.subr.mxu0 0.0
    %7994 = vmatpush1.msra.mxu0 0.0
    %7995 = vmatprep.subr.mxu0 0.0
    %7996 = vmatpush1.msra.mxu0 0.0
    %7997 = vmatprep.subr.mxu0 0.0
    %7998 = vmatpush1.msra.mxu0 0.0
    %7999 = vmatprep.subr.mxu0 0.0
    %8000 = vmatpush1.msra.mxu0 0.0
    %8001 = vmatprep.subr.mxu0 0.0
    %8002 = vmatpush1.msra.mxu0 0.0
    %8003 = vmatprep.subr.mxu0 0.0
    %8004 = vmatpush1.msra.mxu0 0.0
    %8005 = vmatprep.subr.mxu0 0.0
    %8006 = vmatpush1.msra.mxu0 0.0
    %8007 = vmatprep.subr.mxu0 0.0
    %8008 = vmatpush1.msra.mxu0 0.0
    %8009 = vmatprep.subr.mxu0 0.0
    %8010 = vmatpush1.msra.mxu0 0.0
    %8011 = vmatprep.subr.mxu0 0.0
    %8012 = vmatpush1.msra.mxu0 0.0
    %8013 = vmatprep.subr.mxu0 0.0
    %8014 = vmatpush1.msra.mxu0 0.0
    %8015 = vmatprep.subr.mxu0 0.0
    %8016 = vmatpush1.msra.mxu0 0.0
    %8017 = vmatprep.mubr.f32.mxu0 0.0
    %8018 = vmatmul.mubr.f32.gmra.mrb[0].mxu0 %v7951
    %v8019 = vpop.f32.mrb[0].mxu0
    %v8020 = vadd.f32 %v7945, %v8019
    %v8021 = vpop.f32.mrb[0].mxu0
    %8022 = vdwg.mxu0
    %v8023 = vld [vmem:[%s20] sm:$0x1]
    %v8025 = vlaneseq
    %v8026 = vshrl.u32 %v8025, 7
    %v8027 = vsub.s32 0, %v8026
    %v8028 = vrot.slane %v8023, %v8027
    %v8030 = vadd.f32 %v8020, %v8028
    %v8031 = vtanh.pop %v8030
    %s8032 = scalar_lea.vmem [#allocation24], 8
    %8033 = vst [vmem:[%s8032] sm:$0x3] %v8031
    %s8034 = scalar_lea.vmem [#allocation3], 10
    %v8035 = vld [vmem:[%s8034] sm:$0x3]
    %v8036 = vld [vmem:[#allocation15] sm:$0xff]
    %v8037 = vld [vmem:[#allocation15 + $0x8] sm:$0xff]
    %v8038 = vld [vmem:[#allocation15 + $0x10] sm:$0xff]
    %v8039 = vld [vmem:[#allocation15 + $0x18] sm:$0xff]
    %v8040 = vld [vmem:[#allocation15 + $0x20] sm:$0xff]
    %v8041 = vld [vmem:[#allocation15 + $0x28] sm:$0xff]
    %v8042 = vld [vmem:[%s12] sm:$0x7]
    %v8044 = vlaneseq
    %v8045 = vshrl.u32 %v8044, 7
    %v8046 = vsub.s32 0, %v8045
    %v8047 = vrot.slane %v8042, %v8046
    %v8048 = vlaneseq
    %v8049 = vshrl.u32 %v8048, 7
    %v8050 = vsub.s32 1, %v8049
    %v8051 = vrot.slane %v8042, %v8050
    %v8052 = vlaneseq
    %v8053 = vshrl.u32 %v8052, 7
    %v8054 = vsub.s32 2, %v8053
    %v8055 = vrot.slane %v8042, %v8054
    %v8060 = vsel %vm1307, %v8035, 0
    %8062 = vmatprep.subr.mxu0 %v8037
    %8063 = vmatpush1.msra.mxu0 %v8036
    %8064 = vmatprep.subr.mxu0 %v8040
    %8065 = vmatpush1.msra.mxu0 %v8039
    %8066 = vmatprep.subr.mxu0 0.0
    %8067 = vmatpush1.msra.mxu0 0.0
    %8068 = vmatprep.subr.mxu0 0.0
    %8069 = vmatpush1.msra.mxu0 0.0
    %8070 = vmatprep.subr.mxu0 0.0
    %8071 = vmatpush1.msra.mxu0 0.0
    %8072 = vmatprep.subr.mxu0 0.0
    %8073 = vmatpush1.msra.mxu0 0.0
    %8074 = vmatprep.subr.mxu0 0.0
    %8075 = vmatpush1.msra.mxu0 0.0
    %8076 = vmatprep.subr.mxu0 0.0
    %8077 = vmatpush1.msra.mxu0 0.0
    %8078 = vmatprep.subr.mxu0 0.0
    %8079 = vmatpush1.msra.mxu0 0.0
    %8080 = vmatprep.subr.mxu0 0.0
    %8081 = vmatpush1.msra.mxu0 0.0
    %8082 = vmatprep.subr.mxu0 0.0
    %8083 = vmatpush1.msra.mxu0 0.0
    %8084 = vmatprep.subr.mxu0 0.0
    %8085 = vmatpush1.msra.mxu0 0.0
    %8086 = vmatprep.subr.mxu0 0.0
    %8087 = vmatpush1.msra.mxu0 0.0
    %8088 = vmatprep.subr.mxu0 0.0
    %8089 = vmatpush1.msra.mxu0 0.0
    %8090 = vmatprep.subr.mxu0 0.0
    %8091 = vmatpush1.msra.mxu0 0.0
    %8092 = vmatprep.subr.mxu0 0.0
    %8093 = vmatpush1.msra.mxu0 0.0
    %8094 = vmatprep.subr.mxu0 0.0
    %8095 = vmatpush1.msra.mxu0 0.0
    %8096 = vmatprep.subr.mxu0 0.0
    %8097 = vmatpush1.msra.mxu0 0.0
    %8098 = vmatprep.subr.mxu0 0.0
    %8099 = vmatpush1.msra.mxu0 0.0
    %8100 = vmatprep.subr.mxu0 0.0
    %8101 = vmatpush1.msra.mxu0 0.0
    %8102 = vmatprep.subr.mxu0 0.0
    %8103 = vmatpush1.msra.mxu0 0.0
    %8104 = vmatprep.subr.mxu0 0.0
    %8105 = vmatpush1.msra.mxu0 0.0
    %8106 = vmatprep.subr.mxu0 0.0
    %8107 = vmatpush1.msra.mxu0 0.0
    %8108 = vmatprep.subr.mxu0 0.0
    %8109 = vmatpush1.msra.mxu0 0.0
    %8110 = vmatprep.subr.mxu0 0.0
    %8111 = vmatpush1.msra.mxu0 0.0
    %8112 = vmatprep.subr.mxu0 0.0
    %8113 = vmatpush1.msra.mxu0 0.0
    %8114 = vmatprep.subr.mxu0 0.0
    %8115 = vmatpush1.msra.mxu0 0.0
    %8116 = vmatprep.subr.mxu0 0.0
    %8117 = vmatpush1.msra.mxu0 0.0
    %8118 = vmatprep.subr.mxu0 0.0
    %8119 = vmatpush1.msra.mxu0 0.0
    %8120 = vmatprep.subr.mxu0 0.0
    %8121 = vmatpush1.msra.mxu0 0.0
    %8122 = vmatprep.subr.mxu0 0.0
    %8123 = vmatpush1.msra.mxu0 0.0
    %8124 = vmatprep.subr.mxu0 0.0
    %8125 = vmatpush1.msra.mxu0 0.0
    %8126 = vmatprep.mubr.f32.mxu0 0.0
    %8127 = vmatmul.mubr.f32.gmra.mrb[0].mxu0 %v8060
    %v8128 = vpop.f32.mrb[0].mxu0
    %v8129 = vadd.f32 %v8047, %v8128
    %v8130 = vpop.f32.mrb[0].mxu0
    %v8131 = vadd.f32 %v8051, %v8130
    %8132 = vdwg.mxu0
    %8133 = vmatprep.subr.mxu0 0.0
    %8134 = vmatpush1.msra.mxu0 %v8038
    %8135 = vmatprep.subr.mxu0 0.0
    %8136 = vmatpush1.msra.mxu0 %v8041
    %8137 = vmatprep.subr.mxu0 0.0
    %8138 = vmatpush1.msra.mxu0 0.0
    %8139 = vmatprep.subr.mxu0 0.0
    %8140 = vmatpush1.msra.mxu0 0.0
    %8141 = vmatprep.subr.mxu0 0.0
    %8142 = vmatpush1.msra.mxu0 0.0
    %8143 = vmatprep.subr.mxu0 0.0
    %8144 = vmatpush1.msra.mxu0 0.0
    %8145 = vmatprep.subr.mxu0 0.0
    %8146 = vmatpush1.msra.mxu0 0.0
    %8147 = vmatprep.subr.mxu0 0.0
    %8148 = vmatpush1.msra.mxu0 0.0
    %8149 = vmatprep.subr.mxu0 0.0
    %8150 = vmatpush1.msra.mxu0 0.0
    %8151 = vmatprep.subr.mxu0 0.0
    %8152 = vmatpush1.msra.mxu0 0.0
    %8153 = vmatprep.subr.mxu0 0.0
    %8154 = vmatpush1.msra.mxu0 0.0
    %8155 = vmatprep.subr.mxu0 0.0
    %8156 = vmatpush1.msra.mxu0 0.0
    %8157 = vmatprep.subr.mxu0 0.0
    %8158 = vmatpush1.msra.mxu0 0.0
    %8159 = vmatprep.subr.mxu0 0.0
    %8160 = vmatpush1.msra.mxu0 0.0
    %8161 = vmatprep.subr.mxu0 0.0
    %8162 = vmatpush1.msra.mxu0 0.0
    %8163 = vmatprep.subr.mxu0 0.0
    %8164 = vmatpush1.msra.mxu0 0.0
    %8165 = vmatprep.subr.mxu0 0.0
    %8166 = vmatpush1.msra.mxu0 0.0
    %8167 = vmatprep.subr.mxu0 0.0
    %8168 = vmatpush1.msra.mxu0 0.0
    %8169 = vmatprep.subr.mxu0 0.0
    %8170 = vmatpush1.msra.mxu0 0.0
    %8171 = vmatprep.subr.mxu0 0.0
    %8172 = vmatpush1.msra.mxu0 0.0
    %8173 = vmatprep.subr.mxu0 0.0
    %8174 = vmatpush1.msra.mxu0 0.0
    %8175 = vmatprep.subr.mxu0 0.0
    %8176 = vmatpush1.msra.mxu0 0.0
    %8177 = vmatprep.subr.mxu0 0.0
    %8178 = vmatpush1.msra.mxu0 0.0
    %8179 = vmatprep.subr.mxu0 0.0
    %8180 = vmatpush1.msra.mxu0 0.0
    %8181 = vmatprep.subr.mxu0 0.0
    %8182 = vmatpush1.msra.mxu0 0.0
    %8183 = vmatprep.subr.mxu0 0.0
    %8184 = vmatpush1.msra.mxu0 0.0
    %8185 = vmatprep.subr.mxu0 0.0
    %8186 = vmatpush1.msra.mxu0 0.0
    %8187 = vmatprep.subr.mxu0 0.0
    %8188 = vmatpush1.msra.mxu0 0.0
    %8189 = vmatprep.subr.mxu0 0.0
    %8190 = vmatpush1.msra.mxu0 0.0
    %8191 = vmatprep.subr.mxu0 0.0
    %8192 = vmatpush1.msra.mxu0 0.0
    %8193 = vmatprep.subr.mxu0 0.0
    %8194 = vmatpush1.msra.mxu0 0.0
    %8195 = vmatprep.subr.mxu0 0.0
    %8196 = vmatpush1.msra.mxu0 0.0
    %8197 = vmatprep.mubr.f32.mxu0 0.0
    %8198 = vmatmul.mubr.f32.gmra.mrb[0].mxu0 %v8060
    %v8199 = vpop.f32.mrb[0].mxu0
    %v8200 = vadd.f32 %v8055, %v8199
    %v8201 = vpop.f32.mrb[0].mxu0
    %8202 = vdwg.mxu0
    %v8203 = vld [vmem:[#allocation17] sm:$0xff]
    %v8204 = vld [vmem:[#allocation17 + $0x8] sm:$0xff]
    %v8205 = vld [vmem:[#allocation17 + $0x10] sm:$0xff]
    %v8206 = vld [vmem:[#allocation17 + $0x18] sm:$0xff]
    %v8207 = vld [vmem:[#allocation17 + $0x20] sm:$0xff]
    %v8208 = vld [vmem:[#allocation17 + $0x28] sm:$0xff]
    %v8209 = vld [vmem:[#allocation17 + $0x30] sm:$0xff]
    %v8210 = vld [vmem:[#allocation17 + $0x38] sm:$0xff]
    %v8211 = vld [vmem:[#allocation17 + $0x40] sm:$0xff]
    %v8212 = vld [vmem:[#allocation17 + $0x48] sm:$0xff]
    %v8213 = vld [vmem:[#allocation17 + $0x50] sm:$0xff]
    %v8214 = vld [vmem:[#allocation17 + $0x58] sm:$0xff]
    %v8215 = vld [vmem:[#allocation17 + $0x60] sm:$0xff]
    %v8216 = vld [vmem:[#allocation17 + $0x68] sm:$0xff]
    %v8217 = vld [vmem:[#allocation17 + $0x70] sm:$0xff]
    %v8218 = vld [vmem:[#allocation17 + $0x78] sm:$0xff]
    %v8219 = vld [vmem:[#allocation17 + $0x80] sm:$0xff]
    %v8220 = vld [vmem:[#allocation17 + $0x88] sm:$0xff]
    %v8221 = vld [vmem:[#allocation17 + $0x90] sm:$0xff]
    %v8222 = vld [vmem:[#allocation17 + $0x98] sm:$0xff]
    %v8223 = vld [vmem:[#allocation17 + $0xa0] sm:$0xff]
    %v8224 = vld [vmem:[#allocation17 + $0xa8] sm:$0xff]
    %v8225 = vld [vmem:[#allocation17 + $0xb0] sm:$0xff]
    %v8226 = vld [vmem:[#allocation17 + $0xb8] sm:$0xff]
    %v8227 = vld [vmem:[#allocation17 + $0xc0] sm:$0xff]
    %v8228 = vld [vmem:[#allocation17 + $0xc8] sm:$0xff]
    %v8229 = vld [vmem:[#allocation17 + $0xd0] sm:$0xff]
    %v8230 = vld [vmem:[#allocation17 + $0xd8] sm:$0xff]
    %v8231 = vld [vmem:[#allocation17 + $0xe0] sm:$0xff]
    %v8232 = vld [vmem:[#allocation17 + $0xe8] sm:$0xff]
    %v8233 = vld [vmem:[#allocation17 + $0xf0] sm:$0xff]
    %v8234 = vld [vmem:[#allocation17 + $0xf8] sm:$0xff]
    %v8235 = vld [vmem:[#allocation17 + $0x100] sm:$0xff]
    %v8236 = vld [vmem:[#allocation17 + $0x108] sm:$0xff]
    %v8237 = vld [vmem:[#allocation17 + $0x110] sm:$0xff]
    %v8238 = vld [vmem:[#allocation17 + $0x118] sm:$0xff]
    %v8239 = vld [vmem:[#allocation17 + $0x120] sm:$0xff]
    %v8240 = vld [vmem:[#allocation17 + $0x128] sm:$0xff]
    %v8241 = vld [vmem:[#allocation17 + $0x130] sm:$0xff]
    %v8242 = vld [vmem:[#allocation17 + $0x138] sm:$0xff]
    %v8243 = vld [vmem:[#allocation17 + $0x140] sm:$0xff]
    %v8244 = vld [vmem:[#allocation17 + $0x148] sm:$0xff]
    %v8245 = vld [vmem:[#allocation17 + $0x150] sm:$0xff]
    %v8246 = vld [vmem:[#allocation17 + $0x158] sm:$0xff]
    %v8247 = vld [vmem:[#allocation17 + $0x160] sm:$0xff]
    %v8248 = vld [vmem:[#allocation17 + $0x168] sm:$0xff]
    %v8249 = vld [vmem:[#allocation17 + $0x170] sm:$0xff]
    %v8250 = vld [vmem:[#allocation17 + $0x178] sm:$0xff]
    %v8251 = vld [vmem:[%s13] sm:$0x7]
    %v8253 = vlaneseq
    %v8254 = vshrl.u32 %v8253, 7
    %v8255 = vsub.s32 0, %v8254
    %v8256 = vrot.slane %v8251, %v8255
    %v8257 = vlaneseq
    %v8258 = vshrl.u32 %v8257, 7
    %v8259 = vsub.s32 1, %v8258
    %v8260 = vrot.slane %v8251, %v8259
    %v8261 = vlaneseq
    %v8262 = vshrl.u32 %v8261, 7
    %v8263 = vsub.s32 2, %v8262
    %v8264 = vrot.slane %v8251, %v8263
    %8268 = vmatprep.subr.mxu0 %v8204
    %8269 = vmatpush1.msra.mxu0 %v8203
    %8270 = vmatprep.subr.mxu0 %v8207
    %8271 = vmatpush1.msra.mxu0 %v8206
    %8272 = vmatprep.subr.mxu0 %v8210
    %8273 = vmatpush1.msra.mxu0 %v8209
    %8274 = vmatprep.subr.mxu0 %v8213
    %8275 = vmatpush1.msra.mxu0 %v8212
    %8276 = vmatprep.subr.mxu0 %v8216
    %8277 = vmatpush1.msra.mxu0 %v8215
    %8278 = vmatprep.subr.mxu0 %v8219
    %8279 = vmatpush1.msra.mxu0 %v8218
    %8280 = vmatprep.subr.mxu0 %v8222
    %8281 = vmatpush1.msra.mxu0 %v8221
    %8282 = vmatprep.subr.mxu0 %v8225
    %8283 = vmatpush1.msra.mxu0 %v8224
    %8284 = vmatprep.subr.mxu0 %v8228
    %8285 = vmatpush1.msra.mxu0 %v8227
    %8286 = vmatprep.subr.mxu0 %v8231
    %8287 = vmatpush1.msra.mxu0 %v8230
    %8288 = vmatprep.subr.mxu0 %v8234
    %8289 = vmatpush1.msra.mxu0 %v8233
    %8290 = vmatprep.subr.mxu0 %v8237
    %8291 = vmatpush1.msra.mxu0 %v8236
    %8292 = vmatprep.subr.mxu0 %v8240
    %8293 = vmatpush1.msra.mxu0 %v8239
    %8294 = vmatprep.subr.mxu0 %v8243
    %8295 = vmatpush1.msra.mxu0 %v8242
    %8296 = vmatprep.subr.mxu0 %v8246
    %8297 = vmatpush1.msra.mxu0 %v8245
    %8298 = vmatprep.subr.mxu0 %v8249
    %8299 = vmatpush1.msra.mxu0 %v8248
    %8300 = vmatprep.subr.mxu0 0.0
    %8301 = vmatpush1.msra.mxu0 0.0
    %8302 = vmatprep.subr.mxu0 0.0
    %8303 = vmatpush1.msra.mxu0 0.0
    %8304 = vmatprep.subr.mxu0 0.0
    %8305 = vmatpush1.msra.mxu0 0.0
    %8306 = vmatprep.subr.mxu0 0.0
    %8307 = vmatpush1.msra.mxu0 0.0
    %8308 = vmatprep.subr.mxu0 0.0
    %8309 = vmatpush1.msra.mxu0 0.0
    %8310 = vmatprep.subr.mxu0 0.0
    %8311 = vmatpush1.msra.mxu0 0.0
    %8312 = vmatprep.subr.mxu0 0.0
    %8313 = vmatpush1.msra.mxu0 0.0
    %8314 = vmatprep.subr.mxu0 0.0
    %8315 = vmatpush1.msra.mxu0 0.0
    %8316 = vmatprep.subr.mxu0 0.0
    %8317 = vmatpush1.msra.mxu0 0.0
    %8318 = vmatprep.subr.mxu0 0.0
    %8319 = vmatpush1.msra.mxu0 0.0
    %8320 = vmatprep.subr.mxu0 0.0
    %8321 = vmatpush1.msra.mxu0 0.0
    %8322 = vmatprep.subr.mxu0 0.0
    %8323 = vmatpush1.msra.mxu0 0.0
    %8324 = vmatprep.subr.mxu0 0.0
    %8325 = vmatpush1.msra.mxu0 0.0
    %8326 = vmatprep.subr.mxu0 0.0
    %8327 = vmatpush1.msra.mxu0 0.0
    %8328 = vmatprep.subr.mxu0 0.0
    %8329 = vmatpush1.msra.mxu0 0.0
    %8330 = vmatprep.subr.mxu0 0.0
    %8331 = vmatpush1.msra.mxu0 0.0
    %8332 = vmatprep.mubr.f32.mxu0 0.0
    %8333 = vmatmul.mubr.f32.gmra.mrb[0].mxu0 %v7079
    %v8334 = vpop.f32.mrb[0].mxu0
    %v8335 = vadd.f32 %v8256, %v8334
    %v8336 = vpop.f32.mrb[0].mxu0
    %v8337 = vadd.f32 %v8260, %v8336
    %8338 = vdwg.mxu0
    %8339 = vmatprep.subr.mxu0 0.0
    %8340 = vmatpush1.msra.mxu0 %v8205
    %8341 = vmatprep.subr.mxu0 0.0
    %8342 = vmatpush1.msra.mxu0 %v8208
    %8343 = vmatprep.subr.mxu0 0.0
    %8344 = vmatpush1.msra.mxu0 %v8211
    %8345 = vmatprep.subr.mxu0 0.0
    %8346 = vmatpush1.msra.mxu0 %v8214
    %8347 = vmatprep.subr.mxu0 0.0
    %8348 = vmatpush1.msra.mxu0 %v8217
    %8349 = vmatprep.subr.mxu0 0.0
    %8350 = vmatpush1.msra.mxu0 %v8220
    %8351 = vmatprep.subr.mxu0 0.0
    %8352 = vmatpush1.msra.mxu0 %v8223
    %8353 = vmatprep.subr.mxu0 0.0
    %8354 = vmatpush1.msra.mxu0 %v8226
    %8355 = vmatprep.subr.mxu0 0.0
    %8356 = vmatpush1.msra.mxu0 %v8229
    %8357 = vmatprep.subr.mxu0 0.0
    %8358 = vmatpush1.msra.mxu0 %v8232
    %8359 = vmatprep.subr.mxu0 0.0
    %8360 = vmatpush1.msra.mxu0 %v8235
    %8361 = vmatprep.subr.mxu0 0.0
    %8362 = vmatpush1.msra.mxu0 %v8238
    %8363 = vmatprep.subr.mxu0 0.0
    %8364 = vmatpush1.msra.mxu0 %v8241
    %8365 = vmatprep.subr.mxu0 0.0
    %8366 = vmatpush1.msra.mxu0 %v8244
    %8367 = vmatprep.subr.mxu0 0.0
    %8368 = vmatpush1.msra.mxu0 %v8247
    %8369 = vmatprep.subr.mxu0 0.0
    %8370 = vmatpush1.msra.mxu0 %v8250
    %8371 = vmatprep.subr.mxu0 0.0
    %8372 = vmatpush1.msra.mxu0 0.0
    %8373 = vmatprep.subr.mxu0 0.0
    %8374 = vmatpush1.msra.mxu0 0.0
    %8375 = vmatprep.subr.mxu0 0.0
    %8376 = vmatpush1.msra.mxu0 0.0
    %8377 = vmatprep.subr.mxu0 0.0
    %8378 = vmatpush1.msra.mxu0 0.0
    %8379 = vmatprep.subr.mxu0 0.0
    %8380 = vmatpush1.msra.mxu0 0.0
    %8381 = vmatprep.subr.mxu0 0.0
    %8382 = vmatpush1.msra.mxu0 0.0
    %8383 = vmatprep.subr.mxu0 0.0
    %8384 = vmatpush1.msra.mxu0 0.0
    %8385 = vmatprep.subr.mxu0 0.0
    %8386 = vmatpush1.msra.mxu0 0.0
    %8387 = vmatprep.subr.mxu0 0.0
    %8388 = vmatpush1.msra.mxu0 0.0
    %8389 = vmatprep.subr.mxu0 0.0
    %8390 = vmatpush1.msra.mxu0 0.0
    %8391 = vmatprep.subr.mxu0 0.0
    %8392 = vmatpush1.msra.mxu0 0.0
    %8393 = vmatprep.subr.mxu0 0.0
    %8394 = vmatpush1.msra.mxu0 0.0
    %8395 = vmatprep.subr.mxu0 0.0
    %8396 = vmatpush1.msra.mxu0 0.0
    %8397 = vmatprep.subr.mxu0 0.0
    %8398 = vmatpush1.msra.mxu0 0.0
    %8399 = vmatprep.subr.mxu0 0.0
    %8400 = vmatpush1.msra.mxu0 0.0
    %8401 = vmatprep.subr.mxu0 0.0
    %8402 = vmatpush1.msra.mxu0 0.0
    %8403 = vmatprep.mubr.f32.mxu0 0.0
    %8404 = vmatmul.mubr.f32.gmra.mrb[0].mxu0 %v7079
    %v8405 = vpop.f32.mrb[0].mxu0
    %v8406 = vadd.f32 %v8264, %v8405
    %v8407 = vpop.f32.mrb[0].mxu0
    %8408 = vdwg.mxu0
    %v8409 = vadd.f32 %v8129, %v8335
    %v8410 = vxor.u32 %v8409, 2147483648
    %v8411 = vmul.f32 %v8410, 1.442695
    %v8412 = vpow.pop %v8411
    %v8413 = vadd.f32 %v8412, 1.0
    %v8414 = vrcp.pop %v8413
    %v8415 = vmul.f32 1.0, %v8414
    %v8416 = vadd.f32 %v8131, %v8337
    %v8417 = vxor.u32 %v8416, 2147483648
    %v8418 = vmul.f32 %v8417, 1.442695
    %v8419 = vpow.pop %v8418
    %v8420 = vadd.f32 %v8419, 1.0
    %v8421 = vrcp.pop %v8420
    %v8422 = vmul.f32 1.0, %v8421
    %v8423 = vmul.f32 %v8415, %v8406
    %v8424 = vadd.f32 %v8200, %v8423
    %v8425 = vtanh.pop %v8424
    %v8426 = vsub.f32 1.0, %v8422
    %v8427 = vmul.f32 %v8426, %v8425
    %v8428 = vmul.f32 %v8422, %v7079
    %v8429 = vadd.f32 %v8427, %v8428
    %v8430 = vld [vmem:[#allocation18] sm:$0xff]
    %v8431 = vld [vmem:[#allocation18 + $0x8] sm:$0xff]
    %v8432 = vld [vmem:[#allocation18 + $0x10] sm:$0xff]
    %v8433 = vld [vmem:[#allocation18 + $0x18] sm:$0xff]
    %v8434 = vld [vmem:[#allocation18 + $0x20] sm:$0xff]
    %v8435 = vld [vmem:[#allocation18 + $0x28] sm:$0xff]
    %v8436 = vld [vmem:[#allocation18 + $0x30] sm:$0xff]
    %v8437 = vld [vmem:[#allocation18 + $0x38] sm:$0xff]
    %v8438 = vld [vmem:[#allocation18 + $0x40] sm:$0xff]
    %v8439 = vld [vmem:[#allocation18 + $0x48] sm:$0xff]
    %v8440 = vld [vmem:[#allocation18 + $0x50] sm:$0xff]
    %v8441 = vld [vmem:[#allocation18 + $0x58] sm:$0xff]
    %v8442 = vld [vmem:[#allocation18 + $0x60] sm:$0xff]
    %v8443 = vld [vmem:[#allocation18 + $0x68] sm:$0xff]
    %v8444 = vld [vmem:[#allocation18 + $0x70] sm:$0xff]
    %v8445 = vld [vmem:[#allocation18 + $0x78] sm:$0xff]
    %v8446 = vld [vmem:[#allocation18 + $0x80] sm:$0xff]
    %v8447 = vld [vmem:[#allocation18 + $0x88] sm:$0xff]
    %v8448 = vld [vmem:[#allocation18 + $0x90] sm:$0xff]
    %v8449 = vld [vmem:[#allocation18 + $0x98] sm:$0xff]
    %v8450 = vld [vmem:[#allocation18 + $0xa0] sm:$0xff]
    %v8451 = vld [vmem:[#allocation18 + $0xa8] sm:$0xff]
    %v8452 = vld [vmem:[#allocation18 + $0xb0] sm:$0xff]
    %v8453 = vld [vmem:[#allocation18 + $0xb8] sm:$0xff]
    %v8454 = vld [vmem:[#allocation18 + $0xc0] sm:$0xff]
    %v8455 = vld [vmem:[#allocation18 + $0xc8] sm:$0xff]
    %v8456 = vld [vmem:[#allocation18 + $0xd0] sm:$0xff]
    %v8457 = vld [vmem:[#allocation18 + $0xd8] sm:$0xff]
    %v8458 = vld [vmem:[#allocation18 + $0xe0] sm:$0xff]
    %v8459 = vld [vmem:[#allocation18 + $0xe8] sm:$0xff]
    %v8460 = vld [vmem:[#allocation18 + $0xf0] sm:$0xff]
    %v8461 = vld [vmem:[#allocation18 + $0xf8] sm:$0xff]
    %v8462 = vld [vmem:[#allocation18 + $0x100] sm:$0xff]
    %v8463 = vld [vmem:[#allocation18 + $0x108] sm:$0xff]
    %v8464 = vld [vmem:[#allocation18 + $0x110] sm:$0xff]
    %v8465 = vld [vmem:[#allocation18 + $0x118] sm:$0xff]
    %v8466 = vld [vmem:[#allocation18 + $0x120] sm:$0xff]
    %v8467 = vld [vmem:[#allocation18 + $0x128] sm:$0xff]
    %v8468 = vld [vmem:[#allocation18 + $0x130] sm:$0xff]
    %v8469 = vld [vmem:[#allocation18 + $0x138] sm:$0xff]
    %v8470 = vld [vmem:[#allocation18 + $0x140] sm:$0xff]
    %v8471 = vld [vmem:[#allocation18 + $0x148] sm:$0xff]
    %v8472 = vld [vmem:[#allocation18 + $0x150] sm:$0xff]
    %v8473 = vld [vmem:[#allocation18 + $0x158] sm:$0xff]
    %v8474 = vld [vmem:[#allocation18 + $0x160] sm:$0xff]
    %v8475 = vld [vmem:[#allocation18 + $0x168] sm:$0xff]
    %v8476 = vld [vmem:[#allocation18 + $0x170] sm:$0xff]
    %v8477 = vld [vmem:[#allocation18 + $0x178] sm:$0xff]
    %v8478 = vld [vmem:[%s16] sm:$0x7]
    %v8480 = vlaneseq
    %v8481 = vshrl.u32 %v8480, 7
    %v8482 = vsub.s32 0, %v8481
    %v8483 = vrot.slane %v8478, %v8482
    %v8484 = vlaneseq
    %v8485 = vshrl.u32 %v8484, 7
    %v8486 = vsub.s32 1, %v8485
    %v8487 = vrot.slane %v8478, %v8486
    %v8488 = vlaneseq
    %v8489 = vshrl.u32 %v8488, 7
    %v8490 = vsub.s32 2, %v8489
    %v8491 = vrot.slane %v8478, %v8490
    %8495 = vmatprep.subr.mxu0 %v8431
    %8496 = vmatpush1.msra.mxu0 %v8430
    %8497 = vmatprep.subr.mxu0 %v8434
    %8498 = vmatpush1.msra.mxu0 %v8433
    %8499 = vmatprep.subr.mxu0 %v8437
    %8500 = vmatpush1.msra.mxu0 %v8436
    %8501 = vmatprep.subr.mxu0 %v8440
    %8502 = vmatpush1.msra.mxu0 %v8439
    %8503 = vmatprep.subr.mxu0 %v8443
    %8504 = vmatpush1.msra.mxu0 %v8442
    %8505 = vmatprep.subr.mxu0 %v8446
    %8506 = vmatpush1.msra.mxu0 %v8445
    %8507 = vmatprep.subr.mxu0 %v8449
    %8508 = vmatpush1.msra.mxu0 %v8448
    %8509 = vmatprep.subr.mxu0 %v8452
    %8510 = vmatpush1.msra.mxu0 %v8451
    %8511 = vmatprep.subr.mxu0 %v8455
    %8512 = vmatpush1.msra.mxu0 %v8454
    %8513 = vmatprep.subr.mxu0 %v8458
    %8514 = vmatpush1.msra.mxu0 %v8457
    %8515 = vmatprep.subr.mxu0 %v8461
    %8516 = vmatpush1.msra.mxu0 %v8460
    %8517 = vmatprep.subr.mxu0 %v8464
    %8518 = vmatpush1.msra.mxu0 %v8463
    %8519 = vmatprep.subr.mxu0 %v8467
    %8520 = vmatpush1.msra.mxu0 %v8466
    %8521 = vmatprep.subr.mxu0 %v8470
    %8522 = vmatpush1.msra.mxu0 %v8469
    %8523 = vmatprep.subr.mxu0 %v8473
    %8524 = vmatpush1.msra.mxu0 %v8472
    %8525 = vmatprep.subr.mxu0 %v8476
    %8526 = vmatpush1.msra.mxu0 %v8475
    %8527 = vmatprep.subr.mxu0 0.0
    %8528 = vmatpush1.msra.mxu0 0.0
    %8529 = vmatprep.subr.mxu0 0.0
    %8530 = vmatpush1.msra.mxu0 0.0
    %8531 = vmatprep.subr.mxu0 0.0
    %8532 = vmatpush1.msra.mxu0 0.0
    %8533 = vmatprep.subr.mxu0 0.0
    %8534 = vmatpush1.msra.mxu0 0.0
    %8535 = vmatprep.subr.mxu0 0.0
    %8536 = vmatpush1.msra.mxu0 0.0
    %8537 = vmatprep.subr.mxu0 0.0
    %8538 = vmatpush1.msra.mxu0 0.0
    %8539 = vmatprep.subr.mxu0 0.0
    %8540 = vmatpush1.msra.mxu0 0.0
    %8541 = vmatprep.subr.mxu0 0.0
    %8542 = vmatpush1.msra.mxu0 0.0
    %8543 = vmatprep.subr.mxu0 0.0
    %8544 = vmatpush1.msra.mxu0 0.0
    %8545 = vmatprep.subr.mxu0 0.0
    %8546 = vmatpush1.msra.mxu0 0.0
    %8547 = vmatprep.subr.mxu0 0.0
    %8548 = vmatpush1.msra.mxu0 0.0
    %8549 = vmatprep.subr.mxu0 0.0
    %8550 = vmatpush1.msra.mxu0 0.0
    %8551 = vmatprep.subr.mxu0 0.0
    %8552 = vmatpush1.msra.mxu0 0.0
    %8553 = vmatprep.subr.mxu0 0.0
    %8554 = vmatpush1.msra.mxu0 0.0
    %8555 = vmatprep.subr.mxu0 0.0
    %8556 = vmatpush1.msra.mxu0 0.0
    %8557 = vmatprep.subr.mxu0 0.0
    %8558 = vmatpush1.msra.mxu0 0.0
    %8559 = vmatprep.mubr.f32.mxu0 0.0
    %8560 = vmatmul.mubr.f32.gmra.mrb[0].mxu0 %v8429
    %v8561 = vpop.f32.mrb[0].mxu0
    %v8562 = vadd.f32 %v8483, %v8561
    %v8563 = vpop.f32.mrb[0].mxu0
    %v8564 = vadd.f32 %v8487, %v8563
    %8565 = vdwg.mxu0
    %8566 = vmatprep.subr.mxu0 0.0
    %8567 = vmatpush1.msra.mxu0 %v8432
    %8568 = vmatprep.subr.mxu0 0.0
    %8569 = vmatpush1.msra.mxu0 %v8435
    %8570 = vmatprep.subr.mxu0 0.0
    %8571 = vmatpush1.msra.mxu0 %v8438
    %8572 = vmatprep.subr.mxu0 0.0
    %8573 = vmatpush1.msra.mxu0 %v8441
    %8574 = vmatprep.subr.mxu0 0.0
    %8575 = vmatpush1.msra.mxu0 %v8444
    %8576 = vmatprep.subr.mxu0 0.0
    %8577 = vmatpush1.msra.mxu0 %v8447
    %8578 = vmatprep.subr.mxu0 0.0
    %8579 = vmatpush1.msra.mxu0 %v8450
    %8580 = vmatprep.subr.mxu0 0.0
    %8581 = vmatpush1.msra.mxu0 %v8453
    %8582 = vmatprep.subr.mxu0 0.0
    %8583 = vmatpush1.msra.mxu0 %v8456
    %8584 = vmatprep.subr.mxu0 0.0
    %8585 = vmatpush1.msra.mxu0 %v8459
    %8586 = vmatprep.subr.mxu0 0.0
    %8587 = vmatpush1.msra.mxu0 %v8462
    %8588 = vmatprep.subr.mxu0 0.0
    %8589 = vmatpush1.msra.mxu0 %v8465
    %8590 = vmatprep.subr.mxu0 0.0
    %8591 = vmatpush1.msra.mxu0 %v8468
    %8592 = vmatprep.subr.mxu0 0.0
    %8593 = vmatpush1.msra.mxu0 %v8471
    %8594 = vmatprep.subr.mxu0 0.0
    %8595 = vmatpush1.msra.mxu0 %v8474
    %8596 = vmatprep.subr.mxu0 0.0
    %8597 = vmatpush1.msra.mxu0 %v8477
    %8598 = vmatprep.subr.mxu0 0.0
    %8599 = vmatpush1.msra.mxu0 0.0
    %8600 = vmatprep.subr.mxu0 0.0
    %8601 = vmatpush1.msra.mxu0 0.0
    %8602 = vmatprep.subr.mxu0 0.0
    %8603 = vmatpush1.msra.mxu0 0.0
    %8604 = vmatprep.subr.mxu0 0.0
    %8605 = vmatpush1.msra.mxu0 0.0
    %8606 = vmatprep.subr.mxu0 0.0
    %8607 = vmatpush1.msra.mxu0 0.0
    %8608 = vmatprep.subr.mxu0 0.0
    %8609 = vmatpush1.msra.mxu0 0.0
    %8610 = vmatprep.subr.mxu0 0.0
    %8611 = vmatpush1.msra.mxu0 0.0
    %8612 = vmatprep.subr.mxu0 0.0
    %8613 = vmatpush1.msra.mxu0 0.0
    %8614 = vmatprep.subr.mxu0 0.0
    %8615 = vmatpush1.msra.mxu0 0.0
    %8616 = vmatprep.subr.mxu0 0.0
    %8617 = vmatpush1.msra.mxu0 0.0
    %8618 = vmatprep.subr.mxu0 0.0
    %8619 = vmatpush1.msra.mxu0 0.0
    %8620 = vmatprep.subr.mxu0 0.0
    %8621 = vmatpush1.msra.mxu0 0.0
    %8622 = vmatprep.subr.mxu0 0.0
    %8623 = vmatpush1.msra.mxu0 0.0
    %8624 = vmatprep.subr.mxu0 0.0
    %8625 = vmatpush1.msra.mxu0 0.0
    %8626 = vmatprep.subr.mxu0 0.0
    %8627 = vmatpush1.msra.mxu0 0.0
    %8628 = vmatprep.subr.mxu0 0.0
    %8629 = vmatpush1.msra.mxu0 0.0
    %8630 = vmatprep.mubr.f32.mxu0 0.0
    %8631 = vmatmul.mubr.f32.gmra.mrb[0].mxu0 %v8429
    %v8632 = vpop.f32.mrb[0].mxu0
    %v8633 = vadd.f32 %v8491, %v8632
    %v8634 = vpop.f32.mrb[0].mxu0
    %8635 = vdwg.mxu0
    %v8636 = vld [vmem:[#allocation20] sm:$0xff]
    %v8637 = vld [vmem:[#allocation20 + $0x8] sm:$0xff]
    %v8638 = vld [vmem:[#allocation20 + $0x10] sm:$0xff]
    %v8639 = vld [vmem:[#allocation20 + $0x18] sm:$0xff]
    %v8640 = vld [vmem:[#allocation20 + $0x20] sm:$0xff]
    %v8641 = vld [vmem:[#allocation20 + $0x28] sm:$0xff]
    %v8642 = vld [vmem:[#allocation20 + $0x30] sm:$0xff]
    %v8643 = vld [vmem:[#allocation20 + $0x38] sm:$0xff]
    %v8644 = vld [vmem:[#allocation20 + $0x40] sm:$0xff]
    %v8645 = vld [vmem:[#allocation20 + $0x48] sm:$0xff]
    %v8646 = vld [vmem:[#allocation20 + $0x50] sm:$0xff]
    %v8647 = vld [vmem:[#allocation20 + $0x58] sm:$0xff]
    %v8648 = vld [vmem:[#allocation20 + $0x60] sm:$0xff]
    %v8649 = vld [vmem:[#allocation20 + $0x68] sm:$0xff]
    %v8650 = vld [vmem:[#allocation20 + $0x70] sm:$0xff]
    %v8651 = vld [vmem:[#allocation20 + $0x78] sm:$0xff]
    %v8652 = vld [vmem:[#allocation20 + $0x80] sm:$0xff]
    %v8653 = vld [vmem:[#allocation20 + $0x88] sm:$0xff]
    %v8654 = vld [vmem:[#allocation20 + $0x90] sm:$0xff]
    %v8655 = vld [vmem:[#allocation20 + $0x98] sm:$0xff]
    %v8656 = vld [vmem:[#allocation20 + $0xa0] sm:$0xff]
    %v8657 = vld [vmem:[#allocation20 + $0xa8] sm:$0xff]
    %v8658 = vld [vmem:[#allocation20 + $0xb0] sm:$0xff]
    %v8659 = vld [vmem:[#allocation20 + $0xb8] sm:$0xff]
    %v8660 = vld [vmem:[#allocation20 + $0xc0] sm:$0xff]
    %v8661 = vld [vmem:[#allocation20 + $0xc8] sm:$0xff]
    %v8662 = vld [vmem:[#allocation20 + $0xd0] sm:$0xff]
    %v8663 = vld [vmem:[#allocation20 + $0xd8] sm:$0xff]
    %v8664 = vld [vmem:[#allocation20 + $0xe0] sm:$0xff]
    %v8665 = vld [vmem:[#allocation20 + $0xe8] sm:$0xff]
    %v8666 = vld [vmem:[#allocation20 + $0xf0] sm:$0xff]
    %v8667 = vld [vmem:[#allocation20 + $0xf8] sm:$0xff]
    %v8668 = vld [vmem:[#allocation20 + $0x100] sm:$0xff]
    %v8669 = vld [vmem:[#allocation20 + $0x108] sm:$0xff]
    %v8670 = vld [vmem:[#allocation20 + $0x110] sm:$0xff]
    %v8671 = vld [vmem:[#allocation20 + $0x118] sm:$0xff]
    %v8672 = vld [vmem:[#allocation20 + $0x120] sm:$0xff]
    %v8673 = vld [vmem:[#allocation20 + $0x128] sm:$0xff]
    %v8674 = vld [vmem:[#allocation20 + $0x130] sm:$0xff]
    %v8675 = vld [vmem:[#allocation20 + $0x138] sm:$0xff]
    %v8676 = vld [vmem:[#allocation20 + $0x140] sm:$0xff]
    %v8677 = vld [vmem:[#allocation20 + $0x148] sm:$0xff]
    %v8678 = vld [vmem:[#allocation20 + $0x150] sm:$0xff]
    %v8679 = vld [vmem:[#allocation20 + $0x158] sm:$0xff]
    %v8680 = vld [vmem:[#allocation20 + $0x160] sm:$0xff]
    %v8681 = vld [vmem:[#allocation20 + $0x168] sm:$0xff]
    %v8682 = vld [vmem:[#allocation20 + $0x170] sm:$0xff]
    %v8683 = vld [vmem:[#allocation20 + $0x178] sm:$0xff]
    %v8684 = vld [vmem:[%s17] sm:$0x7]
    %v8686 = vlaneseq
    %v8687 = vshrl.u32 %v8686, 7
    %v8688 = vsub.s32 0, %v8687
    %v8689 = vrot.slane %v8684, %v8688
    %v8690 = vlaneseq
    %v8691 = vshrl.u32 %v8690, 7
    %v8692 = vsub.s32 1, %v8691
    %v8693 = vrot.slane %v8684, %v8692
    %v8694 = vlaneseq
    %v8695 = vshrl.u32 %v8694, 7
    %v8696 = vsub.s32 2, %v8695
    %v8697 = vrot.slane %v8684, %v8696
    %8701 = vmatprep.subr.mxu0 %v8637
    %8702 = vmatpush1.msra.mxu0 %v8636
    %8703 = vmatprep.subr.mxu0 %v8640
    %8704 = vmatpush1.msra.mxu0 %v8639
    %8705 = vmatprep.subr.mxu0 %v8643
    %8706 = vmatpush1.msra.mxu0 %v8642
    %8707 = vmatprep.subr.mxu0 %v8646
    %8708 = vmatpush1.msra.mxu0 %v8645
    %8709 = vmatprep.subr.mxu0 %v8649
    %8710 = vmatpush1.msra.mxu0 %v8648
    %8711 = vmatprep.subr.mxu0 %v8652
    %8712 = vmatpush1.msra.mxu0 %v8651
    %8713 = vmatprep.subr.mxu0 %v8655
    %8714 = vmatpush1.msra.mxu0 %v8654
    %8715 = vmatprep.subr.mxu0 %v8658
    %8716 = vmatpush1.msra.mxu0 %v8657
    %8717 = vmatprep.subr.mxu0 %v8661
    %8718 = vmatpush1.msra.mxu0 %v8660
    %8719 = vmatprep.subr.mxu0 %v8664
    %8720 = vmatpush1.msra.mxu0 %v8663
    %8721 = vmatprep.subr.mxu0 %v8667
    %8722 = vmatpush1.msra.mxu0 %v8666
    %8723 = vmatprep.subr.mxu0 %v8670
    %8724 = vmatpush1.msra.mxu0 %v8669
    %8725 = vmatprep.subr.mxu0 %v8673
    %8726 = vmatpush1.msra.mxu0 %v8672
    %8727 = vmatprep.subr.mxu0 %v8676
    %8728 = vmatpush1.msra.mxu0 %v8675
    %8729 = vmatprep.subr.mxu0 %v8679
    %8730 = vmatpush1.msra.mxu0 %v8678
    %8731 = vmatprep.subr.mxu0 %v8682
    %8732 = vmatpush1.msra.mxu0 %v8681
    %8733 = vmatprep.subr.mxu0 0.0
    %8734 = vmatpush1.msra.mxu0 0.0
    %8735 = vmatprep.subr.mxu0 0.0
    %8736 = vmatpush1.msra.mxu0 0.0
    %8737 = vmatprep.subr.mxu0 0.0
    %8738 = vmatpush1.msra.mxu0 0.0
    %8739 = vmatprep.subr.mxu0 0.0
    %8740 = vmatpush1.msra.mxu0 0.0
    %8741 = vmatprep.subr.mxu0 0.0
    %8742 = vmatpush1.msra.mxu0 0.0
    %8743 = vmatprep.subr.mxu0 0.0
    %8744 = vmatpush1.msra.mxu0 0.0
    %8745 = vmatprep.subr.mxu0 0.0
    %8746 = vmatpush1.msra.mxu0 0.0
    %8747 = vmatprep.subr.mxu0 0.0
    %8748 = vmatpush1.msra.mxu0 0.0
    %8749 = vmatprep.subr.mxu0 0.0
    %8750 = vmatpush1.msra.mxu0 0.0
    %8751 = vmatprep.subr.mxu0 0.0
    %8752 = vmatpush1.msra.mxu0 0.0
    %8753 = vmatprep.subr.mxu0 0.0
    %8754 = vmatpush1.msra.mxu0 0.0
    %8755 = vmatprep.subr.mxu0 0.0
    %8756 = vmatpush1.msra.mxu0 0.0
    %8757 = vmatprep.subr.mxu0 0.0
    %8758 = vmatpush1.msra.mxu0 0.0
    %8759 = vmatprep.subr.mxu0 0.0
    %8760 = vmatpush1.msra.mxu0 0.0
    %8761 = vmatprep.subr.mxu0 0.0
    %8762 = vmatpush1.msra.mxu0 0.0
    %8763 = vmatprep.subr.mxu0 0.0
    %8764 = vmatpush1.msra.mxu0 0.0
    %8765 = vmatprep.mubr.f32.mxu0 0.0
    %8766 = vmatmul.mubr.f32.gmra.mrb[0].mxu0 %v7512
    %v8767 = vpop.f32.mrb[0].mxu0
    %v8768 = vadd.f32 %v8689, %v8767
    %v8769 = vpop.f32.mrb[0].mxu0
    %v8770 = vadd.f32 %v8693, %v8769
    %8771 = vdwg.mxu0
    %8772 = vmatprep.subr.mxu0 0.0
    %8773 = vmatpush1.msra.mxu0 %v8638
    %8774 = vmatprep.subr.mxu0 0.0
    %8775 = vmatpush1.msra.mxu0 %v8641
    %8776 = vmatprep.subr.mxu0 0.0
    %8777 = vmatpush1.msra.mxu0 %v8644
    %8778 = vmatprep.subr.mxu0 0.0
    %8779 = vmatpush1.msra.mxu0 %v8647
    %8780 = vmatprep.subr.mxu0 0.0
    %8781 = vmatpush1.msra.mxu0 %v8650
    %8782 = vmatprep.subr.mxu0 0.0
    %8783 = vmatpush1.msra.mxu0 %v8653
    %8784 = vmatprep.subr.mxu0 0.0
    %8785 = vmatpush1.msra.mxu0 %v8656
    %8786 = vmatprep.subr.mxu0 0.0
    %8787 = vmatpush1.msra.mxu0 %v8659
    %8788 = vmatprep.subr.mxu0 0.0
    %8789 = vmatpush1.msra.mxu0 %v8662
    %8790 = vmatprep.subr.mxu0 0.0
    %8791 = vmatpush1.msra.mxu0 %v8665
    %8792 = vmatprep.subr.mxu0 0.0
    %8793 = vmatpush1.msra.mxu0 %v8668
    %8794 = vmatprep.subr.mxu0 0.0
    %8795 = vmatpush1.msra.mxu0 %v8671
    %8796 = vmatprep.subr.mxu0 0.0
    %8797 = vmatpush1.msra.mxu0 %v8674
    %8798 = vmatprep.subr.mxu0 0.0
    %8799 = vmatpush1.msra.mxu0 %v8677
    %8800 = vmatprep.subr.mxu0 0.0
    %8801 = vmatpush1.msra.mxu0 %v8680
    %8802 = vmatprep.subr.mxu0 0.0
    %8803 = vmatpush1.msra.mxu0 %v8683
    %8804 = vmatprep.subr.mxu0 0.0
    %8805 = vmatpush1.msra.mxu0 0.0
    %8806 = vmatprep.subr.mxu0 0.0
    %8807 = vmatpush1.msra.mxu0 0.0
    %8808 = vmatprep.subr.mxu0 0.0
    %8809 = vmatpush1.msra.mxu0 0.0
    %8810 = vmatprep.subr.mxu0 0.0
    %8811 = vmatpush1.msra.mxu0 0.0
    %8812 = vmatprep.subr.mxu0 0.0
    %8813 = vmatpush1.msra.mxu0 0.0
    %8814 = vmatprep.subr.mxu0 0.0
    %8815 = vmatpush1.msra.mxu0 0.0
    %8816 = vmatprep.subr.mxu0 0.0
    %8817 = vmatpush1.msra.mxu0 0.0
    %8818 = vmatprep.subr.mxu0 0.0
    %8819 = vmatpush1.msra.mxu0 0.0
    %8820 = vmatprep.subr.mxu0 0.0
    %8821 = vmatpush1.msra.mxu0 0.0
    %8822 = vmatprep.subr.mxu0 0.0
    %8823 = vmatpush1.msra.mxu0 0.0
    %8824 = vmatprep.subr.mxu0 0.0
    %8825 = vmatpush1.msra.mxu0 0.0
    %8826 = vmatprep.subr.mxu0 0.0
    %8827 = vmatpush1.msra.mxu0 0.0
    %8828 = vmatprep.subr.mxu0 0.0
    %8829 = vmatpush1.msra.mxu0 0.0
    %8830 = vmatprep.subr.mxu0 0.0
    %8831 = vmatpush1.msra.mxu0 0.0
    %8832 = vmatprep.subr.mxu0 0.0
    %8833 = vmatpush1.msra.mxu0 0.0
    %8834 = vmatprep.subr.mxu0 0.0
    %8835 = vmatpush1.msra.mxu0 0.0
    %8836 = vmatprep.mubr.f32.mxu0 0.0
    %8837 = vmatmul.mubr.f32.gmra.mrb[0].mxu0 %v7512
    %v8838 = vpop.f32.mrb[0].mxu0
    %v8839 = vadd.f32 %v8697, %v8838
    %v8840 = vpop.f32.mrb[0].mxu0
    %8841 = vdwg.mxu0
    %v8842 = vadd.f32 %v8562, %v8768
    %v8843 = vxor.u32 %v8842, 2147483648
    %v8844 = vmul.f32 %v8843, 1.442695
    %v8845 = vpow.pop %v8844
    %v8846 = vadd.f32 %v8845, 1.0
    %v8847 = vrcp.pop %v8846
    %v8848 = vmul.f32 1.0, %v8847
    %v8849 = vadd.f32 %v8564, %v8770
    %v8850 = vxor.u32 %v8849, 2147483648
    %v8851 = vmul.f32 %v8850, 1.442695
    %v8852 = vpow.pop %v8851
    %v8853 = vadd.f32 %v8852, 1.0
    %v8854 = vrcp.pop %v8853
    %v8855 = vmul.f32 1.0, %v8854
    %v8856 = vmul.f32 %v8848, %v8839
    %v8857 = vadd.f32 %v8633, %v8856
    %v8858 = vtanh.pop %v8857
    %v8859 = vsub.f32 1.0, %v8855
    %v8860 = vmul.f32 %v8859, %v8858
    %v8861 = vmul.f32 %v8855, %v7512
    %v8862 = vadd.f32 %v8860, %v8861
    %v8865 = vunpack.c.l.s4 1966171168
    %v8866 = vunpack.c.0.s8 %v8865
    %v8867 = vlaneseq
    %v8868 = vshrl.u32 %v8867, 7
    %v8869 = vsub.s32 %v8866, %v8868
    %v8870 = vrot.slane %v8862, %v8869
    %v8871 = vcombine.high %v8870, %v8870
    %v8873 = vunpack.c.l.s4 1966171168
    %v8874 = vunpack.c.0.s8 %v8873
    %v8875 = vlaneseq
    %v8876 = vshrl.u32 %v8875, 7
    %v8877 = vsub.s32 %v8874, %v8876
    %v8878 = vrot.slane %v8870, %v8877
    %v8880 = vunpack.c.l.s4 1966171168
    %v8881 = vunpack.c.0.s8 %v8880
    %v8882 = vlaneseq
    %v8883 = vshrl.u32 %v8882, 7
    %v8884 = vsub.s32 %v8881, %v8883
    %v8885 = vrot.slane %v8871, %v8884
    %8888 = vmatprep.subr.mxu0 0.0
    %8889 = vmatpush1.xpose.msra.mxu0 %v1281
    %8890 = vmatprep.subr.mxu0 0.0
    %8891 = vmatpush1.xpose.msra.mxu0 0.0
    %8892 = vmatprep.subr.mxu0 0.0
    %8893 = vmatpush1.xpose.msra.mxu0 0.0
    %8894 = vmatprep.subr.mxu0 0.0
    %8895 = vmatpush1.xpose.msra.mxu0 0.0
    %8896 = vmatprep.subr.mxu0 0.0
    %8897 = vmatpush1.xpose.msra.mxu0 0.0
    %8898 = vmatprep.subr.mxu0 0.0
    %8899 = vmatpush1.xpose.msra.mxu0 0.0
    %8900 = vmatprep.subr.mxu0 0.0
    %8901 = vmatpush1.xpose.msra.mxu0 0.0
    %8902 = vmatprep.subr.mxu0 0.0
    %8903 = vmatpush1.xpose.msra.mxu0 0.0
    %8904 = vmatprep.subr.mxu0 0.0
    %8905 = vmatpush1.xpose.msra.mxu0 0.0
    %8906 = vmatprep.subr.mxu0 0.0
    %8907 = vmatpush1.xpose.msra.mxu0 0.0
    %8908 = vmatprep.subr.mxu0 0.0
    %8909 = vmatpush1.xpose.msra.mxu0 0.0
    %8910 = vmatprep.subr.mxu0 0.0
    %8911 = vmatpush1.xpose.msra.mxu0 0.0
    %8912 = vmatprep.subr.mxu0 0.0
    %8913 = vmatpush1.xpose.msra.mxu0 0.0
    %8914 = vmatprep.subr.mxu0 0.0
    %8915 = vmatpush1.xpose.msra.mxu0 0.0
    %8916 = vmatprep.subr.mxu0 0.0
    %8917 = vmatpush1.xpose.msra.mxu0 0.0
    %8918 = vmatprep.subr.mxu0 0.0
    %8919 = vmatpush1.xpose.msra.mxu0 0.0
    %8920 = vmatprep.subr.mxu0 0.0
    %8921 = vmatpush1.xpose.msra.mxu0 0.0
    %8922 = vmatprep.subr.mxu0 0.0
    %8923 = vmatpush1.xpose.msra.mxu0 0.0
    %8924 = vmatprep.subr.mxu0 0.0
    %8925 = vmatpush1.xpose.msra.mxu0 0.0
    %8926 = vmatprep.subr.mxu0 0.0
    %8927 = vmatpush1.xpose.msra.mxu0 0.0
    %8928 = vmatprep.subr.mxu0 0.0
    %8929 = vmatpush1.xpose.msra.mxu0 0.0
    %8930 = vmatprep.subr.mxu0 0.0
    %8931 = vmatpush1.xpose.msra.mxu0 0.0
    %8932 = vmatprep.subr.mxu0 0.0
    %8933 = vmatpush1.xpose.msra.mxu0 0.0
    %8934 = vmatprep.subr.mxu0 0.0
    %8935 = vmatpush1.xpose.msra.mxu0 0.0
    %8936 = vmatprep.subr.mxu0 0.0
    %8937 = vmatpush1.xpose.msra.mxu0 0.0
    %8938 = vmatprep.subr.mxu0 0.0
    %8939 = vmatpush1.xpose.msra.mxu0 0.0
    %8940 = vmatprep.subr.mxu0 0.0
    %8941 = vmatpush1.xpose.msra.mxu0 0.0
    %8942 = vmatprep.subr.mxu0 0.0
    %8943 = vmatpush1.xpose.msra.mxu0 0.0
    %8944 = vmatprep.subr.mxu0 0.0
    %8945 = vmatpush1.xpose.msra.mxu0 0.0
    %8946 = vmatprep.subr.mxu0 0.0
    %8947 = vmatpush1.xpose.msra.mxu0 0.0
    %8948 = vmatprep.subr.mxu0 0.0
    %8949 = vmatpush1.xpose.msra.mxu0 0.0
    %8950 = vmatprep.subr.mxu0 0.0
    %8951 = vmatpush1.xpose.msra.mxu0 0.0
    %8952 = vmatprep.mubr.f32.mxu0 0.0
    %8953 = vmatmul.mubr.f32.gmra.mrb[0].mxu0 %v8878
    %v8954 = vpop.f32.mrb[0].mxu0
    %v8955 = vadd.f32 0.0, %v8954
    %v8956 = vpop.f32.mrb[0].mxu0
    %8957 = vdwg.mxu0
    %8958 = vmatprep.subr.mxu0 0.0
    %8959 = vmatpush1.xpose.msra.mxu0 %v1282
    %8960 = vmatprep.subr.mxu0 0.0
    %8961 = vmatpush1.xpose.msra.mxu0 0.0
    %8962 = vmatprep.subr.mxu0 0.0
    %8963 = vmatpush1.xpose.msra.mxu0 0.0
    %8964 = vmatprep.subr.mxu0 0.0
    %8965 = vmatpush1.xpose.msra.mxu0 0.0
    %8966 = vmatprep.subr.mxu0 0.0
    %8967 = vmatpush1.xpose.msra.mxu0 0.0
    %8968 = vmatprep.subr.mxu0 0.0
    %8969 = vmatpush1.xpose.msra.mxu0 0.0
    %8970 = vmatprep.subr.mxu0 0.0
    %8971 = vmatpush1.xpose.msra.mxu0 0.0
    %8972 = vmatprep.subr.mxu0 0.0
    %8973 = vmatpush1.xpose.msra.mxu0 0.0
    %8974 = vmatprep.subr.mxu0 0.0
    %8975 = vmatpush1.xpose.msra.mxu0 0.0
    %8976 = vmatprep.subr.mxu0 0.0
    %8977 = vmatpush1.xpose.msra.mxu0 0.0
    %8978 = vmatprep.subr.mxu0 0.0
    %8979 = vmatpush1.xpose.msra.mxu0 0.0
    %8980 = vmatprep.subr.mxu0 0.0
    %8981 = vmatpush1.xpose.msra.mxu0 0.0
    %8982 = vmatprep.subr.mxu0 0.0
    %8983 = vmatpush1.xpose.msra.mxu0 0.0
    %8984 = vmatprep.subr.mxu0 0.0
    %8985 = vmatpush1.xpose.msra.mxu0 0.0
    %8986 = vmatprep.subr.mxu0 0.0
    %8987 = vmatpush1.xpose.msra.mxu0 0.0
    %8988 = vmatprep.subr.mxu0 0.0
    %8989 = vmatpush1.xpose.msra.mxu0 0.0
    %8990 = vmatprep.subr.mxu0 0.0
    %8991 = vmatpush1.xpose.msra.mxu0 0.0
    %8992 = vmatprep.subr.mxu0 0.0
    %8993 = vmatpush1.xpose.msra.mxu0 0.0
    %8994 = vmatprep.subr.mxu0 0.0
    %8995 = vmatpush1.xpose.msra.mxu0 0.0
    %8996 = vmatprep.subr.mxu0 0.0
    %8997 = vmatpush1.xpose.msra.mxu0 0.0
    %8998 = vmatprep.subr.mxu0 0.0
    %8999 = vmatpush1.xpose.msra.mxu0 0.0
    %9000 = vmatprep.subr.mxu0 0.0
    %9001 = vmatpush1.xpose.msra.mxu0 0.0
    %9002 = vmatprep.subr.mxu0 0.0
    %9003 = vmatpush1.xpose.msra.mxu0 0.0
    %9004 = vmatprep.subr.mxu0 0.0
    %9005 = vmatpush1.xpose.msra.mxu0 0.0
    %9006 = vmatprep.subr.mxu0 0.0
    %9007 = vmatpush1.xpose.msra.mxu0 0.0
    %9008 = vmatprep.subr.mxu0 0.0
    %9009 = vmatpush1.xpose.msra.mxu0 0.0
    %9010 = vmatprep.subr.mxu0 0.0
    %9011 = vmatpush1.xpose.msra.mxu0 0.0
    %9012 = vmatprep.subr.mxu0 0.0
    %9013 = vmatpush1.xpose.msra.mxu0 0.0
    %9014 = vmatprep.subr.mxu0 0.0
    %9015 = vmatpush1.xpose.msra.mxu0 0.0
    %9016 = vmatprep.subr.mxu0 0.0
    %9017 = vmatpush1.xpose.msra.mxu0 0.0
    %9018 = vmatprep.subr.mxu0 0.0
    %9019 = vmatpush1.xpose.msra.mxu0 0.0
    %9020 = vmatprep.subr.mxu0 0.0
    %9021 = vmatpush1.xpose.msra.mxu0 0.0
    %9022 = vmatprep.mubr.f32.mxu0 0.0
    %9023 = vmatmul.mubr.f32.gmra.mrb[0].mxu0 %v8885
    %v9024 = vpop.f32.mrb[0].mxu0
    %v9025 = vadd.f32 0.0, %v9024
    %v9026 = vpop.f32.mrb[0].mxu0
    %9027 = vdwg.mxu0
    %v9028 = vsel %vm2277, %v8955, -inf
    %9029 = vmax.xlane.f32.xlu0 %v9028
    %v9030 = vpop.xlane.xlu0 %9029
    %v9031 = vsel %vm2277, %v9025, -inf
    %9032 = vmax.xlane.f32.xlu0 %v9031
    %v9033 = vpop.xlane.xlu0 %9032
    %v9034 = vsub.f32 %v8955, %v9030
    %v9035 = vsub.f32 %v9025, %v9033
    %v9036 = vmul.f32 %v9034, 1.442695
    %v9037 = vpow.pop %v9036
    %v9038 = vmul.f32 %v9035, 1.442695
    %v9039 = vpow.pop %v9038
    %v9040 = vsel %vm2277, %v9037, 0.0
    %9041 = vadd.xlane.f32.xlu0 %v9040
    %v9042 = vpop.xlane.xlu0 %9041
    %v9043 = vsel %vm2277, %v9039, 0.0
    %9044 = vadd.xlane.f32.xlu0 %v9043
    %v9045 = vpop.xlane.xlu0 %9044
    %v9046 = vrcp.pop %v9042
    %v9047 = vrcp.pop %v9045
    %v9048 = vmul.f32 %v9037, %v9046
    %v9049 = vmul.f32 %v9039, %v9047
    %v9051 = vsel %vm2300, %v9048, 0
    %9053 = vmatprep.subr.mxu0 0.0
    %9054 = vmatpush1.msra.mxu0 %v1281
    %9055 = vmatprep.subr.mxu0 0.0
    %9056 = vmatpush1.msra.mxu0 0.0
    %9057 = vmatprep.subr.mxu0 0.0
    %9058 = vmatpush1.msra.mxu0 0.0
    %9059 = vmatprep.subr.mxu0 0.0
    %9060 = vmatpush1.msra.mxu0 0.0
    %9061 = vmatprep.subr.mxu0 0.0
    %9062 = vmatpush1.msra.mxu0 0.0
    %9063 = vmatprep.subr.mxu0 0.0
    %9064 = vmatpush1.msra.mxu0 0.0
    %9065 = vmatprep.subr.mxu0 0.0
    %9066 = vmatpush1.msra.mxu0 0.0
    %9067 = vmatprep.subr.mxu0 0.0
    %9068 = vmatpush1.msra.mxu0 0.0
    %9069 = vmatprep.subr.mxu0 0.0
    %9070 = vmatpush1.msra.mxu0 0.0
    %9071 = vmatprep.subr.mxu0 0.0
    %9072 = vmatpush1.msra.mxu0 0.0
    %9073 = vmatprep.subr.mxu0 0.0
    %9074 = vmatpush1.msra.mxu0 0.0
    %9075 = vmatprep.subr.mxu0 0.0
    %9076 = vmatpush1.msra.mxu0 0.0
    %9077 = vmatprep.subr.mxu0 0.0
    %9078 = vmatpush1.msra.mxu0 0.0
    %9079 = vmatprep.subr.mxu0 0.0
    %9080 = vmatpush1.msra.mxu0 0.0
    %9081 = vmatprep.subr.mxu0 0.0
    %9082 = vmatpush1.msra.mxu0 0.0
    %9083 = vmatprep.subr.mxu0 0.0
    %9084 = vmatpush1.msra.mxu0 0.0
    %9085 = vmatprep.subr.mxu0 0.0
    %9086 = vmatpush1.msra.mxu0 0.0
    %9087 = vmatprep.subr.mxu0 0.0
    %9088 = vmatpush1.msra.mxu0 0.0
    %9089 = vmatprep.subr.mxu0 0.0
    %9090 = vmatpush1.msra.mxu0 0.0
    %9091 = vmatprep.subr.mxu0 0.0
    %9092 = vmatpush1.msra.mxu0 0.0
    %9093 = vmatprep.subr.mxu0 0.0
    %9094 = vmatpush1.msra.mxu0 0.0
    %9095 = vmatprep.subr.mxu0 0.0
    %9096 = vmatpush1.msra.mxu0 0.0
    %9097 = vmatprep.subr.mxu0 0.0
    %9098 = vmatpush1.msra.mxu0 0.0
    %9099 = vmatprep.subr.mxu0 0.0
    %9100 = vmatpush1.msra.mxu0 0.0
    %9101 = vmatprep.subr.mxu0 0.0
    %9102 = vmatpush1.msra.mxu0 0.0
    %9103 = vmatprep.subr.mxu0 0.0
    %9104 = vmatpush1.msra.mxu0 0.0
    %9105 = vmatprep.subr.mxu0 0.0
    %9106 = vmatpush1.msra.mxu0 0.0
    %9107 = vmatprep.subr.mxu0 0.0
    %9108 = vmatpush1.msra.mxu0 0.0
    %9109 = vmatprep.subr.mxu0 0.0
    %9110 = vmatpush1.msra.mxu0 0.0
    %9111 = vmatprep.subr.mxu0 0.0
    %9112 = vmatpush1.msra.mxu0 0.0
    %9113 = vmatprep.subr.mxu0 0.0
    %9114 = vmatpush1.msra.mxu0 0.0
    %9115 = vmatprep.subr.mxu0 0.0
    %9116 = vmatpush1.msra.mxu0 0.0
    %9117 = vmatprep.mubr.f32.mxu0 0.0
    %9118 = vmatmul.mubr.f32.gmra.mrb[0].mxu0 %v9051
    %v9119 = vpop.f32.mrb[0].mxu0
    %v9120 = vadd.f32 0.0, %v9119
    %v9121 = vpop.f32.mrb[0].mxu0
    %9122 = vdwg.mxu0
    %v9124 = vsel %vm2300, %v9049, 0
    %9126 = vmatprep.subr.mxu0 0.0
    %9127 = vmatpush1.msra.mxu0 %v1282
    %9128 = vmatprep.subr.mxu0 0.0
    %9129 = vmatpush1.msra.mxu0 0.0
    %9130 = vmatprep.subr.mxu0 0.0
    %9131 = vmatpush1.msra.mxu0 0.0
    %9132 = vmatprep.subr.mxu0 0.0
    %9133 = vmatpush1.msra.mxu0 0.0
    %9134 = vmatprep.subr.mxu0 0.0
    %9135 = vmatpush1.msra.mxu0 0.0
    %9136 = vmatprep.subr.mxu0 0.0
    %9137 = vmatpush1.msra.mxu0 0.0
    %9138 = vmatprep.subr.mxu0 0.0
    %9139 = vmatpush1.msra.mxu0 0.0
    %9140 = vmatprep.subr.mxu0 0.0
    %9141 = vmatpush1.msra.mxu0 0.0
    %9142 = vmatprep.subr.mxu0 0.0
    %9143 = vmatpush1.msra.mxu0 0.0
    %9144 = vmatprep.subr.mxu0 0.0
    %9145 = vmatpush1.msra.mxu0 0.0
    %9146 = vmatprep.subr.mxu0 0.0
    %9147 = vmatpush1.msra.mxu0 0.0
    %9148 = vmatprep.subr.mxu0 0.0
    %9149 = vmatpush1.msra.mxu0 0.0
    %9150 = vmatprep.subr.mxu0 0.0
    %9151 = vmatpush1.msra.mxu0 0.0
    %9152 = vmatprep.subr.mxu0 0.0
    %9153 = vmatpush1.msra.mxu0 0.0
    %9154 = vmatprep.subr.mxu0 0.0
    %9155 = vmatpush1.msra.mxu0 0.0
    %9156 = vmatprep.subr.mxu0 0.0
    %9157 = vmatpush1.msra.mxu0 0.0
    %9158 = vmatprep.subr.mxu0 0.0
    %9159 = vmatpush1.msra.mxu0 0.0
    %9160 = vmatprep.subr.mxu0 0.0
    %9161 = vmatpush1.msra.mxu0 0.0
    %9162 = vmatprep.subr.mxu0 0.0
    %9163 = vmatpush1.msra.mxu0 0.0
    %9164 = vmatprep.subr.mxu0 0.0
    %9165 = vmatpush1.msra.mxu0 0.0
    %9166 = vmatprep.subr.mxu0 0.0
    %9167 = vmatpush1.msra.mxu0 0.0
    %9168 = vmatprep.subr.mxu0 0.0
    %9169 = vmatpush1.msra.mxu0 0.0
    %9170 = vmatprep.subr.mxu0 0.0
    %9171 = vmatpush1.msra.mxu0 0.0
    %9172 = vmatprep.subr.mxu0 0.0
    %9173 = vmatpush1.msra.mxu0 0.0
    %9174 = vmatprep.subr.mxu0 0.0
    %9175 = vmatpush1.msra.mxu0 0.0
    %9176 = vmatprep.subr.mxu0 0.0
    %9177 = vmatpush1.msra.mxu0 0.0
    %9178 = vmatprep.subr.mxu0 0.0
    %9179 = vmatpush1.msra.mxu0 0.0
    %9180 = vmatprep.subr.mxu0 0.0
    %9181 = vmatpush1.msra.mxu0 0.0
    %9182 = vmatprep.subr.mxu0 0.0
    %9183 = vmatpush1.msra.mxu0 0.0
    %9184 = vmatprep.subr.mxu0 0.0
    %9185 = vmatpush1.msra.mxu0 0.0
    %9186 = vmatprep.subr.mxu0 0.0
    %9187 = vmatpush1.msra.mxu0 0.0
    %9188 = vmatprep.subr.mxu0 0.0
    %9189 = vmatpush1.msra.mxu0 0.0
    %9190 = vmatprep.mubr.f32.mxu0 0.0
    %9191 = vmatmul.mubr.f32.gmra.mrb[0].mxu0 %v9124
    %v9192 = vpop.f32.mrb[0].mxu0
    %v9193 = vadd.f32 0.0, %v9192
    %v9194 = vpop.f32.mrb[0].mxu0
    %9195 = vdwg.mxu0
    %v9196 = vld [vmem:[#allocation21] sm:$0xff]
    %v9197 = vld [vmem:[#allocation21 + $0x8] sm:$0xff]
    %v9198 = vld [vmem:[#allocation21 + $0x10] sm:$0xff]
    %v9199 = vld [vmem:[#allocation21 + $0x18] sm:$0xff]
    %v9200 = vld [vmem:[#allocation21 + $0x20] sm:$0xff]
    %v9201 = vld [vmem:[#allocation21 + $0x28] sm:$0xff]
    %v9202 = vld [vmem:[#allocation21 + $0x30] sm:$0xff]
    %v9203 = vld [vmem:[#allocation21 + $0x38] sm:$0xff]
    %v9204 = vld [vmem:[#allocation21 + $0x40] sm:$0xff]
    %v9205 = vld [vmem:[#allocation21 + $0x48] sm:$0xff]
    %v9206 = vld [vmem:[#allocation21 + $0x50] sm:$0xff]
    %v9207 = vld [vmem:[#allocation21 + $0x58] sm:$0xff]
    %v9208 = vld [vmem:[#allocation21 + $0x60] sm:$0xff]
    %v9209 = vld [vmem:[#allocation21 + $0x68] sm:$0xff]
    %v9210 = vld [vmem:[#allocation21 + $0x70] sm:$0xff]
    %v9211 = vld [vmem:[#allocation21 + $0x78] sm:$0xff]
    %v9212 = vld [vmem:[#allocation23] sm:$0xff]
    %v9213 = vld [vmem:[#allocation23 + $0x8] sm:$0xff]
    %v9214 = vld [vmem:[#allocation23 + $0x10] sm:$0xff]
    %v9215 = vld [vmem:[#allocation23 + $0x18] sm:$0xff]
    %v9216 = vld [vmem:[#allocation23 + $0x20] sm:$0xff]
    %v9217 = vld [vmem:[#allocation23 + $0x28] sm:$0xff]
    %v9218 = vld [vmem:[#allocation23 + $0x30] sm:$0xff]
    %v9219 = vld [vmem:[#allocation23 + $0x38] sm:$0xff]
    %v9220 = vld [vmem:[#allocation23 + $0x40] sm:$0xff]
    %v9221 = vld [vmem:[#allocation23 + $0x48] sm:$0xff]
    %v9222 = vld [vmem:[#allocation23 + $0x50] sm:$0xff]
    %v9223 = vld [vmem:[#allocation23 + $0x58] sm:$0xff]
    %v9224 = vld [vmem:[#allocation23 + $0x60] sm:$0xff]
    %v9225 = vld [vmem:[#allocation23 + $0x68] sm:$0xff]
    %v9226 = vld [vmem:[#allocation23 + $0x70] sm:$0xff]
    %v9227 = vld [vmem:[#allocation23 + $0x78] sm:$0xff]
    %9228 = vmatprep.subr.mxu0 0.0
    %9229 = vmatpush1.msra.mxu0 %v9212
    %9230 = vmatprep.subr.mxu0 0.0
    %9231 = vmatpush1.msra.mxu0 %v9213
    %9232 = vmatprep.subr.mxu0 0.0
    %9233 = vmatpush1.msra.mxu0 %v9214
    %9234 = vmatprep.subr.mxu0 0.0
    %9235 = vmatpush1.msra.mxu0 %v9215
    %9236 = vmatprep.subr.mxu0 0.0
    %9237 = vmatpush1.msra.mxu0 %v9216
    %9238 = vmatprep.subr.mxu0 0.0
    %9239 = vmatpush1.msra.mxu0 %v9217
    %9240 = vmatprep.subr.mxu0 0.0
    %9241 = vmatpush1.msra.mxu0 %v9218
    %9242 = vmatprep.subr.mxu0 0.0
    %9243 = vmatpush1.msra.mxu0 %v9219
    %9244 = vmatprep.subr.mxu0 0.0
    %9245 = vmatpush1.msra.mxu0 %v9220
    %9246 = vmatprep.subr.mxu0 0.0
    %9247 = vmatpush1.msra.mxu0 %v9221
    %9248 = vmatprep.subr.mxu0 0.0
    %9249 = vmatpush1.msra.mxu0 %v9222
    %9250 = vmatprep.subr.mxu0 0.0
    %9251 = vmatpush1.msra.mxu0 %v9223
    %9252 = vmatprep.subr.mxu0 0.0
    %9253 = vmatpush1.msra.mxu0 %v9224
    %9254 = vmatprep.subr.mxu0 0.0
    %9255 = vmatpush1.msra.mxu0 %v9225
    %9256 = vmatprep.subr.mxu0 0.0
    %9257 = vmatpush1.msra.mxu0 %v9226
    %9258 = vmatprep.subr.mxu0 0.0
    %9259 = vmatpush1.msra.mxu0 %v9227
    %9260 = vmatprep.subr.mxu0 0.0
    %9261 = vmatpush1.msra.mxu0 0.0
    %9262 = vmatprep.subr.mxu0 0.0
    %9263 = vmatpush1.msra.mxu0 0.0
    %9264 = vmatprep.subr.mxu0 0.0
    %9265 = vmatpush1.msra.mxu0 0.0
    %9266 = vmatprep.subr.mxu0 0.0
    %9267 = vmatpush1.msra.mxu0 0.0
    %9268 = vmatprep.subr.mxu0 0.0
    %9269 = vmatpush1.msra.mxu0 0.0
    %9270 = vmatprep.subr.mxu0 0.0
    %9271 = vmatpush1.msra.mxu0 0.0
    %9272 = vmatprep.subr.mxu0 0.0
    %9273 = vmatpush1.msra.mxu0 0.0
    %9274 = vmatprep.subr.mxu0 0.0
    %9275 = vmatpush1.msra.mxu0 0.0
    %9276 = vmatprep.subr.mxu0 0.0
    %9277 = vmatpush1.msra.mxu0 0.0
    %9278 = vmatprep.subr.mxu0 0.0
    %9279 = vmatpush1.msra.mxu0 0.0
    %9280 = vmatprep.subr.mxu0 0.0
    %9281 = vmatpush1.msra.mxu0 0.0
    %9282 = vmatprep.subr.mxu0 0.0
    %9283 = vmatpush1.msra.mxu0 0.0
    %9284 = vmatprep.subr.mxu0 0.0
    %9285 = vmatpush1.msra.mxu0 0.0
    %9286 = vmatprep.subr.mxu0 0.0
    %9287 = vmatpush1.msra.mxu0 0.0
    %9288 = vmatprep.subr.mxu0 0.0
    %9289 = vmatpush1.msra.mxu0 0.0
    %9290 = vmatprep.subr.mxu0 0.0
    %9291 = vmatpush1.msra.mxu0 0.0
    %9292 = vmatprep.mubr.f32.mxu0 0.0
    %9293 = vmatmul.mubr.f32.gmra.mrb[0].mxu0 %v8862
    %v9294 = vpop.f32.mrb[0].mxu0
    %v9295 = vadd.f32 0.0, %v9294
    %v9296 = vpop.f32.mrb[0].mxu0
    %9297 = vdwg.mxu0
    %v9300 = vrot.slane %v9193, 7
    %v9301 = vsel %vm695, %v9300, %v9120
    %9303 = vmatprep.subr.mxu0 0.0
    %9304 = vmatpush1.msra.mxu0 %v9196
    %9305 = vmatprep.subr.mxu0 0.0
    %9306 = vmatpush1.msra.mxu0 %v9197
    %9307 = vmatprep.subr.mxu0 0.0
    %9308 = vmatpush1.msra.mxu0 %v9198
    %9309 = vmatprep.subr.mxu0 0.0
    %9310 = vmatpush1.msra.mxu0 %v9199
    %9311 = vmatprep.subr.mxu0 0.0
    %9312 = vmatpush1.msra.mxu0 %v9200
    %9313 = vmatprep.subr.mxu0 0.0
    %9314 = vmatpush1.msra.mxu0 %v9201
    %9315 = vmatprep.subr.mxu0 0.0
    %9316 = vmatpush1.msra.mxu0 %v9202
    %9317 = vmatprep.subr.mxu0 0.0
    %9318 = vmatpush1.msra.mxu0 %v9203
    %9319 = vmatprep.subr.mxu0 0.0
    %9320 = vmatpush1.msra.mxu0 %v9204
    %9321 = vmatprep.subr.mxu0 0.0
    %9322 = vmatpush1.msra.mxu0 %v9205
    %9323 = vmatprep.subr.mxu0 0.0
    %9324 = vmatpush1.msra.mxu0 %v9206
    %9325 = vmatprep.subr.mxu0 0.0
    %9326 = vmatpush1.msra.mxu0 %v9207
    %9327 = vmatprep.subr.mxu0 0.0
    %9328 = vmatpush1.msra.mxu0 %v9208
    %9329 = vmatprep.subr.mxu0 0.0
    %9330 = vmatpush1.msra.mxu0 %v9209
    %9331 = vmatprep.subr.mxu0 0.0
    %9332 = vmatpush1.msra.mxu0 %v9210
    %9333 = vmatprep.subr.mxu0 0.0
    %9334 = vmatpush1.msra.mxu0 %v9211
    %9335 = vmatprep.subr.mxu0 0.0
    %9336 = vmatpush1.msra.mxu0 0.0
    %9337 = vmatprep.subr.mxu0 0.0
    %9338 = vmatpush1.msra.mxu0 0.0
    %9339 = vmatprep.subr.mxu0 0.0
    %9340 = vmatpush1.msra.mxu0 0.0
    %9341 = vmatprep.subr.mxu0 0.0
    %9342 = vmatpush1.msra.mxu0 0.0
    %9343 = vmatprep.subr.mxu0 0.0
    %9344 = vmatpush1.msra.mxu0 0.0
    %9345 = vmatprep.subr.mxu0 0.0
    %9346 = vmatpush1.msra.mxu0 0.0
    %9347 = vmatprep.subr.mxu0 0.0
    %9348 = vmatpush1.msra.mxu0 0.0
    %9349 = vmatprep.subr.mxu0 0.0
    %9350 = vmatpush1.msra.mxu0 0.0
    %9351 = vmatprep.subr.mxu0 0.0
    %9352 = vmatpush1.msra.mxu0 0.0
    %9353 = vmatprep.subr.mxu0 0.0
    %9354 = vmatpush1.msra.mxu0 0.0
    %9355 = vmatprep.subr.mxu0 0.0
    %9356 = vmatpush1.msra.mxu0 0.0
    %9357 = vmatprep.subr.mxu0 0.0
    %9358 = vmatpush1.msra.mxu0 0.0
    %9359 = vmatprep.subr.mxu0 0.0
    %9360 = vmatpush1.msra.mxu0 0.0
    %9361 = vmatprep.subr.mxu0 0.0
    %9362 = vmatpush1.msra.mxu0 0.0
    %9363 = vmatprep.subr.mxu0 0.0
    %9364 = vmatpush1.msra.mxu0 0.0
    %9365 = vmatprep.subr.mxu0 0.0
    %9366 = vmatpush1.msra.mxu0 0.0
    %9367 = vmatprep.mubr.f32.mxu0 0.0
    %9368 = vmatmul.mubr.f32.gmra.mrb[0].mxu0 %v9301
    %v9369 = vpop.f32.mrb[0].mxu0
    %v9370 = vadd.f32 %v9295, %v9369
    %v9371 = vpop.f32.mrb[0].mxu0
    %9372 = vdwg.mxu0
    %v9373 = vld [vmem:[%s20] sm:$0x1]
    %v9375 = vlaneseq
    %v9376 = vshrl.u32 %v9375, 7
    %v9377 = vsub.s32 0, %v9376
    %v9378 = vrot.slane %v9373, %v9377
    %v9380 = vadd.f32 %v9370, %v9378
    %v9381 = vtanh.pop %v9380
    %s9382 = scalar_lea.vmem [#allocation24], 10
    %9383 = vst [vmem:[%s9382] sm:$0x3] %v9381
    // Predicated region
    $region138: #{tpu_custom_call.1} parent=1 // pred_check
      _
    $region139: #{tpu_custom_call.1} parent=1 // pred_check_branch
      %9385 = sbr.rel (0) target = $region141
    $region140: #{tpu_custom_call.1} parent=1 // pred_region
      %s9387 = ssub.s32 192, 192
      %9388 = vsyncadd [#allocation5], %s9387
      %s9389 = sshll.u32 [#allocation24], 4
      %s9390 = int_to_ptr.vmem [resolvable:$true] %s9389
      %9395 = dma.vmem_to_hbm [thread:$0]  %s9390, 192, %s21, [#allocation5], 32, 32, 2
    $region141: #{tpu_custom_call.1} parent=1 // pred_fallthru
      _
    // Predicated region
    $region142: #{tpu_custom_call.1} parent=1 // pred_check
      _
    $region143: #{tpu_custom_call.1} parent=1 // pred_check_branch
      %9397 = sbr.rel (0) target = $region145
    $region144: #{tpu_custom_call.1} parent=1 // pred_region
      %9398 = dma.done [#allocation5], 192
    $region145: #{tpu_custom_call.1} parent=1 // pred_fallthru
      _
    %9399 = vsyncpa [#allocation4], 1
    %9400 = vsyncpa [#allocation7], 1
    %9401 = vsyncpa [#allocation10], 1
    %9402 = vsyncpa [#allocation13], 1
    %9403 = vsyncpa [#allocation16], 1
    %9404 = vsyncpa [#allocation19], 1
    %9405 = vsyncpa [#allocation22], 1
    %9406 = vsyncpa [#allocation5], 1

</llo_original>
